<compile_context>
chip_gen: v6e
topology: v6e:2x2x1
jax: 0.10.0
libtpu: 0.0.40
codegen_flags: <defaults>
</compile_context>

<pallas_src>
import numpy as np
import jax
import jax.numpy as jnp
from jax.experimental import pallas as pl
from jax.experimental.pallas import tpu as pltpu


def _pick_tile_s(n_samples, target=512):
    """Largest sublane-aligned divisor of n_samples that is <= target."""
    for t in range(min(target, n_samples), 0, -1):
        if n_samples % t == 0 and (t % 8 == 0 or t == n_samples):
            return t
    return n_samples


def _make_kernel(n_width, n_order, n_elements, n_nodes, x_min, x_max,
                 with_phi):
    """Build the fused forward kernel (closure over static config)."""
    # Static Lagrange-node constants and hoisted reciprocals: no f32 divides
    # inside the kernel; per-node denominators folded into one multiply.
    nodes = np.linspace(-1.0, 1.0, n_order + 1).astype(np.float64)
    inv_denom = []
    for j in range(n_order + 1):
        d = 1.0
        for m in range(n_order + 1):
            if m != j:
                d *= float(nodes[j] - nodes[m])
        inv_denom.append(float(1.0 / d))
    shift_scale = float((n_nodes - 1) / (x_max - x_min))
    inv_order = float(1.0 / n_order)
    ref_scale = float(2.0 / n_order)
    nodes_f = [float(v) for v in nodes]
    x_min_f = float(x_min)
    n_el_max = float(n_elements - 1)

    def kernel(x_ref, e_ref, wbd_ref, pcol_ref, *out_refs):
        if with_phi:
            t_ref, phi_ref = out_refs
        else:
            (t_ref,) = out_refs

        x = x_ref[...]                                    # (tile_s, n_width)

        # Expand each width column into its n_nodes-wide lane group via a 0/1
        # repeat matrix on the (otherwise idle) MXU -> lane-dense
        # (tile_s, n_width * n_nodes) working layout for everything below.
        x_e = jnp.dot(x, e_ref[...],
                      preferred_element_type=jnp.float32,
                      precision=jax.lax.Precision.HIGHEST)

        # Shift / element id / reference coordinate (all lane-dense).
        x_shift = (x_e - x_min_f) * shift_scale
        id_el = jnp.clip(jnp.floor(x_shift * inv_order), 0.0, n_el_max)
        nodes_l = id_el * float(n_order)                  # exact small floats
        x_t = (x_shift - nodes_l) * ref_scale - 1.0

        # Local node index each lane is responsible for: p - nodes_l, where
        # p = (column % n_nodes) is a host-precomputed constant row.
        jj = pcol_ref[...] - nodes_l                      # (tile_s, W*N)

        # Lagrange basis with shared differences; scatter as a chained select
        # (targets are disjoint per sample, so this matches assignment).
        d = [x_t - nodes_f[m] for m in range(n_order + 1)]
        phi = None
        for j in range(n_order + 1):
            num = None
            for m in range(n_order + 1):
                if m == j:
                    continue
                num = d[m] if num is None else num * d[m]
            l_j = num * inv_denom[j]
            phi = jnp.where(jj == float(j), l_j, 0.0 if phi is None else phi)

        if with_phi:
            phi_ref[...] = phi.astype(phi_ref.dtype)

        # t_ik = einsum('kp,ikp->ik', W, phi) as one MXU matmul against the
        # block-diagonal weight (moves the contraction off the VPU/XLU path).
        t_ref[...] = jnp.dot(phi, wbd_ref[...],
                             preferred_element_type=jnp.float32,
                             precision=jax.lax.Precision.HIGHEST)

    return kernel


def lagr_kann_auto_outer(x, weight, *, n_width, n_order, n_elements,
                         n_samples, x_min, x_max, tile_s=None,
                         return_phi=True, phi_dtype=jnp.float32):
    """Pallas implementation of LagrKANNautoouter.forward."""
    n_nodes = n_elements * n_order + 1
    wn = n_width * n_nodes

    x = jnp.asarray(x, jnp.float32)
    if x.ndim != 2:
        # torch path: unsqueeze + repeat_interleave across the width dim.
        x = jnp.repeat(x[..., None], n_width, axis=-1)
    weight = jnp.asarray(weight, jnp.float32)

    # Tile the sample axis. ~512 rows keeps the double-buffered, lane-dense
    # phi block (tile_s x wn, padded to 128 lanes) far under even v7x's
    # 32 MiB scoped VMEM, amortizes the ~0.35us per-grid-step overhead, and
    # gives the "parallel" axis >1 step so both v7x TensorCores are used.
    if tile_s is None:
        tile_s = _pick_tile_s(n_samples, target=512)
    assert n_samples % tile_s == 0, (n_samples, tile_s)
    grid = (n_samples // tile_s,)

    # Host-side constants: 0/1 width->lane-group repeat matrix, block-diagonal
    # weight for the MXU contraction, and the per-column local node index.
    expand = jnp.asarray(
        np.repeat(np.eye(n_width, dtype=np.float32), n_nodes, axis=1))
    w_bd = (weight[:, :, None] *
            jnp.eye(n_width, dtype=jnp.float32)[:, None, :]).reshape(wn, n_width)
    p_col = jnp.asarray(
        np.tile(np.arange(n_nodes, dtype=np.float32), n_width))[None, :]

    kernel = _make_kernel(n_width, n_order, n_elements, n_nodes,
                          float(x_min), float(x_max), return_phi)

    out_shape = [jax.ShapeDtypeStruct((n_samples, n_width), jnp.float32)]
    out_specs = [pl.BlockSpec((tile_s, n_width), lambda i: (i, 0))]
    if return_phi:
        # Lane-dense 2-D phi output; reshaped back to 3-D outside the kernel.
        out_shape.append(jax.ShapeDtypeStruct((n_samples, wn), phi_dtype))
        out_specs.append(pl.BlockSpec((tile_s, wn), lambda i: (i, 0)))

    outs = pl.pallas_call(
        kernel,
        out_shape=tuple(out_shape),
        grid_spec=pltpu.PrefetchScalarGridSpec(
            num_scalar_prefetch=0,
            grid=grid,
            in_specs=[
                pl.BlockSpec((tile_s, n_width), lambda i: (i, 0)),
                pl.BlockSpec((n_width, wn), lambda i: (0, 0)),
                pl.BlockSpec((wn, n_width), lambda i: (0, 0)),
                pl.BlockSpec((1, wn), lambda i: (0, 0)),
            ],
            out_specs=out_specs,
        ),
        compiler_params=pltpu.CompilerParams(
            dimension_semantics=("parallel",)),
    )(x, expand, w_bd, p_col)

    t_ik = outs[0]
    phi_ikp = (outs[1].reshape(n_samples, n_width, n_nodes)
               if return_phi else None)
    delta_x = 0.5 * n_order * (x_max - x_min) / (n_nodes - 1)
    return {"t_ik": t_ik, "phi_ikp": phi_ikp, "delta_x": delta_x}


def _numpy_reference(x, weight, n_width, n_order, n_elements, x_min, x_max):
    """Pure numpy reference mirroring the torch forward."""
    n_nodes = n_elements * n_order + 1
    x = np.asarray(x, np.float32)
    if x.ndim != 2:
        x = np.repeat(x[..., None], n_width, axis=-1)
    n_samples = x.shape[0]
    x_shift = (n_nodes - 1) * (x - x_min) / (x_max - x_min)
    id_el = np.floor(x_shift / n_order)
    id_el[id_el >= n_elements] = n_elements - 1
    id_el[id_el < 0] = 0
    nodes_l = (id_el * n_order).astype(np.int64)
    x_t = 2.0 * (x_shift - nodes_l) / n_order - 1.0
    nodes = np.linspace(-1.0, 1.0, n_order + 1).astype(np.float32)
    phi_local = np.zeros((n_samples, n_width, n_order + 1), np.float32)
    for j in range(n_order + 1):
        p = np.ones_like(x_t)
        for m in range(n_order + 1):
            if j != m:
                p = p * (x_t - nodes[m]) / (nodes[j] - nodes[m])
        phi_local[:, :, j] = p
    phi = np.zeros((n_samples, n_width, n_nodes), np.float32)
    s_idx = np.arange(n_samples)[:, None]
    k_idx = np.arange(n_width)[None, :]
    for node in range(n_order + 1):
        phi[s_idx, k_idx, nodes_l + node] = phi_local[:, :, node]
    t_ik = np.einsum("kp,ikp->ik", np.asarray(weight, np.float32), phi)
    return t_ik, phi


if __name__ == "__main__":
    # Small configuration consistent with the module.
    n_width = 8
    n_order = 3
    n_elements = 4
    n_nodes = n_elements * n_order + 1     # 13
    n_samples = 2048                       # default tile_s -> 512, grid=(4,)
    x_min, x_max = -1.0, 1.0

    key = jax.random.PRNGKey(0)
    kx, kw = jax.random.split(key)
    # 1-D input (n_samples,) exercises the repeat-to-width path of forward().
    x = jax.random.uniform(kx, (n_samples,), minval=x_min, maxval=x_max,
                           dtype=jnp.float32)
    # Module __init__ uses zeros; use a deterministic random init here so the
    # t_ik contraction is non-trivial.
    weight = jax.random.normal(kw, (n_width, n_nodes), dtype=jnp.float32)

    out = lagr_kann_auto_outer(
        x, weight,
        n_width=n_width, n_order=n_order, n_elements=n_elements,
        n_samples=n_samples, x_min=x_min, x_max=x_max)
    jax.block_until_ready(out["t_ik"])
    jax.block_until_ready(out["phi_ikp"])

    # Correctness check against a numpy reference of the torch forward.
    t_ref, phi_ref = _numpy_reference(
        np.asarray(x), np.asarray(weight),
        n_width, n_order, n_elements, x_min, x_max)
    np.testing.assert_allclose(np.asarray(out["phi_ikp"]), phi_ref,
                               rtol=1e-5, atol=1e-5)
    np.testing.assert_allclose(np.asarray(out["t_ik"]), t_ref,
                               rtol=1e-5, atol=1e-5)

    # Also exercise the t_ik-only path (skips the phi HBM writeback).
    out2 = lagr_kann_auto_outer(
        x, weight,
        n_width=n_width, n_order=n_order, n_elements=n_elements,
        n_samples=n_samples, x_min=x_min, x_max=x_max,
        tile_s=256, return_phi=False)
    jax.block_until_ready(out2["t_ik"])
    np.testing.assert_allclose(np.asarray(out2["t_ik"]), t_ref,
                               rtol=1e-5, atol=1e-5)

    print("KERNEL_OK")
</pallas_src>

<mosaic_0001>
module attributes {stable_mosaic.version = 11 : i64} {
  func.func @kernel(%arg0: i32, %arg1: memref<512x8xf32, #tpu.memory_space<vmem>>, %arg2: memref<8x104xf32, #tpu.memory_space<vmem>>, %arg3: memref<104x8xf32, #tpu.memory_space<vmem>>, %arg4: memref<1x104xf32, #tpu.memory_space<vmem>>, %arg5: memref<512x8xf32, #tpu.memory_space<vmem>>, %arg6: memref<512x104xf32, #tpu.memory_space<vmem>>) attributes {dimension_semantics = [#tpu.dimension_semantics<parallel>], iteration_bounds = array<i64: 4>, scalar_prefetch = 0 : i64, scratch_operands = 0 : i64, tpu.core_type = #tpu.core_type<tc>, window_params = [{transform_indices = @transform_0, window_bounds = array<i64: 512, 8>}, {pipeline_mode = #tpu.pipeline_mode<synchronous>, transform_indices = @transform_1, window_bounds = array<i64: 8, 104>}, {pipeline_mode = #tpu.pipeline_mode<synchronous>, transform_indices = @transform_2, window_bounds = array<i64: 104, 8>}, {pipeline_mode = #tpu.pipeline_mode<synchronous>, transform_indices = @transform_3, window_bounds = array<i64: 1, 104>}, {transform_indices = @transform_4, window_bounds = array<i64: 512, 8>}, {transform_indices = @transform_5, window_bounds = array<i64: 512, 104>}]} {
    %c0 = arith.constant 0 : index
    %c0_0 = arith.constant 0 : index
    %0 = vector.load %arg1[%c0, %c0_0] : memref<512x8xf32, #tpu.memory_space<vmem>>, vector<512x8xf32>
    %c0_1 = arith.constant 0 : index
    %c0_2 = arith.constant 0 : index
    %1 = vector.load %arg2[%c0_1, %c0_2] : memref<8x104xf32, #tpu.memory_space<vmem>>, vector<8x104xf32>
    %cst = arith.constant dense<0.000000e+00> : vector<512x104xf32>
    %2 = tpu.matmul %0, %1, %cst {dimension_numbers = #tpu.dot_dimension_numbers<[1], [0], [0], [1], [0, 0, 1, 1], [], []>, precision = #tpu.contract_precision<fp32>} : vector<512x8xf32>, vector<8x104xf32>, vector<512x104xf32> -> vector<512x104xf32>
    %cst_3 = arith.constant -1.000000e+00 : f32
    %3 = vector.broadcast %cst_3 : f32 to vector<512x104xf32>
    %4 = arith.subf %2, %3 : vector<512x104xf32>
    %cst_4 = arith.constant 6.000000e+00 : f32
    %5 = vector.broadcast %cst_4 : f32 to vector<512x104xf32>
    %6 = arith.mulf %4, %5 : vector<512x104xf32>
    %cst_5 = arith.constant 0.333333343 : f32
    %7 = vector.broadcast %cst_5 : f32 to vector<512x104xf32>
    %8 = arith.mulf %6, %7 : vector<512x104xf32>
    %9 = math.floor %8 : vector<512x104xf32>
    %cst_6 = arith.constant 0.000000e+00 : f32
    %cst_7 = arith.constant 3.000000e+00 : f32
    %10 = vector.broadcast %cst_6 : f32 to vector<512x104xf32>
    %11 = arith.maximumf %10, %9 : vector<512x104xf32>
    %12 = vector.broadcast %cst_7 : f32 to vector<512x104xf32>
    %13 = arith.minimumf %12, %11 : vector<512x104xf32>
    %cst_8 = arith.constant 3.000000e+00 : f32
    %14 = vector.broadcast %cst_8 : f32 to vector<512x104xf32>
    %15 = arith.mulf %13, %14 : vector<512x104xf32>
    %16 = arith.subf %6, %15 : vector<512x104xf32>
    %cst_9 = arith.constant 0.666666686 : f32
    %17 = vector.broadcast %cst_9 : f32 to vector<512x104xf32>
    %18 = arith.mulf %16, %17 : vector<512x104xf32>
    %cst_10 = arith.constant 1.000000e+00 : f32
    %19 = vector.broadcast %cst_10 : f32 to vector<512x104xf32>
    %20 = arith.subf %18, %19 : vector<512x104xf32>
    %c0_11 = arith.constant 0 : index
    %c0_12 = arith.constant 0 : index
    %21 = vector.load %arg4[%c0_11, %c0_12] : memref<1x104xf32, #tpu.memory_space<vmem>>, vector<1x104xf32>
    %22 = vector.broadcast %21 : vector<1x104xf32> to vector<512x104xf32>
    %23 = arith.subf %22, %15 : vector<512x104xf32>
    %cst_13 = arith.constant -1.000000e+00 : f32
    %24 = vector.broadcast %cst_13 : f32 to vector<512x104xf32>
    %25 = arith.subf %20, %24 : vector<512x104xf32>
    %cst_14 = arith.constant -0.333333343 : f32
    %26 = vector.broadcast %cst_14 : f32 to vector<512x104xf32>
    %27 = arith.subf %20, %26 : vector<512x104xf32>
    %cst_15 = arith.constant 0.333333343 : f32
    %28 = vector.broadcast %cst_15 : f32 to vector<512x104xf32>
    %29 = arith.subf %20, %28 : vector<512x104xf32>
    %cst_16 = arith.constant 1.000000e+00 : f32
    %30 = vector.broadcast %cst_16 : f32 to vector<512x104xf32>
    %31 = arith.subf %20, %30 : vector<512x104xf32>
    %32 = arith.mulf %27, %29 : vector<512x104xf32>
    %33 = arith.mulf %32, %31 : vector<512x104xf32>
    %cst_17 = arith.constant -5.625000e-01 : f32
    %34 = vector.broadcast %cst_17 : f32 to vector<512x104xf32>
    %35 = arith.mulf %33, %34 : vector<512x104xf32>
    %cst_18 = arith.constant 0.000000e+00 : f32
    %36 = vector.broadcast %cst_18 : f32 to vector<512x104xf32>
    %37 = arith.cmpf oeq, %23, %36 : vector<512x104xf32>
    %cst_19 = arith.constant 0.000000e+00 : f32
    %38 = vector.broadcast %cst_19 : f32 to vector<512x104xf32>
    %39 = arith.select %37, %35, %38 : vector<512x104xi1>, vector<512x104xf32>
    %40 = arith.mulf %25, %29 : vector<512x104xf32>
    %41 = arith.mulf %40, %31 : vector<512x104xf32>
    %cst_20 = arith.constant 1.687500e+00 : f32
    %42 = vector.broadcast %cst_20 : f32 to vector<512x104xf32>
    %43 = arith.mulf %41, %42 : vector<512x104xf32>
    %cst_21 = arith.constant 1.000000e+00 : f32
    %44 = vector.broadcast %cst_21 : f32 to vector<512x104xf32>
    %45 = arith.cmpf oeq, %23, %44 : vector<512x104xf32>
    %46 = arith.select %45, %43, %39 : vector<512x104xi1>, vector<512x104xf32>
    %47 = arith.mulf %25, %27 : vector<512x104xf32>
    %48 = arith.mulf %47, %31 : vector<512x104xf32>
    %cst_22 = arith.constant -1.687500e+00 : f32
    %49 = vector.broadcast %cst_22 : f32 to vector<512x104xf32>
    %50 = arith.mulf %48, %49 : vector<512x104xf32>
    %cst_23 = arith.constant 2.000000e+00 : f32
    %51 = vector.broadcast %cst_23 : f32 to vector<512x104xf32>
    %52 = arith.cmpf oeq, %23, %51 : vector<512x104xf32>
    %53 = arith.select %52, %50, %46 : vector<512x104xi1>, vector<512x104xf32>
    %54 = arith.mulf %25, %27 : vector<512x104xf32>
    %55 = arith.mulf %54, %29 : vector<512x104xf32>
    %cst_24 = arith.constant 5.625000e-01 : f32
    %56 = vector.broadcast %cst_24 : f32 to vector<512x104xf32>
    %57 = arith.mulf %55, %56 : vector<512x104xf32>
    %cst_25 = arith.constant 3.000000e+00 : f32
    %58 = vector.broadcast %cst_25 : f32 to vector<512x104xf32>
    %59 = arith.cmpf oeq, %23, %58 : vector<512x104xf32>
    %60 = arith.select %59, %57, %53 : vector<512x104xi1>, vector<512x104xf32>
    %c0_26 = arith.constant 0 : index
    %c0_27 = arith.constant 0 : index
    %61 = vector.load %arg6[%c0_26, %c0_27] : memref<512x104xf32, #tpu.memory_space<vmem>>, vector<512x104xf32>
    tpu.vector_store %arg6[%c0_26, %c0_27], %60 {strides = array<i32>} : memref<512x104xf32, #tpu.memory_space<vmem>>, vector<512x104xf32>,
    %c0_28 = arith.constant 0 : index
    %c0_29 = arith.constant 0 : index
    %62 = vector.load %arg3[%c0_28, %c0_29] : memref<104x8xf32, #tpu.memory_space<vmem>>, vector<104x8xf32>
    %cst_30 = arith.constant dense<0.000000e+00> : vector<512x8xf32>
    %63 = tpu.matmul %60, %62, %cst_30 {dimension_numbers = #tpu.dot_dimension_numbers<[1], [0], [0], [1], [0, 0, 1, 1], [], []>, precision = #tpu.contract_precision<fp32>} : vector<512x104xf32>, vector<104x8xf32>, vector<512x8xf32> -> vector<512x8xf32>
    %c0_31 = arith.constant 0 : index
    %c0_32 = arith.constant 0 : index
    %64 = vector.load %arg5[%c0_31, %c0_32] : memref<512x8xf32, #tpu.memory_space<vmem>>, vector<512x8xf32>
    tpu.vector_store %arg5[%c0_31, %c0_32], %63 {strides = array<i32>} : memref<512x8xf32, #tpu.memory_space<vmem>>, vector<512x8xf32>,
    return
  }
  func.func @transform_0(%arg0: i32) -> (i32, i32) {
    %c0_i32 = arith.constant 0 : i32
    %c0_i32_0 = arith.constant 0 : i32
    return %arg0, %c0_i32 : i32, i32
  }
  func.func @transform_1(%arg0: i32) -> (i32, i32) {
    %c0_i32 = arith.constant 0 : i32
    %c0_i32_0 = arith.constant 0 : i32
    %c0_i32_1 = arith.constant 0 : i32
    return %c0_i32, %c0_i32_0 : i32, i32
  }
  func.func @transform_2(%arg0: i32) -> (i32, i32) {
    %c0_i32 = arith.constant 0 : i32
    %c0_i32_0 = arith.constant 0 : i32
    %c0_i32_1 = arith.constant 0 : i32
    return %c0_i32, %c0_i32_0 : i32, i32
  }
  func.func @transform_3(%arg0: i32) -> (i32, i32) {
    %c0_i32 = arith.constant 0 : i32
    %c0_i32_0 = arith.constant 0 : i32
    %c0_i32_1 = arith.constant 0 : i32
    return %c0_i32, %c0_i32_0 : i32, i32
  }
  func.func @transform_4(%arg0: i32) -> (i32, i32) {
    %c0_i32 = arith.constant 0 : i32
    %c0_i32_0 = arith.constant 0 : i32
    return %arg0, %c0_i32 : i32, i32
  }
  func.func @transform_5(%arg0: i32) -> (i32, i32) {
    %c0_i32 = arith.constant 0 : i32
    %c0_i32_0 = arith.constant 0 : i32
    return %arg0, %c0_i32 : i32, i32
  }
}

</mosaic_0001>

<llo_original>
// kernel: tpu_custom_call.1
$region0: #{tpu_custom_call.1}
  #allocation0 [shape = 'u32[]', space=smem, size = 0x4, offset = 0x4, fixed_abs, tag = 'smem constant byte address 0x4 - core index']
  #allocation1 [shape = 'u32[144,128]{1,0:T(1,128)}', space=vmem, size = 0x12000, scoped, tag = 'internal scratch']
  %s0 = inlined_call_operand.vmem [shape: f32[2048,8], index: 0, kind: input, shape index: {}]
  %s1 = inlined_call_operand.vmem [shape: f32[8,104], index: 1, kind: input, shape index: {}]
  %s2 = inlined_call_operand.vmem [shape: f32[104,8], index: 2, kind: input, shape index: {}]
  %s3 = inlined_call_operand.vmem [shape: f32[1,104], index: 3, kind: input, shape index: {}]
  %s4 = inlined_call_operand.vmem [shape: f32[2048,8], index: 4, kind: output, shape index: {0}]
  %s5 = inlined_call_operand.vmem [shape: f32[2048,104], index: 5, kind: output, shape index: {1}]
  %6 = xla_tuple %s4, %s5
  %s7 = sld [smem:[#allocation0]]
  $region57: #{tpu_custom_call.1} parent=0
    _
  %s9 = ssub.s32 1, %s7
  %s10 = scalar_select 0, %s9, %s7
  loop: start=0, step=1, limit=6
  $region2: #{tpu_custom_call.1} parent=0 // loop_pre_header
    _
  $region3: #{tpu_custom_call.1} parent=0 // loop_header
    %s12 = sphi 0, %s16
    %p13 = scmp.ge.s32.totalorder %s12, 6
    %s22 = sphi 0, %s24
    %s25 = sphi 0, %s22
    %s26 = sphi 0, %s25
    %s42 = sphi 0, %s26
    %s46 = sphi 0, %s46
    %s48 = sphi 0, %s46
    %s49 = sphi 0, %s48
    %s63 = sphi 0, %s49
    %s67 = sphi 0, %s67
    %s69 = sphi 0, %s67
    %s70 = sphi 0, %s69
    %s84 = sphi 0, %s70
    %s88 = sphi 0, %s88
    %s90 = sphi 0, %s88
    %s91 = sphi 0, %s90
    %s105 = sphi 0, %s91
    %s111 = sphi 0, %s113
    %s114 = sphi 0, %s111
    %s115 = sphi 0, %s114
    %s131 = sphi 0, %s115
    %s137 = sphi 0, %s139
    %s140 = sphi 0, %s137
    %s141 = sphi 0, %s140
    %s157 = sphi 0, %s141
  $region4: #{tpu_custom_call.1} parent=0 // loop_header_branch
    %15 = sbr.rel (%p13) target = $region8
  $region5: #{tpu_custom_call.1} parent=0 // loop_body
    %s17 = ssub.s32 %s12, 1
    %s18 = ssub.s32 %s12, 2
    %s19 = sadd.s32 %s12, 1
    %s20 = ssub.s32 %s12, %s19
    %p21 = scmp.eq.s32.totalorder %s20, 0
    %s23 = sadd.s32 %s22, 1
    %s24 = scalar_select %p21, %s22, %s23
    %p27 = pneg %p21
    %p28 = scmp.eq.s32.totalorder %s12, 3
    %p29 = por %p27, %p28
    %p30 = scmp.ne.s32.totalorder %s22, %s25
    %p31 = scmp.eq.s32.totalorder %s12, 0
    %p32 = por %p30, %p31
    %p33 = scmp.ne.s32.totalorder %s22, %s25
    %p34 = scmp.eq.s32.totalorder %s17, 3
    %p35 = por %p33, %p34
    %p36 = scmp.ne.s32.totalorder %s25, %s26
    %p37 = scmp.eq.s32.totalorder %s17, 0
    %p38 = por %p36, %p37
    %p39 = scmp.ne.s32.totalorder %s25, %s26
    %p40 = scmp.eq.s32.totalorder %s18, 3
    %p41 = por %p39, %p40
    %p43 = scmp.ne.s32.totalorder %s26, %s42
    %p44 = scmp.eq.s32.totalorder %s18, 0
    %p45 = por %p43, %p44
    %s47 = sadd.s32 %s46, 1
    %p50 = scmp.eq.s32.totalorder %s12, 3
    %p51 = scmp.ne.s32.totalorder %s46, %s48
    %p52 = scmp.eq.s32.totalorder %s12, 0
    %p53 = por %p51, %p52
    %p54 = scmp.ne.s32.totalorder %s46, %s48
    %p55 = scmp.eq.s32.totalorder %s17, 3
    %p56 = por %p54, %p55
    %p57 = scmp.ne.s32.totalorder %s48, %s49
    %p58 = scmp.eq.s32.totalorder %s17, 0
    %p59 = por %p57, %p58
    %p60 = scmp.ne.s32.totalorder %s48, %s49
    %p61 = scmp.eq.s32.totalorder %s18, 3
    %p62 = por %p60, %p61
    %p64 = scmp.ne.s32.totalorder %s49, %s63
    %p65 = scmp.eq.s32.totalorder %s18, 0
    %p66 = por %p64, %p65
    %s68 = sadd.s32 %s67, 1
    %p71 = scmp.eq.s32.totalorder %s12, 3
    %p72 = scmp.ne.s32.totalorder %s67, %s69
    %p73 = scmp.eq.s32.totalorder %s12, 0
    %p74 = por %p72, %p73
    %p75 = scmp.ne.s32.totalorder %s67, %s69
    %p76 = scmp.eq.s32.totalorder %s17, 3
    %p77 = por %p75, %p76
    %p78 = scmp.ne.s32.totalorder %s69, %s70
    %p79 = scmp.eq.s32.totalorder %s17, 0
    %p80 = por %p78, %p79
    %p81 = scmp.ne.s32.totalorder %s69, %s70
    %p82 = scmp.eq.s32.totalorder %s18, 3
    %p83 = por %p81, %p82
    %p85 = scmp.ne.s32.totalorder %s70, %s84
    %p86 = scmp.eq.s32.totalorder %s18, 0
    %p87 = por %p85, %p86
    %s89 = sadd.s32 %s88, 1
    %p92 = scmp.eq.s32.totalorder %s12, 3
    %p93 = scmp.ne.s32.totalorder %s88, %s90
    %p94 = scmp.eq.s32.totalorder %s12, 0
    %p95 = por %p93, %p94
    %p96 = scmp.ne.s32.totalorder %s88, %s90
    %p97 = scmp.eq.s32.totalorder %s17, 3
    %p98 = por %p96, %p97
    %p99 = scmp.ne.s32.totalorder %s90, %s91
    %p100 = scmp.eq.s32.totalorder %s17, 0
    %p101 = por %p99, %p100
    %p102 = scmp.ne.s32.totalorder %s90, %s91
    %p103 = scmp.eq.s32.totalorder %s18, 3
    %p104 = por %p102, %p103
    %p106 = scmp.ne.s32.totalorder %s91, %s105
    %p107 = scmp.eq.s32.totalorder %s18, 0
    %p108 = por %p106, %p107
    %s109 = ssub.s32 %s12, %s19
    %p110 = scmp.eq.s32.totalorder %s109, 0
    %s112 = sadd.s32 %s111, 1
    %s113 = scalar_select %p110, %s111, %s112
    %p116 = pneg %p110
    %p117 = scmp.eq.s32.totalorder %s12, 3
    %p118 = por %p116, %p117
    %p119 = scmp.ne.s32.totalorder %s111, %s114
    %p120 = scmp.eq.s32.totalorder %s12, 0
    %p121 = por %p119, %p120
    %p122 = scmp.ne.s32.totalorder %s111, %s114
    %p123 = scmp.eq.s32.totalorder %s17, 3
    %p124 = por %p122, %p123
    %p125 = scmp.ne.s32.totalorder %s114, %s115
    %p126 = scmp.eq.s32.totalorder %s17, 0
    %p127 = por %p125, %p126
    %p128 = scmp.ne.s32.totalorder %s114, %s115
    %p129 = scmp.eq.s32.totalorder %s18, 3
    %p130 = por %p128, %p129
    %p132 = scmp.ne.s32.totalorder %s115, %s131
    %p133 = scmp.eq.s32.totalorder %s18, 0
    %p134 = por %p132, %p133
    %s135 = ssub.s32 %s12, %s19
    %p136 = scmp.eq.s32.totalorder %s135, 0
    %s138 = sadd.s32 %s137, 1
    %s139 = scalar_select %p136, %s137, %s138
    %p142 = pneg %p136
    %p143 = scmp.eq.s32.totalorder %s12, 3
    %p144 = por %p142, %p143
    %p145 = scmp.ne.s32.totalorder %s137, %s140
    %p146 = scmp.eq.s32.totalorder %s12, 0
    %p147 = por %p145, %p146
    %p148 = scmp.ne.s32.totalorder %s137, %s140
    %p149 = scmp.eq.s32.totalorder %s17, 3
    %p150 = por %p148, %p149
    %p151 = scmp.ne.s32.totalorder %s140, %s141
    %p152 = scmp.eq.s32.totalorder %s17, 0
    %p153 = por %p151, %p152
    %p154 = scmp.ne.s32.totalorder %s140, %s141
    %p155 = scmp.eq.s32.totalorder %s18, 3
    %p156 = por %p154, %p155
    %p158 = scmp.ne.s32.totalorder %s141, %s157
    %p159 = scmp.eq.s32.totalorder %s18, 0
    %p160 = por %p158, %p159
    %p161 = scmp.le.s32.totalorder 1, %s12
    %p162 = scmp.lt.s32.totalorder %s12, 5
    %p163 = pnand %p161, %p162
    %p164 = pneg %p163
    // Predicated region
    $region9: #{tpu_custom_call.1} parent=5 // pred_check
      _
    $region10: #{tpu_custom_call.1} parent=5 // pred_check_branch
      %166 = sbr.rel (%p163) target = $region12
    $region11: #{tpu_custom_call.1} parent=5 // pred_region
      %s167 = ssub.s32 %s12, 1
      // Predicated region
      $region13: #{tpu_custom_call.1} parent=11 // pred_check
        %p168 = pneg %p59
      $region14: #{tpu_custom_call.1} parent=11 // pred_check_branch
        %170 = sbr.rel (%p168) target = $region16
      $region15: #{tpu_custom_call.1} parent=11 // pred_region
        _
      $region16: #{tpu_custom_call.1} parent=11 // pred_fallthru
        _
      // Predicated region
      $region17: #{tpu_custom_call.1} parent=11 // pred_check
        %p171 = pneg %p80
      $region18: #{tpu_custom_call.1} parent=11 // pred_check_branch
        %173 = sbr.rel (%p171) target = $region20
      $region19: #{tpu_custom_call.1} parent=11 // pred_region
        _
      $region20: #{tpu_custom_call.1} parent=11 // pred_fallthru
        _
      // Predicated region
      $region21: #{tpu_custom_call.1} parent=11 // pred_check
        %p174 = pneg %p101
      $region22: #{tpu_custom_call.1} parent=11 // pred_check_branch
        %176 = sbr.rel (%p174) target = $region24
      $region23: #{tpu_custom_call.1} parent=11 // pred_region
        _
      $region24: #{tpu_custom_call.1} parent=11 // pred_fallthru
        _
    $region12: #{tpu_custom_call.1} parent=5 // pred_fallthru
      _
    %p177 = scmp.lt.s32.totalorder %s12, 4
    // Predicated region
    $region25: #{tpu_custom_call.1} parent=5 // pred_check
      %p178 = pneg %p177
    $region26: #{tpu_custom_call.1} parent=5 // pred_check_branch
      %180 = sbr.rel (%p178) target = $region28
    $region27: #{tpu_custom_call.1} parent=5 // pred_region
      // Predicated region
      $region29: #{tpu_custom_call.1} parent=27 // pred_check
        %p181 = pneg %p32
      $region30: #{tpu_custom_call.1} parent=27 // pred_check_branch
        %183 = sbr.rel (%p181) target = $region32
      $region31: #{tpu_custom_call.1} parent=27 // pred_region
        %s184 = smul.u32 64, %s12
        %p185 = scmp.lt.s32.totalorder %s184, 255
        %s186 = scalar_select %p185, %s184, 255
        %s187 = smul.addr %s186, 8
        %s188 = scalar_lea.vmem %s0, %s187
        %s189 = smul.u32 64, %s12
      $region32: #{tpu_custom_call.1} parent=27 // pred_fallthru
        _
    $region28: #{tpu_custom_call.1} parent=5 // pred_fallthru
      _
    %p190 = scmp.le.s32.totalorder 1, %s12
    %p191 = scmp.lt.s32.totalorder %s12, 5
    %p192 = pnand %p190, %p191
    %p193 = pneg %p192
    // Predicated region
    $region33: #{tpu_custom_call.1} parent=5 // pred_check
      _
    $region34: #{tpu_custom_call.1} parent=5 // pred_check_branch
      %195 = sbr.rel (%p192) target = $region36
    $region35: #{tpu_custom_call.1} parent=5 // pred_region
      %s196 = ssub.s32 %s12, 1
      %s197 = smul.u32 64, %s17
      %p198 = scmp.lt.s32.totalorder %s197, 255
      %s199 = scalar_select %p198, %s197, 255
      %s200 = smul.addr %s199, 8
      %s201 = scalar_lea.vmem %s0, %s200
      %p202 = pneg %p38
      %p203 = pneg %p35
      %p204 = pneg %p59
      %p205 = pneg %p56
      %p206 = pneg %p80
      %p207 = pneg %p77
      %p208 = pneg %p101
      %p209 = pneg %p98
      %p210 = pneg %p127
      %p211 = pneg %p124
      %s212 = smul.u32 64, %s17
      %p213 = scmp.lt.s32.totalorder %s212, 255
      %s214 = scalar_select %p213, %s212, 255
      %s215 = smul.addr %s214, 8
      %s216 = scalar_lea.vmem %s4, %s215
      %p217 = pneg %p153
      %p218 = pneg %p150
      %s219 = smul.u32 64, %s17
      %p220 = scmp.lt.s32.totalorder %s219, 255
      %s221 = scalar_select %p220, %s219, 255
      %s222 = smul.addr %s221, 8
      %s223 = scalar_lea.vmem %s5, %s222
      %s224 = smul.u32 64, %s17
      %p225 = scmp.lt.s32.totalorder %s224, 255
      %s226 = scalar_select %p225, %s224, 255
      %s227 = smul.addr %s226, 8
      %s228 = scalar_lea.vmem %s0, %s227
      %s229 = smul.u32 64, %s17
      %s230 = smul.u32 64, %s17
      %p231 = scmp.lt.s32.totalorder %s230, 255
      %s232 = scalar_select %p231, %s230, 255
      %s233 = smul.addr %s232, 8
      %s234 = scalar_lea.vmem %s4, %s233
      %s235 = smul.u32 64, %s17
      %s236 = smul.u32 64, %s17
      %p237 = scmp.lt.s32.totalorder %s236, 255
      %s238 = scalar_select %p237, %s236, 255
      %s239 = smul.addr %s238, 8
      %s240 = scalar_lea.vmem %s5, %s239
      %s241 = smul.u32 64, %s17
      %v242 = vld [vmem:[%s228] sm:$0xff]
      %v243 = vld [vmem:[%s228 + $0x8] sm:$0xff]
      %v244 = vld [vmem:[%s228 + $0x10] sm:$0xff]
      %v245 = vld [vmem:[%s228 + $0x18] sm:$0xff]
      %v246 = vld [vmem:[%s228 + $0x20] sm:$0xff]
      %v247 = vld [vmem:[%s228 + $0x28] sm:$0xff]
      %v248 = vld [vmem:[%s228 + $0x30] sm:$0xff]
      %v249 = vld [vmem:[%s228 + $0x38] sm:$0xff]
      %v250 = vld [vmem:[%s228 + $0x40] sm:$0xff]
      %v251 = vld [vmem:[%s228 + $0x48] sm:$0xff]
      %v252 = vld [vmem:[%s228 + $0x50] sm:$0xff]
      %v253 = vld [vmem:[%s228 + $0x58] sm:$0xff]
      %v254 = vld [vmem:[%s228 + $0x60] sm:$0xff]
      %v255 = vld [vmem:[%s228 + $0x68] sm:$0xff]
      %v256 = vld [vmem:[%s228 + $0x70] sm:$0xff]
      %v257 = vld [vmem:[%s228 + $0x78] sm:$0xff]
      %v258 = vld [vmem:[%s228 + $0x80] sm:$0xff]
      %v259 = vld [vmem:[%s228 + $0x88] sm:$0xff]
      %v260 = vld [vmem:[%s228 + $0x90] sm:$0xff]
      %v261 = vld [vmem:[%s228 + $0x98] sm:$0xff]
      %v262 = vld [vmem:[%s228 + $0xa0] sm:$0xff]
      %v263 = vld [vmem:[%s228 + $0xa8] sm:$0xff]
      %v264 = vld [vmem:[%s228 + $0xb0] sm:$0xff]
      %v265 = vld [vmem:[%s228 + $0xb8] sm:$0xff]
      %v266 = vld [vmem:[%s228 + $0xc0] sm:$0xff]
      %v267 = vld [vmem:[%s228 + $0xc8] sm:$0xff]
      %v268 = vld [vmem:[%s228 + $0xd0] sm:$0xff]
      %v269 = vld [vmem:[%s228 + $0xd8] sm:$0xff]
      %v270 = vld [vmem:[%s228 + $0xe0] sm:$0xff]
      %v271 = vld [vmem:[%s228 + $0xe8] sm:$0xff]
      %v272 = vld [vmem:[%s228 + $0xf0] sm:$0xff]
      %v273 = vld [vmem:[%s228 + $0xf8] sm:$0xff]
      %v274 = vld [vmem:[%s228 + $0x100] sm:$0xff]
      %v275 = vld [vmem:[%s228 + $0x108] sm:$0xff]
      %v276 = vld [vmem:[%s228 + $0x110] sm:$0xff]
      %v277 = vld [vmem:[%s228 + $0x118] sm:$0xff]
      %v278 = vld [vmem:[%s228 + $0x120] sm:$0xff]
      %v279 = vld [vmem:[%s228 + $0x128] sm:$0xff]
      %v280 = vld [vmem:[%s228 + $0x130] sm:$0xff]
      %v281 = vld [vmem:[%s228 + $0x138] sm:$0xff]
      %v282 = vld [vmem:[%s228 + $0x140] sm:$0xff]
      %v283 = vld [vmem:[%s228 + $0x148] sm:$0xff]
      %v284 = vld [vmem:[%s228 + $0x150] sm:$0xff]
      %v285 = vld [vmem:[%s228 + $0x158] sm:$0xff]
      %v286 = vld [vmem:[%s228 + $0x160] sm:$0xff]
      %v287 = vld [vmem:[%s228 + $0x168] sm:$0xff]
      %v288 = vld [vmem:[%s228 + $0x170] sm:$0xff]
      %v289 = vld [vmem:[%s228 + $0x178] sm:$0xff]
      %v290 = vld [vmem:[%s228 + $0x180] sm:$0xff]
      %v291 = vld [vmem:[%s228 + $0x188] sm:$0xff]
      %v292 = vld [vmem:[%s228 + $0x190] sm:$0xff]
      %v293 = vld [vmem:[%s228 + $0x198] sm:$0xff]
      %v294 = vld [vmem:[%s228 + $0x1a0] sm:$0xff]
      %v295 = vld [vmem:[%s228 + $0x1a8] sm:$0xff]
      %v296 = vld [vmem:[%s228 + $0x1b0] sm:$0xff]
      %v297 = vld [vmem:[%s228 + $0x1b8] sm:$0xff]
      %v298 = vld [vmem:[%s228 + $0x1c0] sm:$0xff]
      %v299 = vld [vmem:[%s228 + $0x1c8] sm:$0xff]
      %v300 = vld [vmem:[%s228 + $0x1d0] sm:$0xff]
      %v301 = vld [vmem:[%s228 + $0x1d8] sm:$0xff]
      %v302 = vld [vmem:[%s228 + $0x1e0] sm:$0xff]
      %v303 = vld [vmem:[%s228 + $0x1e8] sm:$0xff]
      %v304 = vld [vmem:[%s228 + $0x1f0] sm:$0xff]
      %v305 = vld [vmem:[%s228 + $0x1f8] sm:$0xff]
      %v306 = vld [vmem:[%s1] sm:$0xff]
      %vm307 = vcmask 64512
      %v309 = vsel %vm307, %v242, 0
      %v312 = vsel %vm307, %v243, 0
      %v315 = vsel %vm307, %v244, 0
      %v318 = vsel %vm307, %v245, 0
      %v321 = vsel %vm307, %v246, 0
      %v324 = vsel %vm307, %v247, 0
      %v327 = vsel %vm307, %v248, 0
      %v330 = vsel %vm307, %v249, 0
      %v333 = vsel %vm307, %v250, 0
      %v336 = vsel %vm307, %v251, 0
      %v339 = vsel %vm307, %v252, 0
      %v342 = vsel %vm307, %v253, 0
      %v345 = vsel %vm307, %v254, 0
      %v348 = vsel %vm307, %v255, 0
      %v351 = vsel %vm307, %v256, 0
      %v354 = vsel %vm307, %v257, 0
      %v357 = vsel %vm307, %v258, 0
      %v360 = vsel %vm307, %v259, 0
      %v363 = vsel %vm307, %v260, 0
      %v366 = vsel %vm307, %v261, 0
      %v369 = vsel %vm307, %v262, 0
      %v372 = vsel %vm307, %v263, 0
      %v375 = vsel %vm307, %v264, 0
      %v378 = vsel %vm307, %v265, 0
      %v381 = vsel %vm307, %v266, 0
      %v384 = vsel %vm307, %v267, 0
      %v387 = vsel %vm307, %v268, 0
      %v390 = vsel %vm307, %v269, 0
      %v393 = vsel %vm307, %v270, 0
      %v396 = vsel %vm307, %v271, 0
      %v399 = vsel %vm307, %v272, 0
      %v402 = vsel %vm307, %v273, 0
      %v405 = vsel %vm307, %v274, 0
      %v408 = vsel %vm307, %v275, 0
      %v411 = vsel %vm307, %v276, 0
      %v414 = vsel %vm307, %v277, 0
      %v417 = vsel %vm307, %v278, 0
      %v420 = vsel %vm307, %v279, 0
      %v423 = vsel %vm307, %v280, 0
      %v426 = vsel %vm307, %v281, 0
      %v429 = vsel %vm307, %v282, 0
      %v432 = vsel %vm307, %v283, 0
      %v435 = vsel %vm307, %v284, 0
      %v438 = vsel %vm307, %v285, 0
      %v441 = vsel %vm307, %v286, 0
      %v444 = vsel %vm307, %v287, 0
      %v447 = vsel %vm307, %v288, 0
      %v450 = vsel %vm307, %v289, 0
      %v453 = vsel %vm307, %v290, 0
      %v456 = vsel %vm307, %v291, 0
      %v459 = vsel %vm307, %v292, 0
      %v462 = vsel %vm307, %v293, 0
      %v465 = vsel %vm307, %v294, 0
      %v468 = vsel %vm307, %v295, 0
      %v471 = vsel %vm307, %v296, 0
      %v474 = vsel %vm307, %v297, 0
      %v477 = vsel %vm307, %v298, 0
      %v480 = vsel %vm307, %v299, 0
      %v483 = vsel %vm307, %v300, 0
      %v486 = vsel %vm307, %v301, 0
      %v489 = vsel %vm307, %v302, 0
      %v492 = vsel %vm307, %v303, 0
      %v495 = vsel %vm307, %v304, 0
      %v498 = vsel %vm307, %v305, 0
      %500 = vmatprep.subr.mxu0 0.0
      %501 = vmatpush1.msra.mxu0 0.0
      %502 = vmatprep.subr.mxu0 0.0
      %503 = vmatpush1.msra.mxu0 0.0
      %504 = vmatprep.subr.mxu0 0.0
      %505 = vmatpush1.msra.mxu0 0.0
      %506 = vmatprep.subr.mxu0 0.0
      %507 = vmatpush1.msra.mxu0 0.0
      %508 = vmatprep.subr.mxu0 0.0
      %509 = vmatpush1.msra.mxu0 0.0
      %510 = vmatprep.subr.mxu0 0.0
      %511 = vmatpush1.msra.mxu0 0.0
      %512 = vmatprep.subr.mxu0 0.0
      %513 = vmatpush1.msra.mxu0 0.0
      %514 = vmatprep.subr.mxu0 0.0
      %515 = vmatpush1.msra.mxu0 0.0
      %516 = vmatprep.subr.mxu0 0.0
      %517 = vmatpush1.msra.mxu0 0.0
      %518 = vmatprep.subr.mxu0 0.0
      %519 = vmatpush1.msra.mxu0 0.0
      %520 = vmatprep.subr.mxu0 0.0
      %521 = vmatpush1.msra.mxu0 0.0
      %522 = vmatprep.subr.mxu0 0.0
      %523 = vmatpush1.msra.mxu0 0.0
      %524 = vmatprep.subr.mxu0 0.0
      %525 = vmatpush1.msra.mxu0 0.0
      %526 = vmatprep.subr.mxu0 0.0
      %527 = vmatpush1.msra.mxu0 0.0
      %528 = vmatprep.subr.mxu0 0.0
      %529 = vmatpush1.msra.mxu0 0.0
      %530 = vmatprep.subr.mxu0 0.0
      %v531 = vand.u32 %v306, 4294901760
      %532 = vmatpush1.msra.mxu0 %v531
      %533 = vmatprep.subr.mxu0 0.0
      %534 = vmatpush2.msra.mxu0 0.0
      %535 = vmatprep.subr.mxu0 0.0
      %536 = vmatpush2.msra.mxu0 0.0
      %537 = vmatprep.subr.mxu0 0.0
      %538 = vmatpush2.msra.mxu0 0.0
      %539 = vmatprep.subr.mxu0 0.0
      %540 = vmatpush2.msra.mxu0 0.0
      %541 = vmatprep.subr.mxu0 0.0
      %542 = vmatpush2.msra.mxu0 0.0
      %543 = vmatprep.subr.mxu0 0.0
      %544 = vmatpush2.msra.mxu0 0.0
      %545 = vmatprep.subr.mxu0 0.0
      %546 = vmatpush2.msra.mxu0 0.0
      %547 = vmatprep.subr.mxu0 0.0
      %548 = vmatpush2.msra.mxu0 0.0
      %549 = vmatprep.subr.mxu0 0.0
      %550 = vmatpush2.msra.mxu0 0.0
      %551 = vmatprep.subr.mxu0 0.0
      %552 = vmatpush2.msra.mxu0 0.0
      %553 = vmatprep.subr.mxu0 0.0
      %554 = vmatpush2.msra.mxu0 0.0
      %555 = vmatprep.subr.mxu0 0.0
      %556 = vmatpush2.msra.mxu0 0.0
      %557 = vmatprep.subr.mxu0 0.0
      %558 = vmatpush2.msra.mxu0 0.0
      %559 = vmatprep.subr.mxu0 0.0
      %560 = vmatpush2.msra.mxu0 0.0
      %561 = vmatprep.subr.mxu0 0.0
      %562 = vmatpush2.msra.mxu0 0.0
      %563 = vmatprep.subr.mxu0 0.0
      %564 = vmatpush2.msra.mxu0 0.0
      %565 = vmatprep.mubr.f32.mxu0 0.0
      %v566 = vand.u32 %v309, 4294901760
      %v567 = vsub.f32 %v309, %v566
      %v568 = vand.u32 %v567, 4294901760
      %v569 = vsub.f32 %v567, %v568
      %v570 = vand.u32 %v569, 4294901760
      %571 = vmatmul.mubr.f32.gmra.mxu0 %v570
      %v572 = vpop.f32.mrf.mxu0
      %v573 = vadd.f32 0.0, %v572
      %v574 = vpop.f32.mrf.mxu0
      %575 = vmatprep.mubr.f32.mxu0 0.0
      %v576 = vand.u32 %v312, 4294901760
      %v577 = vsub.f32 %v312, %v576
      %v578 = vand.u32 %v577, 4294901760
      %v579 = vsub.f32 %v577, %v578
      %v580 = vand.u32 %v579, 4294901760
      %581 = vmatmul.mubr.f32.gmra.mxu0 %v580
      %v582 = vpop.f32.mrf.mxu0
      %v583 = vadd.f32 0.0, %v582
      %v584 = vpop.f32.mrf.mxu0
      %585 = vmatprep.mubr.f32.mxu0 0.0
      %v586 = vand.u32 %v315, 4294901760
      %v587 = vsub.f32 %v315, %v586
      %v588 = vand.u32 %v587, 4294901760
      %v589 = vsub.f32 %v587, %v588
      %v590 = vand.u32 %v589, 4294901760
      %591 = vmatmul.mubr.f32.gmra.mxu0 %v590
      %v592 = vpop.f32.mrf.mxu0
      %v593 = vadd.f32 0.0, %v592
      %v594 = vpop.f32.mrf.mxu0
      %595 = vmatprep.mubr.f32.mxu0 0.0
      %v596 = vand.u32 %v318, 4294901760
      %v597 = vsub.f32 %v318, %v596
      %v598 = vand.u32 %v597, 4294901760
      %v599 = vsub.f32 %v597, %v598
      %v600 = vand.u32 %v599, 4294901760
      %601 = vmatmul.mubr.f32.gmra.mxu0 %v600
      %v602 = vpop.f32.mrf.mxu0
      %v603 = vadd.f32 0.0, %v602
      %v604 = vpop.f32.mrf.mxu0
      %605 = vmatprep.mubr.f32.mxu0 0.0
      %v606 = vand.u32 %v321, 4294901760
      %v607 = vsub.f32 %v321, %v606
      %v608 = vand.u32 %v607, 4294901760
      %v609 = vsub.f32 %v607, %v608
      %v610 = vand.u32 %v609, 4294901760
      %611 = vmatmul.mubr.f32.gmra.mxu0 %v610
      %v612 = vpop.f32.mrf.mxu0
      %v613 = vadd.f32 0.0, %v612
      %v614 = vpop.f32.mrf.mxu0
      %615 = vmatprep.mubr.f32.mxu0 0.0
      %v616 = vand.u32 %v324, 4294901760
      %v617 = vsub.f32 %v324, %v616
      %v618 = vand.u32 %v617, 4294901760
      %v619 = vsub.f32 %v617, %v618
      %v620 = vand.u32 %v619, 4294901760
      %621 = vmatmul.mubr.f32.gmra.mxu0 %v620
      %v622 = vpop.f32.mrf.mxu0
      %v623 = vadd.f32 0.0, %v622
      %v624 = vpop.f32.mrf.mxu0
      %625 = vmatprep.mubr.f32.mxu0 0.0
      %v626 = vand.u32 %v327, 4294901760
      %v627 = vsub.f32 %v327, %v626
      %v628 = vand.u32 %v627, 4294901760
      %v629 = vsub.f32 %v627, %v628
      %v630 = vand.u32 %v629, 4294901760
      %631 = vmatmul.mubr.f32.gmra.mxu0 %v630
      %v632 = vpop.f32.mrf.mxu0
      %v633 = vadd.f32 0.0, %v632
      %v634 = vpop.f32.mrf.mxu0
      %635 = vmatprep.mubr.f32.mxu0 0.0
      %v636 = vand.u32 %v330, 4294901760
      %v637 = vsub.f32 %v330, %v636
      %v638 = vand.u32 %v637, 4294901760
      %v639 = vsub.f32 %v637, %v638
      %v640 = vand.u32 %v639, 4294901760
      %641 = vmatmul.mubr.f32.gmra.mxu0 %v640
      %v642 = vpop.f32.mrf.mxu0
      %v643 = vadd.f32 0.0, %v642
      %v644 = vpop.f32.mrf.mxu0
      %645 = vmatprep.mubr.f32.mxu0 0.0
      %v646 = vand.u32 %v333, 4294901760
      %v647 = vsub.f32 %v333, %v646
      %v648 = vand.u32 %v647, 4294901760
      %v649 = vsub.f32 %v647, %v648
      %v650 = vand.u32 %v649, 4294901760
      %651 = vmatmul.mubr.f32.gmra.mxu0 %v650
      %v652 = vpop.f32.mrf.mxu0
      %v653 = vadd.f32 0.0, %v652
      %v654 = vpop.f32.mrf.mxu0
      %655 = vmatprep.mubr.f32.mxu0 0.0
      %v656 = vand.u32 %v336, 4294901760
      %v657 = vsub.f32 %v336, %v656
      %v658 = vand.u32 %v657, 4294901760
      %v659 = vsub.f32 %v657, %v658
      %v660 = vand.u32 %v659, 4294901760
      %661 = vmatmul.mubr.f32.gmra.mxu0 %v660
      %v662 = vpop.f32.mrf.mxu0
      %v663 = vadd.f32 0.0, %v662
      %v664 = vpop.f32.mrf.mxu0
      %665 = vmatprep.mubr.f32.mxu0 0.0
      %v666 = vand.u32 %v339, 4294901760
      %v667 = vsub.f32 %v339, %v666
      %v668 = vand.u32 %v667, 4294901760
      %v669 = vsub.f32 %v667, %v668
      %v670 = vand.u32 %v669, 4294901760
      %671 = vmatmul.mubr.f32.gmra.mxu0 %v670
      %v672 = vpop.f32.mrf.mxu0
      %v673 = vadd.f32 0.0, %v672
      %v674 = vpop.f32.mrf.mxu0
      %675 = vmatprep.mubr.f32.mxu0 0.0
      %v676 = vand.u32 %v342, 4294901760
      %v677 = vsub.f32 %v342, %v676
      %v678 = vand.u32 %v677, 4294901760
      %v679 = vsub.f32 %v677, %v678
      %v680 = vand.u32 %v679, 4294901760
      %681 = vmatmul.mubr.f32.gmra.mxu0 %v680
      %v682 = vpop.f32.mrf.mxu0
      %v683 = vadd.f32 0.0, %v682
      %v684 = vpop.f32.mrf.mxu0
      %685 = vmatprep.mubr.f32.mxu0 0.0
      %v686 = vand.u32 %v345, 4294901760
      %v687 = vsub.f32 %v345, %v686
      %v688 = vand.u32 %v687, 4294901760
      %v689 = vsub.f32 %v687, %v688
      %v690 = vand.u32 %v689, 4294901760
      %691 = vmatmul.mubr.f32.gmra.mxu0 %v690
      %v692 = vpop.f32.mrf.mxu0
      %v693 = vadd.f32 0.0, %v692
      %v694 = vpop.f32.mrf.mxu0
      %695 = vmatprep.mubr.f32.mxu0 0.0
      %v696 = vand.u32 %v348, 4294901760
      %v697 = vsub.f32 %v348, %v696
      %v698 = vand.u32 %v697, 4294901760
      %v699 = vsub.f32 %v697, %v698
      %v700 = vand.u32 %v699, 4294901760
      %701 = vmatmul.mubr.f32.gmra.mxu0 %v700
      %v702 = vpop.f32.mrf.mxu0
      %v703 = vadd.f32 0.0, %v702
      %v704 = vpop.f32.mrf.mxu0
      %705 = vmatprep.mubr.f32.mxu0 0.0
      %v706 = vand.u32 %v351, 4294901760
      %v707 = vsub.f32 %v351, %v706
      %v708 = vand.u32 %v707, 4294901760
      %v709 = vsub.f32 %v707, %v708
      %v710 = vand.u32 %v709, 4294901760
      %711 = vmatmul.mubr.f32.gmra.mxu0 %v710
      %v712 = vpop.f32.mrf.mxu0
      %v713 = vadd.f32 0.0, %v712
      %v714 = vpop.f32.mrf.mxu0
      %715 = vmatprep.mubr.f32.mxu0 0.0
      %v716 = vand.u32 %v354, 4294901760
      %v717 = vsub.f32 %v354, %v716
      %v718 = vand.u32 %v717, 4294901760
      %v719 = vsub.f32 %v717, %v718
      %v720 = vand.u32 %v719, 4294901760
      %721 = vmatmul.mubr.f32.gmra.mxu0 %v720
      %v722 = vpop.f32.mrf.mxu0
      %v723 = vadd.f32 0.0, %v722
      %v724 = vpop.f32.mrf.mxu0
      %725 = vmatprep.mubr.f32.mxu0 0.0
      %v726 = vand.u32 %v357, 4294901760
      %v727 = vsub.f32 %v357, %v726
      %v728 = vand.u32 %v727, 4294901760
      %v729 = vsub.f32 %v727, %v728
      %v730 = vand.u32 %v729, 4294901760
      %731 = vmatmul.mubr.f32.gmra.mxu0 %v730
      %v732 = vpop.f32.mrf.mxu0
      %v733 = vadd.f32 0.0, %v732
      %v734 = vpop.f32.mrf.mxu0
      %735 = vmatprep.mubr.f32.mxu0 0.0
      %v736 = vand.u32 %v360, 4294901760
      %v737 = vsub.f32 %v360, %v736
      %v738 = vand.u32 %v737, 4294901760
      %v739 = vsub.f32 %v737, %v738
      %v740 = vand.u32 %v739, 4294901760
      %741 = vmatmul.mubr.f32.gmra.mxu0 %v740
      %v742 = vpop.f32.mrf.mxu0
      %v743 = vadd.f32 0.0, %v742
      %v744 = vpop.f32.mrf.mxu0
      %745 = vmatprep.mubr.f32.mxu0 0.0
      %v746 = vand.u32 %v363, 4294901760
      %v747 = vsub.f32 %v363, %v746
      %v748 = vand.u32 %v747, 4294901760
      %v749 = vsub.f32 %v747, %v748
      %v750 = vand.u32 %v749, 4294901760
      %751 = vmatmul.mubr.f32.gmra.mxu0 %v750
      %v752 = vpop.f32.mrf.mxu0
      %v753 = vadd.f32 0.0, %v752
      %v754 = vpop.f32.mrf.mxu0
      %755 = vmatprep.mubr.f32.mxu0 0.0
      %v756 = vand.u32 %v366, 4294901760
      %v757 = vsub.f32 %v366, %v756
      %v758 = vand.u32 %v757, 4294901760
      %v759 = vsub.f32 %v757, %v758
      %v760 = vand.u32 %v759, 4294901760
      %761 = vmatmul.mubr.f32.gmra.mxu0 %v760
      %v762 = vpop.f32.mrf.mxu0
      %v763 = vadd.f32 0.0, %v762
      %v764 = vpop.f32.mrf.mxu0
      %765 = vmatprep.mubr.f32.mxu0 0.0
      %v766 = vand.u32 %v369, 4294901760
      %v767 = vsub.f32 %v369, %v766
      %v768 = vand.u32 %v767, 4294901760
      %v769 = vsub.f32 %v767, %v768
      %v770 = vand.u32 %v769, 4294901760
      %771 = vmatmul.mubr.f32.gmra.mxu0 %v770
      %v772 = vpop.f32.mrf.mxu0
      %v773 = vadd.f32 0.0, %v772
      %v774 = vpop.f32.mrf.mxu0
      %775 = vmatprep.mubr.f32.mxu0 0.0
      %v776 = vand.u32 %v372, 4294901760
      %v777 = vsub.f32 %v372, %v776
      %v778 = vand.u32 %v777, 4294901760
      %v779 = vsub.f32 %v777, %v778
      %v780 = vand.u32 %v779, 4294901760
      %781 = vmatmul.mubr.f32.gmra.mxu0 %v780
      %v782 = vpop.f32.mrf.mxu0
      %v783 = vadd.f32 0.0, %v782
      %v784 = vpop.f32.mrf.mxu0
      %785 = vmatprep.mubr.f32.mxu0 0.0
      %v786 = vand.u32 %v375, 4294901760
      %v787 = vsub.f32 %v375, %v786
      %v788 = vand.u32 %v787, 4294901760
      %v789 = vsub.f32 %v787, %v788
      %v790 = vand.u32 %v789, 4294901760
      %791 = vmatmul.mubr.f32.gmra.mxu0 %v790
      %v792 = vpop.f32.mrf.mxu0
      %v793 = vadd.f32 0.0, %v792
      %v794 = vpop.f32.mrf.mxu0
      %795 = vmatprep.mubr.f32.mxu0 0.0
      %v796 = vand.u32 %v378, 4294901760
      %v797 = vsub.f32 %v378, %v796
      %v798 = vand.u32 %v797, 4294901760
      %v799 = vsub.f32 %v797, %v798
      %v800 = vand.u32 %v799, 4294901760
      %801 = vmatmul.mubr.f32.gmra.mxu0 %v800
      %v802 = vpop.f32.mrf.mxu0
      %v803 = vadd.f32 0.0, %v802
      %v804 = vpop.f32.mrf.mxu0
      %805 = vmatprep.mubr.f32.mxu0 0.0
      %v806 = vand.u32 %v381, 4294901760
      %v807 = vsub.f32 %v381, %v806
      %v808 = vand.u32 %v807, 4294901760
      %v809 = vsub.f32 %v807, %v808
      %v810 = vand.u32 %v809, 4294901760
      %811 = vmatmul.mubr.f32.gmra.mxu0 %v810
      %v812 = vpop.f32.mrf.mxu0
      %v813 = vadd.f32 0.0, %v812
      %v814 = vpop.f32.mrf.mxu0
      %815 = vmatprep.mubr.f32.mxu0 0.0
      %v816 = vand.u32 %v384, 4294901760
      %v817 = vsub.f32 %v384, %v816
      %v818 = vand.u32 %v817, 4294901760
      %v819 = vsub.f32 %v817, %v818
      %v820 = vand.u32 %v819, 4294901760
      %821 = vmatmul.mubr.f32.gmra.mxu0 %v820
      %v822 = vpop.f32.mrf.mxu0
      %v823 = vadd.f32 0.0, %v822
      %v824 = vpop.f32.mrf.mxu0
      %825 = vmatprep.mubr.f32.mxu0 0.0
      %v826 = vand.u32 %v387, 4294901760
      %v827 = vsub.f32 %v387, %v826
      %v828 = vand.u32 %v827, 4294901760
      %v829 = vsub.f32 %v827, %v828
      %v830 = vand.u32 %v829, 4294901760
      %831 = vmatmul.mubr.f32.gmra.mxu0 %v830
      %v832 = vpop.f32.mrf.mxu0
      %v833 = vadd.f32 0.0, %v832
      %v834 = vpop.f32.mrf.mxu0
      %835 = vmatprep.mubr.f32.mxu0 0.0
      %v836 = vand.u32 %v390, 4294901760
      %v837 = vsub.f32 %v390, %v836
      %v838 = vand.u32 %v837, 4294901760
      %v839 = vsub.f32 %v837, %v838
      %v840 = vand.u32 %v839, 4294901760
      %841 = vmatmul.mubr.f32.gmra.mxu0 %v840
      %v842 = vpop.f32.mrf.mxu0
      %v843 = vadd.f32 0.0, %v842
      %v844 = vpop.f32.mrf.mxu0
      %845 = vmatprep.mubr.f32.mxu0 0.0
      %v846 = vand.u32 %v393, 4294901760
      %v847 = vsub.f32 %v393, %v846
      %v848 = vand.u32 %v847, 4294901760
      %v849 = vsub.f32 %v847, %v848
      %v850 = vand.u32 %v849, 4294901760
      %851 = vmatmul.mubr.f32.gmra.mxu0 %v850
      %v852 = vpop.f32.mrf.mxu0
      %v853 = vadd.f32 0.0, %v852
      %v854 = vpop.f32.mrf.mxu0
      %855 = vmatprep.mubr.f32.mxu0 0.0
      %v856 = vand.u32 %v396, 4294901760
      %v857 = vsub.f32 %v396, %v856
      %v858 = vand.u32 %v857, 4294901760
      %v859 = vsub.f32 %v857, %v858
      %v860 = vand.u32 %v859, 4294901760
      %861 = vmatmul.mubr.f32.gmra.mxu0 %v860
      %v862 = vpop.f32.mrf.mxu0
      %v863 = vadd.f32 0.0, %v862
      %v864 = vpop.f32.mrf.mxu0
      %865 = vmatprep.mubr.f32.mxu0 0.0
      %v866 = vand.u32 %v399, 4294901760
      %v867 = vsub.f32 %v399, %v866
      %v868 = vand.u32 %v867, 4294901760
      %v869 = vsub.f32 %v867, %v868
      %v870 = vand.u32 %v869, 4294901760
      %871 = vmatmul.mubr.f32.gmra.mxu0 %v870
      %v872 = vpop.f32.mrf.mxu0
      %v873 = vadd.f32 0.0, %v872
      %v874 = vpop.f32.mrf.mxu0
      %875 = vmatprep.mubr.f32.mxu0 0.0
      %v876 = vand.u32 %v402, 4294901760
      %v877 = vsub.f32 %v402, %v876
      %v878 = vand.u32 %v877, 4294901760
      %v879 = vsub.f32 %v877, %v878
      %v880 = vand.u32 %v879, 4294901760
      %881 = vmatmul.mubr.f32.gmra.mxu0 %v880
      %v882 = vpop.f32.mrf.mxu0
      %v883 = vadd.f32 0.0, %v882
      %v884 = vpop.f32.mrf.mxu0
      %885 = vmatprep.mubr.f32.mxu0 0.0
      %v886 = vand.u32 %v405, 4294901760
      %v887 = vsub.f32 %v405, %v886
      %v888 = vand.u32 %v887, 4294901760
      %v889 = vsub.f32 %v887, %v888
      %v890 = vand.u32 %v889, 4294901760
      %891 = vmatmul.mubr.f32.gmra.mxu0 %v890
      %v892 = vpop.f32.mrf.mxu0
      %v893 = vadd.f32 0.0, %v892
      %v894 = vpop.f32.mrf.mxu0
      %895 = vmatprep.mubr.f32.mxu0 0.0
      %v896 = vand.u32 %v408, 4294901760
      %v897 = vsub.f32 %v408, %v896
      %v898 = vand.u32 %v897, 4294901760
      %v899 = vsub.f32 %v897, %v898
      %v900 = vand.u32 %v899, 4294901760
      %901 = vmatmul.mubr.f32.gmra.mxu0 %v900
      %v902 = vpop.f32.mrf.mxu0
      %v903 = vadd.f32 0.0, %v902
      %v904 = vpop.f32.mrf.mxu0
      %905 = vmatprep.mubr.f32.mxu0 0.0
      %v906 = vand.u32 %v411, 4294901760
      %v907 = vsub.f32 %v411, %v906
      %v908 = vand.u32 %v907, 4294901760
      %v909 = vsub.f32 %v907, %v908
      %v910 = vand.u32 %v909, 4294901760
      %911 = vmatmul.mubr.f32.gmra.mxu0 %v910
      %v912 = vpop.f32.mrf.mxu0
      %v913 = vadd.f32 0.0, %v912
      %v914 = vpop.f32.mrf.mxu0
      %915 = vmatprep.mubr.f32.mxu0 0.0
      %v916 = vand.u32 %v414, 4294901760
      %v917 = vsub.f32 %v414, %v916
      %v918 = vand.u32 %v917, 4294901760
      %v919 = vsub.f32 %v917, %v918
      %v920 = vand.u32 %v919, 4294901760
      %921 = vmatmul.mubr.f32.gmra.mxu0 %v920
      %v922 = vpop.f32.mrf.mxu0
      %v923 = vadd.f32 0.0, %v922
      %v924 = vpop.f32.mrf.mxu0
      %925 = vmatprep.mubr.f32.mxu0 0.0
      %v926 = vand.u32 %v417, 4294901760
      %v927 = vsub.f32 %v417, %v926
      %v928 = vand.u32 %v927, 4294901760
      %v929 = vsub.f32 %v927, %v928
      %v930 = vand.u32 %v929, 4294901760
      %931 = vmatmul.mubr.f32.gmra.mxu0 %v930
      %v932 = vpop.f32.mrf.mxu0
      %v933 = vadd.f32 0.0, %v932
      %v934 = vpop.f32.mrf.mxu0
      %935 = vmatprep.mubr.f32.mxu0 0.0
      %v936 = vand.u32 %v420, 4294901760
      %v937 = vsub.f32 %v420, %v936
      %v938 = vand.u32 %v937, 4294901760
      %v939 = vsub.f32 %v937, %v938
      %v940 = vand.u32 %v939, 4294901760
      %941 = vmatmul.mubr.f32.gmra.mxu0 %v940
      %v942 = vpop.f32.mrf.mxu0
      %v943 = vadd.f32 0.0, %v942
      %v944 = vpop.f32.mrf.mxu0
      %945 = vmatprep.mubr.f32.mxu0 0.0
      %v946 = vand.u32 %v423, 4294901760
      %v947 = vsub.f32 %v423, %v946
      %v948 = vand.u32 %v947, 4294901760
      %v949 = vsub.f32 %v947, %v948
      %v950 = vand.u32 %v949, 4294901760
      %951 = vmatmul.mubr.f32.gmra.mxu0 %v950
      %v952 = vpop.f32.mrf.mxu0
      %v953 = vadd.f32 0.0, %v952
      %v954 = vpop.f32.mrf.mxu0
      %955 = vmatprep.mubr.f32.mxu0 0.0
      %v956 = vand.u32 %v426, 4294901760
      %v957 = vsub.f32 %v426, %v956
      %v958 = vand.u32 %v957, 4294901760
      %v959 = vsub.f32 %v957, %v958
      %v960 = vand.u32 %v959, 4294901760
      %961 = vmatmul.mubr.f32.gmra.mxu0 %v960
      %v962 = vpop.f32.mrf.mxu0
      %v963 = vadd.f32 0.0, %v962
      %v964 = vpop.f32.mrf.mxu0
      %965 = vmatprep.mubr.f32.mxu0 0.0
      %v966 = vand.u32 %v429, 4294901760
      %v967 = vsub.f32 %v429, %v966
      %v968 = vand.u32 %v967, 4294901760
      %v969 = vsub.f32 %v967, %v968
      %v970 = vand.u32 %v969, 4294901760
      %971 = vmatmul.mubr.f32.gmra.mxu0 %v970
      %v972 = vpop.f32.mrf.mxu0
      %v973 = vadd.f32 0.0, %v972
      %v974 = vpop.f32.mrf.mxu0
      %975 = vmatprep.mubr.f32.mxu0 0.0
      %v976 = vand.u32 %v432, 4294901760
      %v977 = vsub.f32 %v432, %v976
      %v978 = vand.u32 %v977, 4294901760
      %v979 = vsub.f32 %v977, %v978
      %v980 = vand.u32 %v979, 4294901760
      %981 = vmatmul.mubr.f32.gmra.mxu0 %v980
      %v982 = vpop.f32.mrf.mxu0
      %v983 = vadd.f32 0.0, %v982
      %v984 = vpop.f32.mrf.mxu0
      %985 = vmatprep.mubr.f32.mxu0 0.0
      %v986 = vand.u32 %v435, 4294901760
      %v987 = vsub.f32 %v435, %v986
      %v988 = vand.u32 %v987, 4294901760
      %v989 = vsub.f32 %v987, %v988
      %v990 = vand.u32 %v989, 4294901760
      %991 = vmatmul.mubr.f32.gmra.mxu0 %v990
      %v992 = vpop.f32.mrf.mxu0
      %v993 = vadd.f32 0.0, %v992
      %v994 = vpop.f32.mrf.mxu0
      %995 = vmatprep.mubr.f32.mxu0 0.0
      %v996 = vand.u32 %v438, 4294901760
      %v997 = vsub.f32 %v438, %v996
      %v998 = vand.u32 %v997, 4294901760
      %v999 = vsub.f32 %v997, %v998
      %v1000 = vand.u32 %v999, 4294901760
      %1001 = vmatmul.mubr.f32.gmra.mxu0 %v1000
      %v1002 = vpop.f32.mrf.mxu0
      %v1003 = vadd.f32 0.0, %v1002
      %v1004 = vpop.f32.mrf.mxu0
      %1005 = vmatprep.mubr.f32.mxu0 0.0
      %v1006 = vand.u32 %v441, 4294901760
      %v1007 = vsub.f32 %v441, %v1006
      %v1008 = vand.u32 %v1007, 4294901760
      %v1009 = vsub.f32 %v1007, %v1008
      %v1010 = vand.u32 %v1009, 4294901760
      %1011 = vmatmul.mubr.f32.gmra.mxu0 %v1010
      %v1012 = vpop.f32.mrf.mxu0
      %v1013 = vadd.f32 0.0, %v1012
      %v1014 = vpop.f32.mrf.mxu0
      %1015 = vmatprep.mubr.f32.mxu0 0.0
      %v1016 = vand.u32 %v444, 4294901760
      %v1017 = vsub.f32 %v444, %v1016
      %v1018 = vand.u32 %v1017, 4294901760
      %v1019 = vsub.f32 %v1017, %v1018
      %v1020 = vand.u32 %v1019, 4294901760
      %1021 = vmatmul.mubr.f32.gmra.mxu0 %v1020
      %v1022 = vpop.f32.mrf.mxu0
      %v1023 = vadd.f32 0.0, %v1022
      %v1024 = vpop.f32.mrf.mxu0
      %1025 = vmatprep.mubr.f32.mxu0 0.0
      %v1026 = vand.u32 %v447, 4294901760
      %v1027 = vsub.f32 %v447, %v1026
      %v1028 = vand.u32 %v1027, 4294901760
      %v1029 = vsub.f32 %v1027, %v1028
      %v1030 = vand.u32 %v1029, 4294901760
      %1031 = vmatmul.mubr.f32.gmra.mxu0 %v1030
      %v1032 = vpop.f32.mrf.mxu0
      %v1033 = vadd.f32 0.0, %v1032
      %v1034 = vpop.f32.mrf.mxu0
      %1035 = vmatprep.mubr.f32.mxu0 0.0
      %v1036 = vand.u32 %v450, 4294901760
      %v1037 = vsub.f32 %v450, %v1036
      %v1038 = vand.u32 %v1037, 4294901760
      %v1039 = vsub.f32 %v1037, %v1038
      %v1040 = vand.u32 %v1039, 4294901760
      %1041 = vmatmul.mubr.f32.gmra.mxu0 %v1040
      %v1042 = vpop.f32.mrf.mxu0
      %v1043 = vadd.f32 0.0, %v1042
      %v1044 = vpop.f32.mrf.mxu0
      %1045 = vmatprep.mubr.f32.mxu0 0.0
      %v1046 = vand.u32 %v453, 4294901760
      %v1047 = vsub.f32 %v453, %v1046
      %v1048 = vand.u32 %v1047, 4294901760
      %v1049 = vsub.f32 %v1047, %v1048
      %v1050 = vand.u32 %v1049, 4294901760
      %1051 = vmatmul.mubr.f32.gmra.mxu0 %v1050
      %v1052 = vpop.f32.mrf.mxu0
      %v1053 = vadd.f32 0.0, %v1052
      %v1054 = vpop.f32.mrf.mxu0
      %1055 = vmatprep.mubr.f32.mxu0 0.0
      %v1056 = vand.u32 %v456, 4294901760
      %v1057 = vsub.f32 %v456, %v1056
      %v1058 = vand.u32 %v1057, 4294901760
      %v1059 = vsub.f32 %v1057, %v1058
      %v1060 = vand.u32 %v1059, 4294901760
      %1061 = vmatmul.mubr.f32.gmra.mxu0 %v1060
      %v1062 = vpop.f32.mrf.mxu0
      %v1063 = vadd.f32 0.0, %v1062
      %v1064 = vpop.f32.mrf.mxu0
      %1065 = vmatprep.mubr.f32.mxu0 0.0
      %v1066 = vand.u32 %v459, 4294901760
      %v1067 = vsub.f32 %v459, %v1066
      %v1068 = vand.u32 %v1067, 4294901760
      %v1069 = vsub.f32 %v1067, %v1068
      %v1070 = vand.u32 %v1069, 4294901760
      %1071 = vmatmul.mubr.f32.gmra.mxu0 %v1070
      %v1072 = vpop.f32.mrf.mxu0
      %v1073 = vadd.f32 0.0, %v1072
      %v1074 = vpop.f32.mrf.mxu0
      %1075 = vmatprep.mubr.f32.mxu0 0.0
      %v1076 = vand.u32 %v462, 4294901760
      %v1077 = vsub.f32 %v462, %v1076
      %v1078 = vand.u32 %v1077, 4294901760
      %v1079 = vsub.f32 %v1077, %v1078
      %v1080 = vand.u32 %v1079, 4294901760
      %1081 = vmatmul.mubr.f32.gmra.mxu0 %v1080
      %v1082 = vpop.f32.mrf.mxu0
      %v1083 = vadd.f32 0.0, %v1082
      %v1084 = vpop.f32.mrf.mxu0
      %1085 = vmatprep.mubr.f32.mxu0 0.0
      %v1086 = vand.u32 %v465, 4294901760
      %v1087 = vsub.f32 %v465, %v1086
      %v1088 = vand.u32 %v1087, 4294901760
      %v1089 = vsub.f32 %v1087, %v1088
      %v1090 = vand.u32 %v1089, 4294901760
      %1091 = vmatmul.mubr.f32.gmra.mxu0 %v1090
      %v1092 = vpop.f32.mrf.mxu0
      %v1093 = vadd.f32 0.0, %v1092
      %v1094 = vpop.f32.mrf.mxu0
      %1095 = vmatprep.mubr.f32.mxu0 0.0
      %v1096 = vand.u32 %v468, 4294901760
      %v1097 = vsub.f32 %v468, %v1096
      %v1098 = vand.u32 %v1097, 4294901760
      %v1099 = vsub.f32 %v1097, %v1098
      %v1100 = vand.u32 %v1099, 4294901760
      %1101 = vmatmul.mubr.f32.gmra.mxu0 %v1100
      %v1102 = vpop.f32.mrf.mxu0
      %v1103 = vadd.f32 0.0, %v1102
      %v1104 = vpop.f32.mrf.mxu0
      %1105 = vmatprep.mubr.f32.mxu0 0.0
      %v1106 = vand.u32 %v471, 4294901760
      %v1107 = vsub.f32 %v471, %v1106
      %v1108 = vand.u32 %v1107, 4294901760
      %v1109 = vsub.f32 %v1107, %v1108
      %v1110 = vand.u32 %v1109, 4294901760
      %1111 = vmatmul.mubr.f32.gmra.mxu0 %v1110
      %v1112 = vpop.f32.mrf.mxu0
      %v1113 = vadd.f32 0.0, %v1112
      %v1114 = vpop.f32.mrf.mxu0
      %1115 = vmatprep.mubr.f32.mxu0 0.0
      %v1116 = vand.u32 %v474, 4294901760
      %v1117 = vsub.f32 %v474, %v1116
      %v1118 = vand.u32 %v1117, 4294901760
      %v1119 = vsub.f32 %v1117, %v1118
      %v1120 = vand.u32 %v1119, 4294901760
      %1121 = vmatmul.mubr.f32.gmra.mxu0 %v1120
      %v1122 = vpop.f32.mrf.mxu0
      %v1123 = vadd.f32 0.0, %v1122
      %v1124 = vpop.f32.mrf.mxu0
      %1125 = vmatprep.mubr.f32.mxu0 0.0
      %v1126 = vand.u32 %v477, 4294901760
      %v1127 = vsub.f32 %v477, %v1126
      %v1128 = vand.u32 %v1127, 4294901760
      %v1129 = vsub.f32 %v1127, %v1128
      %v1130 = vand.u32 %v1129, 4294901760
      %1131 = vmatmul.mubr.f32.gmra.mxu0 %v1130
      %v1132 = vpop.f32.mrf.mxu0
      %v1133 = vadd.f32 0.0, %v1132
      %v1134 = vpop.f32.mrf.mxu0
      %1135 = vmatprep.mubr.f32.mxu0 0.0
      %v1136 = vand.u32 %v480, 4294901760
      %v1137 = vsub.f32 %v480, %v1136
      %v1138 = vand.u32 %v1137, 4294901760
      %v1139 = vsub.f32 %v1137, %v1138
      %v1140 = vand.u32 %v1139, 4294901760
      %1141 = vmatmul.mubr.f32.gmra.mxu0 %v1140
      %v1142 = vpop.f32.mrf.mxu0
      %v1143 = vadd.f32 0.0, %v1142
      %v1144 = vpop.f32.mrf.mxu0
      %1145 = vmatprep.mubr.f32.mxu0 0.0
      %v1146 = vand.u32 %v483, 4294901760
      %v1147 = vsub.f32 %v483, %v1146
      %v1148 = vand.u32 %v1147, 4294901760
      %v1149 = vsub.f32 %v1147, %v1148
      %v1150 = vand.u32 %v1149, 4294901760
      %1151 = vmatmul.mubr.f32.gmra.mxu0 %v1150
      %v1152 = vpop.f32.mrf.mxu0
      %v1153 = vadd.f32 0.0, %v1152
      %v1154 = vpop.f32.mrf.mxu0
      %1155 = vmatprep.mubr.f32.mxu0 0.0
      %v1156 = vand.u32 %v486, 4294901760
      %v1157 = vsub.f32 %v486, %v1156
      %v1158 = vand.u32 %v1157, 4294901760
      %v1159 = vsub.f32 %v1157, %v1158
      %v1160 = vand.u32 %v1159, 4294901760
      %1161 = vmatmul.mubr.f32.gmra.mxu0 %v1160
      %v1162 = vpop.f32.mrf.mxu0
      %v1163 = vadd.f32 0.0, %v1162
      %v1164 = vpop.f32.mrf.mxu0
      %1165 = vmatprep.mubr.f32.mxu0 0.0
      %v1166 = vand.u32 %v489, 4294901760
      %v1167 = vsub.f32 %v489, %v1166
      %v1168 = vand.u32 %v1167, 4294901760
      %v1169 = vsub.f32 %v1167, %v1168
      %v1170 = vand.u32 %v1169, 4294901760
      %1171 = vmatmul.mubr.f32.gmra.mxu0 %v1170
      %v1172 = vpop.f32.mrf.mxu0
      %v1173 = vadd.f32 0.0, %v1172
      %v1174 = vpop.f32.mrf.mxu0
      %1175 = vmatprep.mubr.f32.mxu0 0.0
      %v1176 = vand.u32 %v492, 4294901760
      %v1177 = vsub.f32 %v492, %v1176
      %v1178 = vand.u32 %v1177, 4294901760
      %v1179 = vsub.f32 %v1177, %v1178
      %v1180 = vand.u32 %v1179, 4294901760
      %1181 = vmatmul.mubr.f32.gmra.mxu0 %v1180
      %v1182 = vpop.f32.mrf.mxu0
      %v1183 = vadd.f32 0.0, %v1182
      %v1184 = vpop.f32.mrf.mxu0
      %1185 = vmatprep.mubr.f32.mxu0 0.0
      %v1186 = vand.u32 %v495, 4294901760
      %v1187 = vsub.f32 %v495, %v1186
      %v1188 = vand.u32 %v1187, 4294901760
      %v1189 = vsub.f32 %v1187, %v1188
      %v1190 = vand.u32 %v1189, 4294901760
      %1191 = vmatmul.mubr.f32.gmra.mxu0 %v1190
      %v1192 = vpop.f32.mrf.mxu0
      %v1193 = vadd.f32 0.0, %v1192
      %v1194 = vpop.f32.mrf.mxu0
      %1195 = vmatprep.mubr.f32.mxu0 0.0
      %v1196 = vand.u32 %v498, 4294901760
      %v1197 = vsub.f32 %v498, %v1196
      %v1198 = vand.u32 %v1197, 4294901760
      %v1199 = vsub.f32 %v1197, %v1198
      %v1200 = vand.u32 %v1199, 4294901760
      %1201 = vmatmul.mubr.f32.gmra.mxu0 %v1200
      %v1202 = vpop.f32.mrf.mxu0
      %v1203 = vadd.f32 0.0, %v1202
      %v1204 = vpop.f32.mrf.mxu0
      %1205 = vdwg.mxu0
      %1206 = vmatprep.subr.mxu0 0.0
      %1207 = vmatpush1.msra.mxu0 0.0
      %1208 = vmatprep.subr.mxu0 0.0
      %1209 = vmatpush1.msra.mxu0 0.0
      %1210 = vmatprep.subr.mxu0 0.0
      %1211 = vmatpush1.msra.mxu0 0.0
      %1212 = vmatprep.subr.mxu0 0.0
      %1213 = vmatpush1.msra.mxu0 0.0
      %1214 = vmatprep.subr.mxu0 0.0
      %1215 = vmatpush1.msra.mxu0 0.0
      %1216 = vmatprep.subr.mxu0 0.0
      %1217 = vmatpush1.msra.mxu0 0.0
      %1218 = vmatprep.subr.mxu0 0.0
      %1219 = vmatpush1.msra.mxu0 0.0
      %1220 = vmatprep.subr.mxu0 0.0
      %1221 = vmatpush1.msra.mxu0 0.0
      %1222 = vmatprep.subr.mxu0 0.0
      %1223 = vmatpush1.msra.mxu0 0.0
      %1224 = vmatprep.subr.mxu0 0.0
      %1225 = vmatpush1.msra.mxu0 0.0
      %1226 = vmatprep.subr.mxu0 0.0
      %1227 = vmatpush1.msra.mxu0 0.0
      %1228 = vmatprep.subr.mxu0 0.0
      %1229 = vmatpush1.msra.mxu0 0.0
      %1230 = vmatprep.subr.mxu0 0.0
      %1231 = vmatpush1.msra.mxu0 0.0
      %1232 = vmatprep.subr.mxu0 0.0
      %1233 = vmatpush1.msra.mxu0 0.0
      %1234 = vmatprep.subr.mxu0 0.0
      %1235 = vmatpush1.msra.mxu0 0.0
      %1236 = vmatprep.subr.mxu0 0.0
      %v1237 = vand.u32 %v306, 4294901760
      %v1238 = vsub.f32 %v306, %v1237
      %v1239 = vand.u32 %v1238, 4294901760
      %v1240 = vsub.f32 %v1238, %v1239
      %v1241 = vand.u32 %v1240, 4294901760
      %1242 = vmatpush1.msra.mxu0 %v1241
      %1243 = vmatprep.subr.mxu0 0.0
      %1244 = vmatpush2.msra.mxu0 0.0
      %1245 = vmatprep.subr.mxu0 0.0
      %1246 = vmatpush2.msra.mxu0 0.0
      %1247 = vmatprep.subr.mxu0 0.0
      %1248 = vmatpush2.msra.mxu0 0.0
      %1249 = vmatprep.subr.mxu0 0.0
      %1250 = vmatpush2.msra.mxu0 0.0
      %1251 = vmatprep.subr.mxu0 0.0
      %1252 = vmatpush2.msra.mxu0 0.0
      %1253 = vmatprep.subr.mxu0 0.0
      %1254 = vmatpush2.msra.mxu0 0.0
      %1255 = vmatprep.subr.mxu0 0.0
      %1256 = vmatpush2.msra.mxu0 0.0
      %1257 = vmatprep.subr.mxu0 0.0
      %1258 = vmatpush2.msra.mxu0 0.0
      %1259 = vmatprep.subr.mxu0 0.0
      %1260 = vmatpush2.msra.mxu0 0.0
      %1261 = vmatprep.subr.mxu0 0.0
      %1262 = vmatpush2.msra.mxu0 0.0
      %1263 = vmatprep.subr.mxu0 0.0
      %1264 = vmatpush2.msra.mxu0 0.0
      %1265 = vmatprep.subr.mxu0 0.0
      %1266 = vmatpush2.msra.mxu0 0.0
      %1267 = vmatprep.subr.mxu0 0.0
      %1268 = vmatpush2.msra.mxu0 0.0
      %1269 = vmatprep.subr.mxu0 0.0
      %1270 = vmatpush2.msra.mxu0 0.0
      %1271 = vmatprep.subr.mxu0 0.0
      %1272 = vmatpush2.msra.mxu0 0.0
      %1273 = vmatprep.subr.mxu0 0.0
      %1274 = vmatpush2.msra.mxu0 0.0
      %1275 = vmatprep.mubr.f32.mxu0 0.0
      %v1276 = vand.u32 %v309, 4294901760
      %1277 = vmatmul.mubr.f32.gmra.mxu0 %v1276
      %v1278 = vpop.f32.mrf.mxu0
      %v1279 = vadd.f32 %v573, %v1278
      %v1280 = vpop.f32.mrf.mxu0
      %1281 = vmatprep.mubr.f32.mxu0 0.0
      %v1282 = vand.u32 %v312, 4294901760
      %1283 = vmatmul.mubr.f32.gmra.mxu0 %v1282
      %v1284 = vpop.f32.mrf.mxu0
      %v1285 = vadd.f32 %v583, %v1284
      %v1286 = vpop.f32.mrf.mxu0
      %1287 = vmatprep.mubr.f32.mxu0 0.0
      %v1288 = vand.u32 %v315, 4294901760
      %1289 = vmatmul.mubr.f32.gmra.mxu0 %v1288
      %v1290 = vpop.f32.mrf.mxu0
      %v1291 = vadd.f32 %v593, %v1290
      %v1292 = vpop.f32.mrf.mxu0
      %1293 = vmatprep.mubr.f32.mxu0 0.0
      %v1294 = vand.u32 %v318, 4294901760
      %1295 = vmatmul.mubr.f32.gmra.mxu0 %v1294
      %v1296 = vpop.f32.mrf.mxu0
      %v1297 = vadd.f32 %v603, %v1296
      %v1298 = vpop.f32.mrf.mxu0
      %1299 = vmatprep.mubr.f32.mxu0 0.0
      %v1300 = vand.u32 %v321, 4294901760
      %1301 = vmatmul.mubr.f32.gmra.mxu0 %v1300
      %v1302 = vpop.f32.mrf.mxu0
      %v1303 = vadd.f32 %v613, %v1302
      %v1304 = vpop.f32.mrf.mxu0
      %1305 = vmatprep.mubr.f32.mxu0 0.0
      %v1306 = vand.u32 %v324, 4294901760
      %1307 = vmatmul.mubr.f32.gmra.mxu0 %v1306
      %v1308 = vpop.f32.mrf.mxu0
      %v1309 = vadd.f32 %v623, %v1308
      %v1310 = vpop.f32.mrf.mxu0
      %1311 = vmatprep.mubr.f32.mxu0 0.0
      %v1312 = vand.u32 %v327, 4294901760
      %1313 = vmatmul.mubr.f32.gmra.mxu0 %v1312
      %v1314 = vpop.f32.mrf.mxu0
      %v1315 = vadd.f32 %v633, %v1314
      %v1316 = vpop.f32.mrf.mxu0
      %1317 = vmatprep.mubr.f32.mxu0 0.0
      %v1318 = vand.u32 %v330, 4294901760
      %1319 = vmatmul.mubr.f32.gmra.mxu0 %v1318
      %v1320 = vpop.f32.mrf.mxu0
      %v1321 = vadd.f32 %v643, %v1320
      %v1322 = vpop.f32.mrf.mxu0
      %1323 = vmatprep.mubr.f32.mxu0 0.0
      %v1324 = vand.u32 %v333, 4294901760
      %1325 = vmatmul.mubr.f32.gmra.mxu0 %v1324
      %v1326 = vpop.f32.mrf.mxu0
      %v1327 = vadd.f32 %v653, %v1326
      %v1328 = vpop.f32.mrf.mxu0
      %1329 = vmatprep.mubr.f32.mxu0 0.0
      %v1330 = vand.u32 %v336, 4294901760
      %1331 = vmatmul.mubr.f32.gmra.mxu0 %v1330
      %v1332 = vpop.f32.mrf.mxu0
      %v1333 = vadd.f32 %v663, %v1332
      %v1334 = vpop.f32.mrf.mxu0
      %1335 = vmatprep.mubr.f32.mxu0 0.0
      %v1336 = vand.u32 %v339, 4294901760
      %1337 = vmatmul.mubr.f32.gmra.mxu0 %v1336
      %v1338 = vpop.f32.mrf.mxu0
      %v1339 = vadd.f32 %v673, %v1338
      %v1340 = vpop.f32.mrf.mxu0
      %1341 = vmatprep.mubr.f32.mxu0 0.0
      %v1342 = vand.u32 %v342, 4294901760
      %1343 = vmatmul.mubr.f32.gmra.mxu0 %v1342
      %v1344 = vpop.f32.mrf.mxu0
      %v1345 = vadd.f32 %v683, %v1344
      %v1346 = vpop.f32.mrf.mxu0
      %1347 = vmatprep.mubr.f32.mxu0 0.0
      %v1348 = vand.u32 %v345, 4294901760
      %1349 = vmatmul.mubr.f32.gmra.mxu0 %v1348
      %v1350 = vpop.f32.mrf.mxu0
      %v1351 = vadd.f32 %v693, %v1350
      %v1352 = vpop.f32.mrf.mxu0
      %1353 = vmatprep.mubr.f32.mxu0 0.0
      %v1354 = vand.u32 %v348, 4294901760
      %1355 = vmatmul.mubr.f32.gmra.mxu0 %v1354
      %v1356 = vpop.f32.mrf.mxu0
      %v1357 = vadd.f32 %v703, %v1356
      %v1358 = vpop.f32.mrf.mxu0
      %1359 = vmatprep.mubr.f32.mxu0 0.0
      %v1360 = vand.u32 %v351, 4294901760
      %1361 = vmatmul.mubr.f32.gmra.mxu0 %v1360
      %v1362 = vpop.f32.mrf.mxu0
      %v1363 = vadd.f32 %v713, %v1362
      %v1364 = vpop.f32.mrf.mxu0
      %1365 = vmatprep.mubr.f32.mxu0 0.0
      %v1366 = vand.u32 %v354, 4294901760
      %1367 = vmatmul.mubr.f32.gmra.mxu0 %v1366
      %v1368 = vpop.f32.mrf.mxu0
      %v1369 = vadd.f32 %v723, %v1368
      %v1370 = vpop.f32.mrf.mxu0
      %1371 = vmatprep.mubr.f32.mxu0 0.0
      %v1372 = vand.u32 %v357, 4294901760
      %1373 = vmatmul.mubr.f32.gmra.mxu0 %v1372
      %v1374 = vpop.f32.mrf.mxu0
      %v1375 = vadd.f32 %v733, %v1374
      %v1376 = vpop.f32.mrf.mxu0
      %1377 = vmatprep.mubr.f32.mxu0 0.0
      %v1378 = vand.u32 %v360, 4294901760
      %1379 = vmatmul.mubr.f32.gmra.mxu0 %v1378
      %v1380 = vpop.f32.mrf.mxu0
      %v1381 = vadd.f32 %v743, %v1380
      %v1382 = vpop.f32.mrf.mxu0
      %1383 = vmatprep.mubr.f32.mxu0 0.0
      %v1384 = vand.u32 %v363, 4294901760
      %1385 = vmatmul.mubr.f32.gmra.mxu0 %v1384
      %v1386 = vpop.f32.mrf.mxu0
      %v1387 = vadd.f32 %v753, %v1386
      %v1388 = vpop.f32.mrf.mxu0
      %1389 = vmatprep.mubr.f32.mxu0 0.0
      %v1390 = vand.u32 %v366, 4294901760
      %1391 = vmatmul.mubr.f32.gmra.mxu0 %v1390
      %v1392 = vpop.f32.mrf.mxu0
      %v1393 = vadd.f32 %v763, %v1392
      %v1394 = vpop.f32.mrf.mxu0
      %1395 = vmatprep.mubr.f32.mxu0 0.0
      %v1396 = vand.u32 %v369, 4294901760
      %1397 = vmatmul.mubr.f32.gmra.mxu0 %v1396
      %v1398 = vpop.f32.mrf.mxu0
      %v1399 = vadd.f32 %v773, %v1398
      %v1400 = vpop.f32.mrf.mxu0
      %1401 = vmatprep.mubr.f32.mxu0 0.0
      %v1402 = vand.u32 %v372, 4294901760
      %1403 = vmatmul.mubr.f32.gmra.mxu0 %v1402
      %v1404 = vpop.f32.mrf.mxu0
      %v1405 = vadd.f32 %v783, %v1404
      %v1406 = vpop.f32.mrf.mxu0
      %1407 = vmatprep.mubr.f32.mxu0 0.0
      %v1408 = vand.u32 %v375, 4294901760
      %1409 = vmatmul.mubr.f32.gmra.mxu0 %v1408
      %v1410 = vpop.f32.mrf.mxu0
      %v1411 = vadd.f32 %v793, %v1410
      %v1412 = vpop.f32.mrf.mxu0
      %1413 = vmatprep.mubr.f32.mxu0 0.0
      %v1414 = vand.u32 %v378, 4294901760
      %1415 = vmatmul.mubr.f32.gmra.mxu0 %v1414
      %v1416 = vpop.f32.mrf.mxu0
      %v1417 = vadd.f32 %v803, %v1416
      %v1418 = vpop.f32.mrf.mxu0
      %1419 = vmatprep.mubr.f32.mxu0 0.0
      %v1420 = vand.u32 %v381, 4294901760
      %1421 = vmatmul.mubr.f32.gmra.mxu0 %v1420
      %v1422 = vpop.f32.mrf.mxu0
      %v1423 = vadd.f32 %v813, %v1422
      %v1424 = vpop.f32.mrf.mxu0
      %1425 = vmatprep.mubr.f32.mxu0 0.0
      %v1426 = vand.u32 %v384, 4294901760
      %1427 = vmatmul.mubr.f32.gmra.mxu0 %v1426
      %v1428 = vpop.f32.mrf.mxu0
      %v1429 = vadd.f32 %v823, %v1428
      %v1430 = vpop.f32.mrf.mxu0
      %1431 = vmatprep.mubr.f32.mxu0 0.0
      %v1432 = vand.u32 %v387, 4294901760
      %1433 = vmatmul.mubr.f32.gmra.mxu0 %v1432
      %v1434 = vpop.f32.mrf.mxu0
      %v1435 = vadd.f32 %v833, %v1434
      %v1436 = vpop.f32.mrf.mxu0
      %1437 = vmatprep.mubr.f32.mxu0 0.0
      %v1438 = vand.u32 %v390, 4294901760
      %1439 = vmatmul.mubr.f32.gmra.mxu0 %v1438
      %v1440 = vpop.f32.mrf.mxu0
      %v1441 = vadd.f32 %v843, %v1440
      %v1442 = vpop.f32.mrf.mxu0
      %1443 = vmatprep.mubr.f32.mxu0 0.0
      %v1444 = vand.u32 %v393, 4294901760
      %1445 = vmatmul.mubr.f32.gmra.mxu0 %v1444
      %v1446 = vpop.f32.mrf.mxu0
      %v1447 = vadd.f32 %v853, %v1446
      %v1448 = vpop.f32.mrf.mxu0
      %1449 = vmatprep.mubr.f32.mxu0 0.0
      %v1450 = vand.u32 %v396, 4294901760
      %1451 = vmatmul.mubr.f32.gmra.mxu0 %v1450
      %v1452 = vpop.f32.mrf.mxu0
      %v1453 = vadd.f32 %v863, %v1452
      %v1454 = vpop.f32.mrf.mxu0
      %1455 = vmatprep.mubr.f32.mxu0 0.0
      %v1456 = vand.u32 %v399, 4294901760
      %1457 = vmatmul.mubr.f32.gmra.mxu0 %v1456
      %v1458 = vpop.f32.mrf.mxu0
      %v1459 = vadd.f32 %v873, %v1458
      %v1460 = vpop.f32.mrf.mxu0
      %1461 = vmatprep.mubr.f32.mxu0 0.0
      %v1462 = vand.u32 %v402, 4294901760
      %1463 = vmatmul.mubr.f32.gmra.mxu0 %v1462
      %v1464 = vpop.f32.mrf.mxu0
      %v1465 = vadd.f32 %v883, %v1464
      %v1466 = vpop.f32.mrf.mxu0
      %1467 = vmatprep.mubr.f32.mxu0 0.0
      %v1468 = vand.u32 %v405, 4294901760
      %1469 = vmatmul.mubr.f32.gmra.mxu0 %v1468
      %v1470 = vpop.f32.mrf.mxu0
      %v1471 = vadd.f32 %v893, %v1470
      %v1472 = vpop.f32.mrf.mxu0
      %1473 = vmatprep.mubr.f32.mxu0 0.0
      %v1474 = vand.u32 %v408, 4294901760
      %1475 = vmatmul.mubr.f32.gmra.mxu0 %v1474
      %v1476 = vpop.f32.mrf.mxu0
      %v1477 = vadd.f32 %v903, %v1476
      %v1478 = vpop.f32.mrf.mxu0
      %1479 = vmatprep.mubr.f32.mxu0 0.0
      %v1480 = vand.u32 %v411, 4294901760
      %1481 = vmatmul.mubr.f32.gmra.mxu0 %v1480
      %v1482 = vpop.f32.mrf.mxu0
      %v1483 = vadd.f32 %v913, %v1482
      %v1484 = vpop.f32.mrf.mxu0
      %1485 = vmatprep.mubr.f32.mxu0 0.0
      %v1486 = vand.u32 %v414, 4294901760
      %1487 = vmatmul.mubr.f32.gmra.mxu0 %v1486
      %v1488 = vpop.f32.mrf.mxu0
      %v1489 = vadd.f32 %v923, %v1488
      %v1490 = vpop.f32.mrf.mxu0
      %1491 = vmatprep.mubr.f32.mxu0 0.0
      %v1492 = vand.u32 %v417, 4294901760
      %1493 = vmatmul.mubr.f32.gmra.mxu0 %v1492
      %v1494 = vpop.f32.mrf.mxu0
      %v1495 = vadd.f32 %v933, %v1494
      %v1496 = vpop.f32.mrf.mxu0
      %1497 = vmatprep.mubr.f32.mxu0 0.0
      %v1498 = vand.u32 %v420, 4294901760
      %1499 = vmatmul.mubr.f32.gmra.mxu0 %v1498
      %v1500 = vpop.f32.mrf.mxu0
      %v1501 = vadd.f32 %v943, %v1500
      %v1502 = vpop.f32.mrf.mxu0
      %1503 = vmatprep.mubr.f32.mxu0 0.0
      %v1504 = vand.u32 %v423, 4294901760
      %1505 = vmatmul.mubr.f32.gmra.mxu0 %v1504
      %v1506 = vpop.f32.mrf.mxu0
      %v1507 = vadd.f32 %v953, %v1506
      %v1508 = vpop.f32.mrf.mxu0
      %1509 = vmatprep.mubr.f32.mxu0 0.0
      %v1510 = vand.u32 %v426, 4294901760
      %1511 = vmatmul.mubr.f32.gmra.mxu0 %v1510
      %v1512 = vpop.f32.mrf.mxu0
      %v1513 = vadd.f32 %v963, %v1512
      %v1514 = vpop.f32.mrf.mxu0
      %1515 = vmatprep.mubr.f32.mxu0 0.0
      %v1516 = vand.u32 %v429, 4294901760
      %1517 = vmatmul.mubr.f32.gmra.mxu0 %v1516
      %v1518 = vpop.f32.mrf.mxu0
      %v1519 = vadd.f32 %v973, %v1518
      %v1520 = vpop.f32.mrf.mxu0
      %1521 = vmatprep.mubr.f32.mxu0 0.0
      %v1522 = vand.u32 %v432, 4294901760
      %1523 = vmatmul.mubr.f32.gmra.mxu0 %v1522
      %v1524 = vpop.f32.mrf.mxu0
      %v1525 = vadd.f32 %v983, %v1524
      %v1526 = vpop.f32.mrf.mxu0
      %1527 = vmatprep.mubr.f32.mxu0 0.0
      %v1528 = vand.u32 %v435, 4294901760
      %1529 = vmatmul.mubr.f32.gmra.mxu0 %v1528
      %v1530 = vpop.f32.mrf.mxu0
      %v1531 = vadd.f32 %v993, %v1530
      %v1532 = vpop.f32.mrf.mxu0
      %1533 = vmatprep.mubr.f32.mxu0 0.0
      %v1534 = vand.u32 %v438, 4294901760
      %1535 = vmatmul.mubr.f32.gmra.mxu0 %v1534
      %v1536 = vpop.f32.mrf.mxu0
      %v1537 = vadd.f32 %v1003, %v1536
      %v1538 = vpop.f32.mrf.mxu0
      %1539 = vmatprep.mubr.f32.mxu0 0.0
      %v1540 = vand.u32 %v441, 4294901760
      %1541 = vmatmul.mubr.f32.gmra.mxu0 %v1540
      %v1542 = vpop.f32.mrf.mxu0
      %v1543 = vadd.f32 %v1013, %v1542
      %v1544 = vpop.f32.mrf.mxu0
      %1545 = vmatprep.mubr.f32.mxu0 0.0
      %v1546 = vand.u32 %v444, 4294901760
      %1547 = vmatmul.mubr.f32.gmra.mxu0 %v1546
      %v1548 = vpop.f32.mrf.mxu0
      %v1549 = vadd.f32 %v1023, %v1548
      %v1550 = vpop.f32.mrf.mxu0
      %1551 = vmatprep.mubr.f32.mxu0 0.0
      %v1552 = vand.u32 %v447, 4294901760
      %1553 = vmatmul.mubr.f32.gmra.mxu0 %v1552
      %v1554 = vpop.f32.mrf.mxu0
      %v1555 = vadd.f32 %v1033, %v1554
      %v1556 = vpop.f32.mrf.mxu0
      %1557 = vmatprep.mubr.f32.mxu0 0.0
      %v1558 = vand.u32 %v450, 4294901760
      %1559 = vmatmul.mubr.f32.gmra.mxu0 %v1558
      %v1560 = vpop.f32.mrf.mxu0
      %v1561 = vadd.f32 %v1043, %v1560
      %v1562 = vpop.f32.mrf.mxu0
      %1563 = vmatprep.mubr.f32.mxu0 0.0
      %v1564 = vand.u32 %v453, 4294901760
      %1565 = vmatmul.mubr.f32.gmra.mxu0 %v1564
      %v1566 = vpop.f32.mrf.mxu0
      %v1567 = vadd.f32 %v1053, %v1566
      %v1568 = vpop.f32.mrf.mxu0
      %1569 = vmatprep.mubr.f32.mxu0 0.0
      %v1570 = vand.u32 %v456, 4294901760
      %1571 = vmatmul.mubr.f32.gmra.mxu0 %v1570
      %v1572 = vpop.f32.mrf.mxu0
      %v1573 = vadd.f32 %v1063, %v1572
      %v1574 = vpop.f32.mrf.mxu0
      %1575 = vmatprep.mubr.f32.mxu0 0.0
      %v1576 = vand.u32 %v459, 4294901760
      %1577 = vmatmul.mubr.f32.gmra.mxu0 %v1576
      %v1578 = vpop.f32.mrf.mxu0
      %v1579 = vadd.f32 %v1073, %v1578
      %v1580 = vpop.f32.mrf.mxu0
      %1581 = vmatprep.mubr.f32.mxu0 0.0
      %v1582 = vand.u32 %v462, 4294901760
      %1583 = vmatmul.mubr.f32.gmra.mxu0 %v1582
      %v1584 = vpop.f32.mrf.mxu0
      %v1585 = vadd.f32 %v1083, %v1584
      %v1586 = vpop.f32.mrf.mxu0
      %1587 = vmatprep.mubr.f32.mxu0 0.0
      %v1588 = vand.u32 %v465, 4294901760
      %1589 = vmatmul.mubr.f32.gmra.mxu0 %v1588
      %v1590 = vpop.f32.mrf.mxu0
      %v1591 = vadd.f32 %v1093, %v1590
      %v1592 = vpop.f32.mrf.mxu0
      %1593 = vmatprep.mubr.f32.mxu0 0.0
      %v1594 = vand.u32 %v468, 4294901760
      %1595 = vmatmul.mubr.f32.gmra.mxu0 %v1594
      %v1596 = vpop.f32.mrf.mxu0
      %v1597 = vadd.f32 %v1103, %v1596
      %v1598 = vpop.f32.mrf.mxu0
      %1599 = vmatprep.mubr.f32.mxu0 0.0
      %v1600 = vand.u32 %v471, 4294901760
      %1601 = vmatmul.mubr.f32.gmra.mxu0 %v1600
      %v1602 = vpop.f32.mrf.mxu0
      %v1603 = vadd.f32 %v1113, %v1602
      %v1604 = vpop.f32.mrf.mxu0
      %1605 = vmatprep.mubr.f32.mxu0 0.0
      %v1606 = vand.u32 %v474, 4294901760
      %1607 = vmatmul.mubr.f32.gmra.mxu0 %v1606
      %v1608 = vpop.f32.mrf.mxu0
      %v1609 = vadd.f32 %v1123, %v1608
      %v1610 = vpop.f32.mrf.mxu0
      %1611 = vmatprep.mubr.f32.mxu0 0.0
      %v1612 = vand.u32 %v477, 4294901760
      %1613 = vmatmul.mubr.f32.gmra.mxu0 %v1612
      %v1614 = vpop.f32.mrf.mxu0
      %v1615 = vadd.f32 %v1133, %v1614
      %v1616 = vpop.f32.mrf.mxu0
      %1617 = vmatprep.mubr.f32.mxu0 0.0
      %v1618 = vand.u32 %v480, 4294901760
      %1619 = vmatmul.mubr.f32.gmra.mxu0 %v1618
      %v1620 = vpop.f32.mrf.mxu0
      %v1621 = vadd.f32 %v1143, %v1620
      %v1622 = vpop.f32.mrf.mxu0
      %1623 = vmatprep.mubr.f32.mxu0 0.0
      %v1624 = vand.u32 %v483, 4294901760
      %1625 = vmatmul.mubr.f32.gmra.mxu0 %v1624
      %v1626 = vpop.f32.mrf.mxu0
      %v1627 = vadd.f32 %v1153, %v1626
      %v1628 = vpop.f32.mrf.mxu0
      %1629 = vmatprep.mubr.f32.mxu0 0.0
      %v1630 = vand.u32 %v486, 4294901760
      %1631 = vmatmul.mubr.f32.gmra.mxu0 %v1630
      %v1632 = vpop.f32.mrf.mxu0
      %v1633 = vadd.f32 %v1163, %v1632
      %v1634 = vpop.f32.mrf.mxu0
      %1635 = vmatprep.mubr.f32.mxu0 0.0
      %v1636 = vand.u32 %v489, 4294901760
      %1637 = vmatmul.mubr.f32.gmra.mxu0 %v1636
      %v1638 = vpop.f32.mrf.mxu0
      %v1639 = vadd.f32 %v1173, %v1638
      %v1640 = vpop.f32.mrf.mxu0
      %1641 = vmatprep.mubr.f32.mxu0 0.0
      %v1642 = vand.u32 %v492, 4294901760
      %1643 = vmatmul.mubr.f32.gmra.mxu0 %v1642
      %v1644 = vpop.f32.mrf.mxu0
      %v1645 = vadd.f32 %v1183, %v1644
      %v1646 = vpop.f32.mrf.mxu0
      %1647 = vmatprep.mubr.f32.mxu0 0.0
      %v1648 = vand.u32 %v495, 4294901760
      %1649 = vmatmul.mubr.f32.gmra.mxu0 %v1648
      %v1650 = vpop.f32.mrf.mxu0
      %v1651 = vadd.f32 %v1193, %v1650
      %v1652 = vpop.f32.mrf.mxu0
      %1653 = vmatprep.mubr.f32.mxu0 0.0
      %v1654 = vand.u32 %v498, 4294901760
      %1655 = vmatmul.mubr.f32.gmra.mxu0 %v1654
      %v1656 = vpop.f32.mrf.mxu0
      %v1657 = vadd.f32 %v1203, %v1656
      %v1658 = vpop.f32.mrf.mxu0
      %1659 = vdwg.mxu0
      %1660 = vmatprep.subr.mxu0 0.0
      %1661 = vmatpush1.msra.mxu0 0.0
      %1662 = vmatprep.subr.mxu0 0.0
      %1663 = vmatpush1.msra.mxu0 0.0
      %1664 = vmatprep.subr.mxu0 0.0
      %1665 = vmatpush1.msra.mxu0 0.0
      %1666 = vmatprep.subr.mxu0 0.0
      %1667 = vmatpush1.msra.mxu0 0.0
      %1668 = vmatprep.subr.mxu0 0.0
      %1669 = vmatpush1.msra.mxu0 0.0
      %1670 = vmatprep.subr.mxu0 0.0
      %1671 = vmatpush1.msra.mxu0 0.0
      %1672 = vmatprep.subr.mxu0 0.0
      %1673 = vmatpush1.msra.mxu0 0.0
      %1674 = vmatprep.subr.mxu0 0.0
      %1675 = vmatpush1.msra.mxu0 0.0
      %1676 = vmatprep.subr.mxu0 0.0
      %1677 = vmatpush1.msra.mxu0 0.0
      %1678 = vmatprep.subr.mxu0 0.0
      %1679 = vmatpush1.msra.mxu0 0.0
      %1680 = vmatprep.subr.mxu0 0.0
      %1681 = vmatpush1.msra.mxu0 0.0
      %1682 = vmatprep.subr.mxu0 0.0
      %1683 = vmatpush1.msra.mxu0 0.0
      %1684 = vmatprep.subr.mxu0 0.0
      %1685 = vmatpush1.msra.mxu0 0.0
      %1686 = vmatprep.subr.mxu0 0.0
      %1687 = vmatpush1.msra.mxu0 0.0
      %1688 = vmatprep.subr.mxu0 0.0
      %1689 = vmatpush1.msra.mxu0 0.0
      %1690 = vmatprep.subr.mxu0 0.0
      %v1691 = vand.u32 %v306, 4294901760
      %v1692 = vsub.f32 %v306, %v1691
      %1693 = vmatpush1.msra.mxu0 %v1692
      %1694 = vmatprep.subr.mxu0 0.0
      %1695 = vmatpush2.msra.mxu0 0.0
      %1696 = vmatprep.subr.mxu0 0.0
      %1697 = vmatpush2.msra.mxu0 0.0
      %1698 = vmatprep.subr.mxu0 0.0
      %1699 = vmatpush2.msra.mxu0 0.0
      %1700 = vmatprep.subr.mxu0 0.0
      %1701 = vmatpush2.msra.mxu0 0.0
      %1702 = vmatprep.subr.mxu0 0.0
      %1703 = vmatpush2.msra.mxu0 0.0
      %1704 = vmatprep.subr.mxu0 0.0
      %1705 = vmatpush2.msra.mxu0 0.0
      %1706 = vmatprep.subr.mxu0 0.0
      %1707 = vmatpush2.msra.mxu0 0.0
      %1708 = vmatprep.subr.mxu0 0.0
      %1709 = vmatpush2.msra.mxu0 0.0
      %1710 = vmatprep.subr.mxu0 0.0
      %1711 = vmatpush2.msra.mxu0 0.0
      %1712 = vmatprep.subr.mxu0 0.0
      %1713 = vmatpush2.msra.mxu0 0.0
      %1714 = vmatprep.subr.mxu0 0.0
      %1715 = vmatpush2.msra.mxu0 0.0
      %1716 = vmatprep.subr.mxu0 0.0
      %1717 = vmatpush2.msra.mxu0 0.0
      %1718 = vmatprep.subr.mxu0 0.0
      %1719 = vmatpush2.msra.mxu0 0.0
      %1720 = vmatprep.subr.mxu0 0.0
      %1721 = vmatpush2.msra.mxu0 0.0
      %1722 = vmatprep.subr.mxu0 0.0
      %1723 = vmatpush2.msra.mxu0 0.0
      %1724 = vmatprep.subr.mxu0 0.0
      %1725 = vmatpush2.msra.mxu0 0.0
      %1726 = vmatprep.mubr.f32.mxu0 0.0
      %v1727 = vand.u32 %v309, 4294901760
      %v1728 = vsub.f32 %v309, %v1727
      %1729 = vmatmul.mubr.f32.gmra.mxu0 %v1728
      %v1730 = vpop.f32.mrf.mxu0
      %v1731 = vadd.f32 %v1279, %v1730
      %v1732 = vpop.f32.mrf.mxu0
      %1733 = vmatprep.mubr.f32.mxu0 0.0
      %v1734 = vand.u32 %v312, 4294901760
      %v1735 = vsub.f32 %v312, %v1734
      %1736 = vmatmul.mubr.f32.gmra.mxu0 %v1735
      %v1737 = vpop.f32.mrf.mxu0
      %v1738 = vadd.f32 %v1285, %v1737
      %v1739 = vpop.f32.mrf.mxu0
      %1740 = vmatprep.mubr.f32.mxu0 0.0
      %v1741 = vand.u32 %v315, 4294901760
      %v1742 = vsub.f32 %v315, %v1741
      %1743 = vmatmul.mubr.f32.gmra.mxu0 %v1742
      %v1744 = vpop.f32.mrf.mxu0
      %v1745 = vadd.f32 %v1291, %v1744
      %v1746 = vpop.f32.mrf.mxu0
      %1747 = vmatprep.mubr.f32.mxu0 0.0
      %v1748 = vand.u32 %v318, 4294901760
      %v1749 = vsub.f32 %v318, %v1748
      %1750 = vmatmul.mubr.f32.gmra.mxu0 %v1749
      %v1751 = vpop.f32.mrf.mxu0
      %v1752 = vadd.f32 %v1297, %v1751
      %v1753 = vpop.f32.mrf.mxu0
      %1754 = vmatprep.mubr.f32.mxu0 0.0
      %v1755 = vand.u32 %v321, 4294901760
      %v1756 = vsub.f32 %v321, %v1755
      %1757 = vmatmul.mubr.f32.gmra.mxu0 %v1756
      %v1758 = vpop.f32.mrf.mxu0
      %v1759 = vadd.f32 %v1303, %v1758
      %v1760 = vpop.f32.mrf.mxu0
      %1761 = vmatprep.mubr.f32.mxu0 0.0
      %v1762 = vand.u32 %v324, 4294901760
      %v1763 = vsub.f32 %v324, %v1762
      %1764 = vmatmul.mubr.f32.gmra.mxu0 %v1763
      %v1765 = vpop.f32.mrf.mxu0
      %v1766 = vadd.f32 %v1309, %v1765
      %v1767 = vpop.f32.mrf.mxu0
      %1768 = vmatprep.mubr.f32.mxu0 0.0
      %v1769 = vand.u32 %v327, 4294901760
      %v1770 = vsub.f32 %v327, %v1769
      %1771 = vmatmul.mubr.f32.gmra.mxu0 %v1770
      %v1772 = vpop.f32.mrf.mxu0
      %v1773 = vadd.f32 %v1315, %v1772
      %v1774 = vpop.f32.mrf.mxu0
      %1775 = vmatprep.mubr.f32.mxu0 0.0
      %v1776 = vand.u32 %v330, 4294901760
      %v1777 = vsub.f32 %v330, %v1776
      %1778 = vmatmul.mubr.f32.gmra.mxu0 %v1777
      %v1779 = vpop.f32.mrf.mxu0
      %v1780 = vadd.f32 %v1321, %v1779
      %v1781 = vpop.f32.mrf.mxu0
      %1782 = vmatprep.mubr.f32.mxu0 0.0
      %v1783 = vand.u32 %v333, 4294901760
      %v1784 = vsub.f32 %v333, %v1783
      %1785 = vmatmul.mubr.f32.gmra.mxu0 %v1784
      %v1786 = vpop.f32.mrf.mxu0
      %v1787 = vadd.f32 %v1327, %v1786
      %v1788 = vpop.f32.mrf.mxu0
      %1789 = vmatprep.mubr.f32.mxu0 0.0
      %v1790 = vand.u32 %v336, 4294901760
      %v1791 = vsub.f32 %v336, %v1790
      %1792 = vmatmul.mubr.f32.gmra.mxu0 %v1791
      %v1793 = vpop.f32.mrf.mxu0
      %v1794 = vadd.f32 %v1333, %v1793
      %v1795 = vpop.f32.mrf.mxu0
      %1796 = vmatprep.mubr.f32.mxu0 0.0
      %v1797 = vand.u32 %v339, 4294901760
      %v1798 = vsub.f32 %v339, %v1797
      %1799 = vmatmul.mubr.f32.gmra.mxu0 %v1798
      %v1800 = vpop.f32.mrf.mxu0
      %v1801 = vadd.f32 %v1339, %v1800
      %v1802 = vpop.f32.mrf.mxu0
      %1803 = vmatprep.mubr.f32.mxu0 0.0
      %v1804 = vand.u32 %v342, 4294901760
      %v1805 = vsub.f32 %v342, %v1804
      %1806 = vmatmul.mubr.f32.gmra.mxu0 %v1805
      %v1807 = vpop.f32.mrf.mxu0
      %v1808 = vadd.f32 %v1345, %v1807
      %v1809 = vpop.f32.mrf.mxu0
      %1810 = vmatprep.mubr.f32.mxu0 0.0
      %v1811 = vand.u32 %v345, 4294901760
      %v1812 = vsub.f32 %v345, %v1811
      %1813 = vmatmul.mubr.f32.gmra.mxu0 %v1812
      %v1814 = vpop.f32.mrf.mxu0
      %v1815 = vadd.f32 %v1351, %v1814
      %v1816 = vpop.f32.mrf.mxu0
      %1817 = vmatprep.mubr.f32.mxu0 0.0
      %v1818 = vand.u32 %v348, 4294901760
      %v1819 = vsub.f32 %v348, %v1818
      %1820 = vmatmul.mubr.f32.gmra.mxu0 %v1819
      %v1821 = vpop.f32.mrf.mxu0
      %v1822 = vadd.f32 %v1357, %v1821
      %v1823 = vpop.f32.mrf.mxu0
      %1824 = vmatprep.mubr.f32.mxu0 0.0
      %v1825 = vand.u32 %v351, 4294901760
      %v1826 = vsub.f32 %v351, %v1825
      %1827 = vmatmul.mubr.f32.gmra.mxu0 %v1826
      %v1828 = vpop.f32.mrf.mxu0
      %v1829 = vadd.f32 %v1363, %v1828
      %v1830 = vpop.f32.mrf.mxu0
      %1831 = vmatprep.mubr.f32.mxu0 0.0
      %v1832 = vand.u32 %v354, 4294901760
      %v1833 = vsub.f32 %v354, %v1832
      %1834 = vmatmul.mubr.f32.gmra.mxu0 %v1833
      %v1835 = vpop.f32.mrf.mxu0
      %v1836 = vadd.f32 %v1369, %v1835
      %v1837 = vpop.f32.mrf.mxu0
      %1838 = vmatprep.mubr.f32.mxu0 0.0
      %v1839 = vand.u32 %v357, 4294901760
      %v1840 = vsub.f32 %v357, %v1839
      %1841 = vmatmul.mubr.f32.gmra.mxu0 %v1840
      %v1842 = vpop.f32.mrf.mxu0
      %v1843 = vadd.f32 %v1375, %v1842
      %v1844 = vpop.f32.mrf.mxu0
      %1845 = vmatprep.mubr.f32.mxu0 0.0
      %v1846 = vand.u32 %v360, 4294901760
      %v1847 = vsub.f32 %v360, %v1846
      %1848 = vmatmul.mubr.f32.gmra.mxu0 %v1847
      %v1849 = vpop.f32.mrf.mxu0
      %v1850 = vadd.f32 %v1381, %v1849
      %v1851 = vpop.f32.mrf.mxu0
      %1852 = vmatprep.mubr.f32.mxu0 0.0
      %v1853 = vand.u32 %v363, 4294901760
      %v1854 = vsub.f32 %v363, %v1853
      %1855 = vmatmul.mubr.f32.gmra.mxu0 %v1854
      %v1856 = vpop.f32.mrf.mxu0
      %v1857 = vadd.f32 %v1387, %v1856
      %v1858 = vpop.f32.mrf.mxu0
      %1859 = vmatprep.mubr.f32.mxu0 0.0
      %v1860 = vand.u32 %v366, 4294901760
      %v1861 = vsub.f32 %v366, %v1860
      %1862 = vmatmul.mubr.f32.gmra.mxu0 %v1861
      %v1863 = vpop.f32.mrf.mxu0
      %v1864 = vadd.f32 %v1393, %v1863
      %v1865 = vpop.f32.mrf.mxu0
      %1866 = vmatprep.mubr.f32.mxu0 0.0
      %v1867 = vand.u32 %v369, 4294901760
      %v1868 = vsub.f32 %v369, %v1867
      %1869 = vmatmul.mubr.f32.gmra.mxu0 %v1868
      %v1870 = vpop.f32.mrf.mxu0
      %v1871 = vadd.f32 %v1399, %v1870
      %v1872 = vpop.f32.mrf.mxu0
      %1873 = vmatprep.mubr.f32.mxu0 0.0
      %v1874 = vand.u32 %v372, 4294901760
      %v1875 = vsub.f32 %v372, %v1874
      %1876 = vmatmul.mubr.f32.gmra.mxu0 %v1875
      %v1877 = vpop.f32.mrf.mxu0
      %v1878 = vadd.f32 %v1405, %v1877
      %v1879 = vpop.f32.mrf.mxu0
      %1880 = vmatprep.mubr.f32.mxu0 0.0
      %v1881 = vand.u32 %v375, 4294901760
      %v1882 = vsub.f32 %v375, %v1881
      %1883 = vmatmul.mubr.f32.gmra.mxu0 %v1882
      %v1884 = vpop.f32.mrf.mxu0
      %v1885 = vadd.f32 %v1411, %v1884
      %v1886 = vpop.f32.mrf.mxu0
      %1887 = vmatprep.mubr.f32.mxu0 0.0
      %v1888 = vand.u32 %v378, 4294901760
      %v1889 = vsub.f32 %v378, %v1888
      %1890 = vmatmul.mubr.f32.gmra.mxu0 %v1889
      %v1891 = vpop.f32.mrf.mxu0
      %v1892 = vadd.f32 %v1417, %v1891
      %v1893 = vpop.f32.mrf.mxu0
      %1894 = vmatprep.mubr.f32.mxu0 0.0
      %v1895 = vand.u32 %v381, 4294901760
      %v1896 = vsub.f32 %v381, %v1895
      %1897 = vmatmul.mubr.f32.gmra.mxu0 %v1896
      %v1898 = vpop.f32.mrf.mxu0
      %v1899 = vadd.f32 %v1423, %v1898
      %v1900 = vpop.f32.mrf.mxu0
      %1901 = vmatprep.mubr.f32.mxu0 0.0
      %v1902 = vand.u32 %v384, 4294901760
      %v1903 = vsub.f32 %v384, %v1902
      %1904 = vmatmul.mubr.f32.gmra.mxu0 %v1903
      %v1905 = vpop.f32.mrf.mxu0
      %v1906 = vadd.f32 %v1429, %v1905
      %v1907 = vpop.f32.mrf.mxu0
      %1908 = vmatprep.mubr.f32.mxu0 0.0
      %v1909 = vand.u32 %v387, 4294901760
      %v1910 = vsub.f32 %v387, %v1909
      %1911 = vmatmul.mubr.f32.gmra.mxu0 %v1910
      %v1912 = vpop.f32.mrf.mxu0
      %v1913 = vadd.f32 %v1435, %v1912
      %v1914 = vpop.f32.mrf.mxu0
      %1915 = vmatprep.mubr.f32.mxu0 0.0
      %v1916 = vand.u32 %v390, 4294901760
      %v1917 = vsub.f32 %v390, %v1916
      %1918 = vmatmul.mubr.f32.gmra.mxu0 %v1917
      %v1919 = vpop.f32.mrf.mxu0
      %v1920 = vadd.f32 %v1441, %v1919
      %v1921 = vpop.f32.mrf.mxu0
      %1922 = vmatprep.mubr.f32.mxu0 0.0
      %v1923 = vand.u32 %v393, 4294901760
      %v1924 = vsub.f32 %v393, %v1923
      %1925 = vmatmul.mubr.f32.gmra.mxu0 %v1924
      %v1926 = vpop.f32.mrf.mxu0
      %v1927 = vadd.f32 %v1447, %v1926
      %v1928 = vpop.f32.mrf.mxu0
      %1929 = vmatprep.mubr.f32.mxu0 0.0
      %v1930 = vand.u32 %v396, 4294901760
      %v1931 = vsub.f32 %v396, %v1930
      %1932 = vmatmul.mubr.f32.gmra.mxu0 %v1931
      %v1933 = vpop.f32.mrf.mxu0
      %v1934 = vadd.f32 %v1453, %v1933
      %v1935 = vpop.f32.mrf.mxu0
      %1936 = vmatprep.mubr.f32.mxu0 0.0
      %v1937 = vand.u32 %v399, 4294901760
      %v1938 = vsub.f32 %v399, %v1937
      %1939 = vmatmul.mubr.f32.gmra.mxu0 %v1938
      %v1940 = vpop.f32.mrf.mxu0
      %v1941 = vadd.f32 %v1459, %v1940
      %v1942 = vpop.f32.mrf.mxu0
      %1943 = vmatprep.mubr.f32.mxu0 0.0
      %v1944 = vand.u32 %v402, 4294901760
      %v1945 = vsub.f32 %v402, %v1944
      %1946 = vmatmul.mubr.f32.gmra.mxu0 %v1945
      %v1947 = vpop.f32.mrf.mxu0
      %v1948 = vadd.f32 %v1465, %v1947
      %v1949 = vpop.f32.mrf.mxu0
      %1950 = vmatprep.mubr.f32.mxu0 0.0
      %v1951 = vand.u32 %v405, 4294901760
      %v1952 = vsub.f32 %v405, %v1951
      %1953 = vmatmul.mubr.f32.gmra.mxu0 %v1952
      %v1954 = vpop.f32.mrf.mxu0
      %v1955 = vadd.f32 %v1471, %v1954
      %v1956 = vpop.f32.mrf.mxu0
      %1957 = vmatprep.mubr.f32.mxu0 0.0
      %v1958 = vand.u32 %v408, 4294901760
      %v1959 = vsub.f32 %v408, %v1958
      %1960 = vmatmul.mubr.f32.gmra.mxu0 %v1959
      %v1961 = vpop.f32.mrf.mxu0
      %v1962 = vadd.f32 %v1477, %v1961
      %v1963 = vpop.f32.mrf.mxu0
      %1964 = vmatprep.mubr.f32.mxu0 0.0
      %v1965 = vand.u32 %v411, 4294901760
      %v1966 = vsub.f32 %v411, %v1965
      %1967 = vmatmul.mubr.f32.gmra.mxu0 %v1966
      %v1968 = vpop.f32.mrf.mxu0
      %v1969 = vadd.f32 %v1483, %v1968
      %v1970 = vpop.f32.mrf.mxu0
      %1971 = vmatprep.mubr.f32.mxu0 0.0
      %v1972 = vand.u32 %v414, 4294901760
      %v1973 = vsub.f32 %v414, %v1972
      %1974 = vmatmul.mubr.f32.gmra.mxu0 %v1973
      %v1975 = vpop.f32.mrf.mxu0
      %v1976 = vadd.f32 %v1489, %v1975
      %v1977 = vpop.f32.mrf.mxu0
      %1978 = vmatprep.mubr.f32.mxu0 0.0
      %v1979 = vand.u32 %v417, 4294901760
      %v1980 = vsub.f32 %v417, %v1979
      %1981 = vmatmul.mubr.f32.gmra.mxu0 %v1980
      %v1982 = vpop.f32.mrf.mxu0
      %v1983 = vadd.f32 %v1495, %v1982
      %v1984 = vpop.f32.mrf.mxu0
      %1985 = vmatprep.mubr.f32.mxu0 0.0
      %v1986 = vand.u32 %v420, 4294901760
      %v1987 = vsub.f32 %v420, %v1986
      %1988 = vmatmul.mubr.f32.gmra.mxu0 %v1987
      %v1989 = vpop.f32.mrf.mxu0
      %v1990 = vadd.f32 %v1501, %v1989
      %v1991 = vpop.f32.mrf.mxu0
      %1992 = vmatprep.mubr.f32.mxu0 0.0
      %v1993 = vand.u32 %v423, 4294901760
      %v1994 = vsub.f32 %v423, %v1993
      %1995 = vmatmul.mubr.f32.gmra.mxu0 %v1994
      %v1996 = vpop.f32.mrf.mxu0
      %v1997 = vadd.f32 %v1507, %v1996
      %v1998 = vpop.f32.mrf.mxu0
      %1999 = vmatprep.mubr.f32.mxu0 0.0
      %v2000 = vand.u32 %v426, 4294901760
      %v2001 = vsub.f32 %v426, %v2000
      %2002 = vmatmul.mubr.f32.gmra.mxu0 %v2001
      %v2003 = vpop.f32.mrf.mxu0
      %v2004 = vadd.f32 %v1513, %v2003
      %v2005 = vpop.f32.mrf.mxu0
      %2006 = vmatprep.mubr.f32.mxu0 0.0
      %v2007 = vand.u32 %v429, 4294901760
      %v2008 = vsub.f32 %v429, %v2007
      %2009 = vmatmul.mubr.f32.gmra.mxu0 %v2008
      %v2010 = vpop.f32.mrf.mxu0
      %v2011 = vadd.f32 %v1519, %v2010
      %v2012 = vpop.f32.mrf.mxu0
      %2013 = vmatprep.mubr.f32.mxu0 0.0
      %v2014 = vand.u32 %v432, 4294901760
      %v2015 = vsub.f32 %v432, %v2014
      %2016 = vmatmul.mubr.f32.gmra.mxu0 %v2015
      %v2017 = vpop.f32.mrf.mxu0
      %v2018 = vadd.f32 %v1525, %v2017
      %v2019 = vpop.f32.mrf.mxu0
      %2020 = vmatprep.mubr.f32.mxu0 0.0
      %v2021 = vand.u32 %v435, 4294901760
      %v2022 = vsub.f32 %v435, %v2021
      %2023 = vmatmul.mubr.f32.gmra.mxu0 %v2022
      %v2024 = vpop.f32.mrf.mxu0
      %v2025 = vadd.f32 %v1531, %v2024
      %v2026 = vpop.f32.mrf.mxu0
      %2027 = vmatprep.mubr.f32.mxu0 0.0
      %v2028 = vand.u32 %v438, 4294901760
      %v2029 = vsub.f32 %v438, %v2028
      %2030 = vmatmul.mubr.f32.gmra.mxu0 %v2029
      %v2031 = vpop.f32.mrf.mxu0
      %v2032 = vadd.f32 %v1537, %v2031
      %v2033 = vpop.f32.mrf.mxu0
      %2034 = vmatprep.mubr.f32.mxu0 0.0
      %v2035 = vand.u32 %v441, 4294901760
      %v2036 = vsub.f32 %v441, %v2035
      %2037 = vmatmul.mubr.f32.gmra.mxu0 %v2036
      %v2038 = vpop.f32.mrf.mxu0
      %v2039 = vadd.f32 %v1543, %v2038
      %v2040 = vpop.f32.mrf.mxu0
      %2041 = vmatprep.mubr.f32.mxu0 0.0
      %v2042 = vand.u32 %v444, 4294901760
      %v2043 = vsub.f32 %v444, %v2042
      %2044 = vmatmul.mubr.f32.gmra.mxu0 %v2043
      %v2045 = vpop.f32.mrf.mxu0
      %v2046 = vadd.f32 %v1549, %v2045
      %v2047 = vpop.f32.mrf.mxu0
      %2048 = vmatprep.mubr.f32.mxu0 0.0
      %v2049 = vand.u32 %v447, 4294901760
      %v2050 = vsub.f32 %v447, %v2049
      %2051 = vmatmul.mubr.f32.gmra.mxu0 %v2050
      %v2052 = vpop.f32.mrf.mxu0
      %v2053 = vadd.f32 %v1555, %v2052
      %v2054 = vpop.f32.mrf.mxu0
      %2055 = vmatprep.mubr.f32.mxu0 0.0
      %v2056 = vand.u32 %v450, 4294901760
      %v2057 = vsub.f32 %v450, %v2056
      %2058 = vmatmul.mubr.f32.gmra.mxu0 %v2057
      %v2059 = vpop.f32.mrf.mxu0
      %v2060 = vadd.f32 %v1561, %v2059
      %v2061 = vpop.f32.mrf.mxu0
      %2062 = vmatprep.mubr.f32.mxu0 0.0
      %v2063 = vand.u32 %v453, 4294901760
      %v2064 = vsub.f32 %v453, %v2063
      %2065 = vmatmul.mubr.f32.gmra.mxu0 %v2064
      %v2066 = vpop.f32.mrf.mxu0
      %v2067 = vadd.f32 %v1567, %v2066
      %v2068 = vpop.f32.mrf.mxu0
      %2069 = vmatprep.mubr.f32.mxu0 0.0
      %v2070 = vand.u32 %v456, 4294901760
      %v2071 = vsub.f32 %v456, %v2070
      %2072 = vmatmul.mubr.f32.gmra.mxu0 %v2071
      %v2073 = vpop.f32.mrf.mxu0
      %v2074 = vadd.f32 %v1573, %v2073
      %v2075 = vpop.f32.mrf.mxu0
      %2076 = vmatprep.mubr.f32.mxu0 0.0
      %v2077 = vand.u32 %v459, 4294901760
      %v2078 = vsub.f32 %v459, %v2077
      %2079 = vmatmul.mubr.f32.gmra.mxu0 %v2078
      %v2080 = vpop.f32.mrf.mxu0
      %v2081 = vadd.f32 %v1579, %v2080
      %v2082 = vpop.f32.mrf.mxu0
      %2083 = vmatprep.mubr.f32.mxu0 0.0
      %v2084 = vand.u32 %v462, 4294901760
      %v2085 = vsub.f32 %v462, %v2084
      %2086 = vmatmul.mubr.f32.gmra.mxu0 %v2085
      %v2087 = vpop.f32.mrf.mxu0
      %v2088 = vadd.f32 %v1585, %v2087
      %v2089 = vpop.f32.mrf.mxu0
      %2090 = vmatprep.mubr.f32.mxu0 0.0
      %v2091 = vand.u32 %v465, 4294901760
      %v2092 = vsub.f32 %v465, %v2091
      %2093 = vmatmul.mubr.f32.gmra.mxu0 %v2092
      %v2094 = vpop.f32.mrf.mxu0
      %v2095 = vadd.f32 %v1591, %v2094
      %v2096 = vpop.f32.mrf.mxu0
      %2097 = vmatprep.mubr.f32.mxu0 0.0
      %v2098 = vand.u32 %v468, 4294901760
      %v2099 = vsub.f32 %v468, %v2098
      %2100 = vmatmul.mubr.f32.gmra.mxu0 %v2099
      %v2101 = vpop.f32.mrf.mxu0
      %v2102 = vadd.f32 %v1597, %v2101
      %v2103 = vpop.f32.mrf.mxu0
      %2104 = vmatprep.mubr.f32.mxu0 0.0
      %v2105 = vand.u32 %v471, 4294901760
      %v2106 = vsub.f32 %v471, %v2105
      %2107 = vmatmul.mubr.f32.gmra.mxu0 %v2106
      %v2108 = vpop.f32.mrf.mxu0
      %v2109 = vadd.f32 %v1603, %v2108
      %v2110 = vpop.f32.mrf.mxu0
      %2111 = vmatprep.mubr.f32.mxu0 0.0
      %v2112 = vand.u32 %v474, 4294901760
      %v2113 = vsub.f32 %v474, %v2112
      %2114 = vmatmul.mubr.f32.gmra.mxu0 %v2113
      %v2115 = vpop.f32.mrf.mxu0
      %v2116 = vadd.f32 %v1609, %v2115
      %v2117 = vpop.f32.mrf.mxu0
      %2118 = vmatprep.mubr.f32.mxu0 0.0
      %v2119 = vand.u32 %v477, 4294901760
      %v2120 = vsub.f32 %v477, %v2119
      %2121 = vmatmul.mubr.f32.gmra.mxu0 %v2120
      %v2122 = vpop.f32.mrf.mxu0
      %v2123 = vadd.f32 %v1615, %v2122
      %v2124 = vpop.f32.mrf.mxu0
      %2125 = vmatprep.mubr.f32.mxu0 0.0
      %v2126 = vand.u32 %v480, 4294901760
      %v2127 = vsub.f32 %v480, %v2126
      %2128 = vmatmul.mubr.f32.gmra.mxu0 %v2127
      %v2129 = vpop.f32.mrf.mxu0
      %v2130 = vadd.f32 %v1621, %v2129
      %v2131 = vpop.f32.mrf.mxu0
      %2132 = vmatprep.mubr.f32.mxu0 0.0
      %v2133 = vand.u32 %v483, 4294901760
      %v2134 = vsub.f32 %v483, %v2133
      %2135 = vmatmul.mubr.f32.gmra.mxu0 %v2134
      %v2136 = vpop.f32.mrf.mxu0
      %v2137 = vadd.f32 %v1627, %v2136
      %v2138 = vpop.f32.mrf.mxu0
      %2139 = vmatprep.mubr.f32.mxu0 0.0
      %v2140 = vand.u32 %v486, 4294901760
      %v2141 = vsub.f32 %v486, %v2140
      %2142 = vmatmul.mubr.f32.gmra.mxu0 %v2141
      %v2143 = vpop.f32.mrf.mxu0
      %v2144 = vadd.f32 %v1633, %v2143
      %v2145 = vpop.f32.mrf.mxu0
      %2146 = vmatprep.mubr.f32.mxu0 0.0
      %v2147 = vand.u32 %v489, 4294901760
      %v2148 = vsub.f32 %v489, %v2147
      %2149 = vmatmul.mubr.f32.gmra.mxu0 %v2148
      %v2150 = vpop.f32.mrf.mxu0
      %v2151 = vadd.f32 %v1639, %v2150
      %v2152 = vpop.f32.mrf.mxu0
      %2153 = vmatprep.mubr.f32.mxu0 0.0
      %v2154 = vand.u32 %v492, 4294901760
      %v2155 = vsub.f32 %v492, %v2154
      %2156 = vmatmul.mubr.f32.gmra.mxu0 %v2155
      %v2157 = vpop.f32.mrf.mxu0
      %v2158 = vadd.f32 %v1645, %v2157
      %v2159 = vpop.f32.mrf.mxu0
      %2160 = vmatprep.mubr.f32.mxu0 0.0
      %v2161 = vand.u32 %v495, 4294901760
      %v2162 = vsub.f32 %v495, %v2161
      %2163 = vmatmul.mubr.f32.gmra.mxu0 %v2162
      %v2164 = vpop.f32.mrf.mxu0
      %v2165 = vadd.f32 %v1651, %v2164
      %v2166 = vpop.f32.mrf.mxu0
      %2167 = vmatprep.mubr.f32.mxu0 0.0
      %v2168 = vand.u32 %v498, 4294901760
      %v2169 = vsub.f32 %v498, %v2168
      %2170 = vmatmul.mubr.f32.gmra.mxu0 %v2169
      %v2171 = vpop.f32.mrf.mxu0
      %v2172 = vadd.f32 %v1657, %v2171
      %v2173 = vpop.f32.mrf.mxu0
      %2174 = vdwg.mxu0
      %2175 = vmatprep.subr.mxu0 0.0
      %2176 = vmatpush1.msra.mxu0 0.0
      %2177 = vmatprep.subr.mxu0 0.0
      %2178 = vmatpush1.msra.mxu0 0.0
      %2179 = vmatprep.subr.mxu0 0.0
      %2180 = vmatpush1.msra.mxu0 0.0
      %2181 = vmatprep.subr.mxu0 0.0
      %2182 = vmatpush1.msra.mxu0 0.0
      %2183 = vmatprep.subr.mxu0 0.0
      %2184 = vmatpush1.msra.mxu0 0.0
      %2185 = vmatprep.subr.mxu0 0.0
      %2186 = vmatpush1.msra.mxu0 0.0
      %2187 = vmatprep.subr.mxu0 0.0
      %2188 = vmatpush1.msra.mxu0 0.0
      %2189 = vmatprep.subr.mxu0 0.0
      %2190 = vmatpush1.msra.mxu0 0.0
      %2191 = vmatprep.subr.mxu0 0.0
      %2192 = vmatpush1.msra.mxu0 0.0
      %2193 = vmatprep.subr.mxu0 0.0
      %2194 = vmatpush1.msra.mxu0 0.0
      %2195 = vmatprep.subr.mxu0 0.0
      %2196 = vmatpush1.msra.mxu0 0.0
      %2197 = vmatprep.subr.mxu0 0.0
      %2198 = vmatpush1.msra.mxu0 0.0
      %2199 = vmatprep.subr.mxu0 0.0
      %2200 = vmatpush1.msra.mxu0 0.0
      %2201 = vmatprep.subr.mxu0 0.0
      %2202 = vmatpush1.msra.mxu0 0.0
      %2203 = vmatprep.subr.mxu0 0.0
      %2204 = vmatpush1.msra.mxu0 0.0
      %2205 = vmatprep.subr.mxu0 0.0
      %v2206 = vand.u32 %v306, 4294901760
      %2207 = vmatpush1.msra.mxu0 %v2206
      %2208 = vmatprep.subr.mxu0 0.0
      %2209 = vmatpush2.msra.mxu0 0.0
      %2210 = vmatprep.subr.mxu0 0.0
      %2211 = vmatpush2.msra.mxu0 0.0
      %2212 = vmatprep.subr.mxu0 0.0
      %2213 = vmatpush2.msra.mxu0 0.0
      %2214 = vmatprep.subr.mxu0 0.0
      %2215 = vmatpush2.msra.mxu0 0.0
      %2216 = vmatprep.subr.mxu0 0.0
      %2217 = vmatpush2.msra.mxu0 0.0
      %2218 = vmatprep.subr.mxu0 0.0
      %2219 = vmatpush2.msra.mxu0 0.0
      %2220 = vmatprep.subr.mxu0 0.0
      %2221 = vmatpush2.msra.mxu0 0.0
      %2222 = vmatprep.subr.mxu0 0.0
      %2223 = vmatpush2.msra.mxu0 0.0
      %2224 = vmatprep.subr.mxu0 0.0
      %2225 = vmatpush2.msra.mxu0 0.0
      %2226 = vmatprep.subr.mxu0 0.0
      %2227 = vmatpush2.msra.mxu0 0.0
      %2228 = vmatprep.subr.mxu0 0.0
      %2229 = vmatpush2.msra.mxu0 0.0
      %2230 = vmatprep.subr.mxu0 0.0
      %2231 = vmatpush2.msra.mxu0 0.0
      %2232 = vmatprep.subr.mxu0 0.0
      %2233 = vmatpush2.msra.mxu0 0.0
      %2234 = vmatprep.subr.mxu0 0.0
      %2235 = vmatpush2.msra.mxu0 0.0
      %2236 = vmatprep.subr.mxu0 0.0
      %2237 = vmatpush2.msra.mxu0 0.0
      %2238 = vmatprep.subr.mxu0 0.0
      %2239 = vmatpush2.msra.mxu0 0.0
      %2240 = vmatprep.mubr.f32.mxu0 0.0
      %v2241 = vand.u32 %v309, 4294901760
      %v2242 = vsub.f32 %v309, %v2241
      %v2243 = vand.u32 %v2242, 4294901760
      %2244 = vmatmul.mubr.f32.gmra.mxu0 %v2243
      %v2245 = vpop.f32.mrf.mxu0
      %v2246 = vadd.f32 %v1731, %v2245
      %v2247 = vpop.f32.mrf.mxu0
      %2248 = vmatprep.mubr.f32.mxu0 0.0
      %v2249 = vand.u32 %v312, 4294901760
      %v2250 = vsub.f32 %v312, %v2249
      %v2251 = vand.u32 %v2250, 4294901760
      %2252 = vmatmul.mubr.f32.gmra.mxu0 %v2251
      %v2253 = vpop.f32.mrf.mxu0
      %v2254 = vadd.f32 %v1738, %v2253
      %v2255 = vpop.f32.mrf.mxu0
      %2256 = vmatprep.mubr.f32.mxu0 0.0
      %v2257 = vand.u32 %v315, 4294901760
      %v2258 = vsub.f32 %v315, %v2257
      %v2259 = vand.u32 %v2258, 4294901760
      %2260 = vmatmul.mubr.f32.gmra.mxu0 %v2259
      %v2261 = vpop.f32.mrf.mxu0
      %v2262 = vadd.f32 %v1745, %v2261
      %v2263 = vpop.f32.mrf.mxu0
      %2264 = vmatprep.mubr.f32.mxu0 0.0
      %v2265 = vand.u32 %v318, 4294901760
      %v2266 = vsub.f32 %v318, %v2265
      %v2267 = vand.u32 %v2266, 4294901760
      %2268 = vmatmul.mubr.f32.gmra.mxu0 %v2267
      %v2269 = vpop.f32.mrf.mxu0
      %v2270 = vadd.f32 %v1752, %v2269
      %v2271 = vpop.f32.mrf.mxu0
      %2272 = vmatprep.mubr.f32.mxu0 0.0
      %v2273 = vand.u32 %v321, 4294901760
      %v2274 = vsub.f32 %v321, %v2273
      %v2275 = vand.u32 %v2274, 4294901760
      %2276 = vmatmul.mubr.f32.gmra.mxu0 %v2275
      %v2277 = vpop.f32.mrf.mxu0
      %v2278 = vadd.f32 %v1759, %v2277
      %v2279 = vpop.f32.mrf.mxu0
      %2280 = vmatprep.mubr.f32.mxu0 0.0
      %v2281 = vand.u32 %v324, 4294901760
      %v2282 = vsub.f32 %v324, %v2281
      %v2283 = vand.u32 %v2282, 4294901760
      %2284 = vmatmul.mubr.f32.gmra.mxu0 %v2283
      %v2285 = vpop.f32.mrf.mxu0
      %v2286 = vadd.f32 %v1766, %v2285
      %v2287 = vpop.f32.mrf.mxu0
      %2288 = vmatprep.mubr.f32.mxu0 0.0
      %v2289 = vand.u32 %v327, 4294901760
      %v2290 = vsub.f32 %v327, %v2289
      %v2291 = vand.u32 %v2290, 4294901760
      %2292 = vmatmul.mubr.f32.gmra.mxu0 %v2291
      %v2293 = vpop.f32.mrf.mxu0
      %v2294 = vadd.f32 %v1773, %v2293
      %v2295 = vpop.f32.mrf.mxu0
      %2296 = vmatprep.mubr.f32.mxu0 0.0
      %v2297 = vand.u32 %v330, 4294901760
      %v2298 = vsub.f32 %v330, %v2297
      %v2299 = vand.u32 %v2298, 4294901760
      %2300 = vmatmul.mubr.f32.gmra.mxu0 %v2299
      %v2301 = vpop.f32.mrf.mxu0
      %v2302 = vadd.f32 %v1780, %v2301
      %v2303 = vpop.f32.mrf.mxu0
      %2304 = vmatprep.mubr.f32.mxu0 0.0
      %v2305 = vand.u32 %v333, 4294901760
      %v2306 = vsub.f32 %v333, %v2305
      %v2307 = vand.u32 %v2306, 4294901760
      %2308 = vmatmul.mubr.f32.gmra.mxu0 %v2307
      %v2309 = vpop.f32.mrf.mxu0
      %v2310 = vadd.f32 %v1787, %v2309
      %v2311 = vpop.f32.mrf.mxu0
      %2312 = vmatprep.mubr.f32.mxu0 0.0
      %v2313 = vand.u32 %v336, 4294901760
      %v2314 = vsub.f32 %v336, %v2313
      %v2315 = vand.u32 %v2314, 4294901760
      %2316 = vmatmul.mubr.f32.gmra.mxu0 %v2315
      %v2317 = vpop.f32.mrf.mxu0
      %v2318 = vadd.f32 %v1794, %v2317
      %v2319 = vpop.f32.mrf.mxu0
      %2320 = vmatprep.mubr.f32.mxu0 0.0
      %v2321 = vand.u32 %v339, 4294901760
      %v2322 = vsub.f32 %v339, %v2321
      %v2323 = vand.u32 %v2322, 4294901760
      %2324 = vmatmul.mubr.f32.gmra.mxu0 %v2323
      %v2325 = vpop.f32.mrf.mxu0
      %v2326 = vadd.f32 %v1801, %v2325
      %v2327 = vpop.f32.mrf.mxu0
      %2328 = vmatprep.mubr.f32.mxu0 0.0
      %v2329 = vand.u32 %v342, 4294901760
      %v2330 = vsub.f32 %v342, %v2329
      %v2331 = vand.u32 %v2330, 4294901760
      %2332 = vmatmul.mubr.f32.gmra.mxu0 %v2331
      %v2333 = vpop.f32.mrf.mxu0
      %v2334 = vadd.f32 %v1808, %v2333
      %v2335 = vpop.f32.mrf.mxu0
      %2336 = vmatprep.mubr.f32.mxu0 0.0
      %v2337 = vand.u32 %v345, 4294901760
      %v2338 = vsub.f32 %v345, %v2337
      %v2339 = vand.u32 %v2338, 4294901760
      %2340 = vmatmul.mubr.f32.gmra.mxu0 %v2339
      %v2341 = vpop.f32.mrf.mxu0
      %v2342 = vadd.f32 %v1815, %v2341
      %v2343 = vpop.f32.mrf.mxu0
      %2344 = vmatprep.mubr.f32.mxu0 0.0
      %v2345 = vand.u32 %v348, 4294901760
      %v2346 = vsub.f32 %v348, %v2345
      %v2347 = vand.u32 %v2346, 4294901760
      %2348 = vmatmul.mubr.f32.gmra.mxu0 %v2347
      %v2349 = vpop.f32.mrf.mxu0
      %v2350 = vadd.f32 %v1822, %v2349
      %v2351 = vpop.f32.mrf.mxu0
      %2352 = vmatprep.mubr.f32.mxu0 0.0
      %v2353 = vand.u32 %v351, 4294901760
      %v2354 = vsub.f32 %v351, %v2353
      %v2355 = vand.u32 %v2354, 4294901760
      %2356 = vmatmul.mubr.f32.gmra.mxu0 %v2355
      %v2357 = vpop.f32.mrf.mxu0
      %v2358 = vadd.f32 %v1829, %v2357
      %v2359 = vpop.f32.mrf.mxu0
      %2360 = vmatprep.mubr.f32.mxu0 0.0
      %v2361 = vand.u32 %v354, 4294901760
      %v2362 = vsub.f32 %v354, %v2361
      %v2363 = vand.u32 %v2362, 4294901760
      %2364 = vmatmul.mubr.f32.gmra.mxu0 %v2363
      %v2365 = vpop.f32.mrf.mxu0
      %v2366 = vadd.f32 %v1836, %v2365
      %v2367 = vpop.f32.mrf.mxu0
      %2368 = vmatprep.mubr.f32.mxu0 0.0
      %v2369 = vand.u32 %v357, 4294901760
      %v2370 = vsub.f32 %v357, %v2369
      %v2371 = vand.u32 %v2370, 4294901760
      %2372 = vmatmul.mubr.f32.gmra.mxu0 %v2371
      %v2373 = vpop.f32.mrf.mxu0
      %v2374 = vadd.f32 %v1843, %v2373
      %v2375 = vpop.f32.mrf.mxu0
      %2376 = vmatprep.mubr.f32.mxu0 0.0
      %v2377 = vand.u32 %v360, 4294901760
      %v2378 = vsub.f32 %v360, %v2377
      %v2379 = vand.u32 %v2378, 4294901760
      %2380 = vmatmul.mubr.f32.gmra.mxu0 %v2379
      %v2381 = vpop.f32.mrf.mxu0
      %v2382 = vadd.f32 %v1850, %v2381
      %v2383 = vpop.f32.mrf.mxu0
      %2384 = vmatprep.mubr.f32.mxu0 0.0
      %v2385 = vand.u32 %v363, 4294901760
      %v2386 = vsub.f32 %v363, %v2385
      %v2387 = vand.u32 %v2386, 4294901760
      %2388 = vmatmul.mubr.f32.gmra.mxu0 %v2387
      %v2389 = vpop.f32.mrf.mxu0
      %v2390 = vadd.f32 %v1857, %v2389
      %v2391 = vpop.f32.mrf.mxu0
      %2392 = vmatprep.mubr.f32.mxu0 0.0
      %v2393 = vand.u32 %v366, 4294901760
      %v2394 = vsub.f32 %v366, %v2393
      %v2395 = vand.u32 %v2394, 4294901760
      %2396 = vmatmul.mubr.f32.gmra.mxu0 %v2395
      %v2397 = vpop.f32.mrf.mxu0
      %v2398 = vadd.f32 %v1864, %v2397
      %v2399 = vpop.f32.mrf.mxu0
      %2400 = vmatprep.mubr.f32.mxu0 0.0
      %v2401 = vand.u32 %v369, 4294901760
      %v2402 = vsub.f32 %v369, %v2401
      %v2403 = vand.u32 %v2402, 4294901760
      %2404 = vmatmul.mubr.f32.gmra.mxu0 %v2403
      %v2405 = vpop.f32.mrf.mxu0
      %v2406 = vadd.f32 %v1871, %v2405
      %v2407 = vpop.f32.mrf.mxu0
      %2408 = vmatprep.mubr.f32.mxu0 0.0
      %v2409 = vand.u32 %v372, 4294901760
      %v2410 = vsub.f32 %v372, %v2409
      %v2411 = vand.u32 %v2410, 4294901760
      %2412 = vmatmul.mubr.f32.gmra.mxu0 %v2411
      %v2413 = vpop.f32.mrf.mxu0
      %v2414 = vadd.f32 %v1878, %v2413
      %v2415 = vpop.f32.mrf.mxu0
      %2416 = vmatprep.mubr.f32.mxu0 0.0
      %v2417 = vand.u32 %v375, 4294901760
      %v2418 = vsub.f32 %v375, %v2417
      %v2419 = vand.u32 %v2418, 4294901760
      %2420 = vmatmul.mubr.f32.gmra.mxu0 %v2419
      %v2421 = vpop.f32.mrf.mxu0
      %v2422 = vadd.f32 %v1885, %v2421
      %v2423 = vpop.f32.mrf.mxu0
      %2424 = vmatprep.mubr.f32.mxu0 0.0
      %v2425 = vand.u32 %v378, 4294901760
      %v2426 = vsub.f32 %v378, %v2425
      %v2427 = vand.u32 %v2426, 4294901760
      %2428 = vmatmul.mubr.f32.gmra.mxu0 %v2427
      %v2429 = vpop.f32.mrf.mxu0
      %v2430 = vadd.f32 %v1892, %v2429
      %v2431 = vpop.f32.mrf.mxu0
      %2432 = vmatprep.mubr.f32.mxu0 0.0
      %v2433 = vand.u32 %v381, 4294901760
      %v2434 = vsub.f32 %v381, %v2433
      %v2435 = vand.u32 %v2434, 4294901760
      %2436 = vmatmul.mubr.f32.gmra.mxu0 %v2435
      %v2437 = vpop.f32.mrf.mxu0
      %v2438 = vadd.f32 %v1899, %v2437
      %v2439 = vpop.f32.mrf.mxu0
      %2440 = vmatprep.mubr.f32.mxu0 0.0
      %v2441 = vand.u32 %v384, 4294901760
      %v2442 = vsub.f32 %v384, %v2441
      %v2443 = vand.u32 %v2442, 4294901760
      %2444 = vmatmul.mubr.f32.gmra.mxu0 %v2443
      %v2445 = vpop.f32.mrf.mxu0
      %v2446 = vadd.f32 %v1906, %v2445
      %v2447 = vpop.f32.mrf.mxu0
      %2448 = vmatprep.mubr.f32.mxu0 0.0
      %v2449 = vand.u32 %v387, 4294901760
      %v2450 = vsub.f32 %v387, %v2449
      %v2451 = vand.u32 %v2450, 4294901760
      %2452 = vmatmul.mubr.f32.gmra.mxu0 %v2451
      %v2453 = vpop.f32.mrf.mxu0
      %v2454 = vadd.f32 %v1913, %v2453
      %v2455 = vpop.f32.mrf.mxu0
      %2456 = vmatprep.mubr.f32.mxu0 0.0
      %v2457 = vand.u32 %v390, 4294901760
      %v2458 = vsub.f32 %v390, %v2457
      %v2459 = vand.u32 %v2458, 4294901760
      %2460 = vmatmul.mubr.f32.gmra.mxu0 %v2459
      %v2461 = vpop.f32.mrf.mxu0
      %v2462 = vadd.f32 %v1920, %v2461
      %v2463 = vpop.f32.mrf.mxu0
      %2464 = vmatprep.mubr.f32.mxu0 0.0
      %v2465 = vand.u32 %v393, 4294901760
      %v2466 = vsub.f32 %v393, %v2465
      %v2467 = vand.u32 %v2466, 4294901760
      %2468 = vmatmul.mubr.f32.gmra.mxu0 %v2467
      %v2469 = vpop.f32.mrf.mxu0
      %v2470 = vadd.f32 %v1927, %v2469
      %v2471 = vpop.f32.mrf.mxu0
      %2472 = vmatprep.mubr.f32.mxu0 0.0
      %v2473 = vand.u32 %v396, 4294901760
      %v2474 = vsub.f32 %v396, %v2473
      %v2475 = vand.u32 %v2474, 4294901760
      %2476 = vmatmul.mubr.f32.gmra.mxu0 %v2475
      %v2477 = vpop.f32.mrf.mxu0
      %v2478 = vadd.f32 %v1934, %v2477
      %v2479 = vpop.f32.mrf.mxu0
      %2480 = vmatprep.mubr.f32.mxu0 0.0
      %v2481 = vand.u32 %v399, 4294901760
      %v2482 = vsub.f32 %v399, %v2481
      %v2483 = vand.u32 %v2482, 4294901760
      %2484 = vmatmul.mubr.f32.gmra.mxu0 %v2483
      %v2485 = vpop.f32.mrf.mxu0
      %v2486 = vadd.f32 %v1941, %v2485
      %v2487 = vpop.f32.mrf.mxu0
      %2488 = vmatprep.mubr.f32.mxu0 0.0
      %v2489 = vand.u32 %v402, 4294901760
      %v2490 = vsub.f32 %v402, %v2489
      %v2491 = vand.u32 %v2490, 4294901760
      %2492 = vmatmul.mubr.f32.gmra.mxu0 %v2491
      %v2493 = vpop.f32.mrf.mxu0
      %v2494 = vadd.f32 %v1948, %v2493
      %v2495 = vpop.f32.mrf.mxu0
      %2496 = vmatprep.mubr.f32.mxu0 0.0
      %v2497 = vand.u32 %v405, 4294901760
      %v2498 = vsub.f32 %v405, %v2497
      %v2499 = vand.u32 %v2498, 4294901760
      %2500 = vmatmul.mubr.f32.gmra.mxu0 %v2499
      %v2501 = vpop.f32.mrf.mxu0
      %v2502 = vadd.f32 %v1955, %v2501
      %v2503 = vpop.f32.mrf.mxu0
      %2504 = vmatprep.mubr.f32.mxu0 0.0
      %v2505 = vand.u32 %v408, 4294901760
      %v2506 = vsub.f32 %v408, %v2505
      %v2507 = vand.u32 %v2506, 4294901760
      %2508 = vmatmul.mubr.f32.gmra.mxu0 %v2507
      %v2509 = vpop.f32.mrf.mxu0
      %v2510 = vadd.f32 %v1962, %v2509
      %v2511 = vpop.f32.mrf.mxu0
      %2512 = vmatprep.mubr.f32.mxu0 0.0
      %v2513 = vand.u32 %v411, 4294901760
      %v2514 = vsub.f32 %v411, %v2513
      %v2515 = vand.u32 %v2514, 4294901760
      %2516 = vmatmul.mubr.f32.gmra.mxu0 %v2515
      %v2517 = vpop.f32.mrf.mxu0
      %v2518 = vadd.f32 %v1969, %v2517
      %v2519 = vpop.f32.mrf.mxu0
      %2520 = vmatprep.mubr.f32.mxu0 0.0
      %v2521 = vand.u32 %v414, 4294901760
      %v2522 = vsub.f32 %v414, %v2521
      %v2523 = vand.u32 %v2522, 4294901760
      %2524 = vmatmul.mubr.f32.gmra.mxu0 %v2523
      %v2525 = vpop.f32.mrf.mxu0
      %v2526 = vadd.f32 %v1976, %v2525
      %v2527 = vpop.f32.mrf.mxu0
      %2528 = vmatprep.mubr.f32.mxu0 0.0
      %v2529 = vand.u32 %v417, 4294901760
      %v2530 = vsub.f32 %v417, %v2529
      %v2531 = vand.u32 %v2530, 4294901760
      %2532 = vmatmul.mubr.f32.gmra.mxu0 %v2531
      %v2533 = vpop.f32.mrf.mxu0
      %v2534 = vadd.f32 %v1983, %v2533
      %v2535 = vpop.f32.mrf.mxu0
      %2536 = vmatprep.mubr.f32.mxu0 0.0
      %v2537 = vand.u32 %v420, 4294901760
      %v2538 = vsub.f32 %v420, %v2537
      %v2539 = vand.u32 %v2538, 4294901760
      %2540 = vmatmul.mubr.f32.gmra.mxu0 %v2539
      %v2541 = vpop.f32.mrf.mxu0
      %v2542 = vadd.f32 %v1990, %v2541
      %v2543 = vpop.f32.mrf.mxu0
      %2544 = vmatprep.mubr.f32.mxu0 0.0
      %v2545 = vand.u32 %v423, 4294901760
      %v2546 = vsub.f32 %v423, %v2545
      %v2547 = vand.u32 %v2546, 4294901760
      %2548 = vmatmul.mubr.f32.gmra.mxu0 %v2547
      %v2549 = vpop.f32.mrf.mxu0
      %v2550 = vadd.f32 %v1997, %v2549
      %v2551 = vpop.f32.mrf.mxu0
      %2552 = vmatprep.mubr.f32.mxu0 0.0
      %v2553 = vand.u32 %v426, 4294901760
      %v2554 = vsub.f32 %v426, %v2553
      %v2555 = vand.u32 %v2554, 4294901760
      %2556 = vmatmul.mubr.f32.gmra.mxu0 %v2555
      %v2557 = vpop.f32.mrf.mxu0
      %v2558 = vadd.f32 %v2004, %v2557
      %v2559 = vpop.f32.mrf.mxu0
      %2560 = vmatprep.mubr.f32.mxu0 0.0
      %v2561 = vand.u32 %v429, 4294901760
      %v2562 = vsub.f32 %v429, %v2561
      %v2563 = vand.u32 %v2562, 4294901760
      %2564 = vmatmul.mubr.f32.gmra.mxu0 %v2563
      %v2565 = vpop.f32.mrf.mxu0
      %v2566 = vadd.f32 %v2011, %v2565
      %v2567 = vpop.f32.mrf.mxu0
      %2568 = vmatprep.mubr.f32.mxu0 0.0
      %v2569 = vand.u32 %v432, 4294901760
      %v2570 = vsub.f32 %v432, %v2569
      %v2571 = vand.u32 %v2570, 4294901760
      %2572 = vmatmul.mubr.f32.gmra.mxu0 %v2571
      %v2573 = vpop.f32.mrf.mxu0
      %v2574 = vadd.f32 %v2018, %v2573
      %v2575 = vpop.f32.mrf.mxu0
      %2576 = vmatprep.mubr.f32.mxu0 0.0
      %v2577 = vand.u32 %v435, 4294901760
      %v2578 = vsub.f32 %v435, %v2577
      %v2579 = vand.u32 %v2578, 4294901760
      %2580 = vmatmul.mubr.f32.gmra.mxu0 %v2579
      %v2581 = vpop.f32.mrf.mxu0
      %v2582 = vadd.f32 %v2025, %v2581
      %v2583 = vpop.f32.mrf.mxu0
      %2584 = vmatprep.mubr.f32.mxu0 0.0
      %v2585 = vand.u32 %v438, 4294901760
      %v2586 = vsub.f32 %v438, %v2585
      %v2587 = vand.u32 %v2586, 4294901760
      %2588 = vmatmul.mubr.f32.gmra.mxu0 %v2587
      %v2589 = vpop.f32.mrf.mxu0
      %v2590 = vadd.f32 %v2032, %v2589
      %v2591 = vpop.f32.mrf.mxu0
      %2592 = vmatprep.mubr.f32.mxu0 0.0
      %v2593 = vand.u32 %v441, 4294901760
      %v2594 = vsub.f32 %v441, %v2593
      %v2595 = vand.u32 %v2594, 4294901760
      %2596 = vmatmul.mubr.f32.gmra.mxu0 %v2595
      %v2597 = vpop.f32.mrf.mxu0
      %v2598 = vadd.f32 %v2039, %v2597
      %v2599 = vpop.f32.mrf.mxu0
      %2600 = vmatprep.mubr.f32.mxu0 0.0
      %v2601 = vand.u32 %v444, 4294901760
      %v2602 = vsub.f32 %v444, %v2601
      %v2603 = vand.u32 %v2602, 4294901760
      %2604 = vmatmul.mubr.f32.gmra.mxu0 %v2603
      %v2605 = vpop.f32.mrf.mxu0
      %v2606 = vadd.f32 %v2046, %v2605
      %v2607 = vpop.f32.mrf.mxu0
      %2608 = vmatprep.mubr.f32.mxu0 0.0
      %v2609 = vand.u32 %v447, 4294901760
      %v2610 = vsub.f32 %v447, %v2609
      %v2611 = vand.u32 %v2610, 4294901760
      %2612 = vmatmul.mubr.f32.gmra.mxu0 %v2611
      %v2613 = vpop.f32.mrf.mxu0
      %v2614 = vadd.f32 %v2053, %v2613
      %v2615 = vpop.f32.mrf.mxu0
      %2616 = vmatprep.mubr.f32.mxu0 0.0
      %v2617 = vand.u32 %v450, 4294901760
      %v2618 = vsub.f32 %v450, %v2617
      %v2619 = vand.u32 %v2618, 4294901760
      %2620 = vmatmul.mubr.f32.gmra.mxu0 %v2619
      %v2621 = vpop.f32.mrf.mxu0
      %v2622 = vadd.f32 %v2060, %v2621
      %v2623 = vpop.f32.mrf.mxu0
      %2624 = vmatprep.mubr.f32.mxu0 0.0
      %v2625 = vand.u32 %v453, 4294901760
      %v2626 = vsub.f32 %v453, %v2625
      %v2627 = vand.u32 %v2626, 4294901760
      %2628 = vmatmul.mubr.f32.gmra.mxu0 %v2627
      %v2629 = vpop.f32.mrf.mxu0
      %v2630 = vadd.f32 %v2067, %v2629
      %v2631 = vpop.f32.mrf.mxu0
      %2632 = vmatprep.mubr.f32.mxu0 0.0
      %v2633 = vand.u32 %v456, 4294901760
      %v2634 = vsub.f32 %v456, %v2633
      %v2635 = vand.u32 %v2634, 4294901760
      %2636 = vmatmul.mubr.f32.gmra.mxu0 %v2635
      %v2637 = vpop.f32.mrf.mxu0
      %v2638 = vadd.f32 %v2074, %v2637
      %v2639 = vpop.f32.mrf.mxu0
      %2640 = vmatprep.mubr.f32.mxu0 0.0
      %v2641 = vand.u32 %v459, 4294901760
      %v2642 = vsub.f32 %v459, %v2641
      %v2643 = vand.u32 %v2642, 4294901760
      %2644 = vmatmul.mubr.f32.gmra.mxu0 %v2643
      %v2645 = vpop.f32.mrf.mxu0
      %v2646 = vadd.f32 %v2081, %v2645
      %v2647 = vpop.f32.mrf.mxu0
      %2648 = vmatprep.mubr.f32.mxu0 0.0
      %v2649 = vand.u32 %v462, 4294901760
      %v2650 = vsub.f32 %v462, %v2649
      %v2651 = vand.u32 %v2650, 4294901760
      %2652 = vmatmul.mubr.f32.gmra.mxu0 %v2651
      %v2653 = vpop.f32.mrf.mxu0
      %v2654 = vadd.f32 %v2088, %v2653
      %v2655 = vpop.f32.mrf.mxu0
      %2656 = vmatprep.mubr.f32.mxu0 0.0
      %v2657 = vand.u32 %v465, 4294901760
      %v2658 = vsub.f32 %v465, %v2657
      %v2659 = vand.u32 %v2658, 4294901760
      %2660 = vmatmul.mubr.f32.gmra.mxu0 %v2659
      %v2661 = vpop.f32.mrf.mxu0
      %v2662 = vadd.f32 %v2095, %v2661
      %v2663 = vpop.f32.mrf.mxu0
      %2664 = vmatprep.mubr.f32.mxu0 0.0
      %v2665 = vand.u32 %v468, 4294901760
      %v2666 = vsub.f32 %v468, %v2665
      %v2667 = vand.u32 %v2666, 4294901760
      %2668 = vmatmul.mubr.f32.gmra.mxu0 %v2667
      %v2669 = vpop.f32.mrf.mxu0
      %v2670 = vadd.f32 %v2102, %v2669
      %v2671 = vpop.f32.mrf.mxu0
      %2672 = vmatprep.mubr.f32.mxu0 0.0
      %v2673 = vand.u32 %v471, 4294901760
      %v2674 = vsub.f32 %v471, %v2673
      %v2675 = vand.u32 %v2674, 4294901760
      %2676 = vmatmul.mubr.f32.gmra.mxu0 %v2675
      %v2677 = vpop.f32.mrf.mxu0
      %v2678 = vadd.f32 %v2109, %v2677
      %v2679 = vpop.f32.mrf.mxu0
      %2680 = vmatprep.mubr.f32.mxu0 0.0
      %v2681 = vand.u32 %v474, 4294901760
      %v2682 = vsub.f32 %v474, %v2681
      %v2683 = vand.u32 %v2682, 4294901760
      %2684 = vmatmul.mubr.f32.gmra.mxu0 %v2683
      %v2685 = vpop.f32.mrf.mxu0
      %v2686 = vadd.f32 %v2116, %v2685
      %v2687 = vpop.f32.mrf.mxu0
      %2688 = vmatprep.mubr.f32.mxu0 0.0
      %v2689 = vand.u32 %v477, 4294901760
      %v2690 = vsub.f32 %v477, %v2689
      %v2691 = vand.u32 %v2690, 4294901760
      %2692 = vmatmul.mubr.f32.gmra.mxu0 %v2691
      %v2693 = vpop.f32.mrf.mxu0
      %v2694 = vadd.f32 %v2123, %v2693
      %v2695 = vpop.f32.mrf.mxu0
      %2696 = vmatprep.mubr.f32.mxu0 0.0
      %v2697 = vand.u32 %v480, 4294901760
      %v2698 = vsub.f32 %v480, %v2697
      %v2699 = vand.u32 %v2698, 4294901760
      %2700 = vmatmul.mubr.f32.gmra.mxu0 %v2699
      %v2701 = vpop.f32.mrf.mxu0
      %v2702 = vadd.f32 %v2130, %v2701
      %v2703 = vpop.f32.mrf.mxu0
      %2704 = vmatprep.mubr.f32.mxu0 0.0
      %v2705 = vand.u32 %v483, 4294901760
      %v2706 = vsub.f32 %v483, %v2705
      %v2707 = vand.u32 %v2706, 4294901760
      %2708 = vmatmul.mubr.f32.gmra.mxu0 %v2707
      %v2709 = vpop.f32.mrf.mxu0
      %v2710 = vadd.f32 %v2137, %v2709
      %v2711 = vpop.f32.mrf.mxu0
      %2712 = vmatprep.mubr.f32.mxu0 0.0
      %v2713 = vand.u32 %v486, 4294901760
      %v2714 = vsub.f32 %v486, %v2713
      %v2715 = vand.u32 %v2714, 4294901760
      %2716 = vmatmul.mubr.f32.gmra.mxu0 %v2715
      %v2717 = vpop.f32.mrf.mxu0
      %v2718 = vadd.f32 %v2144, %v2717
      %v2719 = vpop.f32.mrf.mxu0
      %2720 = vmatprep.mubr.f32.mxu0 0.0
      %v2721 = vand.u32 %v489, 4294901760
      %v2722 = vsub.f32 %v489, %v2721
      %v2723 = vand.u32 %v2722, 4294901760
      %2724 = vmatmul.mubr.f32.gmra.mxu0 %v2723
      %v2725 = vpop.f32.mrf.mxu0
      %v2726 = vadd.f32 %v2151, %v2725
      %v2727 = vpop.f32.mrf.mxu0
      %2728 = vmatprep.mubr.f32.mxu0 0.0
      %v2729 = vand.u32 %v492, 4294901760
      %v2730 = vsub.f32 %v492, %v2729
      %v2731 = vand.u32 %v2730, 4294901760
      %2732 = vmatmul.mubr.f32.gmra.mxu0 %v2731
      %v2733 = vpop.f32.mrf.mxu0
      %v2734 = vadd.f32 %v2158, %v2733
      %v2735 = vpop.f32.mrf.mxu0
      %2736 = vmatprep.mubr.f32.mxu0 0.0
      %v2737 = vand.u32 %v495, 4294901760
      %v2738 = vsub.f32 %v495, %v2737
      %v2739 = vand.u32 %v2738, 4294901760
      %2740 = vmatmul.mubr.f32.gmra.mxu0 %v2739
      %v2741 = vpop.f32.mrf.mxu0
      %v2742 = vadd.f32 %v2165, %v2741
      %v2743 = vpop.f32.mrf.mxu0
      %2744 = vmatprep.mubr.f32.mxu0 0.0
      %v2745 = vand.u32 %v498, 4294901760
      %v2746 = vsub.f32 %v498, %v2745
      %v2747 = vand.u32 %v2746, 4294901760
      %2748 = vmatmul.mubr.f32.gmra.mxu0 %v2747
      %v2749 = vpop.f32.mrf.mxu0
      %v2750 = vadd.f32 %v2172, %v2749
      %v2751 = vpop.f32.mrf.mxu0
      %2752 = vdwg.mxu0
      %2753 = vmatprep.subr.mxu0 0.0
      %2754 = vmatpush1.msra.mxu0 0.0
      %2755 = vmatprep.subr.mxu0 0.0
      %2756 = vmatpush1.msra.mxu0 0.0
      %2757 = vmatprep.subr.mxu0 0.0
      %2758 = vmatpush1.msra.mxu0 0.0
      %2759 = vmatprep.subr.mxu0 0.0
      %2760 = vmatpush1.msra.mxu0 0.0
      %2761 = vmatprep.subr.mxu0 0.0
      %2762 = vmatpush1.msra.mxu0 0.0
      %2763 = vmatprep.subr.mxu0 0.0
      %2764 = vmatpush1.msra.mxu0 0.0
      %2765 = vmatprep.subr.mxu0 0.0
      %2766 = vmatpush1.msra.mxu0 0.0
      %2767 = vmatprep.subr.mxu0 0.0
      %2768 = vmatpush1.msra.mxu0 0.0
      %2769 = vmatprep.subr.mxu0 0.0
      %2770 = vmatpush1.msra.mxu0 0.0
      %2771 = vmatprep.subr.mxu0 0.0
      %2772 = vmatpush1.msra.mxu0 0.0
      %2773 = vmatprep.subr.mxu0 0.0
      %2774 = vmatpush1.msra.mxu0 0.0
      %2775 = vmatprep.subr.mxu0 0.0
      %2776 = vmatpush1.msra.mxu0 0.0
      %2777 = vmatprep.subr.mxu0 0.0
      %2778 = vmatpush1.msra.mxu0 0.0
      %2779 = vmatprep.subr.mxu0 0.0
      %2780 = vmatpush1.msra.mxu0 0.0
      %2781 = vmatprep.subr.mxu0 0.0
      %2782 = vmatpush1.msra.mxu0 0.0
      %2783 = vmatprep.subr.mxu0 0.0
      %v2784 = vand.u32 %v306, 4294901760
      %v2785 = vsub.f32 %v306, %v2784
      %v2786 = vand.u32 %v2785, 4294901760
      %2787 = vmatpush1.msra.mxu0 %v2786
      %2788 = vmatprep.subr.mxu0 0.0
      %2789 = vmatpush2.msra.mxu0 0.0
      %2790 = vmatprep.subr.mxu0 0.0
      %2791 = vmatpush2.msra.mxu0 0.0
      %2792 = vmatprep.subr.mxu0 0.0
      %2793 = vmatpush2.msra.mxu0 0.0
      %2794 = vmatprep.subr.mxu0 0.0
      %2795 = vmatpush2.msra.mxu0 0.0
      %2796 = vmatprep.subr.mxu0 0.0
      %2797 = vmatpush2.msra.mxu0 0.0
      %2798 = vmatprep.subr.mxu0 0.0
      %2799 = vmatpush2.msra.mxu0 0.0
      %2800 = vmatprep.subr.mxu0 0.0
      %2801 = vmatpush2.msra.mxu0 0.0
      %2802 = vmatprep.subr.mxu0 0.0
      %2803 = vmatpush2.msra.mxu0 0.0
      %2804 = vmatprep.subr.mxu0 0.0
      %2805 = vmatpush2.msra.mxu0 0.0
      %2806 = vmatprep.subr.mxu0 0.0
      %2807 = vmatpush2.msra.mxu0 0.0
      %2808 = vmatprep.subr.mxu0 0.0
      %2809 = vmatpush2.msra.mxu0 0.0
      %2810 = vmatprep.subr.mxu0 0.0
      %2811 = vmatpush2.msra.mxu0 0.0
      %2812 = vmatprep.subr.mxu0 0.0
      %2813 = vmatpush2.msra.mxu0 0.0
      %2814 = vmatprep.subr.mxu0 0.0
      %2815 = vmatpush2.msra.mxu0 0.0
      %2816 = vmatprep.subr.mxu0 0.0
      %2817 = vmatpush2.msra.mxu0 0.0
      %2818 = vmatprep.subr.mxu0 0.0
      %2819 = vmatpush2.msra.mxu0 0.0
      %2820 = vmatprep.mubr.f32.mxu0 0.0
      %v2821 = vand.u32 %v309, 4294901760
      %2822 = vmatmul.mubr.f32.gmra.mxu0 %v2821
      %v2823 = vpop.f32.mrf.mxu0
      %v2824 = vadd.f32 %v2246, %v2823
      %v2825 = vpop.f32.mrf.mxu0
      %2826 = vmatprep.mubr.f32.mxu0 0.0
      %v2827 = vand.u32 %v312, 4294901760
      %2828 = vmatmul.mubr.f32.gmra.mxu0 %v2827
      %v2829 = vpop.f32.mrf.mxu0
      %v2830 = vadd.f32 %v2254, %v2829
      %v2831 = vpop.f32.mrf.mxu0
      %2832 = vmatprep.mubr.f32.mxu0 0.0
      %v2833 = vand.u32 %v315, 4294901760
      %2834 = vmatmul.mubr.f32.gmra.mxu0 %v2833
      %v2835 = vpop.f32.mrf.mxu0
      %v2836 = vadd.f32 %v2262, %v2835
      %v2837 = vpop.f32.mrf.mxu0
      %2838 = vmatprep.mubr.f32.mxu0 0.0
      %v2839 = vand.u32 %v318, 4294901760
      %2840 = vmatmul.mubr.f32.gmra.mxu0 %v2839
      %v2841 = vpop.f32.mrf.mxu0
      %v2842 = vadd.f32 %v2270, %v2841
      %v2843 = vpop.f32.mrf.mxu0
      %2844 = vmatprep.mubr.f32.mxu0 0.0
      %v2845 = vand.u32 %v321, 4294901760
      %2846 = vmatmul.mubr.f32.gmra.mxu0 %v2845
      %v2847 = vpop.f32.mrf.mxu0
      %v2848 = vadd.f32 %v2278, %v2847
      %v2849 = vpop.f32.mrf.mxu0
      %2850 = vmatprep.mubr.f32.mxu0 0.0
      %v2851 = vand.u32 %v324, 4294901760
      %2852 = vmatmul.mubr.f32.gmra.mxu0 %v2851
      %v2853 = vpop.f32.mrf.mxu0
      %v2854 = vadd.f32 %v2286, %v2853
      %v2855 = vpop.f32.mrf.mxu0
      %2856 = vmatprep.mubr.f32.mxu0 0.0
      %v2857 = vand.u32 %v327, 4294901760
      %2858 = vmatmul.mubr.f32.gmra.mxu0 %v2857
      %v2859 = vpop.f32.mrf.mxu0
      %v2860 = vadd.f32 %v2294, %v2859
      %v2861 = vpop.f32.mrf.mxu0
      %2862 = vmatprep.mubr.f32.mxu0 0.0
      %v2863 = vand.u32 %v330, 4294901760
      %2864 = vmatmul.mubr.f32.gmra.mxu0 %v2863
      %v2865 = vpop.f32.mrf.mxu0
      %v2866 = vadd.f32 %v2302, %v2865
      %v2867 = vpop.f32.mrf.mxu0
      %2868 = vmatprep.mubr.f32.mxu0 0.0
      %v2869 = vand.u32 %v333, 4294901760
      %2870 = vmatmul.mubr.f32.gmra.mxu0 %v2869
      %v2871 = vpop.f32.mrf.mxu0
      %v2872 = vadd.f32 %v2310, %v2871
      %v2873 = vpop.f32.mrf.mxu0
      %2874 = vmatprep.mubr.f32.mxu0 0.0
      %v2875 = vand.u32 %v336, 4294901760
      %2876 = vmatmul.mubr.f32.gmra.mxu0 %v2875
      %v2877 = vpop.f32.mrf.mxu0
      %v2878 = vadd.f32 %v2318, %v2877
      %v2879 = vpop.f32.mrf.mxu0
      %2880 = vmatprep.mubr.f32.mxu0 0.0
      %v2881 = vand.u32 %v339, 4294901760
      %2882 = vmatmul.mubr.f32.gmra.mxu0 %v2881
      %v2883 = vpop.f32.mrf.mxu0
      %v2884 = vadd.f32 %v2326, %v2883
      %v2885 = vpop.f32.mrf.mxu0
      %2886 = vmatprep.mubr.f32.mxu0 0.0
      %v2887 = vand.u32 %v342, 4294901760
      %2888 = vmatmul.mubr.f32.gmra.mxu0 %v2887
      %v2889 = vpop.f32.mrf.mxu0
      %v2890 = vadd.f32 %v2334, %v2889
      %v2891 = vpop.f32.mrf.mxu0
      %2892 = vmatprep.mubr.f32.mxu0 0.0
      %v2893 = vand.u32 %v345, 4294901760
      %2894 = vmatmul.mubr.f32.gmra.mxu0 %v2893
      %v2895 = vpop.f32.mrf.mxu0
      %v2896 = vadd.f32 %v2342, %v2895
      %v2897 = vpop.f32.mrf.mxu0
      %2898 = vmatprep.mubr.f32.mxu0 0.0
      %v2899 = vand.u32 %v348, 4294901760
      %2900 = vmatmul.mubr.f32.gmra.mxu0 %v2899
      %v2901 = vpop.f32.mrf.mxu0
      %v2902 = vadd.f32 %v2350, %v2901
      %v2903 = vpop.f32.mrf.mxu0
      %2904 = vmatprep.mubr.f32.mxu0 0.0
      %v2905 = vand.u32 %v351, 4294901760
      %2906 = vmatmul.mubr.f32.gmra.mxu0 %v2905
      %v2907 = vpop.f32.mrf.mxu0
      %v2908 = vadd.f32 %v2358, %v2907
      %v2909 = vpop.f32.mrf.mxu0
      %2910 = vmatprep.mubr.f32.mxu0 0.0
      %v2911 = vand.u32 %v354, 4294901760
      %2912 = vmatmul.mubr.f32.gmra.mxu0 %v2911
      %v2913 = vpop.f32.mrf.mxu0
      %v2914 = vadd.f32 %v2366, %v2913
      %v2915 = vpop.f32.mrf.mxu0
      %2916 = vmatprep.mubr.f32.mxu0 0.0
      %v2917 = vand.u32 %v357, 4294901760
      %2918 = vmatmul.mubr.f32.gmra.mxu0 %v2917
      %v2919 = vpop.f32.mrf.mxu0
      %v2920 = vadd.f32 %v2374, %v2919
      %v2921 = vpop.f32.mrf.mxu0
      %2922 = vmatprep.mubr.f32.mxu0 0.0
      %v2923 = vand.u32 %v360, 4294901760
      %2924 = vmatmul.mubr.f32.gmra.mxu0 %v2923
      %v2925 = vpop.f32.mrf.mxu0
      %v2926 = vadd.f32 %v2382, %v2925
      %v2927 = vpop.f32.mrf.mxu0
      %2928 = vmatprep.mubr.f32.mxu0 0.0
      %v2929 = vand.u32 %v363, 4294901760
      %2930 = vmatmul.mubr.f32.gmra.mxu0 %v2929
      %v2931 = vpop.f32.mrf.mxu0
      %v2932 = vadd.f32 %v2390, %v2931
      %v2933 = vpop.f32.mrf.mxu0
      %2934 = vmatprep.mubr.f32.mxu0 0.0
      %v2935 = vand.u32 %v366, 4294901760
      %2936 = vmatmul.mubr.f32.gmra.mxu0 %v2935
      %v2937 = vpop.f32.mrf.mxu0
      %v2938 = vadd.f32 %v2398, %v2937
      %v2939 = vpop.f32.mrf.mxu0
      %2940 = vmatprep.mubr.f32.mxu0 0.0
      %v2941 = vand.u32 %v369, 4294901760
      %2942 = vmatmul.mubr.f32.gmra.mxu0 %v2941
      %v2943 = vpop.f32.mrf.mxu0
      %v2944 = vadd.f32 %v2406, %v2943
      %v2945 = vpop.f32.mrf.mxu0
      %2946 = vmatprep.mubr.f32.mxu0 0.0
      %v2947 = vand.u32 %v372, 4294901760
      %2948 = vmatmul.mubr.f32.gmra.mxu0 %v2947
      %v2949 = vpop.f32.mrf.mxu0
      %v2950 = vadd.f32 %v2414, %v2949
      %v2951 = vpop.f32.mrf.mxu0
      %2952 = vmatprep.mubr.f32.mxu0 0.0
      %v2953 = vand.u32 %v375, 4294901760
      %2954 = vmatmul.mubr.f32.gmra.mxu0 %v2953
      %v2955 = vpop.f32.mrf.mxu0
      %v2956 = vadd.f32 %v2422, %v2955
      %v2957 = vpop.f32.mrf.mxu0
      %2958 = vmatprep.mubr.f32.mxu0 0.0
      %v2959 = vand.u32 %v378, 4294901760
      %2960 = vmatmul.mubr.f32.gmra.mxu0 %v2959
      %v2961 = vpop.f32.mrf.mxu0
      %v2962 = vadd.f32 %v2430, %v2961
      %v2963 = vpop.f32.mrf.mxu0
      %2964 = vmatprep.mubr.f32.mxu0 0.0
      %v2965 = vand.u32 %v381, 4294901760
      %2966 = vmatmul.mubr.f32.gmra.mxu0 %v2965
      %v2967 = vpop.f32.mrf.mxu0
      %v2968 = vadd.f32 %v2438, %v2967
      %v2969 = vpop.f32.mrf.mxu0
      %2970 = vmatprep.mubr.f32.mxu0 0.0
      %v2971 = vand.u32 %v384, 4294901760
      %2972 = vmatmul.mubr.f32.gmra.mxu0 %v2971
      %v2973 = vpop.f32.mrf.mxu0
      %v2974 = vadd.f32 %v2446, %v2973
      %v2975 = vpop.f32.mrf.mxu0
      %2976 = vmatprep.mubr.f32.mxu0 0.0
      %v2977 = vand.u32 %v387, 4294901760
      %2978 = vmatmul.mubr.f32.gmra.mxu0 %v2977
      %v2979 = vpop.f32.mrf.mxu0
      %v2980 = vadd.f32 %v2454, %v2979
      %v2981 = vpop.f32.mrf.mxu0
      %2982 = vmatprep.mubr.f32.mxu0 0.0
      %v2983 = vand.u32 %v390, 4294901760
      %2984 = vmatmul.mubr.f32.gmra.mxu0 %v2983
      %v2985 = vpop.f32.mrf.mxu0
      %v2986 = vadd.f32 %v2462, %v2985
      %v2987 = vpop.f32.mrf.mxu0
      %2988 = vmatprep.mubr.f32.mxu0 0.0
      %v2989 = vand.u32 %v393, 4294901760
      %2990 = vmatmul.mubr.f32.gmra.mxu0 %v2989
      %v2991 = vpop.f32.mrf.mxu0
      %v2992 = vadd.f32 %v2470, %v2991
      %v2993 = vpop.f32.mrf.mxu0
      %2994 = vmatprep.mubr.f32.mxu0 0.0
      %v2995 = vand.u32 %v396, 4294901760
      %2996 = vmatmul.mubr.f32.gmra.mxu0 %v2995
      %v2997 = vpop.f32.mrf.mxu0
      %v2998 = vadd.f32 %v2478, %v2997
      %v2999 = vpop.f32.mrf.mxu0
      %3000 = vmatprep.mubr.f32.mxu0 0.0
      %v3001 = vand.u32 %v399, 4294901760
      %3002 = vmatmul.mubr.f32.gmra.mxu0 %v3001
      %v3003 = vpop.f32.mrf.mxu0
      %v3004 = vadd.f32 %v2486, %v3003
      %v3005 = vpop.f32.mrf.mxu0
      %3006 = vmatprep.mubr.f32.mxu0 0.0
      %v3007 = vand.u32 %v402, 4294901760
      %3008 = vmatmul.mubr.f32.gmra.mxu0 %v3007
      %v3009 = vpop.f32.mrf.mxu0
      %v3010 = vadd.f32 %v2494, %v3009
      %v3011 = vpop.f32.mrf.mxu0
      %3012 = vmatprep.mubr.f32.mxu0 0.0
      %v3013 = vand.u32 %v405, 4294901760
      %3014 = vmatmul.mubr.f32.gmra.mxu0 %v3013
      %v3015 = vpop.f32.mrf.mxu0
      %v3016 = vadd.f32 %v2502, %v3015
      %v3017 = vpop.f32.mrf.mxu0
      %3018 = vmatprep.mubr.f32.mxu0 0.0
      %v3019 = vand.u32 %v408, 4294901760
      %3020 = vmatmul.mubr.f32.gmra.mxu0 %v3019
      %v3021 = vpop.f32.mrf.mxu0
      %v3022 = vadd.f32 %v2510, %v3021
      %v3023 = vpop.f32.mrf.mxu0
      %3024 = vmatprep.mubr.f32.mxu0 0.0
      %v3025 = vand.u32 %v411, 4294901760
      %3026 = vmatmul.mubr.f32.gmra.mxu0 %v3025
      %v3027 = vpop.f32.mrf.mxu0
      %v3028 = vadd.f32 %v2518, %v3027
      %v3029 = vpop.f32.mrf.mxu0
      %3030 = vmatprep.mubr.f32.mxu0 0.0
      %v3031 = vand.u32 %v414, 4294901760
      %3032 = vmatmul.mubr.f32.gmra.mxu0 %v3031
      %v3033 = vpop.f32.mrf.mxu0
      %v3034 = vadd.f32 %v2526, %v3033
      %v3035 = vpop.f32.mrf.mxu0
      %3036 = vmatprep.mubr.f32.mxu0 0.0
      %v3037 = vand.u32 %v417, 4294901760
      %3038 = vmatmul.mubr.f32.gmra.mxu0 %v3037
      %v3039 = vpop.f32.mrf.mxu0
      %v3040 = vadd.f32 %v2534, %v3039
      %v3041 = vpop.f32.mrf.mxu0
      %3042 = vmatprep.mubr.f32.mxu0 0.0
      %v3043 = vand.u32 %v420, 4294901760
      %3044 = vmatmul.mubr.f32.gmra.mxu0 %v3043
      %v3045 = vpop.f32.mrf.mxu0
      %v3046 = vadd.f32 %v2542, %v3045
      %v3047 = vpop.f32.mrf.mxu0
      %3048 = vmatprep.mubr.f32.mxu0 0.0
      %v3049 = vand.u32 %v423, 4294901760
      %3050 = vmatmul.mubr.f32.gmra.mxu0 %v3049
      %v3051 = vpop.f32.mrf.mxu0
      %v3052 = vadd.f32 %v2550, %v3051
      %v3053 = vpop.f32.mrf.mxu0
      %3054 = vmatprep.mubr.f32.mxu0 0.0
      %v3055 = vand.u32 %v426, 4294901760
      %3056 = vmatmul.mubr.f32.gmra.mxu0 %v3055
      %v3057 = vpop.f32.mrf.mxu0
      %v3058 = vadd.f32 %v2558, %v3057
      %v3059 = vpop.f32.mrf.mxu0
      %3060 = vmatprep.mubr.f32.mxu0 0.0
      %v3061 = vand.u32 %v429, 4294901760
      %3062 = vmatmul.mubr.f32.gmra.mxu0 %v3061
      %v3063 = vpop.f32.mrf.mxu0
      %v3064 = vadd.f32 %v2566, %v3063
      %v3065 = vpop.f32.mrf.mxu0
      %3066 = vmatprep.mubr.f32.mxu0 0.0
      %v3067 = vand.u32 %v432, 4294901760
      %3068 = vmatmul.mubr.f32.gmra.mxu0 %v3067
      %v3069 = vpop.f32.mrf.mxu0
      %v3070 = vadd.f32 %v2574, %v3069
      %v3071 = vpop.f32.mrf.mxu0
      %3072 = vmatprep.mubr.f32.mxu0 0.0
      %v3073 = vand.u32 %v435, 4294901760
      %3074 = vmatmul.mubr.f32.gmra.mxu0 %v3073
      %v3075 = vpop.f32.mrf.mxu0
      %v3076 = vadd.f32 %v2582, %v3075
      %v3077 = vpop.f32.mrf.mxu0
      %3078 = vmatprep.mubr.f32.mxu0 0.0
      %v3079 = vand.u32 %v438, 4294901760
      %3080 = vmatmul.mubr.f32.gmra.mxu0 %v3079
      %v3081 = vpop.f32.mrf.mxu0
      %v3082 = vadd.f32 %v2590, %v3081
      %v3083 = vpop.f32.mrf.mxu0
      %3084 = vmatprep.mubr.f32.mxu0 0.0
      %v3085 = vand.u32 %v441, 4294901760
      %3086 = vmatmul.mubr.f32.gmra.mxu0 %v3085
      %v3087 = vpop.f32.mrf.mxu0
      %v3088 = vadd.f32 %v2598, %v3087
      %v3089 = vpop.f32.mrf.mxu0
      %3090 = vmatprep.mubr.f32.mxu0 0.0
      %v3091 = vand.u32 %v444, 4294901760
      %3092 = vmatmul.mubr.f32.gmra.mxu0 %v3091
      %v3093 = vpop.f32.mrf.mxu0
      %v3094 = vadd.f32 %v2606, %v3093
      %v3095 = vpop.f32.mrf.mxu0
      %3096 = vmatprep.mubr.f32.mxu0 0.0
      %v3097 = vand.u32 %v447, 4294901760
      %3098 = vmatmul.mubr.f32.gmra.mxu0 %v3097
      %v3099 = vpop.f32.mrf.mxu0
      %v3100 = vadd.f32 %v2614, %v3099
      %v3101 = vpop.f32.mrf.mxu0
      %3102 = vmatprep.mubr.f32.mxu0 0.0
      %v3103 = vand.u32 %v450, 4294901760
      %3104 = vmatmul.mubr.f32.gmra.mxu0 %v3103
      %v3105 = vpop.f32.mrf.mxu0
      %v3106 = vadd.f32 %v2622, %v3105
      %v3107 = vpop.f32.mrf.mxu0
      %3108 = vmatprep.mubr.f32.mxu0 0.0
      %v3109 = vand.u32 %v453, 4294901760
      %3110 = vmatmul.mubr.f32.gmra.mxu0 %v3109
      %v3111 = vpop.f32.mrf.mxu0
      %v3112 = vadd.f32 %v2630, %v3111
      %v3113 = vpop.f32.mrf.mxu0
      %3114 = vmatprep.mubr.f32.mxu0 0.0
      %v3115 = vand.u32 %v456, 4294901760
      %3116 = vmatmul.mubr.f32.gmra.mxu0 %v3115
      %v3117 = vpop.f32.mrf.mxu0
      %v3118 = vadd.f32 %v2638, %v3117
      %v3119 = vpop.f32.mrf.mxu0
      %3120 = vmatprep.mubr.f32.mxu0 0.0
      %v3121 = vand.u32 %v459, 4294901760
      %3122 = vmatmul.mubr.f32.gmra.mxu0 %v3121
      %v3123 = vpop.f32.mrf.mxu0
      %v3124 = vadd.f32 %v2646, %v3123
      %v3125 = vpop.f32.mrf.mxu0
      %3126 = vmatprep.mubr.f32.mxu0 0.0
      %v3127 = vand.u32 %v462, 4294901760
      %3128 = vmatmul.mubr.f32.gmra.mxu0 %v3127
      %v3129 = vpop.f32.mrf.mxu0
      %v3130 = vadd.f32 %v2654, %v3129
      %v3131 = vpop.f32.mrf.mxu0
      %3132 = vmatprep.mubr.f32.mxu0 0.0
      %v3133 = vand.u32 %v465, 4294901760
      %3134 = vmatmul.mubr.f32.gmra.mxu0 %v3133
      %v3135 = vpop.f32.mrf.mxu0
      %v3136 = vadd.f32 %v2662, %v3135
      %v3137 = vpop.f32.mrf.mxu0
      %3138 = vmatprep.mubr.f32.mxu0 0.0
      %v3139 = vand.u32 %v468, 4294901760
      %3140 = vmatmul.mubr.f32.gmra.mxu0 %v3139
      %v3141 = vpop.f32.mrf.mxu0
      %v3142 = vadd.f32 %v2670, %v3141
      %v3143 = vpop.f32.mrf.mxu0
      %3144 = vmatprep.mubr.f32.mxu0 0.0
      %v3145 = vand.u32 %v471, 4294901760
      %3146 = vmatmul.mubr.f32.gmra.mxu0 %v3145
      %v3147 = vpop.f32.mrf.mxu0
      %v3148 = vadd.f32 %v2678, %v3147
      %v3149 = vpop.f32.mrf.mxu0
      %3150 = vmatprep.mubr.f32.mxu0 0.0
      %v3151 = vand.u32 %v474, 4294901760
      %3152 = vmatmul.mubr.f32.gmra.mxu0 %v3151
      %v3153 = vpop.f32.mrf.mxu0
      %v3154 = vadd.f32 %v2686, %v3153
      %v3155 = vpop.f32.mrf.mxu0
      %3156 = vmatprep.mubr.f32.mxu0 0.0
      %v3157 = vand.u32 %v477, 4294901760
      %3158 = vmatmul.mubr.f32.gmra.mxu0 %v3157
      %v3159 = vpop.f32.mrf.mxu0
      %v3160 = vadd.f32 %v2694, %v3159
      %v3161 = vpop.f32.mrf.mxu0
      %3162 = vmatprep.mubr.f32.mxu0 0.0
      %v3163 = vand.u32 %v480, 4294901760
      %3164 = vmatmul.mubr.f32.gmra.mxu0 %v3163
      %v3165 = vpop.f32.mrf.mxu0
      %v3166 = vadd.f32 %v2702, %v3165
      %v3167 = vpop.f32.mrf.mxu0
      %3168 = vmatprep.mubr.f32.mxu0 0.0
      %v3169 = vand.u32 %v483, 4294901760
      %3170 = vmatmul.mubr.f32.gmra.mxu0 %v3169
      %v3171 = vpop.f32.mrf.mxu0
      %v3172 = vadd.f32 %v2710, %v3171
      %v3173 = vpop.f32.mrf.mxu0
      %3174 = vmatprep.mubr.f32.mxu0 0.0
      %v3175 = vand.u32 %v486, 4294901760
      %3176 = vmatmul.mubr.f32.gmra.mxu0 %v3175
      %v3177 = vpop.f32.mrf.mxu0
      %v3178 = vadd.f32 %v2718, %v3177
      %v3179 = vpop.f32.mrf.mxu0
      %3180 = vmatprep.mubr.f32.mxu0 0.0
      %v3181 = vand.u32 %v489, 4294901760
      %3182 = vmatmul.mubr.f32.gmra.mxu0 %v3181
      %v3183 = vpop.f32.mrf.mxu0
      %v3184 = vadd.f32 %v2726, %v3183
      %v3185 = vpop.f32.mrf.mxu0
      %3186 = vmatprep.mubr.f32.mxu0 0.0
      %v3187 = vand.u32 %v492, 4294901760
      %3188 = vmatmul.mubr.f32.gmra.mxu0 %v3187
      %v3189 = vpop.f32.mrf.mxu0
      %v3190 = vadd.f32 %v2734, %v3189
      %v3191 = vpop.f32.mrf.mxu0
      %3192 = vmatprep.mubr.f32.mxu0 0.0
      %v3193 = vand.u32 %v495, 4294901760
      %3194 = vmatmul.mubr.f32.gmra.mxu0 %v3193
      %v3195 = vpop.f32.mrf.mxu0
      %v3196 = vadd.f32 %v2742, %v3195
      %v3197 = vpop.f32.mrf.mxu0
      %3198 = vmatprep.mubr.f32.mxu0 0.0
      %v3199 = vand.u32 %v498, 4294901760
      %3200 = vmatmul.mubr.f32.gmra.mxu0 %v3199
      %v3201 = vpop.f32.mrf.mxu0
      %v3202 = vadd.f32 %v2750, %v3201
      %v3203 = vpop.f32.mrf.mxu0
      %3204 = vdwg.mxu0
      %3205 = vmatprep.subr.mxu0 0.0
      %3206 = vmatpush1.msra.mxu0 0.0
      %3207 = vmatprep.subr.mxu0 0.0
      %3208 = vmatpush1.msra.mxu0 0.0
      %3209 = vmatprep.subr.mxu0 0.0
      %3210 = vmatpush1.msra.mxu0 0.0
      %3211 = vmatprep.subr.mxu0 0.0
      %3212 = vmatpush1.msra.mxu0 0.0
      %3213 = vmatprep.subr.mxu0 0.0
      %3214 = vmatpush1.msra.mxu0 0.0
      %3215 = vmatprep.subr.mxu0 0.0
      %3216 = vmatpush1.msra.mxu0 0.0
      %3217 = vmatprep.subr.mxu0 0.0
      %3218 = vmatpush1.msra.mxu0 0.0
      %3219 = vmatprep.subr.mxu0 0.0
      %3220 = vmatpush1.msra.mxu0 0.0
      %3221 = vmatprep.subr.mxu0 0.0
      %3222 = vmatpush1.msra.mxu0 0.0
      %3223 = vmatprep.subr.mxu0 0.0
      %3224 = vmatpush1.msra.mxu0 0.0
      %3225 = vmatprep.subr.mxu0 0.0
      %3226 = vmatpush1.msra.mxu0 0.0
      %3227 = vmatprep.subr.mxu0 0.0
      %3228 = vmatpush1.msra.mxu0 0.0
      %3229 = vmatprep.subr.mxu0 0.0
      %3230 = vmatpush1.msra.mxu0 0.0
      %3231 = vmatprep.subr.mxu0 0.0
      %3232 = vmatpush1.msra.mxu0 0.0
      %3233 = vmatprep.subr.mxu0 0.0
      %3234 = vmatpush1.msra.mxu0 0.0
      %3235 = vmatprep.subr.mxu0 0.0
      %v3236 = vand.u32 %v306, 4294901760
      %3237 = vmatpush1.msra.mxu0 %v3236
      %3238 = vmatprep.subr.mxu0 0.0
      %3239 = vmatpush2.msra.mxu0 0.0
      %3240 = vmatprep.subr.mxu0 0.0
      %3241 = vmatpush2.msra.mxu0 0.0
      %3242 = vmatprep.subr.mxu0 0.0
      %3243 = vmatpush2.msra.mxu0 0.0
      %3244 = vmatprep.subr.mxu0 0.0
      %3245 = vmatpush2.msra.mxu0 0.0
      %3246 = vmatprep.subr.mxu0 0.0
      %3247 = vmatpush2.msra.mxu0 0.0
      %3248 = vmatprep.subr.mxu0 0.0
      %3249 = vmatpush2.msra.mxu0 0.0
      %3250 = vmatprep.subr.mxu0 0.0
      %3251 = vmatpush2.msra.mxu0 0.0
      %3252 = vmatprep.subr.mxu0 0.0
      %3253 = vmatpush2.msra.mxu0 0.0
      %3254 = vmatprep.subr.mxu0 0.0
      %3255 = vmatpush2.msra.mxu0 0.0
      %3256 = vmatprep.subr.mxu0 0.0
      %3257 = vmatpush2.msra.mxu0 0.0
      %3258 = vmatprep.subr.mxu0 0.0
      %3259 = vmatpush2.msra.mxu0 0.0
      %3260 = vmatprep.subr.mxu0 0.0
      %3261 = vmatpush2.msra.mxu0 0.0
      %3262 = vmatprep.subr.mxu0 0.0
      %3263 = vmatpush2.msra.mxu0 0.0
      %3264 = vmatprep.subr.mxu0 0.0
      %3265 = vmatpush2.msra.mxu0 0.0
      %3266 = vmatprep.subr.mxu0 0.0
      %3267 = vmatpush2.msra.mxu0 0.0
      %3268 = vmatprep.subr.mxu0 0.0
      %3269 = vmatpush2.msra.mxu0 0.0
      %3270 = vmatprep.mubr.f32.mxu0 0.0
      %v3271 = vand.u32 %v309, 4294901760
      %3272 = vmatmul.mubr.f32.gmra.mxu0 %v3271
      %v3273 = vpop.f32.mrf.mxu0
      %v3274 = vadd.f32 %v2824, %v3273
      %v3275 = vpop.f32.mrf.mxu0
      %3276 = vmatprep.mubr.f32.mxu0 0.0
      %v3277 = vand.u32 %v312, 4294901760
      %3278 = vmatmul.mubr.f32.gmra.mxu0 %v3277
      %v3279 = vpop.f32.mrf.mxu0
      %v3280 = vadd.f32 %v2830, %v3279
      %v3281 = vpop.f32.mrf.mxu0
      %3282 = vmatprep.mubr.f32.mxu0 0.0
      %v3283 = vand.u32 %v315, 4294901760
      %3284 = vmatmul.mubr.f32.gmra.mxu0 %v3283
      %v3285 = vpop.f32.mrf.mxu0
      %v3286 = vadd.f32 %v2836, %v3285
      %v3287 = vpop.f32.mrf.mxu0
      %3288 = vmatprep.mubr.f32.mxu0 0.0
      %v3289 = vand.u32 %v318, 4294901760
      %3290 = vmatmul.mubr.f32.gmra.mxu0 %v3289
      %v3291 = vpop.f32.mrf.mxu0
      %v3292 = vadd.f32 %v2842, %v3291
      %v3293 = vpop.f32.mrf.mxu0
      %3294 = vmatprep.mubr.f32.mxu0 0.0
      %v3295 = vand.u32 %v321, 4294901760
      %3296 = vmatmul.mubr.f32.gmra.mxu0 %v3295
      %v3297 = vpop.f32.mrf.mxu0
      %v3298 = vadd.f32 %v2848, %v3297
      %v3299 = vpop.f32.mrf.mxu0
      %3300 = vmatprep.mubr.f32.mxu0 0.0
      %v3301 = vand.u32 %v324, 4294901760
      %3302 = vmatmul.mubr.f32.gmra.mxu0 %v3301
      %v3303 = vpop.f32.mrf.mxu0
      %v3304 = vadd.f32 %v2854, %v3303
      %v3305 = vpop.f32.mrf.mxu0
      %3306 = vmatprep.mubr.f32.mxu0 0.0
      %v3307 = vand.u32 %v327, 4294901760
      %3308 = vmatmul.mubr.f32.gmra.mxu0 %v3307
      %v3309 = vpop.f32.mrf.mxu0
      %v3310 = vadd.f32 %v2860, %v3309
      %v3311 = vpop.f32.mrf.mxu0
      %3312 = vmatprep.mubr.f32.mxu0 0.0
      %v3313 = vand.u32 %v330, 4294901760
      %3314 = vmatmul.mubr.f32.gmra.mxu0 %v3313
      %v3315 = vpop.f32.mrf.mxu0
      %v3316 = vadd.f32 %v2866, %v3315
      %v3317 = vpop.f32.mrf.mxu0
      %3318 = vmatprep.mubr.f32.mxu0 0.0
      %v3319 = vand.u32 %v333, 4294901760
      %3320 = vmatmul.mubr.f32.gmra.mxu0 %v3319
      %v3321 = vpop.f32.mrf.mxu0
      %v3322 = vadd.f32 %v2872, %v3321
      %v3323 = vpop.f32.mrf.mxu0
      %3324 = vmatprep.mubr.f32.mxu0 0.0
      %v3325 = vand.u32 %v336, 4294901760
      %3326 = vmatmul.mubr.f32.gmra.mxu0 %v3325
      %v3327 = vpop.f32.mrf.mxu0
      %v3328 = vadd.f32 %v2878, %v3327
      %v3329 = vpop.f32.mrf.mxu0
      %3330 = vmatprep.mubr.f32.mxu0 0.0
      %v3331 = vand.u32 %v339, 4294901760
      %3332 = vmatmul.mubr.f32.gmra.mxu0 %v3331
      %v3333 = vpop.f32.mrf.mxu0
      %v3334 = vadd.f32 %v2884, %v3333
      %v3335 = vpop.f32.mrf.mxu0
      %3336 = vmatprep.mubr.f32.mxu0 0.0
      %v3337 = vand.u32 %v342, 4294901760
      %3338 = vmatmul.mubr.f32.gmra.mxu0 %v3337
      %v3339 = vpop.f32.mrf.mxu0
      %v3340 = vadd.f32 %v2890, %v3339
      %v3341 = vpop.f32.mrf.mxu0
      %3342 = vmatprep.mubr.f32.mxu0 0.0
      %v3343 = vand.u32 %v345, 4294901760
      %3344 = vmatmul.mubr.f32.gmra.mxu0 %v3343
      %v3345 = vpop.f32.mrf.mxu0
      %v3346 = vadd.f32 %v2896, %v3345
      %v3347 = vpop.f32.mrf.mxu0
      %3348 = vmatprep.mubr.f32.mxu0 0.0
      %v3349 = vand.u32 %v348, 4294901760
      %3350 = vmatmul.mubr.f32.gmra.mxu0 %v3349
      %v3351 = vpop.f32.mrf.mxu0
      %v3352 = vadd.f32 %v2902, %v3351
      %v3353 = vpop.f32.mrf.mxu0
      %3354 = vmatprep.mubr.f32.mxu0 0.0
      %v3355 = vand.u32 %v351, 4294901760
      %3356 = vmatmul.mubr.f32.gmra.mxu0 %v3355
      %v3357 = vpop.f32.mrf.mxu0
      %v3358 = vadd.f32 %v2908, %v3357
      %v3359 = vpop.f32.mrf.mxu0
      %3360 = vmatprep.mubr.f32.mxu0 0.0
      %v3361 = vand.u32 %v354, 4294901760
      %3362 = vmatmul.mubr.f32.gmra.mxu0 %v3361
      %v3363 = vpop.f32.mrf.mxu0
      %v3364 = vadd.f32 %v2914, %v3363
      %v3365 = vpop.f32.mrf.mxu0
      %3366 = vmatprep.mubr.f32.mxu0 0.0
      %v3367 = vand.u32 %v357, 4294901760
      %3368 = vmatmul.mubr.f32.gmra.mxu0 %v3367
      %v3369 = vpop.f32.mrf.mxu0
      %v3370 = vadd.f32 %v2920, %v3369
      %v3371 = vpop.f32.mrf.mxu0
      %3372 = vmatprep.mubr.f32.mxu0 0.0
      %v3373 = vand.u32 %v360, 4294901760
      %3374 = vmatmul.mubr.f32.gmra.mxu0 %v3373
      %v3375 = vpop.f32.mrf.mxu0
      %v3376 = vadd.f32 %v2926, %v3375
      %v3377 = vpop.f32.mrf.mxu0
      %3378 = vmatprep.mubr.f32.mxu0 0.0
      %v3379 = vand.u32 %v363, 4294901760
      %3380 = vmatmul.mubr.f32.gmra.mxu0 %v3379
      %v3381 = vpop.f32.mrf.mxu0
      %v3382 = vadd.f32 %v2932, %v3381
      %v3383 = vpop.f32.mrf.mxu0
      %3384 = vmatprep.mubr.f32.mxu0 0.0
      %v3385 = vand.u32 %v366, 4294901760
      %3386 = vmatmul.mubr.f32.gmra.mxu0 %v3385
      %v3387 = vpop.f32.mrf.mxu0
      %v3388 = vadd.f32 %v2938, %v3387
      %v3389 = vpop.f32.mrf.mxu0
      %3390 = vmatprep.mubr.f32.mxu0 0.0
      %v3391 = vand.u32 %v369, 4294901760
      %3392 = vmatmul.mubr.f32.gmra.mxu0 %v3391
      %v3393 = vpop.f32.mrf.mxu0
      %v3394 = vadd.f32 %v2944, %v3393
      %v3395 = vpop.f32.mrf.mxu0
      %3396 = vmatprep.mubr.f32.mxu0 0.0
      %v3397 = vand.u32 %v372, 4294901760
      %3398 = vmatmul.mubr.f32.gmra.mxu0 %v3397
      %v3399 = vpop.f32.mrf.mxu0
      %v3400 = vadd.f32 %v2950, %v3399
      %v3401 = vpop.f32.mrf.mxu0
      %3402 = vmatprep.mubr.f32.mxu0 0.0
      %v3403 = vand.u32 %v375, 4294901760
      %3404 = vmatmul.mubr.f32.gmra.mxu0 %v3403
      %v3405 = vpop.f32.mrf.mxu0
      %v3406 = vadd.f32 %v2956, %v3405
      %v3407 = vpop.f32.mrf.mxu0
      %3408 = vmatprep.mubr.f32.mxu0 0.0
      %v3409 = vand.u32 %v378, 4294901760
      %3410 = vmatmul.mubr.f32.gmra.mxu0 %v3409
      %v3411 = vpop.f32.mrf.mxu0
      %v3412 = vadd.f32 %v2962, %v3411
      %v3413 = vpop.f32.mrf.mxu0
      %3414 = vmatprep.mubr.f32.mxu0 0.0
      %v3415 = vand.u32 %v381, 4294901760
      %3416 = vmatmul.mubr.f32.gmra.mxu0 %v3415
      %v3417 = vpop.f32.mrf.mxu0
      %v3418 = vadd.f32 %v2968, %v3417
      %v3419 = vpop.f32.mrf.mxu0
      %3420 = vmatprep.mubr.f32.mxu0 0.0
      %v3421 = vand.u32 %v384, 4294901760
      %3422 = vmatmul.mubr.f32.gmra.mxu0 %v3421
      %v3423 = vpop.f32.mrf.mxu0
      %v3424 = vadd.f32 %v2974, %v3423
      %v3425 = vpop.f32.mrf.mxu0
      %3426 = vmatprep.mubr.f32.mxu0 0.0
      %v3427 = vand.u32 %v387, 4294901760
      %3428 = vmatmul.mubr.f32.gmra.mxu0 %v3427
      %v3429 = vpop.f32.mrf.mxu0
      %v3430 = vadd.f32 %v2980, %v3429
      %v3431 = vpop.f32.mrf.mxu0
      %3432 = vmatprep.mubr.f32.mxu0 0.0
      %v3433 = vand.u32 %v390, 4294901760
      %3434 = vmatmul.mubr.f32.gmra.mxu0 %v3433
      %v3435 = vpop.f32.mrf.mxu0
      %v3436 = vadd.f32 %v2986, %v3435
      %v3437 = vpop.f32.mrf.mxu0
      %3438 = vmatprep.mubr.f32.mxu0 0.0
      %v3439 = vand.u32 %v393, 4294901760
      %3440 = vmatmul.mubr.f32.gmra.mxu0 %v3439
      %v3441 = vpop.f32.mrf.mxu0
      %v3442 = vadd.f32 %v2992, %v3441
      %v3443 = vpop.f32.mrf.mxu0
      %3444 = vmatprep.mubr.f32.mxu0 0.0
      %v3445 = vand.u32 %v396, 4294901760
      %3446 = vmatmul.mubr.f32.gmra.mxu0 %v3445
      %v3447 = vpop.f32.mrf.mxu0
      %v3448 = vadd.f32 %v2998, %v3447
      %v3449 = vpop.f32.mrf.mxu0
      %3450 = vmatprep.mubr.f32.mxu0 0.0
      %v3451 = vand.u32 %v399, 4294901760
      %3452 = vmatmul.mubr.f32.gmra.mxu0 %v3451
      %v3453 = vpop.f32.mrf.mxu0
      %v3454 = vadd.f32 %v3004, %v3453
      %v3455 = vpop.f32.mrf.mxu0
      %3456 = vmatprep.mubr.f32.mxu0 0.0
      %v3457 = vand.u32 %v402, 4294901760
      %3458 = vmatmul.mubr.f32.gmra.mxu0 %v3457
      %v3459 = vpop.f32.mrf.mxu0
      %v3460 = vadd.f32 %v3010, %v3459
      %v3461 = vpop.f32.mrf.mxu0
      %3462 = vmatprep.mubr.f32.mxu0 0.0
      %v3463 = vand.u32 %v405, 4294901760
      %3464 = vmatmul.mubr.f32.gmra.mxu0 %v3463
      %v3465 = vpop.f32.mrf.mxu0
      %v3466 = vadd.f32 %v3016, %v3465
      %v3467 = vpop.f32.mrf.mxu0
      %3468 = vmatprep.mubr.f32.mxu0 0.0
      %v3469 = vand.u32 %v408, 4294901760
      %3470 = vmatmul.mubr.f32.gmra.mxu0 %v3469
      %v3471 = vpop.f32.mrf.mxu0
      %v3472 = vadd.f32 %v3022, %v3471
      %v3473 = vpop.f32.mrf.mxu0
      %3474 = vmatprep.mubr.f32.mxu0 0.0
      %v3475 = vand.u32 %v411, 4294901760
      %3476 = vmatmul.mubr.f32.gmra.mxu0 %v3475
      %v3477 = vpop.f32.mrf.mxu0
      %v3478 = vadd.f32 %v3028, %v3477
      %v3479 = vpop.f32.mrf.mxu0
      %3480 = vmatprep.mubr.f32.mxu0 0.0
      %v3481 = vand.u32 %v414, 4294901760
      %3482 = vmatmul.mubr.f32.gmra.mxu0 %v3481
      %v3483 = vpop.f32.mrf.mxu0
      %v3484 = vadd.f32 %v3034, %v3483
      %v3485 = vpop.f32.mrf.mxu0
      %3486 = vmatprep.mubr.f32.mxu0 0.0
      %v3487 = vand.u32 %v417, 4294901760
      %3488 = vmatmul.mubr.f32.gmra.mxu0 %v3487
      %v3489 = vpop.f32.mrf.mxu0
      %v3490 = vadd.f32 %v3040, %v3489
      %v3491 = vpop.f32.mrf.mxu0
      %3492 = vmatprep.mubr.f32.mxu0 0.0
      %v3493 = vand.u32 %v420, 4294901760
      %3494 = vmatmul.mubr.f32.gmra.mxu0 %v3493
      %v3495 = vpop.f32.mrf.mxu0
      %v3496 = vadd.f32 %v3046, %v3495
      %v3497 = vpop.f32.mrf.mxu0
      %3498 = vmatprep.mubr.f32.mxu0 0.0
      %v3499 = vand.u32 %v423, 4294901760
      %3500 = vmatmul.mubr.f32.gmra.mxu0 %v3499
      %v3501 = vpop.f32.mrf.mxu0
      %v3502 = vadd.f32 %v3052, %v3501
      %v3503 = vpop.f32.mrf.mxu0
      %3504 = vmatprep.mubr.f32.mxu0 0.0
      %v3505 = vand.u32 %v426, 4294901760
      %3506 = vmatmul.mubr.f32.gmra.mxu0 %v3505
      %v3507 = vpop.f32.mrf.mxu0
      %v3508 = vadd.f32 %v3058, %v3507
      %v3509 = vpop.f32.mrf.mxu0
      %3510 = vmatprep.mubr.f32.mxu0 0.0
      %v3511 = vand.u32 %v429, 4294901760
      %3512 = vmatmul.mubr.f32.gmra.mxu0 %v3511
      %v3513 = vpop.f32.mrf.mxu0
      %v3514 = vadd.f32 %v3064, %v3513
      %v3515 = vpop.f32.mrf.mxu0
      %3516 = vmatprep.mubr.f32.mxu0 0.0
      %v3517 = vand.u32 %v432, 4294901760
      %3518 = vmatmul.mubr.f32.gmra.mxu0 %v3517
      %v3519 = vpop.f32.mrf.mxu0
      %v3520 = vadd.f32 %v3070, %v3519
      %v3521 = vpop.f32.mrf.mxu0
      %3522 = vmatprep.mubr.f32.mxu0 0.0
      %v3523 = vand.u32 %v435, 4294901760
      %3524 = vmatmul.mubr.f32.gmra.mxu0 %v3523
      %v3525 = vpop.f32.mrf.mxu0
      %v3526 = vadd.f32 %v3076, %v3525
      %v3527 = vpop.f32.mrf.mxu0
      %3528 = vmatprep.mubr.f32.mxu0 0.0
      %v3529 = vand.u32 %v438, 4294901760
      %3530 = vmatmul.mubr.f32.gmra.mxu0 %v3529
      %v3531 = vpop.f32.mrf.mxu0
      %v3532 = vadd.f32 %v3082, %v3531
      %v3533 = vpop.f32.mrf.mxu0
      %3534 = vmatprep.mubr.f32.mxu0 0.0
      %v3535 = vand.u32 %v441, 4294901760
      %3536 = vmatmul.mubr.f32.gmra.mxu0 %v3535
      %v3537 = vpop.f32.mrf.mxu0
      %v3538 = vadd.f32 %v3088, %v3537
      %v3539 = vpop.f32.mrf.mxu0
      %3540 = vmatprep.mubr.f32.mxu0 0.0
      %v3541 = vand.u32 %v444, 4294901760
      %3542 = vmatmul.mubr.f32.gmra.mxu0 %v3541
      %v3543 = vpop.f32.mrf.mxu0
      %v3544 = vadd.f32 %v3094, %v3543
      %v3545 = vpop.f32.mrf.mxu0
      %3546 = vmatprep.mubr.f32.mxu0 0.0
      %v3547 = vand.u32 %v447, 4294901760
      %3548 = vmatmul.mubr.f32.gmra.mxu0 %v3547
      %v3549 = vpop.f32.mrf.mxu0
      %v3550 = vadd.f32 %v3100, %v3549
      %v3551 = vpop.f32.mrf.mxu0
      %3552 = vmatprep.mubr.f32.mxu0 0.0
      %v3553 = vand.u32 %v450, 4294901760
      %3554 = vmatmul.mubr.f32.gmra.mxu0 %v3553
      %v3555 = vpop.f32.mrf.mxu0
      %v3556 = vadd.f32 %v3106, %v3555
      %v3557 = vpop.f32.mrf.mxu0
      %3558 = vmatprep.mubr.f32.mxu0 0.0
      %v3559 = vand.u32 %v453, 4294901760
      %3560 = vmatmul.mubr.f32.gmra.mxu0 %v3559
      %v3561 = vpop.f32.mrf.mxu0
      %v3562 = vadd.f32 %v3112, %v3561
      %v3563 = vpop.f32.mrf.mxu0
      %3564 = vmatprep.mubr.f32.mxu0 0.0
      %v3565 = vand.u32 %v456, 4294901760
      %3566 = vmatmul.mubr.f32.gmra.mxu0 %v3565
      %v3567 = vpop.f32.mrf.mxu0
      %v3568 = vadd.f32 %v3118, %v3567
      %v3569 = vpop.f32.mrf.mxu0
      %3570 = vmatprep.mubr.f32.mxu0 0.0
      %v3571 = vand.u32 %v459, 4294901760
      %3572 = vmatmul.mubr.f32.gmra.mxu0 %v3571
      %v3573 = vpop.f32.mrf.mxu0
      %v3574 = vadd.f32 %v3124, %v3573
      %v3575 = vpop.f32.mrf.mxu0
      %3576 = vmatprep.mubr.f32.mxu0 0.0
      %v3577 = vand.u32 %v462, 4294901760
      %3578 = vmatmul.mubr.f32.gmra.mxu0 %v3577
      %v3579 = vpop.f32.mrf.mxu0
      %v3580 = vadd.f32 %v3130, %v3579
      %v3581 = vpop.f32.mrf.mxu0
      %3582 = vmatprep.mubr.f32.mxu0 0.0
      %v3583 = vand.u32 %v465, 4294901760
      %3584 = vmatmul.mubr.f32.gmra.mxu0 %v3583
      %v3585 = vpop.f32.mrf.mxu0
      %v3586 = vadd.f32 %v3136, %v3585
      %v3587 = vpop.f32.mrf.mxu0
      %3588 = vmatprep.mubr.f32.mxu0 0.0
      %v3589 = vand.u32 %v468, 4294901760
      %3590 = vmatmul.mubr.f32.gmra.mxu0 %v3589
      %v3591 = vpop.f32.mrf.mxu0
      %v3592 = vadd.f32 %v3142, %v3591
      %v3593 = vpop.f32.mrf.mxu0
      %3594 = vmatprep.mubr.f32.mxu0 0.0
      %v3595 = vand.u32 %v471, 4294901760
      %3596 = vmatmul.mubr.f32.gmra.mxu0 %v3595
      %v3597 = vpop.f32.mrf.mxu0
      %v3598 = vadd.f32 %v3148, %v3597
      %v3599 = vpop.f32.mrf.mxu0
      %3600 = vmatprep.mubr.f32.mxu0 0.0
      %v3601 = vand.u32 %v474, 4294901760
      %3602 = vmatmul.mubr.f32.gmra.mxu0 %v3601
      %v3603 = vpop.f32.mrf.mxu0
      %v3604 = vadd.f32 %v3154, %v3603
      %v3605 = vpop.f32.mrf.mxu0
      %3606 = vmatprep.mubr.f32.mxu0 0.0
      %v3607 = vand.u32 %v477, 4294901760
      %3608 = vmatmul.mubr.f32.gmra.mxu0 %v3607
      %v3609 = vpop.f32.mrf.mxu0
      %v3610 = vadd.f32 %v3160, %v3609
      %v3611 = vpop.f32.mrf.mxu0
      %3612 = vmatprep.mubr.f32.mxu0 0.0
      %v3613 = vand.u32 %v480, 4294901760
      %3614 = vmatmul.mubr.f32.gmra.mxu0 %v3613
      %v3615 = vpop.f32.mrf.mxu0
      %v3616 = vadd.f32 %v3166, %v3615
      %v3617 = vpop.f32.mrf.mxu0
      %3618 = vmatprep.mubr.f32.mxu0 0.0
      %v3619 = vand.u32 %v483, 4294901760
      %3620 = vmatmul.mubr.f32.gmra.mxu0 %v3619
      %v3621 = vpop.f32.mrf.mxu0
      %v3622 = vadd.f32 %v3172, %v3621
      %v3623 = vpop.f32.mrf.mxu0
      %3624 = vmatprep.mubr.f32.mxu0 0.0
      %v3625 = vand.u32 %v486, 4294901760
      %3626 = vmatmul.mubr.f32.gmra.mxu0 %v3625
      %v3627 = vpop.f32.mrf.mxu0
      %v3628 = vadd.f32 %v3178, %v3627
      %v3629 = vpop.f32.mrf.mxu0
      %3630 = vmatprep.mubr.f32.mxu0 0.0
      %v3631 = vand.u32 %v489, 4294901760
      %3632 = vmatmul.mubr.f32.gmra.mxu0 %v3631
      %v3633 = vpop.f32.mrf.mxu0
      %v3634 = vadd.f32 %v3184, %v3633
      %v3635 = vpop.f32.mrf.mxu0
      %3636 = vmatprep.mubr.f32.mxu0 0.0
      %v3637 = vand.u32 %v492, 4294901760
      %3638 = vmatmul.mubr.f32.gmra.mxu0 %v3637
      %v3639 = vpop.f32.mrf.mxu0
      %v3640 = vadd.f32 %v3190, %v3639
      %v3641 = vpop.f32.mrf.mxu0
      %3642 = vmatprep.mubr.f32.mxu0 0.0
      %v3643 = vand.u32 %v495, 4294901760
      %3644 = vmatmul.mubr.f32.gmra.mxu0 %v3643
      %v3645 = vpop.f32.mrf.mxu0
      %v3646 = vadd.f32 %v3196, %v3645
      %v3647 = vpop.f32.mrf.mxu0
      %3648 = vmatprep.mubr.f32.mxu0 0.0
      %v3649 = vand.u32 %v498, 4294901760
      %3650 = vmatmul.mubr.f32.gmra.mxu0 %v3649
      %v3651 = vpop.f32.mrf.mxu0
      %v3652 = vadd.f32 %v3202, %v3651
      %v3653 = vpop.f32.mrf.mxu0
      %3654 = vdwg.mxu0
      %v3655 = vsub.f32 %v3274, -1.0
      %v3656 = vsub.f32 %v3280, -1.0
      %v3657 = vsub.f32 %v3286, -1.0
      %v3658 = vsub.f32 %v3292, -1.0
      %v3659 = vsub.f32 %v3298, -1.0
      %v3660 = vsub.f32 %v3304, -1.0
      %v3661 = vsub.f32 %v3310, -1.0
      %v3662 = vsub.f32 %v3316, -1.0
      %v3663 = vsub.f32 %v3322, -1.0
      %v3664 = vsub.f32 %v3328, -1.0
      %v3665 = vsub.f32 %v3334, -1.0
      %v3666 = vsub.f32 %v3340, -1.0
      %v3667 = vsub.f32 %v3346, -1.0
      %v3668 = vsub.f32 %v3352, -1.0
      %v3669 = vsub.f32 %v3358, -1.0
      %v3670 = vsub.f32 %v3364, -1.0
      %v3671 = vsub.f32 %v3370, -1.0
      %v3672 = vsub.f32 %v3376, -1.0
      %v3673 = vsub.f32 %v3382, -1.0
      %v3674 = vsub.f32 %v3388, -1.0
      %v3675 = vsub.f32 %v3394, -1.0
      %v3676 = vsub.f32 %v3400, -1.0
      %v3677 = vsub.f32 %v3406, -1.0
      %v3678 = vsub.f32 %v3412, -1.0
      %v3679 = vsub.f32 %v3418, -1.0
      %v3680 = vsub.f32 %v3424, -1.0
      %v3681 = vsub.f32 %v3430, -1.0
      %v3682 = vsub.f32 %v3436, -1.0
      %v3683 = vsub.f32 %v3442, -1.0
      %v3684 = vsub.f32 %v3448, -1.0
      %v3685 = vsub.f32 %v3454, -1.0
      %v3686 = vsub.f32 %v3460, -1.0
      %v3687 = vsub.f32 %v3466, -1.0
      %v3688 = vsub.f32 %v3472, -1.0
      %v3689 = vsub.f32 %v3478, -1.0
      %v3690 = vsub.f32 %v3484, -1.0
      %v3691 = vsub.f32 %v3490, -1.0
      %v3692 = vsub.f32 %v3496, -1.0
      %v3693 = vsub.f32 %v3502, -1.0
      %v3694 = vsub.f32 %v3508, -1.0
      %v3695 = vsub.f32 %v3514, -1.0
      %v3696 = vsub.f32 %v3520, -1.0
      %v3697 = vsub.f32 %v3526, -1.0
      %v3698 = vsub.f32 %v3532, -1.0
      %v3699 = vsub.f32 %v3538, -1.0
      %v3700 = vsub.f32 %v3544, -1.0
      %v3701 = vsub.f32 %v3550, -1.0
      %v3702 = vsub.f32 %v3556, -1.0
      %v3703 = vsub.f32 %v3562, -1.0
      %v3704 = vsub.f32 %v3568, -1.0
      %v3705 = vsub.f32 %v3574, -1.0
      %v3706 = vsub.f32 %v3580, -1.0
      %v3707 = vsub.f32 %v3586, -1.0
      %v3708 = vsub.f32 %v3592, -1.0
      %v3709 = vsub.f32 %v3598, -1.0
      %v3710 = vsub.f32 %v3604, -1.0
      %v3711 = vsub.f32 %v3610, -1.0
      %v3712 = vsub.f32 %v3616, -1.0
      %v3713 = vsub.f32 %v3622, -1.0
      %v3714 = vsub.f32 %v3628, -1.0
      %v3715 = vsub.f32 %v3634, -1.0
      %v3716 = vsub.f32 %v3640, -1.0
      %v3717 = vsub.f32 %v3646, -1.0
      %v3718 = vsub.f32 %v3652, -1.0
      %v3719 = vmul.f32 %v3655, 6.0
      %v3720 = vmul.f32 %v3656, 6.0
      %v3721 = vmul.f32 %v3657, 6.0
      %v3722 = vmul.f32 %v3658, 6.0
      %v3723 = vmul.f32 %v3659, 6.0
      %v3724 = vmul.f32 %v3660, 6.0
      %v3725 = vmul.f32 %v3661, 6.0
      %v3726 = vmul.f32 %v3662, 6.0
      %v3727 = vmul.f32 %v3663, 6.0
      %v3728 = vmul.f32 %v3664, 6.0
      %v3729 = vmul.f32 %v3665, 6.0
      %v3730 = vmul.f32 %v3666, 6.0
      %v3731 = vmul.f32 %v3667, 6.0
      %v3732 = vmul.f32 %v3668, 6.0
      %v3733 = vmul.f32 %v3669, 6.0
      %v3734 = vmul.f32 %v3670, 6.0
      %v3735 = vmul.f32 %v3671, 6.0
      %v3736 = vmul.f32 %v3672, 6.0
      %v3737 = vmul.f32 %v3673, 6.0
      %v3738 = vmul.f32 %v3674, 6.0
      %v3739 = vmul.f32 %v3675, 6.0
      %v3740 = vmul.f32 %v3676, 6.0
      %v3741 = vmul.f32 %v3677, 6.0
      %v3742 = vmul.f32 %v3678, 6.0
      %v3743 = vmul.f32 %v3679, 6.0
      %v3744 = vmul.f32 %v3680, 6.0
      %v3745 = vmul.f32 %v3681, 6.0
      %v3746 = vmul.f32 %v3682, 6.0
      %v3747 = vmul.f32 %v3683, 6.0
      %v3748 = vmul.f32 %v3684, 6.0
      %v3749 = vmul.f32 %v3685, 6.0
      %v3750 = vmul.f32 %v3686, 6.0
      %v3751 = vmul.f32 %v3687, 6.0
      %v3752 = vmul.f32 %v3688, 6.0
      %v3753 = vmul.f32 %v3689, 6.0
      %v3754 = vmul.f32 %v3690, 6.0
      %v3755 = vmul.f32 %v3691, 6.0
      %v3756 = vmul.f32 %v3692, 6.0
      %v3757 = vmul.f32 %v3693, 6.0
      %v3758 = vmul.f32 %v3694, 6.0
      %v3759 = vmul.f32 %v3695, 6.0
      %v3760 = vmul.f32 %v3696, 6.0
      %v3761 = vmul.f32 %v3697, 6.0
      %v3762 = vmul.f32 %v3698, 6.0
      %v3763 = vmul.f32 %v3699, 6.0
      %v3764 = vmul.f32 %v3700, 6.0
      %v3765 = vmul.f32 %v3701, 6.0
      %v3766 = vmul.f32 %v3702, 6.0
      %v3767 = vmul.f32 %v3703, 6.0
      %v3768 = vmul.f32 %v3704, 6.0
      %v3769 = vmul.f32 %v3705, 6.0
      %v3770 = vmul.f32 %v3706, 6.0
      %v3771 = vmul.f32 %v3707, 6.0
      %v3772 = vmul.f32 %v3708, 6.0
      %v3773 = vmul.f32 %v3709, 6.0
      %v3774 = vmul.f32 %v3710, 6.0
      %v3775 = vmul.f32 %v3711, 6.0
      %v3776 = vmul.f32 %v3712, 6.0
      %v3777 = vmul.f32 %v3713, 6.0
      %v3778 = vmul.f32 %v3714, 6.0
      %v3779 = vmul.f32 %v3715, 6.0
      %v3780 = vmul.f32 %v3716, 6.0
      %v3781 = vmul.f32 %v3717, 6.0
      %v3782 = vmul.f32 %v3718, 6.0
      %v3783 = vmul.f32 %v3719, 0.33333334
      %v3784 = vmul.f32 %v3720, 0.33333334
      %v3785 = vmul.f32 %v3721, 0.33333334
      %v3786 = vmul.f32 %v3722, 0.33333334
      %v3787 = vmul.f32 %v3723, 0.33333334
      %v3788 = vmul.f32 %v3724, 0.33333334
      %v3789 = vmul.f32 %v3725, 0.33333334
      %v3790 = vmul.f32 %v3726, 0.33333334
      %v3791 = vmul.f32 %v3727, 0.33333334
      %v3792 = vmul.f32 %v3728, 0.33333334
      %v3793 = vmul.f32 %v3729, 0.33333334
      %v3794 = vmul.f32 %v3730, 0.33333334
      %v3795 = vmul.f32 %v3731, 0.33333334
      %v3796 = vmul.f32 %v3732, 0.33333334
      %v3797 = vmul.f32 %v3733, 0.33333334
      %v3798 = vmul.f32 %v3734, 0.33333334
      %v3799 = vmul.f32 %v3735, 0.33333334
      %v3800 = vmul.f32 %v3736, 0.33333334
      %v3801 = vmul.f32 %v3737, 0.33333334
      %v3802 = vmul.f32 %v3738, 0.33333334
      %v3803 = vmul.f32 %v3739, 0.33333334
      %v3804 = vmul.f32 %v3740, 0.33333334
      %v3805 = vmul.f32 %v3741, 0.33333334
      %v3806 = vmul.f32 %v3742, 0.33333334
      %v3807 = vmul.f32 %v3743, 0.33333334
      %v3808 = vmul.f32 %v3744, 0.33333334
      %v3809 = vmul.f32 %v3745, 0.33333334
      %v3810 = vmul.f32 %v3746, 0.33333334
      %v3811 = vmul.f32 %v3747, 0.33333334
      %v3812 = vmul.f32 %v3748, 0.33333334
      %v3813 = vmul.f32 %v3749, 0.33333334
      %v3814 = vmul.f32 %v3750, 0.33333334
      %v3815 = vmul.f32 %v3751, 0.33333334
      %v3816 = vmul.f32 %v3752, 0.33333334
      %v3817 = vmul.f32 %v3753, 0.33333334
      %v3818 = vmul.f32 %v3754, 0.33333334
      %v3819 = vmul.f32 %v3755, 0.33333334
      %v3820 = vmul.f32 %v3756, 0.33333334
      %v3821 = vmul.f32 %v3757, 0.33333334
      %v3822 = vmul.f32 %v3758, 0.33333334
      %v3823 = vmul.f32 %v3759, 0.33333334
      %v3824 = vmul.f32 %v3760, 0.33333334
      %v3825 = vmul.f32 %v3761, 0.33333334
      %v3826 = vmul.f32 %v3762, 0.33333334
      %v3827 = vmul.f32 %v3763, 0.33333334
      %v3828 = vmul.f32 %v3764, 0.33333334
      %v3829 = vmul.f32 %v3765, 0.33333334
      %v3830 = vmul.f32 %v3766, 0.33333334
      %v3831 = vmul.f32 %v3767, 0.33333334
      %v3832 = vmul.f32 %v3768, 0.33333334
      %v3833 = vmul.f32 %v3769, 0.33333334
      %v3834 = vmul.f32 %v3770, 0.33333334
      %v3835 = vmul.f32 %v3771, 0.33333334
      %v3836 = vmul.f32 %v3772, 0.33333334
      %v3837 = vmul.f32 %v3773, 0.33333334
      %v3838 = vmul.f32 %v3774, 0.33333334
      %v3839 = vmul.f32 %v3775, 0.33333334
      %v3840 = vmul.f32 %v3776, 0.33333334
      %v3841 = vmul.f32 %v3777, 0.33333334
      %v3842 = vmul.f32 %v3778, 0.33333334
      %v3843 = vmul.f32 %v3779, 0.33333334
      %v3844 = vmul.f32 %v3780, 0.33333334
      %v3845 = vmul.f32 %v3781, 0.33333334
      %v3846 = vmul.f32 %v3782, 0.33333334
      %v3847 = vfloor.f32 %v3783
      %v3848 = vfloor.f32 %v3784
      %v3849 = vfloor.f32 %v3785
      %v3850 = vfloor.f32 %v3786
      %v3851 = vfloor.f32 %v3787
      %v3852 = vfloor.f32 %v3788
      %v3853 = vfloor.f32 %v3789
      %v3854 = vfloor.f32 %v3790
      %v3855 = vfloor.f32 %v3791
      %v3856 = vfloor.f32 %v3792
      %v3857 = vfloor.f32 %v3793
      %v3858 = vfloor.f32 %v3794
      %v3859 = vfloor.f32 %v3795
      %v3860 = vfloor.f32 %v3796
      %v3861 = vfloor.f32 %v3797
      %v3862 = vfloor.f32 %v3798
      %v3863 = vfloor.f32 %v3799
      %v3864 = vfloor.f32 %v3800
      %v3865 = vfloor.f32 %v3801
      %v3866 = vfloor.f32 %v3802
      %v3867 = vfloor.f32 %v3803
      %v3868 = vfloor.f32 %v3804
      %v3869 = vfloor.f32 %v3805
      %v3870 = vfloor.f32 %v3806
      %v3871 = vfloor.f32 %v3807
      %v3872 = vfloor.f32 %v3808
      %v3873 = vfloor.f32 %v3809
      %v3874 = vfloor.f32 %v3810
      %v3875 = vfloor.f32 %v3811
      %v3876 = vfloor.f32 %v3812
      %v3877 = vfloor.f32 %v3813
      %v3878 = vfloor.f32 %v3814
      %v3879 = vfloor.f32 %v3815
      %v3880 = vfloor.f32 %v3816
      %v3881 = vfloor.f32 %v3817
      %v3882 = vfloor.f32 %v3818
      %v3883 = vfloor.f32 %v3819
      %v3884 = vfloor.f32 %v3820
      %v3885 = vfloor.f32 %v3821
      %v3886 = vfloor.f32 %v3822
      %v3887 = vfloor.f32 %v3823
      %v3888 = vfloor.f32 %v3824
      %v3889 = vfloor.f32 %v3825
      %v3890 = vfloor.f32 %v3826
      %v3891 = vfloor.f32 %v3827
      %v3892 = vfloor.f32 %v3828
      %v3893 = vfloor.f32 %v3829
      %v3894 = vfloor.f32 %v3830
      %v3895 = vfloor.f32 %v3831
      %v3896 = vfloor.f32 %v3832
      %v3897 = vfloor.f32 %v3833
      %v3898 = vfloor.f32 %v3834
      %v3899 = vfloor.f32 %v3835
      %v3900 = vfloor.f32 %v3836
      %v3901 = vfloor.f32 %v3837
      %v3902 = vfloor.f32 %v3838
      %v3903 = vfloor.f32 %v3839
      %v3904 = vfloor.f32 %v3840
      %v3905 = vfloor.f32 %v3841
      %v3906 = vfloor.f32 %v3842
      %v3907 = vfloor.f32 %v3843
      %v3908 = vfloor.f32 %v3844
      %v3909 = vfloor.f32 %v3845
      %v3910 = vfloor.f32 %v3846
      %v3911 = vmax.f32 %v3847, 0.0
      %v3912 = vmax.f32 %v3848, 0.0
      %v3913 = vmax.f32 %v3849, 0.0
      %v3914 = vmax.f32 %v3850, 0.0
      %v3915 = vmax.f32 %v3851, 0.0
      %v3916 = vmax.f32 %v3852, 0.0
      %v3917 = vmax.f32 %v3853, 0.0
      %v3918 = vmax.f32 %v3854, 0.0
      %v3919 = vmax.f32 %v3855, 0.0
      %v3920 = vmax.f32 %v3856, 0.0
      %v3921 = vmax.f32 %v3857, 0.0
      %v3922 = vmax.f32 %v3858, 0.0
      %v3923 = vmax.f32 %v3859, 0.0
      %v3924 = vmax.f32 %v3860, 0.0
      %v3925 = vmax.f32 %v3861, 0.0
      %v3926 = vmax.f32 %v3862, 0.0
      %v3927 = vmax.f32 %v3863, 0.0
      %v3928 = vmax.f32 %v3864, 0.0
      %v3929 = vmax.f32 %v3865, 0.0
      %v3930 = vmax.f32 %v3866, 0.0
      %v3931 = vmax.f32 %v3867, 0.0
      %v3932 = vmax.f32 %v3868, 0.0
      %v3933 = vmax.f32 %v3869, 0.0
      %v3934 = vmax.f32 %v3870, 0.0
      %v3935 = vmax.f32 %v3871, 0.0
      %v3936 = vmax.f32 %v3872, 0.0
      %v3937 = vmax.f32 %v3873, 0.0
      %v3938 = vmax.f32 %v3874, 0.0
      %v3939 = vmax.f32 %v3875, 0.0
      %v3940 = vmax.f32 %v3876, 0.0
      %v3941 = vmax.f32 %v3877, 0.0
      %v3942 = vmax.f32 %v3878, 0.0
      %v3943 = vmax.f32 %v3879, 0.0
      %v3944 = vmax.f32 %v3880, 0.0
      %v3945 = vmax.f32 %v3881, 0.0
      %v3946 = vmax.f32 %v3882, 0.0
      %v3947 = vmax.f32 %v3883, 0.0
      %v3948 = vmax.f32 %v3884, 0.0
      %v3949 = vmax.f32 %v3885, 0.0
      %v3950 = vmax.f32 %v3886, 0.0
      %v3951 = vmax.f32 %v3887, 0.0
      %v3952 = vmax.f32 %v3888, 0.0
      %v3953 = vmax.f32 %v3889, 0.0
      %v3954 = vmax.f32 %v3890, 0.0
      %v3955 = vmax.f32 %v3891, 0.0
      %v3956 = vmax.f32 %v3892, 0.0
      %v3957 = vmax.f32 %v3893, 0.0
      %v3958 = vmax.f32 %v3894, 0.0
      %v3959 = vmax.f32 %v3895, 0.0
      %v3960 = vmax.f32 %v3896, 0.0
      %v3961 = vmax.f32 %v3897, 0.0
      %v3962 = vmax.f32 %v3898, 0.0
      %v3963 = vmax.f32 %v3899, 0.0
      %v3964 = vmax.f32 %v3900, 0.0
      %v3965 = vmax.f32 %v3901, 0.0
      %v3966 = vmax.f32 %v3902, 0.0
      %v3967 = vmax.f32 %v3903, 0.0
      %v3968 = vmax.f32 %v3904, 0.0
      %v3969 = vmax.f32 %v3905, 0.0
      %v3970 = vmax.f32 %v3906, 0.0
      %v3971 = vmax.f32 %v3907, 0.0
      %v3972 = vmax.f32 %v3908, 0.0
      %v3973 = vmax.f32 %v3909, 0.0
      %v3974 = vmax.f32 %v3910, 0.0
      %v3975 = vmin.f32 %v3911, 3.0
      %v3976 = vmin.f32 %v3912, 3.0
      %v3977 = vmin.f32 %v3913, 3.0
      %v3978 = vmin.f32 %v3914, 3.0
      %v3979 = vmin.f32 %v3915, 3.0
      %v3980 = vmin.f32 %v3916, 3.0
      %v3981 = vmin.f32 %v3917, 3.0
      %v3982 = vmin.f32 %v3918, 3.0
      %v3983 = vmin.f32 %v3919, 3.0
      %v3984 = vmin.f32 %v3920, 3.0
      %v3985 = vmin.f32 %v3921, 3.0
      %v3986 = vmin.f32 %v3922, 3.0
      %v3987 = vmin.f32 %v3923, 3.0
      %v3988 = vmin.f32 %v3924, 3.0
      %v3989 = vmin.f32 %v3925, 3.0
      %v3990 = vmin.f32 %v3926, 3.0
      %v3991 = vmin.f32 %v3927, 3.0
      %v3992 = vmin.f32 %v3928, 3.0
      %v3993 = vmin.f32 %v3929, 3.0
      %v3994 = vmin.f32 %v3930, 3.0
      %v3995 = vmin.f32 %v3931, 3.0
      %v3996 = vmin.f32 %v3932, 3.0
      %v3997 = vmin.f32 %v3933, 3.0
      %v3998 = vmin.f32 %v3934, 3.0
      %v3999 = vmin.f32 %v3935, 3.0
      %v4000 = vmin.f32 %v3936, 3.0
      %v4001 = vmin.f32 %v3937, 3.0
      %v4002 = vmin.f32 %v3938, 3.0
      %v4003 = vmin.f32 %v3939, 3.0
      %v4004 = vmin.f32 %v3940, 3.0
      %v4005 = vmin.f32 %v3941, 3.0
      %v4006 = vmin.f32 %v3942, 3.0
      %v4007 = vmin.f32 %v3943, 3.0
      %v4008 = vmin.f32 %v3944, 3.0
      %v4009 = vmin.f32 %v3945, 3.0
      %v4010 = vmin.f32 %v3946, 3.0
      %v4011 = vmin.f32 %v3947, 3.0
      %v4012 = vmin.f32 %v3948, 3.0
      %v4013 = vmin.f32 %v3949, 3.0
      %v4014 = vmin.f32 %v3950, 3.0
      %v4015 = vmin.f32 %v3951, 3.0
      %v4016 = vmin.f32 %v3952, 3.0
      %v4017 = vmin.f32 %v3953, 3.0
      %v4018 = vmin.f32 %v3954, 3.0
      %v4019 = vmin.f32 %v3955, 3.0
      %v4020 = vmin.f32 %v3956, 3.0
      %v4021 = vmin.f32 %v3957, 3.0
      %v4022 = vmin.f32 %v3958, 3.0
      %v4023 = vmin.f32 %v3959, 3.0
      %v4024 = vmin.f32 %v3960, 3.0
      %v4025 = vmin.f32 %v3961, 3.0
      %v4026 = vmin.f32 %v3962, 3.0
      %v4027 = vmin.f32 %v3963, 3.0
      %v4028 = vmin.f32 %v3964, 3.0
      %v4029 = vmin.f32 %v3965, 3.0
      %v4030 = vmin.f32 %v3966, 3.0
      %v4031 = vmin.f32 %v3967, 3.0
      %v4032 = vmin.f32 %v3968, 3.0
      %v4033 = vmin.f32 %v3969, 3.0
      %v4034 = vmin.f32 %v3970, 3.0
      %v4035 = vmin.f32 %v3971, 3.0
      %v4036 = vmin.f32 %v3972, 3.0
      %v4037 = vmin.f32 %v3973, 3.0
      %v4038 = vmin.f32 %v3974, 3.0
      %v4039 = vmul.f32 %v3975, 3.0
      %v4040 = vmul.f32 %v3976, 3.0
      %v4041 = vmul.f32 %v3977, 3.0
      %v4042 = vmul.f32 %v3978, 3.0
      %v4043 = vmul.f32 %v3979, 3.0
      %v4044 = vmul.f32 %v3980, 3.0
      %v4045 = vmul.f32 %v3981, 3.0
      %v4046 = vmul.f32 %v3982, 3.0
      %v4047 = vmul.f32 %v3983, 3.0
      %v4048 = vmul.f32 %v3984, 3.0
      %v4049 = vmul.f32 %v3985, 3.0
      %v4050 = vmul.f32 %v3986, 3.0
      %v4051 = vmul.f32 %v3987, 3.0
      %v4052 = vmul.f32 %v3988, 3.0
      %v4053 = vmul.f32 %v3989, 3.0
      %v4054 = vmul.f32 %v3990, 3.0
      %v4055 = vmul.f32 %v3991, 3.0
      %v4056 = vmul.f32 %v3992, 3.0
      %v4057 = vmul.f32 %v3993, 3.0
      %v4058 = vmul.f32 %v3994, 3.0
      %v4059 = vmul.f32 %v3995, 3.0
      %v4060 = vmul.f32 %v3996, 3.0
      %v4061 = vmul.f32 %v3997, 3.0
      %v4062 = vmul.f32 %v3998, 3.0
      %v4063 = vmul.f32 %v3999, 3.0
      %v4064 = vmul.f32 %v4000, 3.0
      %v4065 = vmul.f32 %v4001, 3.0
      %v4066 = vmul.f32 %v4002, 3.0
      %v4067 = vmul.f32 %v4003, 3.0
      %v4068 = vmul.f32 %v4004, 3.0
      %v4069 = vmul.f32 %v4005, 3.0
      %v4070 = vmul.f32 %v4006, 3.0
      %v4071 = vmul.f32 %v4007, 3.0
      %v4072 = vmul.f32 %v4008, 3.0
      %v4073 = vmul.f32 %v4009, 3.0
      %v4074 = vmul.f32 %v4010, 3.0
      %v4075 = vmul.f32 %v4011, 3.0
      %v4076 = vmul.f32 %v4012, 3.0
      %v4077 = vmul.f32 %v4013, 3.0
      %v4078 = vmul.f32 %v4014, 3.0
      %v4079 = vmul.f32 %v4015, 3.0
      %v4080 = vmul.f32 %v4016, 3.0
      %v4081 = vmul.f32 %v4017, 3.0
      %v4082 = vmul.f32 %v4018, 3.0
      %v4083 = vmul.f32 %v4019, 3.0
      %v4084 = vmul.f32 %v4020, 3.0
      %v4085 = vmul.f32 %v4021, 3.0
      %v4086 = vmul.f32 %v4022, 3.0
      %v4087 = vmul.f32 %v4023, 3.0
      %v4088 = vmul.f32 %v4024, 3.0
      %v4089 = vmul.f32 %v4025, 3.0
      %v4090 = vmul.f32 %v4026, 3.0
      %v4091 = vmul.f32 %v4027, 3.0
      %v4092 = vmul.f32 %v4028, 3.0
      %v4093 = vmul.f32 %v4029, 3.0
      %v4094 = vmul.f32 %v4030, 3.0
      %v4095 = vmul.f32 %v4031, 3.0
      %v4096 = vmul.f32 %v4032, 3.0
      %v4097 = vmul.f32 %v4033, 3.0
      %v4098 = vmul.f32 %v4034, 3.0
      %v4099 = vmul.f32 %v4035, 3.0
      %v4100 = vmul.f32 %v4036, 3.0
      %v4101 = vmul.f32 %v4037, 3.0
      %v4102 = vmul.f32 %v4038, 3.0
      %v4103 = vsub.f32 %v3719, %v4039
      %v4104 = vsub.f32 %v3720, %v4040
      %v4105 = vsub.f32 %v3721, %v4041
      %v4106 = vsub.f32 %v3722, %v4042
      %v4107 = vsub.f32 %v3723, %v4043
      %v4108 = vsub.f32 %v3724, %v4044
      %v4109 = vsub.f32 %v3725, %v4045
      %v4110 = vsub.f32 %v3726, %v4046
      %v4111 = vsub.f32 %v3727, %v4047
      %v4112 = vsub.f32 %v3728, %v4048
      %v4113 = vsub.f32 %v3729, %v4049
      %v4114 = vsub.f32 %v3730, %v4050
      %v4115 = vsub.f32 %v3731, %v4051
      %v4116 = vsub.f32 %v3732, %v4052
      %v4117 = vsub.f32 %v3733, %v4053
      %v4118 = vsub.f32 %v3734, %v4054
      %v4119 = vsub.f32 %v3735, %v4055
      %v4120 = vsub.f32 %v3736, %v4056
      %v4121 = vsub.f32 %v3737, %v4057
      %v4122 = vsub.f32 %v3738, %v4058
      %v4123 = vsub.f32 %v3739, %v4059
      %v4124 = vsub.f32 %v3740, %v4060
      %v4125 = vsub.f32 %v3741, %v4061
      %v4126 = vsub.f32 %v3742, %v4062
      %v4127 = vsub.f32 %v3743, %v4063
      %v4128 = vsub.f32 %v3744, %v4064
      %v4129 = vsub.f32 %v3745, %v4065
      %v4130 = vsub.f32 %v3746, %v4066
      %v4131 = vsub.f32 %v3747, %v4067
      %v4132 = vsub.f32 %v3748, %v4068
      %v4133 = vsub.f32 %v3749, %v4069
      %v4134 = vsub.f32 %v3750, %v4070
      %v4135 = vsub.f32 %v3751, %v4071
      %v4136 = vsub.f32 %v3752, %v4072
      %v4137 = vsub.f32 %v3753, %v4073
      %v4138 = vsub.f32 %v3754, %v4074
      %v4139 = vsub.f32 %v3755, %v4075
      %v4140 = vsub.f32 %v3756, %v4076
      %v4141 = vsub.f32 %v3757, %v4077
      %v4142 = vsub.f32 %v3758, %v4078
      %v4143 = vsub.f32 %v3759, %v4079
      %v4144 = vsub.f32 %v3760, %v4080
      %v4145 = vsub.f32 %v3761, %v4081
      %v4146 = vsub.f32 %v3762, %v4082
      %v4147 = vsub.f32 %v3763, %v4083
      %v4148 = vsub.f32 %v3764, %v4084
      %v4149 = vsub.f32 %v3765, %v4085
      %v4150 = vsub.f32 %v3766, %v4086
      %v4151 = vsub.f32 %v3767, %v4087
      %v4152 = vsub.f32 %v3768, %v4088
      %v4153 = vsub.f32 %v3769, %v4089
      %v4154 = vsub.f32 %v3770, %v4090
      %v4155 = vsub.f32 %v3771, %v4091
      %v4156 = vsub.f32 %v3772, %v4092
      %v4157 = vsub.f32 %v3773, %v4093
      %v4158 = vsub.f32 %v3774, %v4094
      %v4159 = vsub.f32 %v3775, %v4095
      %v4160 = vsub.f32 %v3776, %v4096
      %v4161 = vsub.f32 %v3777, %v4097
      %v4162 = vsub.f32 %v3778, %v4098
      %v4163 = vsub.f32 %v3779, %v4099
      %v4164 = vsub.f32 %v3780, %v4100
      %v4165 = vsub.f32 %v3781, %v4101
      %v4166 = vsub.f32 %v3782, %v4102
      %v4167 = vmul.f32 %v4103, 0.6666667
      %v4168 = vmul.f32 %v4104, 0.6666667
      %v4169 = vmul.f32 %v4105, 0.6666667
      %v4170 = vmul.f32 %v4106, 0.6666667
      %v4171 = vmul.f32 %v4107, 0.6666667
      %v4172 = vmul.f32 %v4108, 0.6666667
      %v4173 = vmul.f32 %v4109, 0.6666667
      %v4174 = vmul.f32 %v4110, 0.6666667
      %v4175 = vmul.f32 %v4111, 0.6666667
      %v4176 = vmul.f32 %v4112, 0.6666667
      %v4177 = vmul.f32 %v4113, 0.6666667
      %v4178 = vmul.f32 %v4114, 0.6666667
      %v4179 = vmul.f32 %v4115, 0.6666667
      %v4180 = vmul.f32 %v4116, 0.6666667
      %v4181 = vmul.f32 %v4117, 0.6666667
      %v4182 = vmul.f32 %v4118, 0.6666667
      %v4183 = vmul.f32 %v4119, 0.6666667
      %v4184 = vmul.f32 %v4120, 0.6666667
      %v4185 = vmul.f32 %v4121, 0.6666667
      %v4186 = vmul.f32 %v4122, 0.6666667
      %v4187 = vmul.f32 %v4123, 0.6666667
      %v4188 = vmul.f32 %v4124, 0.6666667
      %v4189 = vmul.f32 %v4125, 0.6666667
      %v4190 = vmul.f32 %v4126, 0.6666667
      %v4191 = vmul.f32 %v4127, 0.6666667
      %v4192 = vmul.f32 %v4128, 0.6666667
      %v4193 = vmul.f32 %v4129, 0.6666667
      %v4194 = vmul.f32 %v4130, 0.6666667
      %v4195 = vmul.f32 %v4131, 0.6666667
      %v4196 = vmul.f32 %v4132, 0.6666667
      %v4197 = vmul.f32 %v4133, 0.6666667
      %v4198 = vmul.f32 %v4134, 0.6666667
      %v4199 = vmul.f32 %v4135, 0.6666667
      %v4200 = vmul.f32 %v4136, 0.6666667
      %v4201 = vmul.f32 %v4137, 0.6666667
      %v4202 = vmul.f32 %v4138, 0.6666667
      %v4203 = vmul.f32 %v4139, 0.6666667
      %v4204 = vmul.f32 %v4140, 0.6666667
      %v4205 = vmul.f32 %v4141, 0.6666667
      %v4206 = vmul.f32 %v4142, 0.6666667
      %v4207 = vmul.f32 %v4143, 0.6666667
      %v4208 = vmul.f32 %v4144, 0.6666667
      %v4209 = vmul.f32 %v4145, 0.6666667
      %v4210 = vmul.f32 %v4146, 0.6666667
      %v4211 = vmul.f32 %v4147, 0.6666667
      %v4212 = vmul.f32 %v4148, 0.6666667
      %v4213 = vmul.f32 %v4149, 0.6666667
      %v4214 = vmul.f32 %v4150, 0.6666667
      %v4215 = vmul.f32 %v4151, 0.6666667
      %v4216 = vmul.f32 %v4152, 0.6666667
      %v4217 = vmul.f32 %v4153, 0.6666667
      %v4218 = vmul.f32 %v4154, 0.6666667
      %v4219 = vmul.f32 %v4155, 0.6666667
      %v4220 = vmul.f32 %v4156, 0.6666667
      %v4221 = vmul.f32 %v4157, 0.6666667
      %v4222 = vmul.f32 %v4158, 0.6666667
      %v4223 = vmul.f32 %v4159, 0.6666667
      %v4224 = vmul.f32 %v4160, 0.6666667
      %v4225 = vmul.f32 %v4161, 0.6666667
      %v4226 = vmul.f32 %v4162, 0.6666667
      %v4227 = vmul.f32 %v4163, 0.6666667
      %v4228 = vmul.f32 %v4164, 0.6666667
      %v4229 = vmul.f32 %v4165, 0.6666667
      %v4230 = vmul.f32 %v4166, 0.6666667
      %v4231 = vsub.f32 %v4167, 1.0
      %v4232 = vsub.f32 %v4168, 1.0
      %v4233 = vsub.f32 %v4169, 1.0
      %v4234 = vsub.f32 %v4170, 1.0
      %v4235 = vsub.f32 %v4171, 1.0
      %v4236 = vsub.f32 %v4172, 1.0
      %v4237 = vsub.f32 %v4173, 1.0
      %v4238 = vsub.f32 %v4174, 1.0
      %v4239 = vsub.f32 %v4175, 1.0
      %v4240 = vsub.f32 %v4176, 1.0
      %v4241 = vsub.f32 %v4177, 1.0
      %v4242 = vsub.f32 %v4178, 1.0
      %v4243 = vsub.f32 %v4179, 1.0
      %v4244 = vsub.f32 %v4180, 1.0
      %v4245 = vsub.f32 %v4181, 1.0
      %v4246 = vsub.f32 %v4182, 1.0
      %v4247 = vsub.f32 %v4183, 1.0
      %v4248 = vsub.f32 %v4184, 1.0
      %v4249 = vsub.f32 %v4185, 1.0
      %v4250 = vsub.f32 %v4186, 1.0
      %v4251 = vsub.f32 %v4187, 1.0
      %v4252 = vsub.f32 %v4188, 1.0
      %v4253 = vsub.f32 %v4189, 1.0
      %v4254 = vsub.f32 %v4190, 1.0
      %v4255 = vsub.f32 %v4191, 1.0
      %v4256 = vsub.f32 %v4192, 1.0
      %v4257 = vsub.f32 %v4193, 1.0
      %v4258 = vsub.f32 %v4194, 1.0
      %v4259 = vsub.f32 %v4195, 1.0
      %v4260 = vsub.f32 %v4196, 1.0
      %v4261 = vsub.f32 %v4197, 1.0
      %v4262 = vsub.f32 %v4198, 1.0
      %v4263 = vsub.f32 %v4199, 1.0
      %v4264 = vsub.f32 %v4200, 1.0
      %v4265 = vsub.f32 %v4201, 1.0
      %v4266 = vsub.f32 %v4202, 1.0
      %v4267 = vsub.f32 %v4203, 1.0
      %v4268 = vsub.f32 %v4204, 1.0
      %v4269 = vsub.f32 %v4205, 1.0
      %v4270 = vsub.f32 %v4206, 1.0
      %v4271 = vsub.f32 %v4207, 1.0
      %v4272 = vsub.f32 %v4208, 1.0
      %v4273 = vsub.f32 %v4209, 1.0
      %v4274 = vsub.f32 %v4210, 1.0
      %v4275 = vsub.f32 %v4211, 1.0
      %v4276 = vsub.f32 %v4212, 1.0
      %v4277 = vsub.f32 %v4213, 1.0
      %v4278 = vsub.f32 %v4214, 1.0
      %v4279 = vsub.f32 %v4215, 1.0
      %v4280 = vsub.f32 %v4216, 1.0
      %v4281 = vsub.f32 %v4217, 1.0
      %v4282 = vsub.f32 %v4218, 1.0
      %v4283 = vsub.f32 %v4219, 1.0
      %v4284 = vsub.f32 %v4220, 1.0
      %v4285 = vsub.f32 %v4221, 1.0
      %v4286 = vsub.f32 %v4222, 1.0
      %v4287 = vsub.f32 %v4223, 1.0
      %v4288 = vsub.f32 %v4224, 1.0
      %v4289 = vsub.f32 %v4225, 1.0
      %v4290 = vsub.f32 %v4226, 1.0
      %v4291 = vsub.f32 %v4227, 1.0
      %v4292 = vsub.f32 %v4228, 1.0
      %v4293 = vsub.f32 %v4229, 1.0
      %v4294 = vsub.f32 %v4230, 1.0
      %v4295 = vld [vmem:[%s3] sm:$0x1]
      %v4297 = vlaneseq
      %v4298 = vshrl.u32 %v4297, 7
      %v4299 = vsub.s32 0, %v4298
      %v4300 = vrot.slane %v4295, %v4299
      %v4302 = vsub.f32 %v4300, %v4039
      %v4303 = vsub.f32 %v4300, %v4040
      %v4304 = vsub.f32 %v4300, %v4041
      %v4305 = vsub.f32 %v4300, %v4042
      %v4306 = vsub.f32 %v4300, %v4043
      %v4307 = vsub.f32 %v4300, %v4044
      %v4308 = vsub.f32 %v4300, %v4045
      %v4309 = vsub.f32 %v4300, %v4046
      %v4310 = vsub.f32 %v4300, %v4047
      %v4311 = vsub.f32 %v4300, %v4048
      %v4312 = vsub.f32 %v4300, %v4049
      %v4313 = vsub.f32 %v4300, %v4050
      %v4314 = vsub.f32 %v4300, %v4051
      %v4315 = vsub.f32 %v4300, %v4052
      %v4316 = vsub.f32 %v4300, %v4053
      %v4317 = vsub.f32 %v4300, %v4054
      %v4318 = vsub.f32 %v4300, %v4055
      %v4319 = vsub.f32 %v4300, %v4056
      %v4320 = vsub.f32 %v4300, %v4057
      %v4321 = vsub.f32 %v4300, %v4058
      %v4322 = vsub.f32 %v4300, %v4059
      %v4323 = vsub.f32 %v4300, %v4060
      %v4324 = vsub.f32 %v4300, %v4061
      %v4325 = vsub.f32 %v4300, %v4062
      %v4326 = vsub.f32 %v4300, %v4063
      %v4327 = vsub.f32 %v4300, %v4064
      %v4328 = vsub.f32 %v4300, %v4065
      %v4329 = vsub.f32 %v4300, %v4066
      %v4330 = vsub.f32 %v4300, %v4067
      %v4331 = vsub.f32 %v4300, %v4068
      %v4332 = vsub.f32 %v4300, %v4069
      %v4333 = vsub.f32 %v4300, %v4070
      %v4334 = vsub.f32 %v4300, %v4071
      %v4335 = vsub.f32 %v4300, %v4072
      %v4336 = vsub.f32 %v4300, %v4073
      %v4337 = vsub.f32 %v4300, %v4074
      %v4338 = vsub.f32 %v4300, %v4075
      %v4339 = vsub.f32 %v4300, %v4076
      %v4340 = vsub.f32 %v4300, %v4077
      %v4341 = vsub.f32 %v4300, %v4078
      %v4342 = vsub.f32 %v4300, %v4079
      %v4343 = vsub.f32 %v4300, %v4080
      %v4344 = vsub.f32 %v4300, %v4081
      %v4345 = vsub.f32 %v4300, %v4082
      %v4346 = vsub.f32 %v4300, %v4083
      %v4347 = vsub.f32 %v4300, %v4084
      %v4348 = vsub.f32 %v4300, %v4085
      %v4349 = vsub.f32 %v4300, %v4086
      %v4350 = vsub.f32 %v4300, %v4087
      %v4351 = vsub.f32 %v4300, %v4088
      %v4352 = vsub.f32 %v4300, %v4089
      %v4353 = vsub.f32 %v4300, %v4090
      %v4354 = vsub.f32 %v4300, %v4091
      %v4355 = vsub.f32 %v4300, %v4092
      %v4356 = vsub.f32 %v4300, %v4093
      %v4357 = vsub.f32 %v4300, %v4094
      %v4358 = vsub.f32 %v4300, %v4095
      %v4359 = vsub.f32 %v4300, %v4096
      %v4360 = vsub.f32 %v4300, %v4097
      %v4361 = vsub.f32 %v4300, %v4098
      %v4362 = vsub.f32 %v4300, %v4099
      %v4363 = vsub.f32 %v4300, %v4100
      %v4364 = vsub.f32 %v4300, %v4101
      %v4365 = vsub.f32 %v4300, %v4102
      %v4366 = vsub.f32 %v4231, -1.0
      %v4367 = vsub.f32 %v4232, -1.0
      %v4368 = vsub.f32 %v4233, -1.0
      %v4369 = vsub.f32 %v4234, -1.0
      %v4370 = vsub.f32 %v4235, -1.0
      %v4371 = vsub.f32 %v4236, -1.0
      %v4372 = vsub.f32 %v4237, -1.0
      %v4373 = vsub.f32 %v4238, -1.0
      %v4374 = vsub.f32 %v4239, -1.0
      %v4375 = vsub.f32 %v4240, -1.0
      %v4376 = vsub.f32 %v4241, -1.0
      %v4377 = vsub.f32 %v4242, -1.0
      %v4378 = vsub.f32 %v4243, -1.0
      %v4379 = vsub.f32 %v4244, -1.0
      %v4380 = vsub.f32 %v4245, -1.0
      %v4381 = vsub.f32 %v4246, -1.0
      %v4382 = vsub.f32 %v4247, -1.0
      %v4383 = vsub.f32 %v4248, -1.0
      %v4384 = vsub.f32 %v4249, -1.0
      %v4385 = vsub.f32 %v4250, -1.0
      %v4386 = vsub.f32 %v4251, -1.0
      %v4387 = vsub.f32 %v4252, -1.0
      %v4388 = vsub.f32 %v4253, -1.0
      %v4389 = vsub.f32 %v4254, -1.0
      %v4390 = vsub.f32 %v4255, -1.0
      %v4391 = vsub.f32 %v4256, -1.0
      %v4392 = vsub.f32 %v4257, -1.0
      %v4393 = vsub.f32 %v4258, -1.0
      %v4394 = vsub.f32 %v4259, -1.0
      %v4395 = vsub.f32 %v4260, -1.0
      %v4396 = vsub.f32 %v4261, -1.0
      %v4397 = vsub.f32 %v4262, -1.0
      %v4398 = vsub.f32 %v4263, -1.0
      %v4399 = vsub.f32 %v4264, -1.0
      %v4400 = vsub.f32 %v4265, -1.0
      %v4401 = vsub.f32 %v4266, -1.0
      %v4402 = vsub.f32 %v4267, -1.0
      %v4403 = vsub.f32 %v4268, -1.0
      %v4404 = vsub.f32 %v4269, -1.0
      %v4405 = vsub.f32 %v4270, -1.0
      %v4406 = vsub.f32 %v4271, -1.0
      %v4407 = vsub.f32 %v4272, -1.0
      %v4408 = vsub.f32 %v4273, -1.0
      %v4409 = vsub.f32 %v4274, -1.0
      %v4410 = vsub.f32 %v4275, -1.0
      %v4411 = vsub.f32 %v4276, -1.0
      %v4412 = vsub.f32 %v4277, -1.0
      %v4413 = vsub.f32 %v4278, -1.0
      %v4414 = vsub.f32 %v4279, -1.0
      %v4415 = vsub.f32 %v4280, -1.0
      %v4416 = vsub.f32 %v4281, -1.0
      %v4417 = vsub.f32 %v4282, -1.0
      %v4418 = vsub.f32 %v4283, -1.0
      %v4419 = vsub.f32 %v4284, -1.0
      %v4420 = vsub.f32 %v4285, -1.0
      %v4421 = vsub.f32 %v4286, -1.0
      %v4422 = vsub.f32 %v4287, -1.0
      %v4423 = vsub.f32 %v4288, -1.0
      %v4424 = vsub.f32 %v4289, -1.0
      %v4425 = vsub.f32 %v4290, -1.0
      %v4426 = vsub.f32 %v4291, -1.0
      %v4427 = vsub.f32 %v4292, -1.0
      %v4428 = vsub.f32 %v4293, -1.0
      %v4429 = vsub.f32 %v4294, -1.0
      %v4430 = vsub.f32 %v4231, -0.33333334
      %v4431 = vsub.f32 %v4232, -0.33333334
      %v4432 = vsub.f32 %v4233, -0.33333334
      %v4433 = vsub.f32 %v4234, -0.33333334
      %v4434 = vsub.f32 %v4235, -0.33333334
      %v4435 = vsub.f32 %v4236, -0.33333334
      %v4436 = vsub.f32 %v4237, -0.33333334
      %v4437 = vsub.f32 %v4238, -0.33333334
      %v4438 = vsub.f32 %v4239, -0.33333334
      %v4439 = vsub.f32 %v4240, -0.33333334
      %v4440 = vsub.f32 %v4241, -0.33333334
      %v4441 = vsub.f32 %v4242, -0.33333334
      %v4442 = vsub.f32 %v4243, -0.33333334
      %v4443 = vsub.f32 %v4244, -0.33333334
      %v4444 = vsub.f32 %v4245, -0.33333334
      %v4445 = vsub.f32 %v4246, -0.33333334
      %v4446 = vsub.f32 %v4247, -0.33333334
      %v4447 = vsub.f32 %v4248, -0.33333334
      %v4448 = vsub.f32 %v4249, -0.33333334
      %v4449 = vsub.f32 %v4250, -0.33333334
      %v4450 = vsub.f32 %v4251, -0.33333334
      %v4451 = vsub.f32 %v4252, -0.33333334
      %v4452 = vsub.f32 %v4253, -0.33333334
      %v4453 = vsub.f32 %v4254, -0.33333334
      %v4454 = vsub.f32 %v4255, -0.33333334
      %v4455 = vsub.f32 %v4256, -0.33333334
      %v4456 = vsub.f32 %v4257, -0.33333334
      %v4457 = vsub.f32 %v4258, -0.33333334
      %v4458 = vsub.f32 %v4259, -0.33333334
      %v4459 = vsub.f32 %v4260, -0.33333334
      %v4460 = vsub.f32 %v4261, -0.33333334
      %v4461 = vsub.f32 %v4262, -0.33333334
      %v4462 = vsub.f32 %v4263, -0.33333334
      %v4463 = vsub.f32 %v4264, -0.33333334
      %v4464 = vsub.f32 %v4265, -0.33333334
      %v4465 = vsub.f32 %v4266, -0.33333334
      %v4466 = vsub.f32 %v4267, -0.33333334
      %v4467 = vsub.f32 %v4268, -0.33333334
      %v4468 = vsub.f32 %v4269, -0.33333334
      %v4469 = vsub.f32 %v4270, -0.33333334
      %v4470 = vsub.f32 %v4271, -0.33333334
      %v4471 = vsub.f32 %v4272, -0.33333334
      %v4472 = vsub.f32 %v4273, -0.33333334
      %v4473 = vsub.f32 %v4274, -0.33333334
      %v4474 = vsub.f32 %v4275, -0.33333334
      %v4475 = vsub.f32 %v4276, -0.33333334
      %v4476 = vsub.f32 %v4277, -0.33333334
      %v4477 = vsub.f32 %v4278, -0.33333334
      %v4478 = vsub.f32 %v4279, -0.33333334
      %v4479 = vsub.f32 %v4280, -0.33333334
      %v4480 = vsub.f32 %v4281, -0.33333334
      %v4481 = vsub.f32 %v4282, -0.33333334
      %v4482 = vsub.f32 %v4283, -0.33333334
      %v4483 = vsub.f32 %v4284, -0.33333334
      %v4484 = vsub.f32 %v4285, -0.33333334
      %v4485 = vsub.f32 %v4286, -0.33333334
      %v4486 = vsub.f32 %v4287, -0.33333334
      %v4487 = vsub.f32 %v4288, -0.33333334
      %v4488 = vsub.f32 %v4289, -0.33333334
      %v4489 = vsub.f32 %v4290, -0.33333334
      %v4490 = vsub.f32 %v4291, -0.33333334
      %v4491 = vsub.f32 %v4292, -0.33333334
      %v4492 = vsub.f32 %v4293, -0.33333334
      %v4493 = vsub.f32 %v4294, -0.33333334
      %v4494 = vsub.f32 %v4231, 0.33333334
      %v4495 = vsub.f32 %v4232, 0.33333334
      %v4496 = vsub.f32 %v4233, 0.33333334
      %v4497 = vsub.f32 %v4234, 0.33333334
      %v4498 = vsub.f32 %v4235, 0.33333334
      %v4499 = vsub.f32 %v4236, 0.33333334
      %v4500 = vsub.f32 %v4237, 0.33333334
      %v4501 = vsub.f32 %v4238, 0.33333334
      %v4502 = vsub.f32 %v4239, 0.33333334
      %v4503 = vsub.f32 %v4240, 0.33333334
      %v4504 = vsub.f32 %v4241, 0.33333334
      %v4505 = vsub.f32 %v4242, 0.33333334
      %v4506 = vsub.f32 %v4243, 0.33333334
      %v4507 = vsub.f32 %v4244, 0.33333334
      %v4508 = vsub.f32 %v4245, 0.33333334
      %v4509 = vsub.f32 %v4246, 0.33333334
      %v4510 = vsub.f32 %v4247, 0.33333334
      %v4511 = vsub.f32 %v4248, 0.33333334
      %v4512 = vsub.f32 %v4249, 0.33333334
      %v4513 = vsub.f32 %v4250, 0.33333334
      %v4514 = vsub.f32 %v4251, 0.33333334
      %v4515 = vsub.f32 %v4252, 0.33333334
      %v4516 = vsub.f32 %v4253, 0.33333334
      %v4517 = vsub.f32 %v4254, 0.33333334
      %v4518 = vsub.f32 %v4255, 0.33333334
      %v4519 = vsub.f32 %v4256, 0.33333334
      %v4520 = vsub.f32 %v4257, 0.33333334
      %v4521 = vsub.f32 %v4258, 0.33333334
      %v4522 = vsub.f32 %v4259, 0.33333334
      %v4523 = vsub.f32 %v4260, 0.33333334
      %v4524 = vsub.f32 %v4261, 0.33333334
      %v4525 = vsub.f32 %v4262, 0.33333334
      %v4526 = vsub.f32 %v4263, 0.33333334
      %v4527 = vsub.f32 %v4264, 0.33333334
      %v4528 = vsub.f32 %v4265, 0.33333334
      %v4529 = vsub.f32 %v4266, 0.33333334
      %v4530 = vsub.f32 %v4267, 0.33333334
      %v4531 = vsub.f32 %v4268, 0.33333334
      %v4532 = vsub.f32 %v4269, 0.33333334
      %v4533 = vsub.f32 %v4270, 0.33333334
      %v4534 = vsub.f32 %v4271, 0.33333334
      %v4535 = vsub.f32 %v4272, 0.33333334
      %v4536 = vsub.f32 %v4273, 0.33333334
      %v4537 = vsub.f32 %v4274, 0.33333334
      %v4538 = vsub.f32 %v4275, 0.33333334
      %v4539 = vsub.f32 %v4276, 0.33333334
      %v4540 = vsub.f32 %v4277, 0.33333334
      %v4541 = vsub.f32 %v4278, 0.33333334
      %v4542 = vsub.f32 %v4279, 0.33333334
      %v4543 = vsub.f32 %v4280, 0.33333334
      %v4544 = vsub.f32 %v4281, 0.33333334
      %v4545 = vsub.f32 %v4282, 0.33333334
      %v4546 = vsub.f32 %v4283, 0.33333334
      %v4547 = vsub.f32 %v4284, 0.33333334
      %v4548 = vsub.f32 %v4285, 0.33333334
      %v4549 = vsub.f32 %v4286, 0.33333334
      %v4550 = vsub.f32 %v4287, 0.33333334
      %v4551 = vsub.f32 %v4288, 0.33333334
      %v4552 = vsub.f32 %v4289, 0.33333334
      %v4553 = vsub.f32 %v4290, 0.33333334
      %v4554 = vsub.f32 %v4291, 0.33333334
      %v4555 = vsub.f32 %v4292, 0.33333334
      %v4556 = vsub.f32 %v4293, 0.33333334
      %v4557 = vsub.f32 %v4294, 0.33333334
      %v4558 = vsub.f32 %v4231, 1.0
      %v4559 = vsub.f32 %v4232, 1.0
      %v4560 = vsub.f32 %v4233, 1.0
      %v4561 = vsub.f32 %v4234, 1.0
      %v4562 = vsub.f32 %v4235, 1.0
      %v4563 = vsub.f32 %v4236, 1.0
      %v4564 = vsub.f32 %v4237, 1.0
      %v4565 = vsub.f32 %v4238, 1.0
      %v4566 = vsub.f32 %v4239, 1.0
      %v4567 = vsub.f32 %v4240, 1.0
      %v4568 = vsub.f32 %v4241, 1.0
      %v4569 = vsub.f32 %v4242, 1.0
      %v4570 = vsub.f32 %v4243, 1.0
      %v4571 = vsub.f32 %v4244, 1.0
      %v4572 = vsub.f32 %v4245, 1.0
      %v4573 = vsub.f32 %v4246, 1.0
      %v4574 = vsub.f32 %v4247, 1.0
      %v4575 = vsub.f32 %v4248, 1.0
      %v4576 = vsub.f32 %v4249, 1.0
      %v4577 = vsub.f32 %v4250, 1.0
      %v4578 = vsub.f32 %v4251, 1.0
      %v4579 = vsub.f32 %v4252, 1.0
      %v4580 = vsub.f32 %v4253, 1.0
      %v4581 = vsub.f32 %v4254, 1.0
      %v4582 = vsub.f32 %v4255, 1.0
      %v4583 = vsub.f32 %v4256, 1.0
      %v4584 = vsub.f32 %v4257, 1.0
      %v4585 = vsub.f32 %v4258, 1.0
      %v4586 = vsub.f32 %v4259, 1.0
      %v4587 = vsub.f32 %v4260, 1.0
      %v4588 = vsub.f32 %v4261, 1.0
      %v4589 = vsub.f32 %v4262, 1.0
      %v4590 = vsub.f32 %v4263, 1.0
      %v4591 = vsub.f32 %v4264, 1.0
      %v4592 = vsub.f32 %v4265, 1.0
      %v4593 = vsub.f32 %v4266, 1.0
      %v4594 = vsub.f32 %v4267, 1.0
      %v4595 = vsub.f32 %v4268, 1.0
      %v4596 = vsub.f32 %v4269, 1.0
      %v4597 = vsub.f32 %v4270, 1.0
      %v4598 = vsub.f32 %v4271, 1.0
      %v4599 = vsub.f32 %v4272, 1.0
      %v4600 = vsub.f32 %v4273, 1.0
      %v4601 = vsub.f32 %v4274, 1.0
      %v4602 = vsub.f32 %v4275, 1.0
      %v4603 = vsub.f32 %v4276, 1.0
      %v4604 = vsub.f32 %v4277, 1.0
      %v4605 = vsub.f32 %v4278, 1.0
      %v4606 = vsub.f32 %v4279, 1.0
      %v4607 = vsub.f32 %v4280, 1.0
      %v4608 = vsub.f32 %v4281, 1.0
      %v4609 = vsub.f32 %v4282, 1.0
      %v4610 = vsub.f32 %v4283, 1.0
      %v4611 = vsub.f32 %v4284, 1.0
      %v4612 = vsub.f32 %v4285, 1.0
      %v4613 = vsub.f32 %v4286, 1.0
      %v4614 = vsub.f32 %v4287, 1.0
      %v4615 = vsub.f32 %v4288, 1.0
      %v4616 = vsub.f32 %v4289, 1.0
      %v4617 = vsub.f32 %v4290, 1.0
      %v4618 = vsub.f32 %v4291, 1.0
      %v4619 = vsub.f32 %v4292, 1.0
      %v4620 = vsub.f32 %v4293, 1.0
      %v4621 = vsub.f32 %v4294, 1.0
      %v4622 = vmul.f32 %v4430, %v4494
      %v4623 = vmul.f32 %v4431, %v4495
      %v4624 = vmul.f32 %v4432, %v4496
      %v4625 = vmul.f32 %v4433, %v4497
      %v4626 = vmul.f32 %v4434, %v4498
      %v4627 = vmul.f32 %v4435, %v4499
      %v4628 = vmul.f32 %v4436, %v4500
      %v4629 = vmul.f32 %v4437, %v4501
      %v4630 = vmul.f32 %v4438, %v4502
      %v4631 = vmul.f32 %v4439, %v4503
      %v4632 = vmul.f32 %v4440, %v4504
      %v4633 = vmul.f32 %v4441, %v4505
      %v4634 = vmul.f32 %v4442, %v4506
      %v4635 = vmul.f32 %v4443, %v4507
      %v4636 = vmul.f32 %v4444, %v4508
      %v4637 = vmul.f32 %v4445, %v4509
      %v4638 = vmul.f32 %v4446, %v4510
      %v4639 = vmul.f32 %v4447, %v4511
      %v4640 = vmul.f32 %v4448, %v4512
      %v4641 = vmul.f32 %v4449, %v4513
      %v4642 = vmul.f32 %v4450, %v4514
      %v4643 = vmul.f32 %v4451, %v4515
      %v4644 = vmul.f32 %v4452, %v4516
      %v4645 = vmul.f32 %v4453, %v4517
      %v4646 = vmul.f32 %v4454, %v4518
      %v4647 = vmul.f32 %v4455, %v4519
      %v4648 = vmul.f32 %v4456, %v4520
      %v4649 = vmul.f32 %v4457, %v4521
      %v4650 = vmul.f32 %v4458, %v4522
      %v4651 = vmul.f32 %v4459, %v4523
      %v4652 = vmul.f32 %v4460, %v4524
      %v4653 = vmul.f32 %v4461, %v4525
      %v4654 = vmul.f32 %v4462, %v4526
      %v4655 = vmul.f32 %v4463, %v4527
      %v4656 = vmul.f32 %v4464, %v4528
      %v4657 = vmul.f32 %v4465, %v4529
      %v4658 = vmul.f32 %v4466, %v4530
      %v4659 = vmul.f32 %v4467, %v4531
      %v4660 = vmul.f32 %v4468, %v4532
      %v4661 = vmul.f32 %v4469, %v4533
      %v4662 = vmul.f32 %v4470, %v4534
      %v4663 = vmul.f32 %v4471, %v4535
      %v4664 = vmul.f32 %v4472, %v4536
      %v4665 = vmul.f32 %v4473, %v4537
      %v4666 = vmul.f32 %v4474, %v4538
      %v4667 = vmul.f32 %v4475, %v4539
      %v4668 = vmul.f32 %v4476, %v4540
      %v4669 = vmul.f32 %v4477, %v4541
      %v4670 = vmul.f32 %v4478, %v4542
      %v4671 = vmul.f32 %v4479, %v4543
      %v4672 = vmul.f32 %v4480, %v4544
      %v4673 = vmul.f32 %v4481, %v4545
      %v4674 = vmul.f32 %v4482, %v4546
      %v4675 = vmul.f32 %v4483, %v4547
      %v4676 = vmul.f32 %v4484, %v4548
      %v4677 = vmul.f32 %v4485, %v4549
      %v4678 = vmul.f32 %v4486, %v4550
      %v4679 = vmul.f32 %v4487, %v4551
      %v4680 = vmul.f32 %v4488, %v4552
      %v4681 = vmul.f32 %v4489, %v4553
      %v4682 = vmul.f32 %v4490, %v4554
      %v4683 = vmul.f32 %v4491, %v4555
      %v4684 = vmul.f32 %v4492, %v4556
      %v4685 = vmul.f32 %v4493, %v4557
      %v4686 = vmul.f32 %v4622, %v4558
      %v4687 = vmul.f32 %v4623, %v4559
      %v4688 = vmul.f32 %v4624, %v4560
      %v4689 = vmul.f32 %v4625, %v4561
      %v4690 = vmul.f32 %v4626, %v4562
      %v4691 = vmul.f32 %v4627, %v4563
      %v4692 = vmul.f32 %v4628, %v4564
      %v4693 = vmul.f32 %v4629, %v4565
      %v4694 = vmul.f32 %v4630, %v4566
      %v4695 = vmul.f32 %v4631, %v4567
      %v4696 = vmul.f32 %v4632, %v4568
      %v4697 = vmul.f32 %v4633, %v4569
      %v4698 = vmul.f32 %v4634, %v4570
      %v4699 = vmul.f32 %v4635, %v4571
      %v4700 = vmul.f32 %v4636, %v4572
      %v4701 = vmul.f32 %v4637, %v4573
      %v4702 = vmul.f32 %v4638, %v4574
      %v4703 = vmul.f32 %v4639, %v4575
      %v4704 = vmul.f32 %v4640, %v4576
      %v4705 = vmul.f32 %v4641, %v4577
      %v4706 = vmul.f32 %v4642, %v4578
      %v4707 = vmul.f32 %v4643, %v4579
      %v4708 = vmul.f32 %v4644, %v4580
      %v4709 = vmul.f32 %v4645, %v4581
      %v4710 = vmul.f32 %v4646, %v4582
      %v4711 = vmul.f32 %v4647, %v4583
      %v4712 = vmul.f32 %v4648, %v4584
      %v4713 = vmul.f32 %v4649, %v4585
      %v4714 = vmul.f32 %v4650, %v4586
      %v4715 = vmul.f32 %v4651, %v4587
      %v4716 = vmul.f32 %v4652, %v4588
      %v4717 = vmul.f32 %v4653, %v4589
      %v4718 = vmul.f32 %v4654, %v4590
      %v4719 = vmul.f32 %v4655, %v4591
      %v4720 = vmul.f32 %v4656, %v4592
      %v4721 = vmul.f32 %v4657, %v4593
      %v4722 = vmul.f32 %v4658, %v4594
      %v4723 = vmul.f32 %v4659, %v4595
      %v4724 = vmul.f32 %v4660, %v4596
      %v4725 = vmul.f32 %v4661, %v4597
      %v4726 = vmul.f32 %v4662, %v4598
      %v4727 = vmul.f32 %v4663, %v4599
      %v4728 = vmul.f32 %v4664, %v4600
      %v4729 = vmul.f32 %v4665, %v4601
      %v4730 = vmul.f32 %v4666, %v4602
      %v4731 = vmul.f32 %v4667, %v4603
      %v4732 = vmul.f32 %v4668, %v4604
      %v4733 = vmul.f32 %v4669, %v4605
      %v4734 = vmul.f32 %v4670, %v4606
      %v4735 = vmul.f32 %v4671, %v4607
      %v4736 = vmul.f32 %v4672, %v4608
      %v4737 = vmul.f32 %v4673, %v4609
      %v4738 = vmul.f32 %v4674, %v4610
      %v4739 = vmul.f32 %v4675, %v4611
      %v4740 = vmul.f32 %v4676, %v4612
      %v4741 = vmul.f32 %v4677, %v4613
      %v4742 = vmul.f32 %v4678, %v4614
      %v4743 = vmul.f32 %v4679, %v4615
      %v4744 = vmul.f32 %v4680, %v4616
      %v4745 = vmul.f32 %v4681, %v4617
      %v4746 = vmul.f32 %v4682, %v4618
      %v4747 = vmul.f32 %v4683, %v4619
      %v4748 = vmul.f32 %v4684, %v4620
      %v4749 = vmul.f32 %v4685, %v4621
      %v4750 = vmul.f32 %v4686, -0.5625
      %v4751 = vmul.f32 %v4687, -0.5625
      %v4752 = vmul.f32 %v4688, -0.5625
      %v4753 = vmul.f32 %v4689, -0.5625
      %v4754 = vmul.f32 %v4690, -0.5625
      %v4755 = vmul.f32 %v4691, -0.5625
      %v4756 = vmul.f32 %v4692, -0.5625
      %v4757 = vmul.f32 %v4693, -0.5625
      %v4758 = vmul.f32 %v4694, -0.5625
      %v4759 = vmul.f32 %v4695, -0.5625
      %v4760 = vmul.f32 %v4696, -0.5625
      %v4761 = vmul.f32 %v4697, -0.5625
      %v4762 = vmul.f32 %v4698, -0.5625
      %v4763 = vmul.f32 %v4699, -0.5625
      %v4764 = vmul.f32 %v4700, -0.5625
      %v4765 = vmul.f32 %v4701, -0.5625
      %v4766 = vmul.f32 %v4702, -0.5625
      %v4767 = vmul.f32 %v4703, -0.5625
      %v4768 = vmul.f32 %v4704, -0.5625
      %v4769 = vmul.f32 %v4705, -0.5625
      %v4770 = vmul.f32 %v4706, -0.5625
      %v4771 = vmul.f32 %v4707, -0.5625
      %v4772 = vmul.f32 %v4708, -0.5625
      %v4773 = vmul.f32 %v4709, -0.5625
      %v4774 = vmul.f32 %v4710, -0.5625
      %v4775 = vmul.f32 %v4711, -0.5625
      %v4776 = vmul.f32 %v4712, -0.5625
      %v4777 = vmul.f32 %v4713, -0.5625
      %v4778 = vmul.f32 %v4714, -0.5625
      %v4779 = vmul.f32 %v4715, -0.5625
      %v4780 = vmul.f32 %v4716, -0.5625
      %v4781 = vmul.f32 %v4717, -0.5625
      %v4782 = vmul.f32 %v4718, -0.5625
      %v4783 = vmul.f32 %v4719, -0.5625
      %v4784 = vmul.f32 %v4720, -0.5625
      %v4785 = vmul.f32 %v4721, -0.5625
      %v4786 = vmul.f32 %v4722, -0.5625
      %v4787 = vmul.f32 %v4723, -0.5625
      %v4788 = vmul.f32 %v4724, -0.5625
      %v4789 = vmul.f32 %v4725, -0.5625
      %v4790 = vmul.f32 %v4726, -0.5625
      %v4791 = vmul.f32 %v4727, -0.5625
      %v4792 = vmul.f32 %v4728, -0.5625
      %v4793 = vmul.f32 %v4729, -0.5625
      %v4794 = vmul.f32 %v4730, -0.5625
      %v4795 = vmul.f32 %v4731, -0.5625
      %v4796 = vmul.f32 %v4732, -0.5625
      %v4797 = vmul.f32 %v4733, -0.5625
      %v4798 = vmul.f32 %v4734, -0.5625
      %v4799 = vmul.f32 %v4735, -0.5625
      %v4800 = vmul.f32 %v4736, -0.5625
      %v4801 = vmul.f32 %v4737, -0.5625
      %v4802 = vmul.f32 %v4738, -0.5625
      %v4803 = vmul.f32 %v4739, -0.5625
      %v4804 = vmul.f32 %v4740, -0.5625
      %v4805 = vmul.f32 %v4741, -0.5625
      %v4806 = vmul.f32 %v4742, -0.5625
      %v4807 = vmul.f32 %v4743, -0.5625
      %v4808 = vmul.f32 %v4744, -0.5625
      %v4809 = vmul.f32 %v4745, -0.5625
      %v4810 = vmul.f32 %v4746, -0.5625
      %v4811 = vmul.f32 %v4747, -0.5625
      %v4812 = vmul.f32 %v4748, -0.5625
      %v4813 = vmul.f32 %v4749, -0.5625
      %vm4814 = vcmp.eq.f32.partialorder %v4302, 0.0
      %vm4815 = vcmp.eq.f32.partialorder %v4303, 0.0
      %vm4816 = vcmp.eq.f32.partialorder %v4304, 0.0
      %vm4817 = vcmp.eq.f32.partialorder %v4305, 0.0
      %vm4818 = vcmp.eq.f32.partialorder %v4306, 0.0
      %vm4819 = vcmp.eq.f32.partialorder %v4307, 0.0
      %vm4820 = vcmp.eq.f32.partialorder %v4308, 0.0
      %vm4821 = vcmp.eq.f32.partialorder %v4309, 0.0
      %vm4822 = vcmp.eq.f32.partialorder %v4310, 0.0
      %vm4823 = vcmp.eq.f32.partialorder %v4311, 0.0
      %vm4824 = vcmp.eq.f32.partialorder %v4312, 0.0
      %vm4825 = vcmp.eq.f32.partialorder %v4313, 0.0
      %vm4826 = vcmp.eq.f32.partialorder %v4314, 0.0
      %vm4827 = vcmp.eq.f32.partialorder %v4315, 0.0
      %vm4828 = vcmp.eq.f32.partialorder %v4316, 0.0
      %vm4829 = vcmp.eq.f32.partialorder %v4317, 0.0
      %vm4830 = vcmp.eq.f32.partialorder %v4318, 0.0
      %vm4831 = vcmp.eq.f32.partialorder %v4319, 0.0
      %vm4832 = vcmp.eq.f32.partialorder %v4320, 0.0
      %vm4833 = vcmp.eq.f32.partialorder %v4321, 0.0
      %vm4834 = vcmp.eq.f32.partialorder %v4322, 0.0
      %vm4835 = vcmp.eq.f32.partialorder %v4323, 0.0
      %vm4836 = vcmp.eq.f32.partialorder %v4324, 0.0
      %vm4837 = vcmp.eq.f32.partialorder %v4325, 0.0
      %vm4838 = vcmp.eq.f32.partialorder %v4326, 0.0
      %vm4839 = vcmp.eq.f32.partialorder %v4327, 0.0
      %vm4840 = vcmp.eq.f32.partialorder %v4328, 0.0
      %vm4841 = vcmp.eq.f32.partialorder %v4329, 0.0
      %vm4842 = vcmp.eq.f32.partialorder %v4330, 0.0
      %vm4843 = vcmp.eq.f32.partialorder %v4331, 0.0
      %vm4844 = vcmp.eq.f32.partialorder %v4332, 0.0
      %vm4845 = vcmp.eq.f32.partialorder %v4333, 0.0
      %vm4846 = vcmp.eq.f32.partialorder %v4334, 0.0
      %vm4847 = vcmp.eq.f32.partialorder %v4335, 0.0
      %vm4848 = vcmp.eq.f32.partialorder %v4336, 0.0
      %vm4849 = vcmp.eq.f32.partialorder %v4337, 0.0
      %vm4850 = vcmp.eq.f32.partialorder %v4338, 0.0
      %vm4851 = vcmp.eq.f32.partialorder %v4339, 0.0
      %vm4852 = vcmp.eq.f32.partialorder %v4340, 0.0
      %vm4853 = vcmp.eq.f32.partialorder %v4341, 0.0
      %vm4854 = vcmp.eq.f32.partialorder %v4342, 0.0
      %vm4855 = vcmp.eq.f32.partialorder %v4343, 0.0
      %vm4856 = vcmp.eq.f32.partialorder %v4344, 0.0
      %vm4857 = vcmp.eq.f32.partialorder %v4345, 0.0
      %vm4858 = vcmp.eq.f32.partialorder %v4346, 0.0
      %vm4859 = vcmp.eq.f32.partialorder %v4347, 0.0
      %vm4860 = vcmp.eq.f32.partialorder %v4348, 0.0
      %vm4861 = vcmp.eq.f32.partialorder %v4349, 0.0
      %vm4862 = vcmp.eq.f32.partialorder %v4350, 0.0
      %vm4863 = vcmp.eq.f32.partialorder %v4351, 0.0
      %vm4864 = vcmp.eq.f32.partialorder %v4352, 0.0
      %vm4865 = vcmp.eq.f32.partialorder %v4353, 0.0
      %vm4866 = vcmp.eq.f32.partialorder %v4354, 0.0
      %vm4867 = vcmp.eq.f32.partialorder %v4355, 0.0
      %vm4868 = vcmp.eq.f32.partialorder %v4356, 0.0
      %vm4869 = vcmp.eq.f32.partialorder %v4357, 0.0
      %vm4870 = vcmp.eq.f32.partialorder %v4358, 0.0
      %vm4871 = vcmp.eq.f32.partialorder %v4359, 0.0
      %vm4872 = vcmp.eq.f32.partialorder %v4360, 0.0
      %vm4873 = vcmp.eq.f32.partialorder %v4361, 0.0
      %vm4874 = vcmp.eq.f32.partialorder %v4362, 0.0
      %vm4875 = vcmp.eq.f32.partialorder %v4363, 0.0
      %vm4876 = vcmp.eq.f32.partialorder %v4364, 0.0
      %vm4877 = vcmp.eq.f32.partialorder %v4365, 0.0
      %v4878 = vsel %vm4814, %v4750, 0.0
      %v4879 = vsel %vm4815, %v4751, 0.0
      %v4880 = vsel %vm4816, %v4752, 0.0
      %v4881 = vsel %vm4817, %v4753, 0.0
      %v4882 = vsel %vm4818, %v4754, 0.0
      %v4883 = vsel %vm4819, %v4755, 0.0
      %v4884 = vsel %vm4820, %v4756, 0.0
      %v4885 = vsel %vm4821, %v4757, 0.0
      %v4886 = vsel %vm4822, %v4758, 0.0
      %v4887 = vsel %vm4823, %v4759, 0.0
      %v4888 = vsel %vm4824, %v4760, 0.0
      %v4889 = vsel %vm4825, %v4761, 0.0
      %v4890 = vsel %vm4826, %v4762, 0.0
      %v4891 = vsel %vm4827, %v4763, 0.0
      %v4892 = vsel %vm4828, %v4764, 0.0
      %v4893 = vsel %vm4829, %v4765, 0.0
      %v4894 = vsel %vm4830, %v4766, 0.0
      %v4895 = vsel %vm4831, %v4767, 0.0
      %v4896 = vsel %vm4832, %v4768, 0.0
      %v4897 = vsel %vm4833, %v4769, 0.0
      %v4898 = vsel %vm4834, %v4770, 0.0
      %v4899 = vsel %vm4835, %v4771, 0.0
      %v4900 = vsel %vm4836, %v4772, 0.0
      %v4901 = vsel %vm4837, %v4773, 0.0
      %v4902 = vsel %vm4838, %v4774, 0.0
      %v4903 = vsel %vm4839, %v4775, 0.0
      %v4904 = vsel %vm4840, %v4776, 0.0
      %v4905 = vsel %vm4841, %v4777, 0.0
      %v4906 = vsel %vm4842, %v4778, 0.0
      %v4907 = vsel %vm4843, %v4779, 0.0
      %v4908 = vsel %vm4844, %v4780, 0.0
      %v4909 = vsel %vm4845, %v4781, 0.0
      %v4910 = vsel %vm4846, %v4782, 0.0
      %v4911 = vsel %vm4847, %v4783, 0.0
      %v4912 = vsel %vm4848, %v4784, 0.0
      %v4913 = vsel %vm4849, %v4785, 0.0
      %v4914 = vsel %vm4850, %v4786, 0.0
      %v4915 = vsel %vm4851, %v4787, 0.0
      %v4916 = vsel %vm4852, %v4788, 0.0
      %v4917 = vsel %vm4853, %v4789, 0.0
      %v4918 = vsel %vm4854, %v4790, 0.0
      %v4919 = vsel %vm4855, %v4791, 0.0
      %v4920 = vsel %vm4856, %v4792, 0.0
      %v4921 = vsel %vm4857, %v4793, 0.0
      %v4922 = vsel %vm4858, %v4794, 0.0
      %v4923 = vsel %vm4859, %v4795, 0.0
      %v4924 = vsel %vm4860, %v4796, 0.0
      %v4925 = vsel %vm4861, %v4797, 0.0
      %v4926 = vsel %vm4862, %v4798, 0.0
      %v4927 = vsel %vm4863, %v4799, 0.0
      %v4928 = vsel %vm4864, %v4800, 0.0
      %v4929 = vsel %vm4865, %v4801, 0.0
      %v4930 = vsel %vm4866, %v4802, 0.0
      %v4931 = vsel %vm4867, %v4803, 0.0
      %v4932 = vsel %vm4868, %v4804, 0.0
      %v4933 = vsel %vm4869, %v4805, 0.0
      %v4934 = vsel %vm4870, %v4806, 0.0
      %v4935 = vsel %vm4871, %v4807, 0.0
      %v4936 = vsel %vm4872, %v4808, 0.0
      %v4937 = vsel %vm4873, %v4809, 0.0
      %v4938 = vsel %vm4874, %v4810, 0.0
      %v4939 = vsel %vm4875, %v4811, 0.0
      %v4940 = vsel %vm4876, %v4812, 0.0
      %v4941 = vsel %vm4877, %v4813, 0.0
      %v4942 = vmul.f32 %v4366, %v4494
      %v4943 = vmul.f32 %v4367, %v4495
      %v4944 = vmul.f32 %v4368, %v4496
      %v4945 = vmul.f32 %v4369, %v4497
      %v4946 = vmul.f32 %v4370, %v4498
      %v4947 = vmul.f32 %v4371, %v4499
      %v4948 = vmul.f32 %v4372, %v4500
      %v4949 = vmul.f32 %v4373, %v4501
      %v4950 = vmul.f32 %v4374, %v4502
      %v4951 = vmul.f32 %v4375, %v4503
      %v4952 = vmul.f32 %v4376, %v4504
      %v4953 = vmul.f32 %v4377, %v4505
      %v4954 = vmul.f32 %v4378, %v4506
      %v4955 = vmul.f32 %v4379, %v4507
      %v4956 = vmul.f32 %v4380, %v4508
      %v4957 = vmul.f32 %v4381, %v4509
      %v4958 = vmul.f32 %v4382, %v4510
      %v4959 = vmul.f32 %v4383, %v4511
      %v4960 = vmul.f32 %v4384, %v4512
      %v4961 = vmul.f32 %v4385, %v4513
      %v4962 = vmul.f32 %v4386, %v4514
      %v4963 = vmul.f32 %v4387, %v4515
      %v4964 = vmul.f32 %v4388, %v4516
      %v4965 = vmul.f32 %v4389, %v4517
      %v4966 = vmul.f32 %v4390, %v4518
      %v4967 = vmul.f32 %v4391, %v4519
      %v4968 = vmul.f32 %v4392, %v4520
      %v4969 = vmul.f32 %v4393, %v4521
      %v4970 = vmul.f32 %v4394, %v4522
      %v4971 = vmul.f32 %v4395, %v4523
      %v4972 = vmul.f32 %v4396, %v4524
      %v4973 = vmul.f32 %v4397, %v4525
      %v4974 = vmul.f32 %v4398, %v4526
      %v4975 = vmul.f32 %v4399, %v4527
      %v4976 = vmul.f32 %v4400, %v4528
      %v4977 = vmul.f32 %v4401, %v4529
      %v4978 = vmul.f32 %v4402, %v4530
      %v4979 = vmul.f32 %v4403, %v4531
      %v4980 = vmul.f32 %v4404, %v4532
      %v4981 = vmul.f32 %v4405, %v4533
      %v4982 = vmul.f32 %v4406, %v4534
      %v4983 = vmul.f32 %v4407, %v4535
      %v4984 = vmul.f32 %v4408, %v4536
      %v4985 = vmul.f32 %v4409, %v4537
      %v4986 = vmul.f32 %v4410, %v4538
      %v4987 = vmul.f32 %v4411, %v4539
      %v4988 = vmul.f32 %v4412, %v4540
      %v4989 = vmul.f32 %v4413, %v4541
      %v4990 = vmul.f32 %v4414, %v4542
      %v4991 = vmul.f32 %v4415, %v4543
      %v4992 = vmul.f32 %v4416, %v4544
      %v4993 = vmul.f32 %v4417, %v4545
      %v4994 = vmul.f32 %v4418, %v4546
      %v4995 = vmul.f32 %v4419, %v4547
      %v4996 = vmul.f32 %v4420, %v4548
      %v4997 = vmul.f32 %v4421, %v4549
      %v4998 = vmul.f32 %v4422, %v4550
      %v4999 = vmul.f32 %v4423, %v4551
      %v5000 = vmul.f32 %v4424, %v4552
      %v5001 = vmul.f32 %v4425, %v4553
      %v5002 = vmul.f32 %v4426, %v4554
      %v5003 = vmul.f32 %v4427, %v4555
      %v5004 = vmul.f32 %v4428, %v4556
      %v5005 = vmul.f32 %v4429, %v4557
      %v5006 = vmul.f32 %v4942, %v4558
      %v5007 = vmul.f32 %v4943, %v4559
      %v5008 = vmul.f32 %v4944, %v4560
      %v5009 = vmul.f32 %v4945, %v4561
      %v5010 = vmul.f32 %v4946, %v4562
      %v5011 = vmul.f32 %v4947, %v4563
      %v5012 = vmul.f32 %v4948, %v4564
      %v5013 = vmul.f32 %v4949, %v4565
      %v5014 = vmul.f32 %v4950, %v4566
      %v5015 = vmul.f32 %v4951, %v4567
      %v5016 = vmul.f32 %v4952, %v4568
      %v5017 = vmul.f32 %v4953, %v4569
      %v5018 = vmul.f32 %v4954, %v4570
      %v5019 = vmul.f32 %v4955, %v4571
      %v5020 = vmul.f32 %v4956, %v4572
      %v5021 = vmul.f32 %v4957, %v4573
      %v5022 = vmul.f32 %v4958, %v4574
      %v5023 = vmul.f32 %v4959, %v4575
      %v5024 = vmul.f32 %v4960, %v4576
      %v5025 = vmul.f32 %v4961, %v4577
      %v5026 = vmul.f32 %v4962, %v4578
      %v5027 = vmul.f32 %v4963, %v4579
      %v5028 = vmul.f32 %v4964, %v4580
      %v5029 = vmul.f32 %v4965, %v4581
      %v5030 = vmul.f32 %v4966, %v4582
      %v5031 = vmul.f32 %v4967, %v4583
      %v5032 = vmul.f32 %v4968, %v4584
      %v5033 = vmul.f32 %v4969, %v4585
      %v5034 = vmul.f32 %v4970, %v4586
      %v5035 = vmul.f32 %v4971, %v4587
      %v5036 = vmul.f32 %v4972, %v4588
      %v5037 = vmul.f32 %v4973, %v4589
      %v5038 = vmul.f32 %v4974, %v4590
      %v5039 = vmul.f32 %v4975, %v4591
      %v5040 = vmul.f32 %v4976, %v4592
      %v5041 = vmul.f32 %v4977, %v4593
      %v5042 = vmul.f32 %v4978, %v4594
      %v5043 = vmul.f32 %v4979, %v4595
      %v5044 = vmul.f32 %v4980, %v4596
      %v5045 = vmul.f32 %v4981, %v4597
      %v5046 = vmul.f32 %v4982, %v4598
      %v5047 = vmul.f32 %v4983, %v4599
      %v5048 = vmul.f32 %v4984, %v4600
      %v5049 = vmul.f32 %v4985, %v4601
      %v5050 = vmul.f32 %v4986, %v4602
      %v5051 = vmul.f32 %v4987, %v4603
      %v5052 = vmul.f32 %v4988, %v4604
      %v5053 = vmul.f32 %v4989, %v4605
      %v5054 = vmul.f32 %v4990, %v4606
      %v5055 = vmul.f32 %v4991, %v4607
      %v5056 = vmul.f32 %v4992, %v4608
      %v5057 = vmul.f32 %v4993, %v4609
      %v5058 = vmul.f32 %v4994, %v4610
      %v5059 = vmul.f32 %v4995, %v4611
      %v5060 = vmul.f32 %v4996, %v4612
      %v5061 = vmul.f32 %v4997, %v4613
      %v5062 = vmul.f32 %v4998, %v4614
      %v5063 = vmul.f32 %v4999, %v4615
      %v5064 = vmul.f32 %v5000, %v4616
      %v5065 = vmul.f32 %v5001, %v4617
      %v5066 = vmul.f32 %v5002, %v4618
      %v5067 = vmul.f32 %v5003, %v4619
      %v5068 = vmul.f32 %v5004, %v4620
      %v5069 = vmul.f32 %v5005, %v4621
      %v5070 = vmul.f32 %v5006, 1.6875
      %v5071 = vmul.f32 %v5007, 1.6875
      %v5072 = vmul.f32 %v5008, 1.6875
      %v5073 = vmul.f32 %v5009, 1.6875
      %v5074 = vmul.f32 %v5010, 1.6875
      %v5075 = vmul.f32 %v5011, 1.6875
      %v5076 = vmul.f32 %v5012, 1.6875
      %v5077 = vmul.f32 %v5013, 1.6875
      %v5078 = vmul.f32 %v5014, 1.6875
      %v5079 = vmul.f32 %v5015, 1.6875
      %v5080 = vmul.f32 %v5016, 1.6875
      %v5081 = vmul.f32 %v5017, 1.6875
      %v5082 = vmul.f32 %v5018, 1.6875
      %v5083 = vmul.f32 %v5019, 1.6875
      %v5084 = vmul.f32 %v5020, 1.6875
      %v5085 = vmul.f32 %v5021, 1.6875
      %v5086 = vmul.f32 %v5022, 1.6875
      %v5087 = vmul.f32 %v5023, 1.6875
      %v5088 = vmul.f32 %v5024, 1.6875
      %v5089 = vmul.f32 %v5025, 1.6875
      %v5090 = vmul.f32 %v5026, 1.6875
      %v5091 = vmul.f32 %v5027, 1.6875
      %v5092 = vmul.f32 %v5028, 1.6875
      %v5093 = vmul.f32 %v5029, 1.6875
      %v5094 = vmul.f32 %v5030, 1.6875
      %v5095 = vmul.f32 %v5031, 1.6875
      %v5096 = vmul.f32 %v5032, 1.6875
      %v5097 = vmul.f32 %v5033, 1.6875
      %v5098 = vmul.f32 %v5034, 1.6875
      %v5099 = vmul.f32 %v5035, 1.6875
      %v5100 = vmul.f32 %v5036, 1.6875
      %v5101 = vmul.f32 %v5037, 1.6875
      %v5102 = vmul.f32 %v5038, 1.6875
      %v5103 = vmul.f32 %v5039, 1.6875
      %v5104 = vmul.f32 %v5040, 1.6875
      %v5105 = vmul.f32 %v5041, 1.6875
      %v5106 = vmul.f32 %v5042, 1.6875
      %v5107 = vmul.f32 %v5043, 1.6875
      %v5108 = vmul.f32 %v5044, 1.6875
      %v5109 = vmul.f32 %v5045, 1.6875
      %v5110 = vmul.f32 %v5046, 1.6875
      %v5111 = vmul.f32 %v5047, 1.6875
      %v5112 = vmul.f32 %v5048, 1.6875
      %v5113 = vmul.f32 %v5049, 1.6875
      %v5114 = vmul.f32 %v5050, 1.6875
      %v5115 = vmul.f32 %v5051, 1.6875
      %v5116 = vmul.f32 %v5052, 1.6875
      %v5117 = vmul.f32 %v5053, 1.6875
      %v5118 = vmul.f32 %v5054, 1.6875
      %v5119 = vmul.f32 %v5055, 1.6875
      %v5120 = vmul.f32 %v5056, 1.6875
      %v5121 = vmul.f32 %v5057, 1.6875
      %v5122 = vmul.f32 %v5058, 1.6875
      %v5123 = vmul.f32 %v5059, 1.6875
      %v5124 = vmul.f32 %v5060, 1.6875
      %v5125 = vmul.f32 %v5061, 1.6875
      %v5126 = vmul.f32 %v5062, 1.6875
      %v5127 = vmul.f32 %v5063, 1.6875
      %v5128 = vmul.f32 %v5064, 1.6875
      %v5129 = vmul.f32 %v5065, 1.6875
      %v5130 = vmul.f32 %v5066, 1.6875
      %v5131 = vmul.f32 %v5067, 1.6875
      %v5132 = vmul.f32 %v5068, 1.6875
      %v5133 = vmul.f32 %v5069, 1.6875
      %vm5134 = vcmp.eq.f32.partialorder %v4302, 1.0
      %vm5135 = vcmp.eq.f32.partialorder %v4303, 1.0
      %vm5136 = vcmp.eq.f32.partialorder %v4304, 1.0
      %vm5137 = vcmp.eq.f32.partialorder %v4305, 1.0
      %vm5138 = vcmp.eq.f32.partialorder %v4306, 1.0
      %vm5139 = vcmp.eq.f32.partialorder %v4307, 1.0
      %vm5140 = vcmp.eq.f32.partialorder %v4308, 1.0
      %vm5141 = vcmp.eq.f32.partialorder %v4309, 1.0
      %vm5142 = vcmp.eq.f32.partialorder %v4310, 1.0
      %vm5143 = vcmp.eq.f32.partialorder %v4311, 1.0
      %vm5144 = vcmp.eq.f32.partialorder %v4312, 1.0
      %vm5145 = vcmp.eq.f32.partialorder %v4313, 1.0
      %vm5146 = vcmp.eq.f32.partialorder %v4314, 1.0
      %vm5147 = vcmp.eq.f32.partialorder %v4315, 1.0
      %vm5148 = vcmp.eq.f32.partialorder %v4316, 1.0
      %vm5149 = vcmp.eq.f32.partialorder %v4317, 1.0
      %vm5150 = vcmp.eq.f32.partialorder %v4318, 1.0
      %vm5151 = vcmp.eq.f32.partialorder %v4319, 1.0
      %vm5152 = vcmp.eq.f32.partialorder %v4320, 1.0
      %vm5153 = vcmp.eq.f32.partialorder %v4321, 1.0
      %vm5154 = vcmp.eq.f32.partialorder %v4322, 1.0
      %vm5155 = vcmp.eq.f32.partialorder %v4323, 1.0
      %vm5156 = vcmp.eq.f32.partialorder %v4324, 1.0
      %vm5157 = vcmp.eq.f32.partialorder %v4325, 1.0
      %vm5158 = vcmp.eq.f32.partialorder %v4326, 1.0
      %vm5159 = vcmp.eq.f32.partialorder %v4327, 1.0
      %vm5160 = vcmp.eq.f32.partialorder %v4328, 1.0
      %vm5161 = vcmp.eq.f32.partialorder %v4329, 1.0
      %vm5162 = vcmp.eq.f32.partialorder %v4330, 1.0
      %vm5163 = vcmp.eq.f32.partialorder %v4331, 1.0
      %vm5164 = vcmp.eq.f32.partialorder %v4332, 1.0
      %vm5165 = vcmp.eq.f32.partialorder %v4333, 1.0
      %vm5166 = vcmp.eq.f32.partialorder %v4334, 1.0
      %vm5167 = vcmp.eq.f32.partialorder %v4335, 1.0
      %vm5168 = vcmp.eq.f32.partialorder %v4336, 1.0
      %vm5169 = vcmp.eq.f32.partialorder %v4337, 1.0
      %vm5170 = vcmp.eq.f32.partialorder %v4338, 1.0
      %vm5171 = vcmp.eq.f32.partialorder %v4339, 1.0
      %vm5172 = vcmp.eq.f32.partialorder %v4340, 1.0
      %vm5173 = vcmp.eq.f32.partialorder %v4341, 1.0
      %vm5174 = vcmp.eq.f32.partialorder %v4342, 1.0
      %vm5175 = vcmp.eq.f32.partialorder %v4343, 1.0
      %vm5176 = vcmp.eq.f32.partialorder %v4344, 1.0
      %vm5177 = vcmp.eq.f32.partialorder %v4345, 1.0
      %vm5178 = vcmp.eq.f32.partialorder %v4346, 1.0
      %vm5179 = vcmp.eq.f32.partialorder %v4347, 1.0
      %vm5180 = vcmp.eq.f32.partialorder %v4348, 1.0
      %vm5181 = vcmp.eq.f32.partialorder %v4349, 1.0
      %vm5182 = vcmp.eq.f32.partialorder %v4350, 1.0
      %vm5183 = vcmp.eq.f32.partialorder %v4351, 1.0
      %vm5184 = vcmp.eq.f32.partialorder %v4352, 1.0
      %vm5185 = vcmp.eq.f32.partialorder %v4353, 1.0
      %vm5186 = vcmp.eq.f32.partialorder %v4354, 1.0
      %vm5187 = vcmp.eq.f32.partialorder %v4355, 1.0
      %vm5188 = vcmp.eq.f32.partialorder %v4356, 1.0
      %vm5189 = vcmp.eq.f32.partialorder %v4357, 1.0
      %vm5190 = vcmp.eq.f32.partialorder %v4358, 1.0
      %vm5191 = vcmp.eq.f32.partialorder %v4359, 1.0
      %vm5192 = vcmp.eq.f32.partialorder %v4360, 1.0
      %vm5193 = vcmp.eq.f32.partialorder %v4361, 1.0
      %vm5194 = vcmp.eq.f32.partialorder %v4362, 1.0
      %vm5195 = vcmp.eq.f32.partialorder %v4363, 1.0
      %vm5196 = vcmp.eq.f32.partialorder %v4364, 1.0
      %vm5197 = vcmp.eq.f32.partialorder %v4365, 1.0
      %v5198 = vsel %vm5134, %v5070, %v4878
      %v5199 = vsel %vm5135, %v5071, %v4879
      %v5200 = vsel %vm5136, %v5072, %v4880
      %v5201 = vsel %vm5137, %v5073, %v4881
      %v5202 = vsel %vm5138, %v5074, %v4882
      %v5203 = vsel %vm5139, %v5075, %v4883
      %v5204 = vsel %vm5140, %v5076, %v4884
      %v5205 = vsel %vm5141, %v5077, %v4885
      %v5206 = vsel %vm5142, %v5078, %v4886
      %v5207 = vsel %vm5143, %v5079, %v4887
      %v5208 = vsel %vm5144, %v5080, %v4888
      %v5209 = vsel %vm5145, %v5081, %v4889
      %v5210 = vsel %vm5146, %v5082, %v4890
      %v5211 = vsel %vm5147, %v5083, %v4891
      %v5212 = vsel %vm5148, %v5084, %v4892
      %v5213 = vsel %vm5149, %v5085, %v4893
      %v5214 = vsel %vm5150, %v5086, %v4894
      %v5215 = vsel %vm5151, %v5087, %v4895
      %v5216 = vsel %vm5152, %v5088, %v4896
      %v5217 = vsel %vm5153, %v5089, %v4897
      %v5218 = vsel %vm5154, %v5090, %v4898
      %v5219 = vsel %vm5155, %v5091, %v4899
      %v5220 = vsel %vm5156, %v5092, %v4900
      %v5221 = vsel %vm5157, %v5093, %v4901
      %v5222 = vsel %vm5158, %v5094, %v4902
      %v5223 = vsel %vm5159, %v5095, %v4903
      %v5224 = vsel %vm5160, %v5096, %v4904
      %v5225 = vsel %vm5161, %v5097, %v4905
      %v5226 = vsel %vm5162, %v5098, %v4906
      %v5227 = vsel %vm5163, %v5099, %v4907
      %v5228 = vsel %vm5164, %v5100, %v4908
      %v5229 = vsel %vm5165, %v5101, %v4909
      %v5230 = vsel %vm5166, %v5102, %v4910
      %v5231 = vsel %vm5167, %v5103, %v4911
      %v5232 = vsel %vm5168, %v5104, %v4912
      %v5233 = vsel %vm5169, %v5105, %v4913
      %v5234 = vsel %vm5170, %v5106, %v4914
      %v5235 = vsel %vm5171, %v5107, %v4915
      %v5236 = vsel %vm5172, %v5108, %v4916
      %v5237 = vsel %vm5173, %v5109, %v4917
      %v5238 = vsel %vm5174, %v5110, %v4918
      %v5239 = vsel %vm5175, %v5111, %v4919
      %v5240 = vsel %vm5176, %v5112, %v4920
      %v5241 = vsel %vm5177, %v5113, %v4921
      %v5242 = vsel %vm5178, %v5114, %v4922
      %v5243 = vsel %vm5179, %v5115, %v4923
      %v5244 = vsel %vm5180, %v5116, %v4924
      %v5245 = vsel %vm5181, %v5117, %v4925
      %v5246 = vsel %vm5182, %v5118, %v4926
      %v5247 = vsel %vm5183, %v5119, %v4927
      %v5248 = vsel %vm5184, %v5120, %v4928
      %v5249 = vsel %vm5185, %v5121, %v4929
      %v5250 = vsel %vm5186, %v5122, %v4930
      %v5251 = vsel %vm5187, %v5123, %v4931
      %v5252 = vsel %vm5188, %v5124, %v4932
      %v5253 = vsel %vm5189, %v5125, %v4933
      %v5254 = vsel %vm5190, %v5126, %v4934
      %v5255 = vsel %vm5191, %v5127, %v4935
      %v5256 = vsel %vm5192, %v5128, %v4936
      %v5257 = vsel %vm5193, %v5129, %v4937
      %v5258 = vsel %vm5194, %v5130, %v4938
      %v5259 = vsel %vm5195, %v5131, %v4939
      %v5260 = vsel %vm5196, %v5132, %v4940
      %v5261 = vsel %vm5197, %v5133, %v4941
      %v5262 = vmul.f32 %v4366, %v4430
      %v5263 = vmul.f32 %v4367, %v4431
      %v5264 = vmul.f32 %v4368, %v4432
      %v5265 = vmul.f32 %v4369, %v4433
      %v5266 = vmul.f32 %v4370, %v4434
      %v5267 = vmul.f32 %v4371, %v4435
      %v5268 = vmul.f32 %v4372, %v4436
      %v5269 = vmul.f32 %v4373, %v4437
      %v5270 = vmul.f32 %v4374, %v4438
      %v5271 = vmul.f32 %v4375, %v4439
      %v5272 = vmul.f32 %v4376, %v4440
      %v5273 = vmul.f32 %v4377, %v4441
      %v5274 = vmul.f32 %v4378, %v4442
      %v5275 = vmul.f32 %v4379, %v4443
      %v5276 = vmul.f32 %v4380, %v4444
      %v5277 = vmul.f32 %v4381, %v4445
      %v5278 = vmul.f32 %v4382, %v4446
      %v5279 = vmul.f32 %v4383, %v4447
      %v5280 = vmul.f32 %v4384, %v4448
      %v5281 = vmul.f32 %v4385, %v4449
      %v5282 = vmul.f32 %v4386, %v4450
      %v5283 = vmul.f32 %v4387, %v4451
      %v5284 = vmul.f32 %v4388, %v4452
      %v5285 = vmul.f32 %v4389, %v4453
      %v5286 = vmul.f32 %v4390, %v4454
      %v5287 = vmul.f32 %v4391, %v4455
      %v5288 = vmul.f32 %v4392, %v4456
      %v5289 = vmul.f32 %v4393, %v4457
      %v5290 = vmul.f32 %v4394, %v4458
      %v5291 = vmul.f32 %v4395, %v4459
      %v5292 = vmul.f32 %v4396, %v4460
      %v5293 = vmul.f32 %v4397, %v4461
      %v5294 = vmul.f32 %v4398, %v4462
      %v5295 = vmul.f32 %v4399, %v4463
      %v5296 = vmul.f32 %v4400, %v4464
      %v5297 = vmul.f32 %v4401, %v4465
      %v5298 = vmul.f32 %v4402, %v4466
      %v5299 = vmul.f32 %v4403, %v4467
      %v5300 = vmul.f32 %v4404, %v4468
      %v5301 = vmul.f32 %v4405, %v4469
      %v5302 = vmul.f32 %v4406, %v4470
      %v5303 = vmul.f32 %v4407, %v4471
      %v5304 = vmul.f32 %v4408, %v4472
      %v5305 = vmul.f32 %v4409, %v4473
      %v5306 = vmul.f32 %v4410, %v4474
      %v5307 = vmul.f32 %v4411, %v4475
      %v5308 = vmul.f32 %v4412, %v4476
      %v5309 = vmul.f32 %v4413, %v4477
      %v5310 = vmul.f32 %v4414, %v4478
      %v5311 = vmul.f32 %v4415, %v4479
      %v5312 = vmul.f32 %v4416, %v4480
      %v5313 = vmul.f32 %v4417, %v4481
      %v5314 = vmul.f32 %v4418, %v4482
      %v5315 = vmul.f32 %v4419, %v4483
      %v5316 = vmul.f32 %v4420, %v4484
      %v5317 = vmul.f32 %v4421, %v4485
      %v5318 = vmul.f32 %v4422, %v4486
      %v5319 = vmul.f32 %v4423, %v4487
      %v5320 = vmul.f32 %v4424, %v4488
      %v5321 = vmul.f32 %v4425, %v4489
      %v5322 = vmul.f32 %v4426, %v4490
      %v5323 = vmul.f32 %v4427, %v4491
      %v5324 = vmul.f32 %v4428, %v4492
      %v5325 = vmul.f32 %v4429, %v4493
      %v5326 = vmul.f32 %v5262, %v4558
      %v5327 = vmul.f32 %v5263, %v4559
      %v5328 = vmul.f32 %v5264, %v4560
      %v5329 = vmul.f32 %v5265, %v4561
      %v5330 = vmul.f32 %v5266, %v4562
      %v5331 = vmul.f32 %v5267, %v4563
      %v5332 = vmul.f32 %v5268, %v4564
      %v5333 = vmul.f32 %v5269, %v4565
      %v5334 = vmul.f32 %v5270, %v4566
      %v5335 = vmul.f32 %v5271, %v4567
      %v5336 = vmul.f32 %v5272, %v4568
      %v5337 = vmul.f32 %v5273, %v4569
      %v5338 = vmul.f32 %v5274, %v4570
      %v5339 = vmul.f32 %v5275, %v4571
      %v5340 = vmul.f32 %v5276, %v4572
      %v5341 = vmul.f32 %v5277, %v4573
      %v5342 = vmul.f32 %v5278, %v4574
      %v5343 = vmul.f32 %v5279, %v4575
      %v5344 = vmul.f32 %v5280, %v4576
      %v5345 = vmul.f32 %v5281, %v4577
      %v5346 = vmul.f32 %v5282, %v4578
      %v5347 = vmul.f32 %v5283, %v4579
      %v5348 = vmul.f32 %v5284, %v4580
      %v5349 = vmul.f32 %v5285, %v4581
      %v5350 = vmul.f32 %v5286, %v4582
      %v5351 = vmul.f32 %v5287, %v4583
      %v5352 = vmul.f32 %v5288, %v4584
      %v5353 = vmul.f32 %v5289, %v4585
      %v5354 = vmul.f32 %v5290, %v4586
      %v5355 = vmul.f32 %v5291, %v4587
      %v5356 = vmul.f32 %v5292, %v4588
      %v5357 = vmul.f32 %v5293, %v4589
      %v5358 = vmul.f32 %v5294, %v4590
      %v5359 = vmul.f32 %v5295, %v4591
      %v5360 = vmul.f32 %v5296, %v4592
      %v5361 = vmul.f32 %v5297, %v4593
      %v5362 = vmul.f32 %v5298, %v4594
      %v5363 = vmul.f32 %v5299, %v4595
      %v5364 = vmul.f32 %v5300, %v4596
      %v5365 = vmul.f32 %v5301, %v4597
      %v5366 = vmul.f32 %v5302, %v4598
      %v5367 = vmul.f32 %v5303, %v4599
      %v5368 = vmul.f32 %v5304, %v4600
      %v5369 = vmul.f32 %v5305, %v4601
      %v5370 = vmul.f32 %v5306, %v4602
      %v5371 = vmul.f32 %v5307, %v4603
      %v5372 = vmul.f32 %v5308, %v4604
      %v5373 = vmul.f32 %v5309, %v4605
      %v5374 = vmul.f32 %v5310, %v4606
      %v5375 = vmul.f32 %v5311, %v4607
      %v5376 = vmul.f32 %v5312, %v4608
      %v5377 = vmul.f32 %v5313, %v4609
      %v5378 = vmul.f32 %v5314, %v4610
      %v5379 = vmul.f32 %v5315, %v4611
      %v5380 = vmul.f32 %v5316, %v4612
      %v5381 = vmul.f32 %v5317, %v4613
      %v5382 = vmul.f32 %v5318, %v4614
      %v5383 = vmul.f32 %v5319, %v4615
      %v5384 = vmul.f32 %v5320, %v4616
      %v5385 = vmul.f32 %v5321, %v4617
      %v5386 = vmul.f32 %v5322, %v4618
      %v5387 = vmul.f32 %v5323, %v4619
      %v5388 = vmul.f32 %v5324, %v4620
      %v5389 = vmul.f32 %v5325, %v4621
      %v5390 = vmul.f32 %v5326, -1.6875
      %v5391 = vmul.f32 %v5327, -1.6875
      %v5392 = vmul.f32 %v5328, -1.6875
      %v5393 = vmul.f32 %v5329, -1.6875
      %v5394 = vmul.f32 %v5330, -1.6875
      %v5395 = vmul.f32 %v5331, -1.6875
      %v5396 = vmul.f32 %v5332, -1.6875
      %v5397 = vmul.f32 %v5333, -1.6875
      %v5398 = vmul.f32 %v5334, -1.6875
      %v5399 = vmul.f32 %v5335, -1.6875
      %v5400 = vmul.f32 %v5336, -1.6875
      %v5401 = vmul.f32 %v5337, -1.6875
      %v5402 = vmul.f32 %v5338, -1.6875
      %v5403 = vmul.f32 %v5339, -1.6875
      %v5404 = vmul.f32 %v5340, -1.6875
      %v5405 = vmul.f32 %v5341, -1.6875
      %v5406 = vmul.f32 %v5342, -1.6875
      %v5407 = vmul.f32 %v5343, -1.6875
      %v5408 = vmul.f32 %v5344, -1.6875
      %v5409 = vmul.f32 %v5345, -1.6875
      %v5410 = vmul.f32 %v5346, -1.6875
      %v5411 = vmul.f32 %v5347, -1.6875
      %v5412 = vmul.f32 %v5348, -1.6875
      %v5413 = vmul.f32 %v5349, -1.6875
      %v5414 = vmul.f32 %v5350, -1.6875
      %v5415 = vmul.f32 %v5351, -1.6875
      %v5416 = vmul.f32 %v5352, -1.6875
      %v5417 = vmul.f32 %v5353, -1.6875
      %v5418 = vmul.f32 %v5354, -1.6875
      %v5419 = vmul.f32 %v5355, -1.6875
      %v5420 = vmul.f32 %v5356, -1.6875
      %v5421 = vmul.f32 %v5357, -1.6875
      %v5422 = vmul.f32 %v5358, -1.6875
      %v5423 = vmul.f32 %v5359, -1.6875
      %v5424 = vmul.f32 %v5360, -1.6875
      %v5425 = vmul.f32 %v5361, -1.6875
      %v5426 = vmul.f32 %v5362, -1.6875
      %v5427 = vmul.f32 %v5363, -1.6875
      %v5428 = vmul.f32 %v5364, -1.6875
      %v5429 = vmul.f32 %v5365, -1.6875
      %v5430 = vmul.f32 %v5366, -1.6875
      %v5431 = vmul.f32 %v5367, -1.6875
      %v5432 = vmul.f32 %v5368, -1.6875
      %v5433 = vmul.f32 %v5369, -1.6875
      %v5434 = vmul.f32 %v5370, -1.6875
      %v5435 = vmul.f32 %v5371, -1.6875
      %v5436 = vmul.f32 %v5372, -1.6875
      %v5437 = vmul.f32 %v5373, -1.6875
      %v5438 = vmul.f32 %v5374, -1.6875
      %v5439 = vmul.f32 %v5375, -1.6875
      %v5440 = vmul.f32 %v5376, -1.6875
      %v5441 = vmul.f32 %v5377, -1.6875
      %v5442 = vmul.f32 %v5378, -1.6875
      %v5443 = vmul.f32 %v5379, -1.6875
      %v5444 = vmul.f32 %v5380, -1.6875
      %v5445 = vmul.f32 %v5381, -1.6875
      %v5446 = vmul.f32 %v5382, -1.6875
      %v5447 = vmul.f32 %v5383, -1.6875
      %v5448 = vmul.f32 %v5384, -1.6875
      %v5449 = vmul.f32 %v5385, -1.6875
      %v5450 = vmul.f32 %v5386, -1.6875
      %v5451 = vmul.f32 %v5387, -1.6875
      %v5452 = vmul.f32 %v5388, -1.6875
      %v5453 = vmul.f32 %v5389, -1.6875
      %vm5454 = vcmp.eq.f32.partialorder %v4302, 2.0
      %vm5455 = vcmp.eq.f32.partialorder %v4303, 2.0
      %vm5456 = vcmp.eq.f32.partialorder %v4304, 2.0
      %vm5457 = vcmp.eq.f32.partialorder %v4305, 2.0
      %vm5458 = vcmp.eq.f32.partialorder %v4306, 2.0
      %vm5459 = vcmp.eq.f32.partialorder %v4307, 2.0
      %vm5460 = vcmp.eq.f32.partialorder %v4308, 2.0
      %vm5461 = vcmp.eq.f32.partialorder %v4309, 2.0
      %vm5462 = vcmp.eq.f32.partialorder %v4310, 2.0
      %vm5463 = vcmp.eq.f32.partialorder %v4311, 2.0
      %vm5464 = vcmp.eq.f32.partialorder %v4312, 2.0
      %vm5465 = vcmp.eq.f32.partialorder %v4313, 2.0
      %vm5466 = vcmp.eq.f32.partialorder %v4314, 2.0
      %vm5467 = vcmp.eq.f32.partialorder %v4315, 2.0
      %vm5468 = vcmp.eq.f32.partialorder %v4316, 2.0
      %vm5469 = vcmp.eq.f32.partialorder %v4317, 2.0
      %vm5470 = vcmp.eq.f32.partialorder %v4318, 2.0
      %vm5471 = vcmp.eq.f32.partialorder %v4319, 2.0
      %vm5472 = vcmp.eq.f32.partialorder %v4320, 2.0
      %vm5473 = vcmp.eq.f32.partialorder %v4321, 2.0
      %vm5474 = vcmp.eq.f32.partialorder %v4322, 2.0
      %vm5475 = vcmp.eq.f32.partialorder %v4323, 2.0
      %vm5476 = vcmp.eq.f32.partialorder %v4324, 2.0
      %vm5477 = vcmp.eq.f32.partialorder %v4325, 2.0
      %vm5478 = vcmp.eq.f32.partialorder %v4326, 2.0
      %vm5479 = vcmp.eq.f32.partialorder %v4327, 2.0
      %vm5480 = vcmp.eq.f32.partialorder %v4328, 2.0
      %vm5481 = vcmp.eq.f32.partialorder %v4329, 2.0
      %vm5482 = vcmp.eq.f32.partialorder %v4330, 2.0
      %vm5483 = vcmp.eq.f32.partialorder %v4331, 2.0
      %vm5484 = vcmp.eq.f32.partialorder %v4332, 2.0
      %vm5485 = vcmp.eq.f32.partialorder %v4333, 2.0
      %vm5486 = vcmp.eq.f32.partialorder %v4334, 2.0
      %vm5487 = vcmp.eq.f32.partialorder %v4335, 2.0
      %vm5488 = vcmp.eq.f32.partialorder %v4336, 2.0
      %vm5489 = vcmp.eq.f32.partialorder %v4337, 2.0
      %vm5490 = vcmp.eq.f32.partialorder %v4338, 2.0
      %vm5491 = vcmp.eq.f32.partialorder %v4339, 2.0
      %vm5492 = vcmp.eq.f32.partialorder %v4340, 2.0
      %vm5493 = vcmp.eq.f32.partialorder %v4341, 2.0
      %vm5494 = vcmp.eq.f32.partialorder %v4342, 2.0
      %vm5495 = vcmp.eq.f32.partialorder %v4343, 2.0
      %vm5496 = vcmp.eq.f32.partialorder %v4344, 2.0
      %vm5497 = vcmp.eq.f32.partialorder %v4345, 2.0
      %vm5498 = vcmp.eq.f32.partialorder %v4346, 2.0
      %vm5499 = vcmp.eq.f32.partialorder %v4347, 2.0
      %vm5500 = vcmp.eq.f32.partialorder %v4348, 2.0
      %vm5501 = vcmp.eq.f32.partialorder %v4349, 2.0
      %vm5502 = vcmp.eq.f32.partialorder %v4350, 2.0
      %vm5503 = vcmp.eq.f32.partialorder %v4351, 2.0
      %vm5504 = vcmp.eq.f32.partialorder %v4352, 2.0
      %vm5505 = vcmp.eq.f32.partialorder %v4353, 2.0
      %vm5506 = vcmp.eq.f32.partialorder %v4354, 2.0
      %vm5507 = vcmp.eq.f32.partialorder %v4355, 2.0
      %vm5508 = vcmp.eq.f32.partialorder %v4356, 2.0
      %vm5509 = vcmp.eq.f32.partialorder %v4357, 2.0
      %vm5510 = vcmp.eq.f32.partialorder %v4358, 2.0
      %vm5511 = vcmp.eq.f32.partialorder %v4359, 2.0
      %vm5512 = vcmp.eq.f32.partialorder %v4360, 2.0
      %vm5513 = vcmp.eq.f32.partialorder %v4361, 2.0
      %vm5514 = vcmp.eq.f32.partialorder %v4362, 2.0
      %vm5515 = vcmp.eq.f32.partialorder %v4363, 2.0
      %vm5516 = vcmp.eq.f32.partialorder %v4364, 2.0
      %vm5517 = vcmp.eq.f32.partialorder %v4365, 2.0
      %v5518 = vsel %vm5454, %v5390, %v5198
      %v5519 = vsel %vm5455, %v5391, %v5199
      %v5520 = vsel %vm5456, %v5392, %v5200
      %v5521 = vsel %vm5457, %v5393, %v5201
      %v5522 = vsel %vm5458, %v5394, %v5202
      %v5523 = vsel %vm5459, %v5395, %v5203
      %v5524 = vsel %vm5460, %v5396, %v5204
      %v5525 = vsel %vm5461, %v5397, %v5205
      %v5526 = vsel %vm5462, %v5398, %v5206
      %v5527 = vsel %vm5463, %v5399, %v5207
      %v5528 = vsel %vm5464, %v5400, %v5208
      %v5529 = vsel %vm5465, %v5401, %v5209
      %v5530 = vsel %vm5466, %v5402, %v5210
      %v5531 = vsel %vm5467, %v5403, %v5211
      %v5532 = vsel %vm5468, %v5404, %v5212
      %v5533 = vsel %vm5469, %v5405, %v5213
      %v5534 = vsel %vm5470, %v5406, %v5214
      %v5535 = vsel %vm5471, %v5407, %v5215
      %v5536 = vsel %vm5472, %v5408, %v5216
      %v5537 = vsel %vm5473, %v5409, %v5217
      %v5538 = vsel %vm5474, %v5410, %v5218
      %v5539 = vsel %vm5475, %v5411, %v5219
      %v5540 = vsel %vm5476, %v5412, %v5220
      %v5541 = vsel %vm5477, %v5413, %v5221
      %v5542 = vsel %vm5478, %v5414, %v5222
      %v5543 = vsel %vm5479, %v5415, %v5223
      %v5544 = vsel %vm5480, %v5416, %v5224
      %v5545 = vsel %vm5481, %v5417, %v5225
      %v5546 = vsel %vm5482, %v5418, %v5226
      %v5547 = vsel %vm5483, %v5419, %v5227
      %v5548 = vsel %vm5484, %v5420, %v5228
      %v5549 = vsel %vm5485, %v5421, %v5229
      %v5550 = vsel %vm5486, %v5422, %v5230
      %v5551 = vsel %vm5487, %v5423, %v5231
      %v5552 = vsel %vm5488, %v5424, %v5232
      %v5553 = vsel %vm5489, %v5425, %v5233
      %v5554 = vsel %vm5490, %v5426, %v5234
      %v5555 = vsel %vm5491, %v5427, %v5235
      %v5556 = vsel %vm5492, %v5428, %v5236
      %v5557 = vsel %vm5493, %v5429, %v5237
      %v5558 = vsel %vm5494, %v5430, %v5238
      %v5559 = vsel %vm5495, %v5431, %v5239
      %v5560 = vsel %vm5496, %v5432, %v5240
      %v5561 = vsel %vm5497, %v5433, %v5241
      %v5562 = vsel %vm5498, %v5434, %v5242
      %v5563 = vsel %vm5499, %v5435, %v5243
      %v5564 = vsel %vm5500, %v5436, %v5244
      %v5565 = vsel %vm5501, %v5437, %v5245
      %v5566 = vsel %vm5502, %v5438, %v5246
      %v5567 = vsel %vm5503, %v5439, %v5247
      %v5568 = vsel %vm5504, %v5440, %v5248
      %v5569 = vsel %vm5505, %v5441, %v5249
      %v5570 = vsel %vm5506, %v5442, %v5250
      %v5571 = vsel %vm5507, %v5443, %v5251
      %v5572 = vsel %vm5508, %v5444, %v5252
      %v5573 = vsel %vm5509, %v5445, %v5253
      %v5574 = vsel %vm5510, %v5446, %v5254
      %v5575 = vsel %vm5511, %v5447, %v5255
      %v5576 = vsel %vm5512, %v5448, %v5256
      %v5577 = vsel %vm5513, %v5449, %v5257
      %v5578 = vsel %vm5514, %v5450, %v5258
      %v5579 = vsel %vm5515, %v5451, %v5259
      %v5580 = vsel %vm5516, %v5452, %v5260
      %v5581 = vsel %vm5517, %v5453, %v5261
      %v5582 = vmul.f32 %v5262, %v4494
      %v5583 = vmul.f32 %v5263, %v4495
      %v5584 = vmul.f32 %v5264, %v4496
      %v5585 = vmul.f32 %v5265, %v4497
      %v5586 = vmul.f32 %v5266, %v4498
      %v5587 = vmul.f32 %v5267, %v4499
      %v5588 = vmul.f32 %v5268, %v4500
      %v5589 = vmul.f32 %v5269, %v4501
      %v5590 = vmul.f32 %v5270, %v4502
      %v5591 = vmul.f32 %v5271, %v4503
      %v5592 = vmul.f32 %v5272, %v4504
      %v5593 = vmul.f32 %v5273, %v4505
      %v5594 = vmul.f32 %v5274, %v4506
      %v5595 = vmul.f32 %v5275, %v4507
      %v5596 = vmul.f32 %v5276, %v4508
      %v5597 = vmul.f32 %v5277, %v4509
      %v5598 = vmul.f32 %v5278, %v4510
      %v5599 = vmul.f32 %v5279, %v4511
      %v5600 = vmul.f32 %v5280, %v4512
      %v5601 = vmul.f32 %v5281, %v4513
      %v5602 = vmul.f32 %v5282, %v4514
      %v5603 = vmul.f32 %v5283, %v4515
      %v5604 = vmul.f32 %v5284, %v4516
      %v5605 = vmul.f32 %v5285, %v4517
      %v5606 = vmul.f32 %v5286, %v4518
      %v5607 = vmul.f32 %v5287, %v4519
      %v5608 = vmul.f32 %v5288, %v4520
      %v5609 = vmul.f32 %v5289, %v4521
      %v5610 = vmul.f32 %v5290, %v4522
      %v5611 = vmul.f32 %v5291, %v4523
      %v5612 = vmul.f32 %v5292, %v4524
      %v5613 = vmul.f32 %v5293, %v4525
      %v5614 = vmul.f32 %v5294, %v4526
      %v5615 = vmul.f32 %v5295, %v4527
      %v5616 = vmul.f32 %v5296, %v4528
      %v5617 = vmul.f32 %v5297, %v4529
      %v5618 = vmul.f32 %v5298, %v4530
      %v5619 = vmul.f32 %v5299, %v4531
      %v5620 = vmul.f32 %v5300, %v4532
      %v5621 = vmul.f32 %v5301, %v4533
      %v5622 = vmul.f32 %v5302, %v4534
      %v5623 = vmul.f32 %v5303, %v4535
      %v5624 = vmul.f32 %v5304, %v4536
      %v5625 = vmul.f32 %v5305, %v4537
      %v5626 = vmul.f32 %v5306, %v4538
      %v5627 = vmul.f32 %v5307, %v4539
      %v5628 = vmul.f32 %v5308, %v4540
      %v5629 = vmul.f32 %v5309, %v4541
      %v5630 = vmul.f32 %v5310, %v4542
      %v5631 = vmul.f32 %v5311, %v4543
      %v5632 = vmul.f32 %v5312, %v4544
      %v5633 = vmul.f32 %v5313, %v4545
      %v5634 = vmul.f32 %v5314, %v4546
      %v5635 = vmul.f32 %v5315, %v4547
      %v5636 = vmul.f32 %v5316, %v4548
      %v5637 = vmul.f32 %v5317, %v4549
      %v5638 = vmul.f32 %v5318, %v4550
      %v5639 = vmul.f32 %v5319, %v4551
      %v5640 = vmul.f32 %v5320, %v4552
      %v5641 = vmul.f32 %v5321, %v4553
      %v5642 = vmul.f32 %v5322, %v4554
      %v5643 = vmul.f32 %v5323, %v4555
      %v5644 = vmul.f32 %v5324, %v4556
      %v5645 = vmul.f32 %v5325, %v4557
      %v5646 = vmul.f32 %v5582, 0.5625
      %v5647 = vmul.f32 %v5583, 0.5625
      %v5648 = vmul.f32 %v5584, 0.5625
      %v5649 = vmul.f32 %v5585, 0.5625
      %v5650 = vmul.f32 %v5586, 0.5625
      %v5651 = vmul.f32 %v5587, 0.5625
      %v5652 = vmul.f32 %v5588, 0.5625
      %v5653 = vmul.f32 %v5589, 0.5625
      %v5654 = vmul.f32 %v5590, 0.5625
      %v5655 = vmul.f32 %v5591, 0.5625
      %v5656 = vmul.f32 %v5592, 0.5625
      %v5657 = vmul.f32 %v5593, 0.5625
      %v5658 = vmul.f32 %v5594, 0.5625
      %v5659 = vmul.f32 %v5595, 0.5625
      %v5660 = vmul.f32 %v5596, 0.5625
      %v5661 = vmul.f32 %v5597, 0.5625
      %v5662 = vmul.f32 %v5598, 0.5625
      %v5663 = vmul.f32 %v5599, 0.5625
      %v5664 = vmul.f32 %v5600, 0.5625
      %v5665 = vmul.f32 %v5601, 0.5625
      %v5666 = vmul.f32 %v5602, 0.5625
      %v5667 = vmul.f32 %v5603, 0.5625
      %v5668 = vmul.f32 %v5604, 0.5625
      %v5669 = vmul.f32 %v5605, 0.5625
      %v5670 = vmul.f32 %v5606, 0.5625
      %v5671 = vmul.f32 %v5607, 0.5625
      %v5672 = vmul.f32 %v5608, 0.5625
      %v5673 = vmul.f32 %v5609, 0.5625
      %v5674 = vmul.f32 %v5610, 0.5625
      %v5675 = vmul.f32 %v5611, 0.5625
      %v5676 = vmul.f32 %v5612, 0.5625
      %v5677 = vmul.f32 %v5613, 0.5625
      %v5678 = vmul.f32 %v5614, 0.5625
      %v5679 = vmul.f32 %v5615, 0.5625
      %v5680 = vmul.f32 %v5616, 0.5625
      %v5681 = vmul.f32 %v5617, 0.5625
      %v5682 = vmul.f32 %v5618, 0.5625
      %v5683 = vmul.f32 %v5619, 0.5625
      %v5684 = vmul.f32 %v5620, 0.5625
      %v5685 = vmul.f32 %v5621, 0.5625
      %v5686 = vmul.f32 %v5622, 0.5625
      %v5687 = vmul.f32 %v5623, 0.5625
      %v5688 = vmul.f32 %v5624, 0.5625
      %v5689 = vmul.f32 %v5625, 0.5625
      %v5690 = vmul.f32 %v5626, 0.5625
      %v5691 = vmul.f32 %v5627, 0.5625
      %v5692 = vmul.f32 %v5628, 0.5625
      %v5693 = vmul.f32 %v5629, 0.5625
      %v5694 = vmul.f32 %v5630, 0.5625
      %v5695 = vmul.f32 %v5631, 0.5625
      %v5696 = vmul.f32 %v5632, 0.5625
      %v5697 = vmul.f32 %v5633, 0.5625
      %v5698 = vmul.f32 %v5634, 0.5625
      %v5699 = vmul.f32 %v5635, 0.5625
      %v5700 = vmul.f32 %v5636, 0.5625
      %v5701 = vmul.f32 %v5637, 0.5625
      %v5702 = vmul.f32 %v5638, 0.5625
      %v5703 = vmul.f32 %v5639, 0.5625
      %v5704 = vmul.f32 %v5640, 0.5625
      %v5705 = vmul.f32 %v5641, 0.5625
      %v5706 = vmul.f32 %v5642, 0.5625
      %v5707 = vmul.f32 %v5643, 0.5625
      %v5708 = vmul.f32 %v5644, 0.5625
      %v5709 = vmul.f32 %v5645, 0.5625
      %vm5710 = vcmp.eq.f32.partialorder %v4302, 3.0
      %vm5711 = vcmp.eq.f32.partialorder %v4303, 3.0
      %vm5712 = vcmp.eq.f32.partialorder %v4304, 3.0
      %vm5713 = vcmp.eq.f32.partialorder %v4305, 3.0
      %vm5714 = vcmp.eq.f32.partialorder %v4306, 3.0
      %vm5715 = vcmp.eq.f32.partialorder %v4307, 3.0
      %vm5716 = vcmp.eq.f32.partialorder %v4308, 3.0
      %vm5717 = vcmp.eq.f32.partialorder %v4309, 3.0
      %vm5718 = vcmp.eq.f32.partialorder %v4310, 3.0
      %vm5719 = vcmp.eq.f32.partialorder %v4311, 3.0
      %vm5720 = vcmp.eq.f32.partialorder %v4312, 3.0
      %vm5721 = vcmp.eq.f32.partialorder %v4313, 3.0
      %vm5722 = vcmp.eq.f32.partialorder %v4314, 3.0
      %vm5723 = vcmp.eq.f32.partialorder %v4315, 3.0
      %vm5724 = vcmp.eq.f32.partialorder %v4316, 3.0
      %vm5725 = vcmp.eq.f32.partialorder %v4317, 3.0
      %vm5726 = vcmp.eq.f32.partialorder %v4318, 3.0
      %vm5727 = vcmp.eq.f32.partialorder %v4319, 3.0
      %vm5728 = vcmp.eq.f32.partialorder %v4320, 3.0
      %vm5729 = vcmp.eq.f32.partialorder %v4321, 3.0
      %vm5730 = vcmp.eq.f32.partialorder %v4322, 3.0
      %vm5731 = vcmp.eq.f32.partialorder %v4323, 3.0
      %vm5732 = vcmp.eq.f32.partialorder %v4324, 3.0
      %vm5733 = vcmp.eq.f32.partialorder %v4325, 3.0
      %vm5734 = vcmp.eq.f32.partialorder %v4326, 3.0
      %vm5735 = vcmp.eq.f32.partialorder %v4327, 3.0
      %vm5736 = vcmp.eq.f32.partialorder %v4328, 3.0
      %vm5737 = vcmp.eq.f32.partialorder %v4329, 3.0
      %vm5738 = vcmp.eq.f32.partialorder %v4330, 3.0
      %vm5739 = vcmp.eq.f32.partialorder %v4331, 3.0
      %vm5740 = vcmp.eq.f32.partialorder %v4332, 3.0
      %vm5741 = vcmp.eq.f32.partialorder %v4333, 3.0
      %vm5742 = vcmp.eq.f32.partialorder %v4334, 3.0
      %vm5743 = vcmp.eq.f32.partialorder %v4335, 3.0
      %vm5744 = vcmp.eq.f32.partialorder %v4336, 3.0
      %vm5745 = vcmp.eq.f32.partialorder %v4337, 3.0
      %vm5746 = vcmp.eq.f32.partialorder %v4338, 3.0
      %vm5747 = vcmp.eq.f32.partialorder %v4339, 3.0
      %vm5748 = vcmp.eq.f32.partialorder %v4340, 3.0
      %vm5749 = vcmp.eq.f32.partialorder %v4341, 3.0
      %vm5750 = vcmp.eq.f32.partialorder %v4342, 3.0
      %vm5751 = vcmp.eq.f32.partialorder %v4343, 3.0
      %vm5752 = vcmp.eq.f32.partialorder %v4344, 3.0
      %vm5753 = vcmp.eq.f32.partialorder %v4345, 3.0
      %vm5754 = vcmp.eq.f32.partialorder %v4346, 3.0
      %vm5755 = vcmp.eq.f32.partialorder %v4347, 3.0
      %vm5756 = vcmp.eq.f32.partialorder %v4348, 3.0
      %vm5757 = vcmp.eq.f32.partialorder %v4349, 3.0
      %vm5758 = vcmp.eq.f32.partialorder %v4350, 3.0
      %vm5759 = vcmp.eq.f32.partialorder %v4351, 3.0
      %vm5760 = vcmp.eq.f32.partialorder %v4352, 3.0
      %vm5761 = vcmp.eq.f32.partialorder %v4353, 3.0
      %vm5762 = vcmp.eq.f32.partialorder %v4354, 3.0
      %vm5763 = vcmp.eq.f32.partialorder %v4355, 3.0
      %vm5764 = vcmp.eq.f32.partialorder %v4356, 3.0
      %vm5765 = vcmp.eq.f32.partialorder %v4357, 3.0
      %vm5766 = vcmp.eq.f32.partialorder %v4358, 3.0
      %vm5767 = vcmp.eq.f32.partialorder %v4359, 3.0
      %vm5768 = vcmp.eq.f32.partialorder %v4360, 3.0
      %vm5769 = vcmp.eq.f32.partialorder %v4361, 3.0
      %vm5770 = vcmp.eq.f32.partialorder %v4362, 3.0
      %vm5771 = vcmp.eq.f32.partialorder %v4363, 3.0
      %vm5772 = vcmp.eq.f32.partialorder %v4364, 3.0
      %vm5773 = vcmp.eq.f32.partialorder %v4365, 3.0
      %v5774 = vsel %vm5710, %v5646, %v5518
      %v5775 = vsel %vm5711, %v5647, %v5519
      %v5776 = vsel %vm5712, %v5648, %v5520
      %v5777 = vsel %vm5713, %v5649, %v5521
      %v5778 = vsel %vm5714, %v5650, %v5522
      %v5779 = vsel %vm5715, %v5651, %v5523
      %v5780 = vsel %vm5716, %v5652, %v5524
      %v5781 = vsel %vm5717, %v5653, %v5525
      %v5782 = vsel %vm5718, %v5654, %v5526
      %v5783 = vsel %vm5719, %v5655, %v5527
      %v5784 = vsel %vm5720, %v5656, %v5528
      %v5785 = vsel %vm5721, %v5657, %v5529
      %v5786 = vsel %vm5722, %v5658, %v5530
      %v5787 = vsel %vm5723, %v5659, %v5531
      %v5788 = vsel %vm5724, %v5660, %v5532
      %v5789 = vsel %vm5725, %v5661, %v5533
      %v5790 = vsel %vm5726, %v5662, %v5534
      %v5791 = vsel %vm5727, %v5663, %v5535
      %v5792 = vsel %vm5728, %v5664, %v5536
      %v5793 = vsel %vm5729, %v5665, %v5537
      %v5794 = vsel %vm5730, %v5666, %v5538
      %v5795 = vsel %vm5731, %v5667, %v5539
      %v5796 = vsel %vm5732, %v5668, %v5540
      %v5797 = vsel %vm5733, %v5669, %v5541
      %v5798 = vsel %vm5734, %v5670, %v5542
      %v5799 = vsel %vm5735, %v5671, %v5543
      %v5800 = vsel %vm5736, %v5672, %v5544
      %v5801 = vsel %vm5737, %v5673, %v5545
      %v5802 = vsel %vm5738, %v5674, %v5546
      %v5803 = vsel %vm5739, %v5675, %v5547
      %v5804 = vsel %vm5740, %v5676, %v5548
      %v5805 = vsel %vm5741, %v5677, %v5549
      %v5806 = vsel %vm5742, %v5678, %v5550
      %v5807 = vsel %vm5743, %v5679, %v5551
      %v5808 = vsel %vm5744, %v5680, %v5552
      %v5809 = vsel %vm5745, %v5681, %v5553
      %v5810 = vsel %vm5746, %v5682, %v5554
      %v5811 = vsel %vm5747, %v5683, %v5555
      %v5812 = vsel %vm5748, %v5684, %v5556
      %v5813 = vsel %vm5749, %v5685, %v5557
      %v5814 = vsel %vm5750, %v5686, %v5558
      %v5815 = vsel %vm5751, %v5687, %v5559
      %v5816 = vsel %vm5752, %v5688, %v5560
      %v5817 = vsel %vm5753, %v5689, %v5561
      %v5818 = vsel %vm5754, %v5690, %v5562
      %v5819 = vsel %vm5755, %v5691, %v5563
      %v5820 = vsel %vm5756, %v5692, %v5564
      %v5821 = vsel %vm5757, %v5693, %v5565
      %v5822 = vsel %vm5758, %v5694, %v5566
      %v5823 = vsel %vm5759, %v5695, %v5567
      %v5824 = vsel %vm5760, %v5696, %v5568
      %v5825 = vsel %vm5761, %v5697, %v5569
      %v5826 = vsel %vm5762, %v5698, %v5570
      %v5827 = vsel %vm5763, %v5699, %v5571
      %v5828 = vsel %vm5764, %v5700, %v5572
      %v5829 = vsel %vm5765, %v5701, %v5573
      %v5830 = vsel %vm5766, %v5702, %v5574
      %v5831 = vsel %vm5767, %v5703, %v5575
      %v5832 = vsel %vm5768, %v5704, %v5576
      %v5833 = vsel %vm5769, %v5705, %v5577
      %v5834 = vsel %vm5770, %v5706, %v5578
      %v5835 = vsel %vm5771, %v5707, %v5579
      %v5836 = vsel %vm5772, %v5708, %v5580
      %v5837 = vsel %vm5773, %v5709, %v5581
      %vm5838 = vcmask 850944
      %5839 = vst.msk [vmem:[%s240] sm:$0xff] %vm5838, %v5774
      %5840 = vst.msk [vmem:[%s240 + $0x8] sm:$0xff] %vm5838, %v5775
      %5841 = vst.msk [vmem:[%s240 + $0x10] sm:$0xff] %vm5838, %v5776
      %5842 = vst.msk [vmem:[%s240 + $0x18] sm:$0xff] %vm5838, %v5777
      %5843 = vst.msk [vmem:[%s240 + $0x20] sm:$0xff] %vm5838, %v5778
      %5844 = vst.msk [vmem:[%s240 + $0x28] sm:$0xff] %vm5838, %v5779
      %5845 = vst.msk [vmem:[%s240 + $0x30] sm:$0xff] %vm5838, %v5780
      %5846 = vst.msk [vmem:[%s240 + $0x38] sm:$0xff] %vm5838, %v5781
      %5847 = vst.msk [vmem:[%s240 + $0x40] sm:$0xff] %vm5838, %v5782
      %5848 = vst.msk [vmem:[%s240 + $0x48] sm:$0xff] %vm5838, %v5783
      %5849 = vst.msk [vmem:[%s240 + $0x50] sm:$0xff] %vm5838, %v5784
      %5850 = vst.msk [vmem:[%s240 + $0x58] sm:$0xff] %vm5838, %v5785
      %5851 = vst.msk [vmem:[%s240 + $0x60] sm:$0xff] %vm5838, %v5786
      %5852 = vst.msk [vmem:[%s240 + $0x68] sm:$0xff] %vm5838, %v5787
      %5853 = vst.msk [vmem:[%s240 + $0x70] sm:$0xff] %vm5838, %v5788
      %5854 = vst.msk [vmem:[%s240 + $0x78] sm:$0xff] %vm5838, %v5789
      %5855 = vst.msk [vmem:[%s240 + $0x80] sm:$0xff] %vm5838, %v5790
      %5856 = vst.msk [vmem:[%s240 + $0x88] sm:$0xff] %vm5838, %v5791
      %5857 = vst.msk [vmem:[%s240 + $0x90] sm:$0xff] %vm5838, %v5792
      %5858 = vst.msk [vmem:[%s240 + $0x98] sm:$0xff] %vm5838, %v5793
      %5859 = vst.msk [vmem:[%s240 + $0xa0] sm:$0xff] %vm5838, %v5794
      %5860 = vst.msk [vmem:[%s240 + $0xa8] sm:$0xff] %vm5838, %v5795
      %5861 = vst.msk [vmem:[%s240 + $0xb0] sm:$0xff] %vm5838, %v5796
      %5862 = vst.msk [vmem:[%s240 + $0xb8] sm:$0xff] %vm5838, %v5797
      %5863 = vst.msk [vmem:[%s240 + $0xc0] sm:$0xff] %vm5838, %v5798
      %5864 = vst.msk [vmem:[%s240 + $0xc8] sm:$0xff] %vm5838, %v5799
      %5865 = vst.msk [vmem:[%s240 + $0xd0] sm:$0xff] %vm5838, %v5800
      %5866 = vst.msk [vmem:[%s240 + $0xd8] sm:$0xff] %vm5838, %v5801
      %5867 = vst.msk [vmem:[%s240 + $0xe0] sm:$0xff] %vm5838, %v5802
      %5868 = vst.msk [vmem:[%s240 + $0xe8] sm:$0xff] %vm5838, %v5803
      %5869 = vst.msk [vmem:[%s240 + $0xf0] sm:$0xff] %vm5838, %v5804
      %5870 = vst.msk [vmem:[%s240 + $0xf8] sm:$0xff] %vm5838, %v5805
      %5871 = vst.msk [vmem:[%s240 + $0x100] sm:$0xff] %vm5838, %v5806
      %5872 = vst.msk [vmem:[%s240 + $0x108] sm:$0xff] %vm5838, %v5807
      %5873 = vst.msk [vmem:[%s240 + $0x110] sm:$0xff] %vm5838, %v5808
      %5874 = vst.msk [vmem:[%s240 + $0x118] sm:$0xff] %vm5838, %v5809
      %5875 = vst.msk [vmem:[%s240 + $0x120] sm:$0xff] %vm5838, %v5810
      %5876 = vst.msk [vmem:[%s240 + $0x128] sm:$0xff] %vm5838, %v5811
      %5877 = vst.msk [vmem:[%s240 + $0x130] sm:$0xff] %vm5838, %v5812
      %5878 = vst.msk [vmem:[%s240 + $0x138] sm:$0xff] %vm5838, %v5813
      %5879 = vst.msk [vmem:[%s240 + $0x140] sm:$0xff] %vm5838, %v5814
      %5880 = vst.msk [vmem:[%s240 + $0x148] sm:$0xff] %vm5838, %v5815
      %5881 = vst.msk [vmem:[%s240 + $0x150] sm:$0xff] %vm5838, %v5816
      %5882 = vst.msk [vmem:[%s240 + $0x158] sm:$0xff] %vm5838, %v5817
      %5883 = vst.msk [vmem:[%s240 + $0x160] sm:$0xff] %vm5838, %v5818
      %5884 = vst.msk [vmem:[%s240 + $0x168] sm:$0xff] %vm5838, %v5819
      %5885 = vst.msk [vmem:[%s240 + $0x170] sm:$0xff] %vm5838, %v5820
      %5886 = vst.msk [vmem:[%s240 + $0x178] sm:$0xff] %vm5838, %v5821
      %5887 = vst.msk [vmem:[%s240 + $0x180] sm:$0xff] %vm5838, %v5822
      %5888 = vst.msk [vmem:[%s240 + $0x188] sm:$0xff] %vm5838, %v5823
      %5889 = vst.msk [vmem:[%s240 + $0x190] sm:$0xff] %vm5838, %v5824
      %5890 = vst.msk [vmem:[%s240 + $0x198] sm:$0xff] %vm5838, %v5825
      %5891 = vst.msk [vmem:[%s240 + $0x1a0] sm:$0xff] %vm5838, %v5826
      %5892 = vst.msk [vmem:[%s240 + $0x1a8] sm:$0xff] %vm5838, %v5827
      %5893 = vst.msk [vmem:[%s240 + $0x1b0] sm:$0xff] %vm5838, %v5828
      %5894 = vst.msk [vmem:[%s240 + $0x1b8] sm:$0xff] %vm5838, %v5829
      %5895 = vst.msk [vmem:[%s240 + $0x1c0] sm:$0xff] %vm5838, %v5830
      %5896 = vst.msk [vmem:[%s240 + $0x1c8] sm:$0xff] %vm5838, %v5831
      %5897 = vst.msk [vmem:[%s240 + $0x1d0] sm:$0xff] %vm5838, %v5832
      %5898 = vst.msk [vmem:[%s240 + $0x1d8] sm:$0xff] %vm5838, %v5833
      %5899 = vst.msk [vmem:[%s240 + $0x1e0] sm:$0xff] %vm5838, %v5834
      %5900 = vst.msk [vmem:[%s240 + $0x1e8] sm:$0xff] %vm5838, %v5835
      %5901 = vst.msk [vmem:[%s240 + $0x1f0] sm:$0xff] %vm5838, %v5836
      %5902 = vst.msk [vmem:[%s240 + $0x1f8] sm:$0xff] %vm5838, %v5837
      %v5903 = vld [vmem:[%s2] sm:$0xff]
      %v5904 = vld [vmem:[%s2 + $0x8] sm:$0xff]
      %v5905 = vld [vmem:[%s2 + $0x10] sm:$0xff]
      %v5906 = vld [vmem:[%s2 + $0x18] sm:$0xff]
      %v5907 = vld [vmem:[%s2 + $0x20] sm:$0xff]
      %v5908 = vld [vmem:[%s2 + $0x28] sm:$0xff]
      %v5909 = vld [vmem:[%s2 + $0x30] sm:$0xff]
      %v5910 = vld [vmem:[%s2 + $0x38] sm:$0xff]
      %v5911 = vld [vmem:[%s2 + $0x40] sm:$0xff]
      %v5912 = vld [vmem:[%s2 + $0x48] sm:$0xff]
      %v5913 = vld [vmem:[%s2 + $0x50] sm:$0xff]
      %v5914 = vld [vmem:[%s2 + $0x58] sm:$0xff]
      %v5915 = vld [vmem:[%s2 + $0x60] sm:$0xff]
      %v5917 = vsel %vm5838, %v5774, 0
      %v5920 = vsel %vm5838, %v5775, 0
      %v5923 = vsel %vm5838, %v5776, 0
      %v5926 = vsel %vm5838, %v5777, 0
      %v5929 = vsel %vm5838, %v5778, 0
      %v5932 = vsel %vm5838, %v5779, 0
      %v5935 = vsel %vm5838, %v5780, 0
      %v5938 = vsel %vm5838, %v5781, 0
      %v5941 = vsel %vm5838, %v5782, 0
      %v5944 = vsel %vm5838, %v5783, 0
      %v5947 = vsel %vm5838, %v5784, 0
      %v5950 = vsel %vm5838, %v5785, 0
      %v5953 = vsel %vm5838, %v5786, 0
      %v5956 = vsel %vm5838, %v5787, 0
      %v5959 = vsel %vm5838, %v5788, 0
      %v5962 = vsel %vm5838, %v5789, 0
      %v5965 = vsel %vm5838, %v5790, 0
      %v5968 = vsel %vm5838, %v5791, 0
      %v5971 = vsel %vm5838, %v5792, 0
      %v5974 = vsel %vm5838, %v5793, 0
      %v5977 = vsel %vm5838, %v5794, 0
      %v5980 = vsel %vm5838, %v5795, 0
      %v5983 = vsel %vm5838, %v5796, 0
      %v5986 = vsel %vm5838, %v5797, 0
      %v5989 = vsel %vm5838, %v5798, 0
      %v5992 = vsel %vm5838, %v5799, 0
      %v5995 = vsel %vm5838, %v5800, 0
      %v5998 = vsel %vm5838, %v5801, 0
      %v6001 = vsel %vm5838, %v5802, 0
      %v6004 = vsel %vm5838, %v5803, 0
      %v6007 = vsel %vm5838, %v5804, 0
      %v6010 = vsel %vm5838, %v5805, 0
      %v6013 = vsel %vm5838, %v5806, 0
      %v6016 = vsel %vm5838, %v5807, 0
      %v6019 = vsel %vm5838, %v5808, 0
      %v6022 = vsel %vm5838, %v5809, 0
      %v6025 = vsel %vm5838, %v5810, 0
      %v6028 = vsel %vm5838, %v5811, 0
      %v6031 = vsel %vm5838, %v5812, 0
      %v6034 = vsel %vm5838, %v5813, 0
      %v6037 = vsel %vm5838, %v5814, 0
      %v6040 = vsel %vm5838, %v5815, 0
      %v6043 = vsel %vm5838, %v5816, 0
      %v6046 = vsel %vm5838, %v5817, 0
      %v6049 = vsel %vm5838, %v5818, 0
      %v6052 = vsel %vm5838, %v5819, 0
      %v6055 = vsel %vm5838, %v5820, 0
      %v6058 = vsel %vm5838, %v5821, 0
      %v6061 = vsel %vm5838, %v5822, 0
      %v6064 = vsel %vm5838, %v5823, 0
      %v6067 = vsel %vm5838, %v5824, 0
      %v6070 = vsel %vm5838, %v5825, 0
      %v6073 = vsel %vm5838, %v5826, 0
      %v6076 = vsel %vm5838, %v5827, 0
      %v6079 = vsel %vm5838, %v5828, 0
      %v6082 = vsel %vm5838, %v5829, 0
      %v6085 = vsel %vm5838, %v5830, 0
      %v6088 = vsel %vm5838, %v5831, 0
      %v6091 = vsel %vm5838, %v5832, 0
      %v6094 = vsel %vm5838, %v5833, 0
      %v6097 = vsel %vm5838, %v5834, 0
      %v6100 = vsel %vm5838, %v5835, 0
      %v6103 = vsel %vm5838, %v5836, 0
      %v6106 = vsel %vm5838, %v5837, 0
      %6108 = vmatprep.subr.mxu0 0.0
      %6109 = vmatpush1.msra.mxu0 0.0
      %6110 = vmatprep.subr.mxu0 0.0
      %6111 = vmatpush1.msra.mxu0 0.0
      %6112 = vmatprep.subr.mxu0 0.0
      %6113 = vmatpush1.msra.mxu0 0.0
      %6114 = vmatprep.subr.mxu0 0.0
      %v6115 = vand.u32 %v5915, 4294901760
      %6116 = vmatpush1.msra.mxu0 %v6115
      %6117 = vmatprep.subr.mxu0 0.0
      %v6118 = vand.u32 %v5914, 4294901760
      %6119 = vmatpush1.msra.mxu0 %v6118
      %6120 = vmatprep.subr.mxu0 0.0
      %v6121 = vand.u32 %v5913, 4294901760
      %6122 = vmatpush1.msra.mxu0 %v6121
      %6123 = vmatprep.subr.mxu0 0.0
      %v6124 = vand.u32 %v5912, 4294901760
      %6125 = vmatpush1.msra.mxu0 %v6124
      %6126 = vmatprep.subr.mxu0 0.0
      %v6127 = vand.u32 %v5911, 4294901760
      %6128 = vmatpush1.msra.mxu0 %v6127
      %6129 = vmatprep.subr.mxu0 0.0
      %v6130 = vand.u32 %v5910, 4294901760
      %6131 = vmatpush1.msra.mxu0 %v6130
      %6132 = vmatprep.subr.mxu0 0.0
      %v6133 = vand.u32 %v5909, 4294901760
      %6134 = vmatpush1.msra.mxu0 %v6133
      %6135 = vmatprep.subr.mxu0 0.0
      %v6136 = vand.u32 %v5908, 4294901760
      %6137 = vmatpush1.msra.mxu0 %v6136
      %6138 = vmatprep.subr.mxu0 0.0
      %v6139 = vand.u32 %v5907, 4294901760
      %6140 = vmatpush1.msra.mxu0 %v6139
      %6141 = vmatprep.subr.mxu0 0.0
      %v6142 = vand.u32 %v5906, 4294901760
      %6143 = vmatpush1.msra.mxu0 %v6142
      %6144 = vmatprep.subr.mxu0 0.0
      %v6145 = vand.u32 %v5905, 4294901760
      %6146 = vmatpush1.msra.mxu0 %v6145
      %6147 = vmatprep.subr.mxu0 0.0
      %v6148 = vand.u32 %v5904, 4294901760
      %6149 = vmatpush1.msra.mxu0 %v6148
      %6150 = vmatprep.subr.mxu0 0.0
      %v6151 = vand.u32 %v5903, 4294901760
      %6152 = vmatpush1.msra.mxu0 %v6151
      %6153 = vmatprep.subr.mxu0 0.0
      %6154 = vmatpush2.msra.mxu0 0.0
      %6155 = vmatprep.subr.mxu0 0.0
      %6156 = vmatpush2.msra.mxu0 0.0
      %6157 = vmatprep.subr.mxu0 0.0
      %6158 = vmatpush2.msra.mxu0 0.0
      %6159 = vmatprep.subr.mxu0 0.0
      %6160 = vmatpush2.msra.mxu0 0.0
      %6161 = vmatprep.subr.mxu0 0.0
      %6162 = vmatpush2.msra.mxu0 0.0
      %6163 = vmatprep.subr.mxu0 0.0
      %6164 = vmatpush2.msra.mxu0 0.0
      %6165 = vmatprep.subr.mxu0 0.0
      %6166 = vmatpush2.msra.mxu0 0.0
      %6167 = vmatprep.subr.mxu0 0.0
      %6168 = vmatpush2.msra.mxu0 0.0
      %6169 = vmatprep.subr.mxu0 0.0
      %6170 = vmatpush2.msra.mxu0 0.0
      %6171 = vmatprep.subr.mxu0 0.0
      %6172 = vmatpush2.msra.mxu0 0.0
      %6173 = vmatprep.subr.mxu0 0.0
      %6174 = vmatpush2.msra.mxu0 0.0
      %6175 = vmatprep.subr.mxu0 0.0
      %6176 = vmatpush2.msra.mxu0 0.0
      %6177 = vmatprep.subr.mxu0 0.0
      %6178 = vmatpush2.msra.mxu0 0.0
      %6179 = vmatprep.subr.mxu0 0.0
      %6180 = vmatpush2.msra.mxu0 0.0
      %6181 = vmatprep.subr.mxu0 0.0
      %6182 = vmatpush2.msra.mxu0 0.0
      %6183 = vmatprep.subr.mxu0 0.0
      %6184 = vmatpush2.msra.mxu0 0.0
      %6185 = vmatprep.mubr.f32.mxu0 0.0
      %v6186 = vand.u32 %v5917, 4294901760
      %v6187 = vsub.f32 %v5917, %v6186
      %v6188 = vand.u32 %v6187, 4294901760
      %v6189 = vsub.f32 %v6187, %v6188
      %v6190 = vand.u32 %v6189, 4294901760
      %6191 = vmatmul.mubr.f32.gmra.mxu0 %v6190
      %v6192 = vpop.f32.mrf.mxu0
      %v6193 = vadd.f32 0.0, %v6192
      %v6194 = vpop.f32.mrf.mxu0
      %6195 = vmatprep.mubr.f32.mxu0 0.0
      %v6196 = vand.u32 %v5920, 4294901760
      %v6197 = vsub.f32 %v5920, %v6196
      %v6198 = vand.u32 %v6197, 4294901760
      %v6199 = vsub.f32 %v6197, %v6198
      %v6200 = vand.u32 %v6199, 4294901760
      %6201 = vmatmul.mubr.f32.gmra.mxu0 %v6200
      %v6202 = vpop.f32.mrf.mxu0
      %v6203 = vadd.f32 0.0, %v6202
      %v6204 = vpop.f32.mrf.mxu0
      %6205 = vmatprep.mubr.f32.mxu0 0.0
      %v6206 = vand.u32 %v5923, 4294901760
      %v6207 = vsub.f32 %v5923, %v6206
      %v6208 = vand.u32 %v6207, 4294901760
      %v6209 = vsub.f32 %v6207, %v6208
      %v6210 = vand.u32 %v6209, 4294901760
      %6211 = vmatmul.mubr.f32.gmra.mxu0 %v6210
      %v6212 = vpop.f32.mrf.mxu0
      %v6213 = vadd.f32 0.0, %v6212
      %v6214 = vpop.f32.mrf.mxu0
      %6215 = vmatprep.mubr.f32.mxu0 0.0
      %v6216 = vand.u32 %v5926, 4294901760
      %v6217 = vsub.f32 %v5926, %v6216
      %v6218 = vand.u32 %v6217, 4294901760
      %v6219 = vsub.f32 %v6217, %v6218
      %v6220 = vand.u32 %v6219, 4294901760
      %6221 = vmatmul.mubr.f32.gmra.mxu0 %v6220
      %v6222 = vpop.f32.mrf.mxu0
      %v6223 = vadd.f32 0.0, %v6222
      %v6224 = vpop.f32.mrf.mxu0
      %6225 = vmatprep.mubr.f32.mxu0 0.0
      %v6226 = vand.u32 %v5929, 4294901760
      %v6227 = vsub.f32 %v5929, %v6226
      %v6228 = vand.u32 %v6227, 4294901760
      %v6229 = vsub.f32 %v6227, %v6228
      %v6230 = vand.u32 %v6229, 4294901760
      %6231 = vmatmul.mubr.f32.gmra.mxu0 %v6230
      %v6232 = vpop.f32.mrf.mxu0
      %v6233 = vadd.f32 0.0, %v6232
      %v6234 = vpop.f32.mrf.mxu0
      %6235 = vmatprep.mubr.f32.mxu0 0.0
      %v6236 = vand.u32 %v5932, 4294901760
      %v6237 = vsub.f32 %v5932, %v6236
      %v6238 = vand.u32 %v6237, 4294901760
      %v6239 = vsub.f32 %v6237, %v6238
      %v6240 = vand.u32 %v6239, 4294901760
      %6241 = vmatmul.mubr.f32.gmra.mxu0 %v6240
      %v6242 = vpop.f32.mrf.mxu0
      %v6243 = vadd.f32 0.0, %v6242
      %v6244 = vpop.f32.mrf.mxu0
      %6245 = vmatprep.mubr.f32.mxu0 0.0
      %v6246 = vand.u32 %v5935, 4294901760
      %v6247 = vsub.f32 %v5935, %v6246
      %v6248 = vand.u32 %v6247, 4294901760
      %v6249 = vsub.f32 %v6247, %v6248
      %v6250 = vand.u32 %v6249, 4294901760
      %6251 = vmatmul.mubr.f32.gmra.mxu0 %v6250
      %v6252 = vpop.f32.mrf.mxu0
      %v6253 = vadd.f32 0.0, %v6252
      %v6254 = vpop.f32.mrf.mxu0
      %6255 = vmatprep.mubr.f32.mxu0 0.0
      %v6256 = vand.u32 %v5938, 4294901760
      %v6257 = vsub.f32 %v5938, %v6256
      %v6258 = vand.u32 %v6257, 4294901760
      %v6259 = vsub.f32 %v6257, %v6258
      %v6260 = vand.u32 %v6259, 4294901760
      %6261 = vmatmul.mubr.f32.gmra.mxu0 %v6260
      %v6262 = vpop.f32.mrf.mxu0
      %v6263 = vadd.f32 0.0, %v6262
      %v6264 = vpop.f32.mrf.mxu0
      %6265 = vmatprep.mubr.f32.mxu0 0.0
      %v6266 = vand.u32 %v5941, 4294901760
      %v6267 = vsub.f32 %v5941, %v6266
      %v6268 = vand.u32 %v6267, 4294901760
      %v6269 = vsub.f32 %v6267, %v6268
      %v6270 = vand.u32 %v6269, 4294901760
      %6271 = vmatmul.mubr.f32.gmra.mxu0 %v6270
      %v6272 = vpop.f32.mrf.mxu0
      %v6273 = vadd.f32 0.0, %v6272
      %v6274 = vpop.f32.mrf.mxu0
      %6275 = vmatprep.mubr.f32.mxu0 0.0
      %v6276 = vand.u32 %v5944, 4294901760
      %v6277 = vsub.f32 %v5944, %v6276
      %v6278 = vand.u32 %v6277, 4294901760
      %v6279 = vsub.f32 %v6277, %v6278
      %v6280 = vand.u32 %v6279, 4294901760
      %6281 = vmatmul.mubr.f32.gmra.mxu0 %v6280
      %v6282 = vpop.f32.mrf.mxu0
      %v6283 = vadd.f32 0.0, %v6282
      %v6284 = vpop.f32.mrf.mxu0
      %6285 = vmatprep.mubr.f32.mxu0 0.0
      %v6286 = vand.u32 %v5947, 4294901760
      %v6287 = vsub.f32 %v5947, %v6286
      %v6288 = vand.u32 %v6287, 4294901760
      %v6289 = vsub.f32 %v6287, %v6288
      %v6290 = vand.u32 %v6289, 4294901760
      %6291 = vmatmul.mubr.f32.gmra.mxu0 %v6290
      %v6292 = vpop.f32.mrf.mxu0
      %v6293 = vadd.f32 0.0, %v6292
      %v6294 = vpop.f32.mrf.mxu0
      %6295 = vmatprep.mubr.f32.mxu0 0.0
      %v6296 = vand.u32 %v5950, 4294901760
      %v6297 = vsub.f32 %v5950, %v6296
      %v6298 = vand.u32 %v6297, 4294901760
      %v6299 = vsub.f32 %v6297, %v6298
      %v6300 = vand.u32 %v6299, 4294901760
      %6301 = vmatmul.mubr.f32.gmra.mxu0 %v6300
      %v6302 = vpop.f32.mrf.mxu0
      %v6303 = vadd.f32 0.0, %v6302
      %v6304 = vpop.f32.mrf.mxu0
      %6305 = vmatprep.mubr.f32.mxu0 0.0
      %v6306 = vand.u32 %v5953, 4294901760
      %v6307 = vsub.f32 %v5953, %v6306
      %v6308 = vand.u32 %v6307, 4294901760
      %v6309 = vsub.f32 %v6307, %v6308
      %v6310 = vand.u32 %v6309, 4294901760
      %6311 = vmatmul.mubr.f32.gmra.mxu0 %v6310
      %v6312 = vpop.f32.mrf.mxu0
      %v6313 = vadd.f32 0.0, %v6312
      %v6314 = vpop.f32.mrf.mxu0
      %6315 = vmatprep.mubr.f32.mxu0 0.0
      %v6316 = vand.u32 %v5956, 4294901760
      %v6317 = vsub.f32 %v5956, %v6316
      %v6318 = vand.u32 %v6317, 4294901760
      %v6319 = vsub.f32 %v6317, %v6318
      %v6320 = vand.u32 %v6319, 4294901760
      %6321 = vmatmul.mubr.f32.gmra.mxu0 %v6320
      %v6322 = vpop.f32.mrf.mxu0
      %v6323 = vadd.f32 0.0, %v6322
      %v6324 = vpop.f32.mrf.mxu0
      %6325 = vmatprep.mubr.f32.mxu0 0.0
      %v6326 = vand.u32 %v5959, 4294901760
      %v6327 = vsub.f32 %v5959, %v6326
      %v6328 = vand.u32 %v6327, 4294901760
      %v6329 = vsub.f32 %v6327, %v6328
      %v6330 = vand.u32 %v6329, 4294901760
      %6331 = vmatmul.mubr.f32.gmra.mxu0 %v6330
      %v6332 = vpop.f32.mrf.mxu0
      %v6333 = vadd.f32 0.0, %v6332
      %v6334 = vpop.f32.mrf.mxu0
      %6335 = vmatprep.mubr.f32.mxu0 0.0
      %v6336 = vand.u32 %v5962, 4294901760
      %v6337 = vsub.f32 %v5962, %v6336
      %v6338 = vand.u32 %v6337, 4294901760
      %v6339 = vsub.f32 %v6337, %v6338
      %v6340 = vand.u32 %v6339, 4294901760
      %6341 = vmatmul.mubr.f32.gmra.mxu0 %v6340
      %v6342 = vpop.f32.mrf.mxu0
      %v6343 = vadd.f32 0.0, %v6342
      %v6344 = vpop.f32.mrf.mxu0
      %6345 = vmatprep.mubr.f32.mxu0 0.0
      %v6346 = vand.u32 %v5965, 4294901760
      %v6347 = vsub.f32 %v5965, %v6346
      %v6348 = vand.u32 %v6347, 4294901760
      %v6349 = vsub.f32 %v6347, %v6348
      %v6350 = vand.u32 %v6349, 4294901760
      %6351 = vmatmul.mubr.f32.gmra.mxu0 %v6350
      %v6352 = vpop.f32.mrf.mxu0
      %v6353 = vadd.f32 0.0, %v6352
      %v6354 = vpop.f32.mrf.mxu0
      %6355 = vmatprep.mubr.f32.mxu0 0.0
      %v6356 = vand.u32 %v5968, 4294901760
      %v6357 = vsub.f32 %v5968, %v6356
      %v6358 = vand.u32 %v6357, 4294901760
      %v6359 = vsub.f32 %v6357, %v6358
      %v6360 = vand.u32 %v6359, 4294901760
      %6361 = vmatmul.mubr.f32.gmra.mxu0 %v6360
      %v6362 = vpop.f32.mrf.mxu0
      %v6363 = vadd.f32 0.0, %v6362
      %v6364 = vpop.f32.mrf.mxu0
      %6365 = vmatprep.mubr.f32.mxu0 0.0
      %v6366 = vand.u32 %v5971, 4294901760
      %v6367 = vsub.f32 %v5971, %v6366
      %v6368 = vand.u32 %v6367, 4294901760
      %v6369 = vsub.f32 %v6367, %v6368
      %v6370 = vand.u32 %v6369, 4294901760
      %6371 = vmatmul.mubr.f32.gmra.mxu0 %v6370
      %v6372 = vpop.f32.mrf.mxu0
      %v6373 = vadd.f32 0.0, %v6372
      %v6374 = vpop.f32.mrf.mxu0
      %6375 = vmatprep.mubr.f32.mxu0 0.0
      %v6376 = vand.u32 %v5974, 4294901760
      %v6377 = vsub.f32 %v5974, %v6376
      %v6378 = vand.u32 %v6377, 4294901760
      %v6379 = vsub.f32 %v6377, %v6378
      %v6380 = vand.u32 %v6379, 4294901760
      %6381 = vmatmul.mubr.f32.gmra.mxu0 %v6380
      %v6382 = vpop.f32.mrf.mxu0
      %v6383 = vadd.f32 0.0, %v6382
      %v6384 = vpop.f32.mrf.mxu0
      %6385 = vmatprep.mubr.f32.mxu0 0.0
      %v6386 = vand.u32 %v5977, 4294901760
      %v6387 = vsub.f32 %v5977, %v6386
      %v6388 = vand.u32 %v6387, 4294901760
      %v6389 = vsub.f32 %v6387, %v6388
      %v6390 = vand.u32 %v6389, 4294901760
      %6391 = vmatmul.mubr.f32.gmra.mxu0 %v6390
      %v6392 = vpop.f32.mrf.mxu0
      %v6393 = vadd.f32 0.0, %v6392
      %v6394 = vpop.f32.mrf.mxu0
      %6395 = vmatprep.mubr.f32.mxu0 0.0
      %v6396 = vand.u32 %v5980, 4294901760
      %v6397 = vsub.f32 %v5980, %v6396
      %v6398 = vand.u32 %v6397, 4294901760
      %v6399 = vsub.f32 %v6397, %v6398
      %v6400 = vand.u32 %v6399, 4294901760
      %6401 = vmatmul.mubr.f32.gmra.mxu0 %v6400
      %v6402 = vpop.f32.mrf.mxu0
      %v6403 = vadd.f32 0.0, %v6402
      %v6404 = vpop.f32.mrf.mxu0
      %6405 = vmatprep.mubr.f32.mxu0 0.0
      %v6406 = vand.u32 %v5983, 4294901760
      %v6407 = vsub.f32 %v5983, %v6406
      %v6408 = vand.u32 %v6407, 4294901760
      %v6409 = vsub.f32 %v6407, %v6408
      %v6410 = vand.u32 %v6409, 4294901760
      %6411 = vmatmul.mubr.f32.gmra.mxu0 %v6410
      %v6412 = vpop.f32.mrf.mxu0
      %v6413 = vadd.f32 0.0, %v6412
      %v6414 = vpop.f32.mrf.mxu0
      %6415 = vmatprep.mubr.f32.mxu0 0.0
      %v6416 = vand.u32 %v5986, 4294901760
      %v6417 = vsub.f32 %v5986, %v6416
      %v6418 = vand.u32 %v6417, 4294901760
      %v6419 = vsub.f32 %v6417, %v6418
      %v6420 = vand.u32 %v6419, 4294901760
      %6421 = vmatmul.mubr.f32.gmra.mxu0 %v6420
      %v6422 = vpop.f32.mrf.mxu0
      %v6423 = vadd.f32 0.0, %v6422
      %v6424 = vpop.f32.mrf.mxu0
      %6425 = vmatprep.mubr.f32.mxu0 0.0
      %v6426 = vand.u32 %v5989, 4294901760
      %v6427 = vsub.f32 %v5989, %v6426
      %v6428 = vand.u32 %v6427, 4294901760
      %v6429 = vsub.f32 %v6427, %v6428
      %v6430 = vand.u32 %v6429, 4294901760
      %6431 = vmatmul.mubr.f32.gmra.mxu0 %v6430
      %v6432 = vpop.f32.mrf.mxu0
      %v6433 = vadd.f32 0.0, %v6432
      %v6434 = vpop.f32.mrf.mxu0
      %6435 = vmatprep.mubr.f32.mxu0 0.0
      %v6436 = vand.u32 %v5992, 4294901760
      %v6437 = vsub.f32 %v5992, %v6436
      %v6438 = vand.u32 %v6437, 4294901760
      %v6439 = vsub.f32 %v6437, %v6438
      %v6440 = vand.u32 %v6439, 4294901760
      %6441 = vmatmul.mubr.f32.gmra.mxu0 %v6440
      %v6442 = vpop.f32.mrf.mxu0
      %v6443 = vadd.f32 0.0, %v6442
      %v6444 = vpop.f32.mrf.mxu0
      %6445 = vmatprep.mubr.f32.mxu0 0.0
      %v6446 = vand.u32 %v5995, 4294901760
      %v6447 = vsub.f32 %v5995, %v6446
      %v6448 = vand.u32 %v6447, 4294901760
      %v6449 = vsub.f32 %v6447, %v6448
      %v6450 = vand.u32 %v6449, 4294901760
      %6451 = vmatmul.mubr.f32.gmra.mxu0 %v6450
      %v6452 = vpop.f32.mrf.mxu0
      %v6453 = vadd.f32 0.0, %v6452
      %v6454 = vpop.f32.mrf.mxu0
      %6455 = vmatprep.mubr.f32.mxu0 0.0
      %v6456 = vand.u32 %v5998, 4294901760
      %v6457 = vsub.f32 %v5998, %v6456
      %v6458 = vand.u32 %v6457, 4294901760
      %v6459 = vsub.f32 %v6457, %v6458
      %v6460 = vand.u32 %v6459, 4294901760
      %6461 = vmatmul.mubr.f32.gmra.mxu0 %v6460
      %v6462 = vpop.f32.mrf.mxu0
      %v6463 = vadd.f32 0.0, %v6462
      %v6464 = vpop.f32.mrf.mxu0
      %6465 = vmatprep.mubr.f32.mxu0 0.0
      %v6466 = vand.u32 %v6001, 4294901760
      %v6467 = vsub.f32 %v6001, %v6466
      %v6468 = vand.u32 %v6467, 4294901760
      %v6469 = vsub.f32 %v6467, %v6468
      %v6470 = vand.u32 %v6469, 4294901760
      %6471 = vmatmul.mubr.f32.gmra.mxu0 %v6470
      %v6472 = vpop.f32.mrf.mxu0
      %v6473 = vadd.f32 0.0, %v6472
      %v6474 = vpop.f32.mrf.mxu0
      %6475 = vmatprep.mubr.f32.mxu0 0.0
      %v6476 = vand.u32 %v6004, 4294901760
      %v6477 = vsub.f32 %v6004, %v6476
      %v6478 = vand.u32 %v6477, 4294901760
      %v6479 = vsub.f32 %v6477, %v6478
      %v6480 = vand.u32 %v6479, 4294901760
      %6481 = vmatmul.mubr.f32.gmra.mxu0 %v6480
      %v6482 = vpop.f32.mrf.mxu0
      %v6483 = vadd.f32 0.0, %v6482
      %v6484 = vpop.f32.mrf.mxu0
      %6485 = vmatprep.mubr.f32.mxu0 0.0
      %v6486 = vand.u32 %v6007, 4294901760
      %v6487 = vsub.f32 %v6007, %v6486
      %v6488 = vand.u32 %v6487, 4294901760
      %v6489 = vsub.f32 %v6487, %v6488
      %v6490 = vand.u32 %v6489, 4294901760
      %6491 = vmatmul.mubr.f32.gmra.mxu0 %v6490
      %v6492 = vpop.f32.mrf.mxu0
      %v6493 = vadd.f32 0.0, %v6492
      %v6494 = vpop.f32.mrf.mxu0
      %6495 = vmatprep.mubr.f32.mxu0 0.0
      %v6496 = vand.u32 %v6010, 4294901760
      %v6497 = vsub.f32 %v6010, %v6496
      %v6498 = vand.u32 %v6497, 4294901760
      %v6499 = vsub.f32 %v6497, %v6498
      %v6500 = vand.u32 %v6499, 4294901760
      %6501 = vmatmul.mubr.f32.gmra.mxu0 %v6500
      %v6502 = vpop.f32.mrf.mxu0
      %v6503 = vadd.f32 0.0, %v6502
      %v6504 = vpop.f32.mrf.mxu0
      %6505 = vmatprep.mubr.f32.mxu0 0.0
      %v6506 = vand.u32 %v6013, 4294901760
      %v6507 = vsub.f32 %v6013, %v6506
      %v6508 = vand.u32 %v6507, 4294901760
      %v6509 = vsub.f32 %v6507, %v6508
      %v6510 = vand.u32 %v6509, 4294901760
      %6511 = vmatmul.mubr.f32.gmra.mxu0 %v6510
      %v6512 = vpop.f32.mrf.mxu0
      %v6513 = vadd.f32 0.0, %v6512
      %v6514 = vpop.f32.mrf.mxu0
      %6515 = vmatprep.mubr.f32.mxu0 0.0
      %v6516 = vand.u32 %v6016, 4294901760
      %v6517 = vsub.f32 %v6016, %v6516
      %v6518 = vand.u32 %v6517, 4294901760
      %v6519 = vsub.f32 %v6517, %v6518
      %v6520 = vand.u32 %v6519, 4294901760
      %6521 = vmatmul.mubr.f32.gmra.mxu0 %v6520
      %v6522 = vpop.f32.mrf.mxu0
      %v6523 = vadd.f32 0.0, %v6522
      %v6524 = vpop.f32.mrf.mxu0
      %6525 = vmatprep.mubr.f32.mxu0 0.0
      %v6526 = vand.u32 %v6019, 4294901760
      %v6527 = vsub.f32 %v6019, %v6526
      %v6528 = vand.u32 %v6527, 4294901760
      %v6529 = vsub.f32 %v6527, %v6528
      %v6530 = vand.u32 %v6529, 4294901760
      %6531 = vmatmul.mubr.f32.gmra.mxu0 %v6530
      %v6532 = vpop.f32.mrf.mxu0
      %v6533 = vadd.f32 0.0, %v6532
      %v6534 = vpop.f32.mrf.mxu0
      %6535 = vmatprep.mubr.f32.mxu0 0.0
      %v6536 = vand.u32 %v6022, 4294901760
      %v6537 = vsub.f32 %v6022, %v6536
      %v6538 = vand.u32 %v6537, 4294901760
      %v6539 = vsub.f32 %v6537, %v6538
      %v6540 = vand.u32 %v6539, 4294901760
      %6541 = vmatmul.mubr.f32.gmra.mxu0 %v6540
      %v6542 = vpop.f32.mrf.mxu0
      %v6543 = vadd.f32 0.0, %v6542
      %v6544 = vpop.f32.mrf.mxu0
      %6545 = vmatprep.mubr.f32.mxu0 0.0
      %v6546 = vand.u32 %v6025, 4294901760
      %v6547 = vsub.f32 %v6025, %v6546
      %v6548 = vand.u32 %v6547, 4294901760
      %v6549 = vsub.f32 %v6547, %v6548
      %v6550 = vand.u32 %v6549, 4294901760
      %6551 = vmatmul.mubr.f32.gmra.mxu0 %v6550
      %v6552 = vpop.f32.mrf.mxu0
      %v6553 = vadd.f32 0.0, %v6552
      %v6554 = vpop.f32.mrf.mxu0
      %6555 = vmatprep.mubr.f32.mxu0 0.0
      %v6556 = vand.u32 %v6028, 4294901760
      %v6557 = vsub.f32 %v6028, %v6556
      %v6558 = vand.u32 %v6557, 4294901760
      %v6559 = vsub.f32 %v6557, %v6558
      %v6560 = vand.u32 %v6559, 4294901760
      %6561 = vmatmul.mubr.f32.gmra.mxu0 %v6560
      %v6562 = vpop.f32.mrf.mxu0
      %v6563 = vadd.f32 0.0, %v6562
      %v6564 = vpop.f32.mrf.mxu0
      %6565 = vmatprep.mubr.f32.mxu0 0.0
      %v6566 = vand.u32 %v6031, 4294901760
      %v6567 = vsub.f32 %v6031, %v6566
      %v6568 = vand.u32 %v6567, 4294901760
      %v6569 = vsub.f32 %v6567, %v6568
      %v6570 = vand.u32 %v6569, 4294901760
      %6571 = vmatmul.mubr.f32.gmra.mxu0 %v6570
      %v6572 = vpop.f32.mrf.mxu0
      %v6573 = vadd.f32 0.0, %v6572
      %v6574 = vpop.f32.mrf.mxu0
      %6575 = vmatprep.mubr.f32.mxu0 0.0
      %v6576 = vand.u32 %v6034, 4294901760
      %v6577 = vsub.f32 %v6034, %v6576
      %v6578 = vand.u32 %v6577, 4294901760
      %v6579 = vsub.f32 %v6577, %v6578
      %v6580 = vand.u32 %v6579, 4294901760
      %6581 = vmatmul.mubr.f32.gmra.mxu0 %v6580
      %v6582 = vpop.f32.mrf.mxu0
      %v6583 = vadd.f32 0.0, %v6582
      %v6584 = vpop.f32.mrf.mxu0
      %6585 = vmatprep.mubr.f32.mxu0 0.0
      %v6586 = vand.u32 %v6037, 4294901760
      %v6587 = vsub.f32 %v6037, %v6586
      %v6588 = vand.u32 %v6587, 4294901760
      %v6589 = vsub.f32 %v6587, %v6588
      %v6590 = vand.u32 %v6589, 4294901760
      %6591 = vmatmul.mubr.f32.gmra.mxu0 %v6590
      %v6592 = vpop.f32.mrf.mxu0
      %v6593 = vadd.f32 0.0, %v6592
      %v6594 = vpop.f32.mrf.mxu0
      %6595 = vmatprep.mubr.f32.mxu0 0.0
      %v6596 = vand.u32 %v6040, 4294901760
      %v6597 = vsub.f32 %v6040, %v6596
      %v6598 = vand.u32 %v6597, 4294901760
      %v6599 = vsub.f32 %v6597, %v6598
      %v6600 = vand.u32 %v6599, 4294901760
      %6601 = vmatmul.mubr.f32.gmra.mxu0 %v6600
      %v6602 = vpop.f32.mrf.mxu0
      %v6603 = vadd.f32 0.0, %v6602
      %v6604 = vpop.f32.mrf.mxu0
      %6605 = vmatprep.mubr.f32.mxu0 0.0
      %v6606 = vand.u32 %v6043, 4294901760
      %v6607 = vsub.f32 %v6043, %v6606
      %v6608 = vand.u32 %v6607, 4294901760
      %v6609 = vsub.f32 %v6607, %v6608
      %v6610 = vand.u32 %v6609, 4294901760
      %6611 = vmatmul.mubr.f32.gmra.mxu0 %v6610
      %v6612 = vpop.f32.mrf.mxu0
      %v6613 = vadd.f32 0.0, %v6612
      %v6614 = vpop.f32.mrf.mxu0
      %6615 = vmatprep.mubr.f32.mxu0 0.0
      %v6616 = vand.u32 %v6046, 4294901760
      %v6617 = vsub.f32 %v6046, %v6616
      %v6618 = vand.u32 %v6617, 4294901760
      %v6619 = vsub.f32 %v6617, %v6618
      %v6620 = vand.u32 %v6619, 4294901760
      %6621 = vmatmul.mubr.f32.gmra.mxu0 %v6620
      %v6622 = vpop.f32.mrf.mxu0
      %v6623 = vadd.f32 0.0, %v6622
      %v6624 = vpop.f32.mrf.mxu0
      %6625 = vmatprep.mubr.f32.mxu0 0.0
      %v6626 = vand.u32 %v6049, 4294901760
      %v6627 = vsub.f32 %v6049, %v6626
      %v6628 = vand.u32 %v6627, 4294901760
      %v6629 = vsub.f32 %v6627, %v6628
      %v6630 = vand.u32 %v6629, 4294901760
      %6631 = vmatmul.mubr.f32.gmra.mxu0 %v6630
      %v6632 = vpop.f32.mrf.mxu0
      %v6633 = vadd.f32 0.0, %v6632
      %v6634 = vpop.f32.mrf.mxu0
      %6635 = vmatprep.mubr.f32.mxu0 0.0
      %v6636 = vand.u32 %v6052, 4294901760
      %v6637 = vsub.f32 %v6052, %v6636
      %v6638 = vand.u32 %v6637, 4294901760
      %v6639 = vsub.f32 %v6637, %v6638
      %v6640 = vand.u32 %v6639, 4294901760
      %6641 = vmatmul.mubr.f32.gmra.mxu0 %v6640
      %v6642 = vpop.f32.mrf.mxu0
      %v6643 = vadd.f32 0.0, %v6642
      %v6644 = vpop.f32.mrf.mxu0
      %6645 = vmatprep.mubr.f32.mxu0 0.0
      %v6646 = vand.u32 %v6055, 4294901760
      %v6647 = vsub.f32 %v6055, %v6646
      %v6648 = vand.u32 %v6647, 4294901760
      %v6649 = vsub.f32 %v6647, %v6648
      %v6650 = vand.u32 %v6649, 4294901760
      %6651 = vmatmul.mubr.f32.gmra.mxu0 %v6650
      %v6652 = vpop.f32.mrf.mxu0
      %v6653 = vadd.f32 0.0, %v6652
      %v6654 = vpop.f32.mrf.mxu0
      %6655 = vmatprep.mubr.f32.mxu0 0.0
      %v6656 = vand.u32 %v6058, 4294901760
      %v6657 = vsub.f32 %v6058, %v6656
      %v6658 = vand.u32 %v6657, 4294901760
      %v6659 = vsub.f32 %v6657, %v6658
      %v6660 = vand.u32 %v6659, 4294901760
      %6661 = vmatmul.mubr.f32.gmra.mxu0 %v6660
      %v6662 = vpop.f32.mrf.mxu0
      %v6663 = vadd.f32 0.0, %v6662
      %v6664 = vpop.f32.mrf.mxu0
      %6665 = vmatprep.mubr.f32.mxu0 0.0
      %v6666 = vand.u32 %v6061, 4294901760
      %v6667 = vsub.f32 %v6061, %v6666
      %v6668 = vand.u32 %v6667, 4294901760
      %v6669 = vsub.f32 %v6667, %v6668
      %v6670 = vand.u32 %v6669, 4294901760
      %6671 = vmatmul.mubr.f32.gmra.mxu0 %v6670
      %v6672 = vpop.f32.mrf.mxu0
      %v6673 = vadd.f32 0.0, %v6672
      %v6674 = vpop.f32.mrf.mxu0
      %6675 = vmatprep.mubr.f32.mxu0 0.0
      %v6676 = vand.u32 %v6064, 4294901760
      %v6677 = vsub.f32 %v6064, %v6676
      %v6678 = vand.u32 %v6677, 4294901760
      %v6679 = vsub.f32 %v6677, %v6678
      %v6680 = vand.u32 %v6679, 4294901760
      %6681 = vmatmul.mubr.f32.gmra.mxu0 %v6680
      %v6682 = vpop.f32.mrf.mxu0
      %v6683 = vadd.f32 0.0, %v6682
      %v6684 = vpop.f32.mrf.mxu0
      %6685 = vmatprep.mubr.f32.mxu0 0.0
      %v6686 = vand.u32 %v6067, 4294901760
      %v6687 = vsub.f32 %v6067, %v6686
      %v6688 = vand.u32 %v6687, 4294901760
      %v6689 = vsub.f32 %v6687, %v6688
      %v6690 = vand.u32 %v6689, 4294901760
      %6691 = vmatmul.mubr.f32.gmra.mxu0 %v6690
      %v6692 = vpop.f32.mrf.mxu0
      %v6693 = vadd.f32 0.0, %v6692
      %v6694 = vpop.f32.mrf.mxu0
      %6695 = vmatprep.mubr.f32.mxu0 0.0
      %v6696 = vand.u32 %v6070, 4294901760
      %v6697 = vsub.f32 %v6070, %v6696
      %v6698 = vand.u32 %v6697, 4294901760
      %v6699 = vsub.f32 %v6697, %v6698
      %v6700 = vand.u32 %v6699, 4294901760
      %6701 = vmatmul.mubr.f32.gmra.mxu0 %v6700
      %v6702 = vpop.f32.mrf.mxu0
      %v6703 = vadd.f32 0.0, %v6702
      %v6704 = vpop.f32.mrf.mxu0
      %6705 = vmatprep.mubr.f32.mxu0 0.0
      %v6706 = vand.u32 %v6073, 4294901760
      %v6707 = vsub.f32 %v6073, %v6706
      %v6708 = vand.u32 %v6707, 4294901760
      %v6709 = vsub.f32 %v6707, %v6708
      %v6710 = vand.u32 %v6709, 4294901760
      %6711 = vmatmul.mubr.f32.gmra.mxu0 %v6710
      %v6712 = vpop.f32.mrf.mxu0
      %v6713 = vadd.f32 0.0, %v6712
      %v6714 = vpop.f32.mrf.mxu0
      %6715 = vmatprep.mubr.f32.mxu0 0.0
      %v6716 = vand.u32 %v6076, 4294901760
      %v6717 = vsub.f32 %v6076, %v6716
      %v6718 = vand.u32 %v6717, 4294901760
      %v6719 = vsub.f32 %v6717, %v6718
      %v6720 = vand.u32 %v6719, 4294901760
      %6721 = vmatmul.mubr.f32.gmra.mxu0 %v6720
      %v6722 = vpop.f32.mrf.mxu0
      %v6723 = vadd.f32 0.0, %v6722
      %v6724 = vpop.f32.mrf.mxu0
      %6725 = vmatprep.mubr.f32.mxu0 0.0
      %v6726 = vand.u32 %v6079, 4294901760
      %v6727 = vsub.f32 %v6079, %v6726
      %v6728 = vand.u32 %v6727, 4294901760
      %v6729 = vsub.f32 %v6727, %v6728
      %v6730 = vand.u32 %v6729, 4294901760
      %6731 = vmatmul.mubr.f32.gmra.mxu0 %v6730
      %v6732 = vpop.f32.mrf.mxu0
      %v6733 = vadd.f32 0.0, %v6732
      %v6734 = vpop.f32.mrf.mxu0
      %6735 = vmatprep.mubr.f32.mxu0 0.0
      %v6736 = vand.u32 %v6082, 4294901760
      %v6737 = vsub.f32 %v6082, %v6736
      %v6738 = vand.u32 %v6737, 4294901760
      %v6739 = vsub.f32 %v6737, %v6738
      %v6740 = vand.u32 %v6739, 4294901760
      %6741 = vmatmul.mubr.f32.gmra.mxu0 %v6740
      %v6742 = vpop.f32.mrf.mxu0
      %v6743 = vadd.f32 0.0, %v6742
      %v6744 = vpop.f32.mrf.mxu0
      %6745 = vmatprep.mubr.f32.mxu0 0.0
      %v6746 = vand.u32 %v6085, 4294901760
      %v6747 = vsub.f32 %v6085, %v6746
      %v6748 = vand.u32 %v6747, 4294901760
      %v6749 = vsub.f32 %v6747, %v6748
      %v6750 = vand.u32 %v6749, 4294901760
      %6751 = vmatmul.mubr.f32.gmra.mxu0 %v6750
      %v6752 = vpop.f32.mrf.mxu0
      %v6753 = vadd.f32 0.0, %v6752
      %v6754 = vpop.f32.mrf.mxu0
      %6755 = vmatprep.mubr.f32.mxu0 0.0
      %v6756 = vand.u32 %v6088, 4294901760
      %v6757 = vsub.f32 %v6088, %v6756
      %v6758 = vand.u32 %v6757, 4294901760
      %v6759 = vsub.f32 %v6757, %v6758
      %v6760 = vand.u32 %v6759, 4294901760
      %6761 = vmatmul.mubr.f32.gmra.mxu0 %v6760
      %v6762 = vpop.f32.mrf.mxu0
      %v6763 = vadd.f32 0.0, %v6762
      %v6764 = vpop.f32.mrf.mxu0
      %6765 = vmatprep.mubr.f32.mxu0 0.0
      %v6766 = vand.u32 %v6091, 4294901760
      %v6767 = vsub.f32 %v6091, %v6766
      %v6768 = vand.u32 %v6767, 4294901760
      %v6769 = vsub.f32 %v6767, %v6768
      %v6770 = vand.u32 %v6769, 4294901760
      %6771 = vmatmul.mubr.f32.gmra.mxu0 %v6770
      %v6772 = vpop.f32.mrf.mxu0
      %v6773 = vadd.f32 0.0, %v6772
      %v6774 = vpop.f32.mrf.mxu0
      %6775 = vmatprep.mubr.f32.mxu0 0.0
      %v6776 = vand.u32 %v6094, 4294901760
      %v6777 = vsub.f32 %v6094, %v6776
      %v6778 = vand.u32 %v6777, 4294901760
      %v6779 = vsub.f32 %v6777, %v6778
      %v6780 = vand.u32 %v6779, 4294901760
      %6781 = vmatmul.mubr.f32.gmra.mxu0 %v6780
      %v6782 = vpop.f32.mrf.mxu0
      %v6783 = vadd.f32 0.0, %v6782
      %v6784 = vpop.f32.mrf.mxu0
      %6785 = vmatprep.mubr.f32.mxu0 0.0
      %v6786 = vand.u32 %v6097, 4294901760
      %v6787 = vsub.f32 %v6097, %v6786
      %v6788 = vand.u32 %v6787, 4294901760
      %v6789 = vsub.f32 %v6787, %v6788
      %v6790 = vand.u32 %v6789, 4294901760
      %6791 = vmatmul.mubr.f32.gmra.mxu0 %v6790
      %v6792 = vpop.f32.mrf.mxu0
      %v6793 = vadd.f32 0.0, %v6792
      %v6794 = vpop.f32.mrf.mxu0
      %6795 = vmatprep.mubr.f32.mxu0 0.0
      %v6796 = vand.u32 %v6100, 4294901760
      %v6797 = vsub.f32 %v6100, %v6796
      %v6798 = vand.u32 %v6797, 4294901760
      %v6799 = vsub.f32 %v6797, %v6798
      %v6800 = vand.u32 %v6799, 4294901760
      %6801 = vmatmul.mubr.f32.gmra.mxu0 %v6800
      %v6802 = vpop.f32.mrf.mxu0
      %v6803 = vadd.f32 0.0, %v6802
      %v6804 = vpop.f32.mrf.mxu0
      %6805 = vmatprep.mubr.f32.mxu0 0.0
      %v6806 = vand.u32 %v6103, 4294901760
      %v6807 = vsub.f32 %v6103, %v6806
      %v6808 = vand.u32 %v6807, 4294901760
      %v6809 = vsub.f32 %v6807, %v6808
      %v6810 = vand.u32 %v6809, 4294901760
      %6811 = vmatmul.mubr.f32.gmra.mxu0 %v6810
      %v6812 = vpop.f32.mrf.mxu0
      %v6813 = vadd.f32 0.0, %v6812
      %v6814 = vpop.f32.mrf.mxu0
      %6815 = vmatprep.mubr.f32.mxu0 0.0
      %v6816 = vand.u32 %v6106, 4294901760
      %v6817 = vsub.f32 %v6106, %v6816
      %v6818 = vand.u32 %v6817, 4294901760
      %v6819 = vsub.f32 %v6817, %v6818
      %v6820 = vand.u32 %v6819, 4294901760
      %6821 = vmatmul.mubr.f32.gmra.mxu0 %v6820
      %v6822 = vpop.f32.mrf.mxu0
      %v6823 = vadd.f32 0.0, %v6822
      %v6824 = vpop.f32.mrf.mxu0
      %6825 = vdwg.mxu0
      %6826 = vmatprep.subr.mxu0 0.0
      %6827 = vmatpush1.msra.mxu0 0.0
      %6828 = vmatprep.subr.mxu0 0.0
      %6829 = vmatpush1.msra.mxu0 0.0
      %6830 = vmatprep.subr.mxu0 0.0
      %6831 = vmatpush1.msra.mxu0 0.0
      %6832 = vmatprep.subr.mxu0 0.0
      %v6833 = vand.u32 %v5915, 4294901760
      %v6834 = vsub.f32 %v5915, %v6833
      %v6835 = vand.u32 %v6834, 4294901760
      %v6836 = vsub.f32 %v6834, %v6835
      %v6837 = vand.u32 %v6836, 4294901760
      %6838 = vmatpush1.msra.mxu0 %v6837
      %6839 = vmatprep.subr.mxu0 0.0
      %v6840 = vand.u32 %v5914, 4294901760
      %v6841 = vsub.f32 %v5914, %v6840
      %v6842 = vand.u32 %v6841, 4294901760
      %v6843 = vsub.f32 %v6841, %v6842
      %v6844 = vand.u32 %v6843, 4294901760
      %6845 = vmatpush1.msra.mxu0 %v6844
      %6846 = vmatprep.subr.mxu0 0.0
      %v6847 = vand.u32 %v5913, 4294901760
      %v6848 = vsub.f32 %v5913, %v6847
      %v6849 = vand.u32 %v6848, 4294901760
      %v6850 = vsub.f32 %v6848, %v6849
      %v6851 = vand.u32 %v6850, 4294901760
      %6852 = vmatpush1.msra.mxu0 %v6851
      %6853 = vmatprep.subr.mxu0 0.0
      %v6854 = vand.u32 %v5912, 4294901760
      %v6855 = vsub.f32 %v5912, %v6854
      %v6856 = vand.u32 %v6855, 4294901760
      %v6857 = vsub.f32 %v6855, %v6856
      %v6858 = vand.u32 %v6857, 4294901760
      %6859 = vmatpush1.msra.mxu0 %v6858
      %6860 = vmatprep.subr.mxu0 0.0
      %v6861 = vand.u32 %v5911, 4294901760
      %v6862 = vsub.f32 %v5911, %v6861
      %v6863 = vand.u32 %v6862, 4294901760
      %v6864 = vsub.f32 %v6862, %v6863
      %v6865 = vand.u32 %v6864, 4294901760
      %6866 = vmatpush1.msra.mxu0 %v6865
      %6867 = vmatprep.subr.mxu0 0.0
      %v6868 = vand.u32 %v5910, 4294901760
      %v6869 = vsub.f32 %v5910, %v6868
      %v6870 = vand.u32 %v6869, 4294901760
      %v6871 = vsub.f32 %v6869, %v6870
      %v6872 = vand.u32 %v6871, 4294901760
      %6873 = vmatpush1.msra.mxu0 %v6872
      %6874 = vmatprep.subr.mxu0 0.0
      %v6875 = vand.u32 %v5909, 4294901760
      %v6876 = vsub.f32 %v5909, %v6875
      %v6877 = vand.u32 %v6876, 4294901760
      %v6878 = vsub.f32 %v6876, %v6877
      %v6879 = vand.u32 %v6878, 4294901760
      %6880 = vmatpush1.msra.mxu0 %v6879
      %6881 = vmatprep.subr.mxu0 0.0
      %v6882 = vand.u32 %v5908, 4294901760
      %v6883 = vsub.f32 %v5908, %v6882
      %v6884 = vand.u32 %v6883, 4294901760
      %v6885 = vsub.f32 %v6883, %v6884
      %v6886 = vand.u32 %v6885, 4294901760
      %6887 = vmatpush1.msra.mxu0 %v6886
      %6888 = vmatprep.subr.mxu0 0.0
      %v6889 = vand.u32 %v5907, 4294901760
      %v6890 = vsub.f32 %v5907, %v6889
      %v6891 = vand.u32 %v6890, 4294901760
      %v6892 = vsub.f32 %v6890, %v6891
      %v6893 = vand.u32 %v6892, 4294901760
      %6894 = vmatpush1.msra.mxu0 %v6893
      %6895 = vmatprep.subr.mxu0 0.0
      %v6896 = vand.u32 %v5906, 4294901760
      %v6897 = vsub.f32 %v5906, %v6896
      %v6898 = vand.u32 %v6897, 4294901760
      %v6899 = vsub.f32 %v6897, %v6898
      %v6900 = vand.u32 %v6899, 4294901760
      %6901 = vmatpush1.msra.mxu0 %v6900
      %6902 = vmatprep.subr.mxu0 0.0
      %v6903 = vand.u32 %v5905, 4294901760
      %v6904 = vsub.f32 %v5905, %v6903
      %v6905 = vand.u32 %v6904, 4294901760
      %v6906 = vsub.f32 %v6904, %v6905
      %v6907 = vand.u32 %v6906, 4294901760
      %6908 = vmatpush1.msra.mxu0 %v6907
      %6909 = vmatprep.subr.mxu0 0.0
      %v6910 = vand.u32 %v5904, 4294901760
      %v6911 = vsub.f32 %v5904, %v6910
      %v6912 = vand.u32 %v6911, 4294901760
      %v6913 = vsub.f32 %v6911, %v6912
      %v6914 = vand.u32 %v6913, 4294901760
      %6915 = vmatpush1.msra.mxu0 %v6914
      %6916 = vmatprep.subr.mxu0 0.0
      %v6917 = vand.u32 %v5903, 4294901760
      %v6918 = vsub.f32 %v5903, %v6917
      %v6919 = vand.u32 %v6918, 4294901760
      %v6920 = vsub.f32 %v6918, %v6919
      %v6921 = vand.u32 %v6920, 4294901760
      %6922 = vmatpush1.msra.mxu0 %v6921
      %6923 = vmatprep.subr.mxu0 0.0
      %6924 = vmatpush2.msra.mxu0 0.0
      %6925 = vmatprep.subr.mxu0 0.0
      %6926 = vmatpush2.msra.mxu0 0.0
      %6927 = vmatprep.subr.mxu0 0.0
      %6928 = vmatpush2.msra.mxu0 0.0
      %6929 = vmatprep.subr.mxu0 0.0
      %6930 = vmatpush2.msra.mxu0 0.0
      %6931 = vmatprep.subr.mxu0 0.0
      %6932 = vmatpush2.msra.mxu0 0.0
      %6933 = vmatprep.subr.mxu0 0.0
      %6934 = vmatpush2.msra.mxu0 0.0
      %6935 = vmatprep.subr.mxu0 0.0
      %6936 = vmatpush2.msra.mxu0 0.0
      %6937 = vmatprep.subr.mxu0 0.0
      %6938 = vmatpush2.msra.mxu0 0.0
      %6939 = vmatprep.subr.mxu0 0.0
      %6940 = vmatpush2.msra.mxu0 0.0
      %6941 = vmatprep.subr.mxu0 0.0
      %6942 = vmatpush2.msra.mxu0 0.0
      %6943 = vmatprep.subr.mxu0 0.0
      %6944 = vmatpush2.msra.mxu0 0.0
      %6945 = vmatprep.subr.mxu0 0.0
      %6946 = vmatpush2.msra.mxu0 0.0
      %6947 = vmatprep.subr.mxu0 0.0
      %6948 = vmatpush2.msra.mxu0 0.0
      %6949 = vmatprep.subr.mxu0 0.0
      %6950 = vmatpush2.msra.mxu0 0.0
      %6951 = vmatprep.subr.mxu0 0.0
      %6952 = vmatpush2.msra.mxu0 0.0
      %6953 = vmatprep.subr.mxu0 0.0
      %6954 = vmatpush2.msra.mxu0 0.0
      %6955 = vmatprep.mubr.f32.mxu0 0.0
      %v6956 = vand.u32 %v5917, 4294901760
      %6957 = vmatmul.mubr.f32.gmra.mxu0 %v6956
      %v6958 = vpop.f32.mrf.mxu0
      %v6959 = vadd.f32 %v6193, %v6958
      %v6960 = vpop.f32.mrf.mxu0
      %6961 = vmatprep.mubr.f32.mxu0 0.0
      %v6962 = vand.u32 %v5920, 4294901760
      %6963 = vmatmul.mubr.f32.gmra.mxu0 %v6962
      %v6964 = vpop.f32.mrf.mxu0
      %v6965 = vadd.f32 %v6203, %v6964
      %v6966 = vpop.f32.mrf.mxu0
      %6967 = vmatprep.mubr.f32.mxu0 0.0
      %v6968 = vand.u32 %v5923, 4294901760
      %6969 = vmatmul.mubr.f32.gmra.mxu0 %v6968
      %v6970 = vpop.f32.mrf.mxu0
      %v6971 = vadd.f32 %v6213, %v6970
      %v6972 = vpop.f32.mrf.mxu0
      %6973 = vmatprep.mubr.f32.mxu0 0.0
      %v6974 = vand.u32 %v5926, 4294901760
      %6975 = vmatmul.mubr.f32.gmra.mxu0 %v6974
      %v6976 = vpop.f32.mrf.mxu0
      %v6977 = vadd.f32 %v6223, %v6976
      %v6978 = vpop.f32.mrf.mxu0
      %6979 = vmatprep.mubr.f32.mxu0 0.0
      %v6980 = vand.u32 %v5929, 4294901760
      %6981 = vmatmul.mubr.f32.gmra.mxu0 %v6980
      %v6982 = vpop.f32.mrf.mxu0
      %v6983 = vadd.f32 %v6233, %v6982
      %v6984 = vpop.f32.mrf.mxu0
      %6985 = vmatprep.mubr.f32.mxu0 0.0
      %v6986 = vand.u32 %v5932, 4294901760
      %6987 = vmatmul.mubr.f32.gmra.mxu0 %v6986
      %v6988 = vpop.f32.mrf.mxu0
      %v6989 = vadd.f32 %v6243, %v6988
      %v6990 = vpop.f32.mrf.mxu0
      %6991 = vmatprep.mubr.f32.mxu0 0.0
      %v6992 = vand.u32 %v5935, 4294901760
      %6993 = vmatmul.mubr.f32.gmra.mxu0 %v6992
      %v6994 = vpop.f32.mrf.mxu0
      %v6995 = vadd.f32 %v6253, %v6994
      %v6996 = vpop.f32.mrf.mxu0
      %6997 = vmatprep.mubr.f32.mxu0 0.0
      %v6998 = vand.u32 %v5938, 4294901760
      %6999 = vmatmul.mubr.f32.gmra.mxu0 %v6998
      %v7000 = vpop.f32.mrf.mxu0
      %v7001 = vadd.f32 %v6263, %v7000
      %v7002 = vpop.f32.mrf.mxu0
      %7003 = vmatprep.mubr.f32.mxu0 0.0
      %v7004 = vand.u32 %v5941, 4294901760
      %7005 = vmatmul.mubr.f32.gmra.mxu0 %v7004
      %v7006 = vpop.f32.mrf.mxu0
      %v7007 = vadd.f32 %v6273, %v7006
      %v7008 = vpop.f32.mrf.mxu0
      %7009 = vmatprep.mubr.f32.mxu0 0.0
      %v7010 = vand.u32 %v5944, 4294901760
      %7011 = vmatmul.mubr.f32.gmra.mxu0 %v7010
      %v7012 = vpop.f32.mrf.mxu0
      %v7013 = vadd.f32 %v6283, %v7012
      %v7014 = vpop.f32.mrf.mxu0
      %7015 = vmatprep.mubr.f32.mxu0 0.0
      %v7016 = vand.u32 %v5947, 4294901760
      %7017 = vmatmul.mubr.f32.gmra.mxu0 %v7016
      %v7018 = vpop.f32.mrf.mxu0
      %v7019 = vadd.f32 %v6293, %v7018
      %v7020 = vpop.f32.mrf.mxu0
      %7021 = vmatprep.mubr.f32.mxu0 0.0
      %v7022 = vand.u32 %v5950, 4294901760
      %7023 = vmatmul.mubr.f32.gmra.mxu0 %v7022
      %v7024 = vpop.f32.mrf.mxu0
      %v7025 = vadd.f32 %v6303, %v7024
      %v7026 = vpop.f32.mrf.mxu0
      %7027 = vmatprep.mubr.f32.mxu0 0.0
      %v7028 = vand.u32 %v5953, 4294901760
      %7029 = vmatmul.mubr.f32.gmra.mxu0 %v7028
      %v7030 = vpop.f32.mrf.mxu0
      %v7031 = vadd.f32 %v6313, %v7030
      %v7032 = vpop.f32.mrf.mxu0
      %7033 = vmatprep.mubr.f32.mxu0 0.0
      %v7034 = vand.u32 %v5956, 4294901760
      %7035 = vmatmul.mubr.f32.gmra.mxu0 %v7034
      %v7036 = vpop.f32.mrf.mxu0
      %v7037 = vadd.f32 %v6323, %v7036
      %v7038 = vpop.f32.mrf.mxu0
      %7039 = vmatprep.mubr.f32.mxu0 0.0
      %v7040 = vand.u32 %v5959, 4294901760
      %7041 = vmatmul.mubr.f32.gmra.mxu0 %v7040
      %v7042 = vpop.f32.mrf.mxu0
      %v7043 = vadd.f32 %v6333, %v7042
      %v7044 = vpop.f32.mrf.mxu0
      %7045 = vmatprep.mubr.f32.mxu0 0.0
      %v7046 = vand.u32 %v5962, 4294901760
      %7047 = vmatmul.mubr.f32.gmra.mxu0 %v7046
      %v7048 = vpop.f32.mrf.mxu0
      %v7049 = vadd.f32 %v6343, %v7048
      %v7050 = vpop.f32.mrf.mxu0
      %7051 = vmatprep.mubr.f32.mxu0 0.0
      %v7052 = vand.u32 %v5965, 4294901760
      %7053 = vmatmul.mubr.f32.gmra.mxu0 %v7052
      %v7054 = vpop.f32.mrf.mxu0
      %v7055 = vadd.f32 %v6353, %v7054
      %v7056 = vpop.f32.mrf.mxu0
      %7057 = vmatprep.mubr.f32.mxu0 0.0
      %v7058 = vand.u32 %v5968, 4294901760
      %7059 = vmatmul.mubr.f32.gmra.mxu0 %v7058
      %v7060 = vpop.f32.mrf.mxu0
      %v7061 = vadd.f32 %v6363, %v7060
      %v7062 = vpop.f32.mrf.mxu0
      %7063 = vmatprep.mubr.f32.mxu0 0.0
      %v7064 = vand.u32 %v5971, 4294901760
      %7065 = vmatmul.mubr.f32.gmra.mxu0 %v7064
      %v7066 = vpop.f32.mrf.mxu0
      %v7067 = vadd.f32 %v6373, %v7066
      %v7068 = vpop.f32.mrf.mxu0
      %7069 = vmatprep.mubr.f32.mxu0 0.0
      %v7070 = vand.u32 %v5974, 4294901760
      %7071 = vmatmul.mubr.f32.gmra.mxu0 %v7070
      %v7072 = vpop.f32.mrf.mxu0
      %v7073 = vadd.f32 %v6383, %v7072
      %v7074 = vpop.f32.mrf.mxu0
      %7075 = vmatprep.mubr.f32.mxu0 0.0
      %v7076 = vand.u32 %v5977, 4294901760
      %7077 = vmatmul.mubr.f32.gmra.mxu0 %v7076
      %v7078 = vpop.f32.mrf.mxu0
      %v7079 = vadd.f32 %v6393, %v7078
      %v7080 = vpop.f32.mrf.mxu0
      %7081 = vmatprep.mubr.f32.mxu0 0.0
      %v7082 = vand.u32 %v5980, 4294901760
      %7083 = vmatmul.mubr.f32.gmra.mxu0 %v7082
      %v7084 = vpop.f32.mrf.mxu0
      %v7085 = vadd.f32 %v6403, %v7084
      %v7086 = vpop.f32.mrf.mxu0
      %7087 = vmatprep.mubr.f32.mxu0 0.0
      %v7088 = vand.u32 %v5983, 4294901760
      %7089 = vmatmul.mubr.f32.gmra.mxu0 %v7088
      %v7090 = vpop.f32.mrf.mxu0
      %v7091 = vadd.f32 %v6413, %v7090
      %v7092 = vpop.f32.mrf.mxu0
      %7093 = vmatprep.mubr.f32.mxu0 0.0
      %v7094 = vand.u32 %v5986, 4294901760
      %7095 = vmatmul.mubr.f32.gmra.mxu0 %v7094
      %v7096 = vpop.f32.mrf.mxu0
      %v7097 = vadd.f32 %v6423, %v7096
      %v7098 = vpop.f32.mrf.mxu0
      %7099 = vmatprep.mubr.f32.mxu0 0.0
      %v7100 = vand.u32 %v5989, 4294901760
      %7101 = vmatmul.mubr.f32.gmra.mxu0 %v7100
      %v7102 = vpop.f32.mrf.mxu0
      %v7103 = vadd.f32 %v6433, %v7102
      %v7104 = vpop.f32.mrf.mxu0
      %7105 = vmatprep.mubr.f32.mxu0 0.0
      %v7106 = vand.u32 %v5992, 4294901760
      %7107 = vmatmul.mubr.f32.gmra.mxu0 %v7106
      %v7108 = vpop.f32.mrf.mxu0
      %v7109 = vadd.f32 %v6443, %v7108
      %v7110 = vpop.f32.mrf.mxu0
      %7111 = vmatprep.mubr.f32.mxu0 0.0
      %v7112 = vand.u32 %v5995, 4294901760
      %7113 = vmatmul.mubr.f32.gmra.mxu0 %v7112
      %v7114 = vpop.f32.mrf.mxu0
      %v7115 = vadd.f32 %v6453, %v7114
      %v7116 = vpop.f32.mrf.mxu0
      %7117 = vmatprep.mubr.f32.mxu0 0.0
      %v7118 = vand.u32 %v5998, 4294901760
      %7119 = vmatmul.mubr.f32.gmra.mxu0 %v7118
      %v7120 = vpop.f32.mrf.mxu0
      %v7121 = vadd.f32 %v6463, %v7120
      %v7122 = vpop.f32.mrf.mxu0
      %7123 = vmatprep.mubr.f32.mxu0 0.0
      %v7124 = vand.u32 %v6001, 4294901760
      %7125 = vmatmul.mubr.f32.gmra.mxu0 %v7124
      %v7126 = vpop.f32.mrf.mxu0
      %v7127 = vadd.f32 %v6473, %v7126
      %v7128 = vpop.f32.mrf.mxu0
      %7129 = vmatprep.mubr.f32.mxu0 0.0
      %v7130 = vand.u32 %v6004, 4294901760
      %7131 = vmatmul.mubr.f32.gmra.mxu0 %v7130
      %v7132 = vpop.f32.mrf.mxu0
      %v7133 = vadd.f32 %v6483, %v7132
      %v7134 = vpop.f32.mrf.mxu0
      %7135 = vmatprep.mubr.f32.mxu0 0.0
      %v7136 = vand.u32 %v6007, 4294901760
      %7137 = vmatmul.mubr.f32.gmra.mxu0 %v7136
      %v7138 = vpop.f32.mrf.mxu0
      %v7139 = vadd.f32 %v6493, %v7138
      %v7140 = vpop.f32.mrf.mxu0
      %7141 = vmatprep.mubr.f32.mxu0 0.0
      %v7142 = vand.u32 %v6010, 4294901760
      %7143 = vmatmul.mubr.f32.gmra.mxu0 %v7142
      %v7144 = vpop.f32.mrf.mxu0
      %v7145 = vadd.f32 %v6503, %v7144
      %v7146 = vpop.f32.mrf.mxu0
      %7147 = vmatprep.mubr.f32.mxu0 0.0
      %v7148 = vand.u32 %v6013, 4294901760
      %7149 = vmatmul.mubr.f32.gmra.mxu0 %v7148
      %v7150 = vpop.f32.mrf.mxu0
      %v7151 = vadd.f32 %v6513, %v7150
      %v7152 = vpop.f32.mrf.mxu0
      %7153 = vmatprep.mubr.f32.mxu0 0.0
      %v7154 = vand.u32 %v6016, 4294901760
      %7155 = vmatmul.mubr.f32.gmra.mxu0 %v7154
      %v7156 = vpop.f32.mrf.mxu0
      %v7157 = vadd.f32 %v6523, %v7156
      %v7158 = vpop.f32.mrf.mxu0
      %7159 = vmatprep.mubr.f32.mxu0 0.0
      %v7160 = vand.u32 %v6019, 4294901760
      %7161 = vmatmul.mubr.f32.gmra.mxu0 %v7160
      %v7162 = vpop.f32.mrf.mxu0
      %v7163 = vadd.f32 %v6533, %v7162
      %v7164 = vpop.f32.mrf.mxu0
      %7165 = vmatprep.mubr.f32.mxu0 0.0
      %v7166 = vand.u32 %v6022, 4294901760
      %7167 = vmatmul.mubr.f32.gmra.mxu0 %v7166
      %v7168 = vpop.f32.mrf.mxu0
      %v7169 = vadd.f32 %v6543, %v7168
      %v7170 = vpop.f32.mrf.mxu0
      %7171 = vmatprep.mubr.f32.mxu0 0.0
      %v7172 = vand.u32 %v6025, 4294901760
      %7173 = vmatmul.mubr.f32.gmra.mxu0 %v7172
      %v7174 = vpop.f32.mrf.mxu0
      %v7175 = vadd.f32 %v6553, %v7174
      %v7176 = vpop.f32.mrf.mxu0
      %7177 = vmatprep.mubr.f32.mxu0 0.0
      %v7178 = vand.u32 %v6028, 4294901760
      %7179 = vmatmul.mubr.f32.gmra.mxu0 %v7178
      %v7180 = vpop.f32.mrf.mxu0
      %v7181 = vadd.f32 %v6563, %v7180
      %v7182 = vpop.f32.mrf.mxu0
      %7183 = vmatprep.mubr.f32.mxu0 0.0
      %v7184 = vand.u32 %v6031, 4294901760
      %7185 = vmatmul.mubr.f32.gmra.mxu0 %v7184
      %v7186 = vpop.f32.mrf.mxu0
      %v7187 = vadd.f32 %v6573, %v7186
      %v7188 = vpop.f32.mrf.mxu0
      %7189 = vmatprep.mubr.f32.mxu0 0.0
      %v7190 = vand.u32 %v6034, 4294901760
      %7191 = vmatmul.mubr.f32.gmra.mxu0 %v7190
      %v7192 = vpop.f32.mrf.mxu0
      %v7193 = vadd.f32 %v6583, %v7192
      %v7194 = vpop.f32.mrf.mxu0
      %7195 = vmatprep.mubr.f32.mxu0 0.0
      %v7196 = vand.u32 %v6037, 4294901760
      %7197 = vmatmul.mubr.f32.gmra.mxu0 %v7196
      %v7198 = vpop.f32.mrf.mxu0
      %v7199 = vadd.f32 %v6593, %v7198
      %v7200 = vpop.f32.mrf.mxu0
      %7201 = vmatprep.mubr.f32.mxu0 0.0
      %v7202 = vand.u32 %v6040, 4294901760
      %7203 = vmatmul.mubr.f32.gmra.mxu0 %v7202
      %v7204 = vpop.f32.mrf.mxu0
      %v7205 = vadd.f32 %v6603, %v7204
      %v7206 = vpop.f32.mrf.mxu0
      %7207 = vmatprep.mubr.f32.mxu0 0.0
      %v7208 = vand.u32 %v6043, 4294901760
      %7209 = vmatmul.mubr.f32.gmra.mxu0 %v7208
      %v7210 = vpop.f32.mrf.mxu0
      %v7211 = vadd.f32 %v6613, %v7210
      %v7212 = vpop.f32.mrf.mxu0
      %7213 = vmatprep.mubr.f32.mxu0 0.0
      %v7214 = vand.u32 %v6046, 4294901760
      %7215 = vmatmul.mubr.f32.gmra.mxu0 %v7214
      %v7216 = vpop.f32.mrf.mxu0
      %v7217 = vadd.f32 %v6623, %v7216
      %v7218 = vpop.f32.mrf.mxu0
      %7219 = vmatprep.mubr.f32.mxu0 0.0
      %v7220 = vand.u32 %v6049, 4294901760
      %7221 = vmatmul.mubr.f32.gmra.mxu0 %v7220
      %v7222 = vpop.f32.mrf.mxu0
      %v7223 = vadd.f32 %v6633, %v7222
      %v7224 = vpop.f32.mrf.mxu0
      %7225 = vmatprep.mubr.f32.mxu0 0.0
      %v7226 = vand.u32 %v6052, 4294901760
      %7227 = vmatmul.mubr.f32.gmra.mxu0 %v7226
      %v7228 = vpop.f32.mrf.mxu0
      %v7229 = vadd.f32 %v6643, %v7228
      %v7230 = vpop.f32.mrf.mxu0
      %7231 = vmatprep.mubr.f32.mxu0 0.0
      %v7232 = vand.u32 %v6055, 4294901760
      %7233 = vmatmul.mubr.f32.gmra.mxu0 %v7232
      %v7234 = vpop.f32.mrf.mxu0
      %v7235 = vadd.f32 %v6653, %v7234
      %v7236 = vpop.f32.mrf.mxu0
      %7237 = vmatprep.mubr.f32.mxu0 0.0
      %v7238 = vand.u32 %v6058, 4294901760
      %7239 = vmatmul.mubr.f32.gmra.mxu0 %v7238
      %v7240 = vpop.f32.mrf.mxu0
      %v7241 = vadd.f32 %v6663, %v7240
      %v7242 = vpop.f32.mrf.mxu0
      %7243 = vmatprep.mubr.f32.mxu0 0.0
      %v7244 = vand.u32 %v6061, 4294901760
      %7245 = vmatmul.mubr.f32.gmra.mxu0 %v7244
      %v7246 = vpop.f32.mrf.mxu0
      %v7247 = vadd.f32 %v6673, %v7246
      %v7248 = vpop.f32.mrf.mxu0
      %7249 = vmatprep.mubr.f32.mxu0 0.0
      %v7250 = vand.u32 %v6064, 4294901760
      %7251 = vmatmul.mubr.f32.gmra.mxu0 %v7250
      %v7252 = vpop.f32.mrf.mxu0
      %v7253 = vadd.f32 %v6683, %v7252
      %v7254 = vpop.f32.mrf.mxu0
      %7255 = vmatprep.mubr.f32.mxu0 0.0
      %v7256 = vand.u32 %v6067, 4294901760
      %7257 = vmatmul.mubr.f32.gmra.mxu0 %v7256
      %v7258 = vpop.f32.mrf.mxu0
      %v7259 = vadd.f32 %v6693, %v7258
      %v7260 = vpop.f32.mrf.mxu0
      %7261 = vmatprep.mubr.f32.mxu0 0.0
      %v7262 = vand.u32 %v6070, 4294901760
      %7263 = vmatmul.mubr.f32.gmra.mxu0 %v7262
      %v7264 = vpop.f32.mrf.mxu0
      %v7265 = vadd.f32 %v6703, %v7264
      %v7266 = vpop.f32.mrf.mxu0
      %7267 = vmatprep.mubr.f32.mxu0 0.0
      %v7268 = vand.u32 %v6073, 4294901760
      %7269 = vmatmul.mubr.f32.gmra.mxu0 %v7268
      %v7270 = vpop.f32.mrf.mxu0
      %v7271 = vadd.f32 %v6713, %v7270
      %v7272 = vpop.f32.mrf.mxu0
      %7273 = vmatprep.mubr.f32.mxu0 0.0
      %v7274 = vand.u32 %v6076, 4294901760
      %7275 = vmatmul.mubr.f32.gmra.mxu0 %v7274
      %v7276 = vpop.f32.mrf.mxu0
      %v7277 = vadd.f32 %v6723, %v7276
      %v7278 = vpop.f32.mrf.mxu0
      %7279 = vmatprep.mubr.f32.mxu0 0.0
      %v7280 = vand.u32 %v6079, 4294901760
      %7281 = vmatmul.mubr.f32.gmra.mxu0 %v7280
      %v7282 = vpop.f32.mrf.mxu0
      %v7283 = vadd.f32 %v6733, %v7282
      %v7284 = vpop.f32.mrf.mxu0
      %7285 = vmatprep.mubr.f32.mxu0 0.0
      %v7286 = vand.u32 %v6082, 4294901760
      %7287 = vmatmul.mubr.f32.gmra.mxu0 %v7286
      %v7288 = vpop.f32.mrf.mxu0
      %v7289 = vadd.f32 %v6743, %v7288
      %v7290 = vpop.f32.mrf.mxu0
      %7291 = vmatprep.mubr.f32.mxu0 0.0
      %v7292 = vand.u32 %v6085, 4294901760
      %7293 = vmatmul.mubr.f32.gmra.mxu0 %v7292
      %v7294 = vpop.f32.mrf.mxu0
      %v7295 = vadd.f32 %v6753, %v7294
      %v7296 = vpop.f32.mrf.mxu0
      %7297 = vmatprep.mubr.f32.mxu0 0.0
      %v7298 = vand.u32 %v6088, 4294901760
      %7299 = vmatmul.mubr.f32.gmra.mxu0 %v7298
      %v7300 = vpop.f32.mrf.mxu0
      %v7301 = vadd.f32 %v6763, %v7300
      %v7302 = vpop.f32.mrf.mxu0
      %7303 = vmatprep.mubr.f32.mxu0 0.0
      %v7304 = vand.u32 %v6091, 4294901760
      %7305 = vmatmul.mubr.f32.gmra.mxu0 %v7304
      %v7306 = vpop.f32.mrf.mxu0
      %v7307 = vadd.f32 %v6773, %v7306
      %v7308 = vpop.f32.mrf.mxu0
      %7309 = vmatprep.mubr.f32.mxu0 0.0
      %v7310 = vand.u32 %v6094, 4294901760
      %7311 = vmatmul.mubr.f32.gmra.mxu0 %v7310
      %v7312 = vpop.f32.mrf.mxu0
      %v7313 = vadd.f32 %v6783, %v7312
      %v7314 = vpop.f32.mrf.mxu0
      %7315 = vmatprep.mubr.f32.mxu0 0.0
      %v7316 = vand.u32 %v6097, 4294901760
      %7317 = vmatmul.mubr.f32.gmra.mxu0 %v7316
      %v7318 = vpop.f32.mrf.mxu0
      %v7319 = vadd.f32 %v6793, %v7318
      %v7320 = vpop.f32.mrf.mxu0
      %7321 = vmatprep.mubr.f32.mxu0 0.0
      %v7322 = vand.u32 %v6100, 4294901760
      %7323 = vmatmul.mubr.f32.gmra.mxu0 %v7322
      %v7324 = vpop.f32.mrf.mxu0
      %v7325 = vadd.f32 %v6803, %v7324
      %v7326 = vpop.f32.mrf.mxu0
      %7327 = vmatprep.mubr.f32.mxu0 0.0
      %v7328 = vand.u32 %v6103, 4294901760
      %7329 = vmatmul.mubr.f32.gmra.mxu0 %v7328
      %v7330 = vpop.f32.mrf.mxu0
      %v7331 = vadd.f32 %v6813, %v7330
      %v7332 = vpop.f32.mrf.mxu0
      %7333 = vmatprep.mubr.f32.mxu0 0.0
      %v7334 = vand.u32 %v6106, 4294901760
      %7335 = vmatmul.mubr.f32.gmra.mxu0 %v7334
      %v7336 = vpop.f32.mrf.mxu0
      %v7337 = vadd.f32 %v6823, %v7336
      %v7338 = vpop.f32.mrf.mxu0
      %7339 = vdwg.mxu0
      %7340 = vmatprep.subr.mxu0 0.0
      %7341 = vmatpush1.msra.mxu0 0.0
      %7342 = vmatprep.subr.mxu0 0.0
      %7343 = vmatpush1.msra.mxu0 0.0
      %7344 = vmatprep.subr.mxu0 0.0
      %7345 = vmatpush1.msra.mxu0 0.0
      %7346 = vmatprep.subr.mxu0 0.0
      %v7347 = vand.u32 %v5915, 4294901760
      %v7348 = vsub.f32 %v5915, %v7347
      %7349 = vmatpush1.msra.mxu0 %v7348
      %7350 = vmatprep.subr.mxu0 0.0
      %v7351 = vand.u32 %v5914, 4294901760
      %v7352 = vsub.f32 %v5914, %v7351
      %7353 = vmatpush1.msra.mxu0 %v7352
      %7354 = vmatprep.subr.mxu0 0.0
      %v7355 = vand.u32 %v5913, 4294901760
      %v7356 = vsub.f32 %v5913, %v7355
      %7357 = vmatpush1.msra.mxu0 %v7356
      %7358 = vmatprep.subr.mxu0 0.0
      %v7359 = vand.u32 %v5912, 4294901760
      %v7360 = vsub.f32 %v5912, %v7359
      %7361 = vmatpush1.msra.mxu0 %v7360
      %7362 = vmatprep.subr.mxu0 0.0
      %v7363 = vand.u32 %v5911, 4294901760
      %v7364 = vsub.f32 %v5911, %v7363
      %7365 = vmatpush1.msra.mxu0 %v7364
      %7366 = vmatprep.subr.mxu0 0.0
      %v7367 = vand.u32 %v5910, 4294901760
      %v7368 = vsub.f32 %v5910, %v7367
      %7369 = vmatpush1.msra.mxu0 %v7368
      %7370 = vmatprep.subr.mxu0 0.0
      %v7371 = vand.u32 %v5909, 4294901760
      %v7372 = vsub.f32 %v5909, %v7371
      %7373 = vmatpush1.msra.mxu0 %v7372
      %7374 = vmatprep.subr.mxu0 0.0
      %v7375 = vand.u32 %v5908, 4294901760
      %v7376 = vsub.f32 %v5908, %v7375
      %7377 = vmatpush1.msra.mxu0 %v7376
      %7378 = vmatprep.subr.mxu0 0.0
      %v7379 = vand.u32 %v5907, 4294901760
      %v7380 = vsub.f32 %v5907, %v7379
      %7381 = vmatpush1.msra.mxu0 %v7380
      %7382 = vmatprep.subr.mxu0 0.0
      %v7383 = vand.u32 %v5906, 4294901760
      %v7384 = vsub.f32 %v5906, %v7383
      %7385 = vmatpush1.msra.mxu0 %v7384
      %7386 = vmatprep.subr.mxu0 0.0
      %v7387 = vand.u32 %v5905, 4294901760
      %v7388 = vsub.f32 %v5905, %v7387
      %7389 = vmatpush1.msra.mxu0 %v7388
      %7390 = vmatprep.subr.mxu0 0.0
      %v7391 = vand.u32 %v5904, 4294901760
      %v7392 = vsub.f32 %v5904, %v7391
      %7393 = vmatpush1.msra.mxu0 %v7392
      %7394 = vmatprep.subr.mxu0 0.0
      %v7395 = vand.u32 %v5903, 4294901760
      %v7396 = vsub.f32 %v5903, %v7395
      %7397 = vmatpush1.msra.mxu0 %v7396
      %7398 = vmatprep.subr.mxu0 0.0
      %7399 = vmatpush2.msra.mxu0 0.0
      %7400 = vmatprep.subr.mxu0 0.0
      %7401 = vmatpush2.msra.mxu0 0.0
      %7402 = vmatprep.subr.mxu0 0.0
      %7403 = vmatpush2.msra.mxu0 0.0
      %7404 = vmatprep.subr.mxu0 0.0
      %7405 = vmatpush2.msra.mxu0 0.0
      %7406 = vmatprep.subr.mxu0 0.0
      %7407 = vmatpush2.msra.mxu0 0.0
      %7408 = vmatprep.subr.mxu0 0.0
      %7409 = vmatpush2.msra.mxu0 0.0
      %7410 = vmatprep.subr.mxu0 0.0
      %7411 = vmatpush2.msra.mxu0 0.0
      %7412 = vmatprep.subr.mxu0 0.0
      %7413 = vmatpush2.msra.mxu0 0.0
      %7414 = vmatprep.subr.mxu0 0.0
      %7415 = vmatpush2.msra.mxu0 0.0
      %7416 = vmatprep.subr.mxu0 0.0
      %7417 = vmatpush2.msra.mxu0 0.0
      %7418 = vmatprep.subr.mxu0 0.0
      %7419 = vmatpush2.msra.mxu0 0.0
      %7420 = vmatprep.subr.mxu0 0.0
      %7421 = vmatpush2.msra.mxu0 0.0
      %7422 = vmatprep.subr.mxu0 0.0
      %7423 = vmatpush2.msra.mxu0 0.0
      %7424 = vmatprep.subr.mxu0 0.0
      %7425 = vmatpush2.msra.mxu0 0.0
      %7426 = vmatprep.subr.mxu0 0.0
      %7427 = vmatpush2.msra.mxu0 0.0
      %7428 = vmatprep.subr.mxu0 0.0
      %7429 = vmatpush2.msra.mxu0 0.0
      %7430 = vmatprep.mubr.f32.mxu0 0.0
      %v7431 = vand.u32 %v5917, 4294901760
      %v7432 = vsub.f32 %v5917, %v7431
      %7433 = vmatmul.mubr.f32.gmra.mxu0 %v7432
      %v7434 = vpop.f32.mrf.mxu0
      %v7435 = vadd.f32 %v6959, %v7434
      %v7436 = vpop.f32.mrf.mxu0
      %7437 = vmatprep.mubr.f32.mxu0 0.0
      %v7438 = vand.u32 %v5920, 4294901760
      %v7439 = vsub.f32 %v5920, %v7438
      %7440 = vmatmul.mubr.f32.gmra.mxu0 %v7439
      %v7441 = vpop.f32.mrf.mxu0
      %v7442 = vadd.f32 %v6965, %v7441
      %v7443 = vpop.f32.mrf.mxu0
      %7444 = vmatprep.mubr.f32.mxu0 0.0
      %v7445 = vand.u32 %v5923, 4294901760
      %v7446 = vsub.f32 %v5923, %v7445
      %7447 = vmatmul.mubr.f32.gmra.mxu0 %v7446
      %v7448 = vpop.f32.mrf.mxu0
      %v7449 = vadd.f32 %v6971, %v7448
      %v7450 = vpop.f32.mrf.mxu0
      %7451 = vmatprep.mubr.f32.mxu0 0.0
      %v7452 = vand.u32 %v5926, 4294901760
      %v7453 = vsub.f32 %v5926, %v7452
      %7454 = vmatmul.mubr.f32.gmra.mxu0 %v7453
      %v7455 = vpop.f32.mrf.mxu0
      %v7456 = vadd.f32 %v6977, %v7455
      %v7457 = vpop.f32.mrf.mxu0
      %7458 = vmatprep.mubr.f32.mxu0 0.0
      %v7459 = vand.u32 %v5929, 4294901760
      %v7460 = vsub.f32 %v5929, %v7459
      %7461 = vmatmul.mubr.f32.gmra.mxu0 %v7460
      %v7462 = vpop.f32.mrf.mxu0
      %v7463 = vadd.f32 %v6983, %v7462
      %v7464 = vpop.f32.mrf.mxu0
      %7465 = vmatprep.mubr.f32.mxu0 0.0
      %v7466 = vand.u32 %v5932, 4294901760
      %v7467 = vsub.f32 %v5932, %v7466
      %7468 = vmatmul.mubr.f32.gmra.mxu0 %v7467
      %v7469 = vpop.f32.mrf.mxu0
      %v7470 = vadd.f32 %v6989, %v7469
      %v7471 = vpop.f32.mrf.mxu0
      %7472 = vmatprep.mubr.f32.mxu0 0.0
      %v7473 = vand.u32 %v5935, 4294901760
      %v7474 = vsub.f32 %v5935, %v7473
      %7475 = vmatmul.mubr.f32.gmra.mxu0 %v7474
      %v7476 = vpop.f32.mrf.mxu0
      %v7477 = vadd.f32 %v6995, %v7476
      %v7478 = vpop.f32.mrf.mxu0
      %7479 = vmatprep.mubr.f32.mxu0 0.0
      %v7480 = vand.u32 %v5938, 4294901760
      %v7481 = vsub.f32 %v5938, %v7480
      %7482 = vmatmul.mubr.f32.gmra.mxu0 %v7481
      %v7483 = vpop.f32.mrf.mxu0
      %v7484 = vadd.f32 %v7001, %v7483
      %v7485 = vpop.f32.mrf.mxu0
      %7486 = vmatprep.mubr.f32.mxu0 0.0
      %v7487 = vand.u32 %v5941, 4294901760
      %v7488 = vsub.f32 %v5941, %v7487
      %7489 = vmatmul.mubr.f32.gmra.mxu0 %v7488
      %v7490 = vpop.f32.mrf.mxu0
      %v7491 = vadd.f32 %v7007, %v7490
      %v7492 = vpop.f32.mrf.mxu0
      %7493 = vmatprep.mubr.f32.mxu0 0.0
      %v7494 = vand.u32 %v5944, 4294901760
      %v7495 = vsub.f32 %v5944, %v7494
      %7496 = vmatmul.mubr.f32.gmra.mxu0 %v7495
      %v7497 = vpop.f32.mrf.mxu0
      %v7498 = vadd.f32 %v7013, %v7497
      %v7499 = vpop.f32.mrf.mxu0
      %7500 = vmatprep.mubr.f32.mxu0 0.0
      %v7501 = vand.u32 %v5947, 4294901760
      %v7502 = vsub.f32 %v5947, %v7501
      %7503 = vmatmul.mubr.f32.gmra.mxu0 %v7502
      %v7504 = vpop.f32.mrf.mxu0
      %v7505 = vadd.f32 %v7019, %v7504
      %v7506 = vpop.f32.mrf.mxu0
      %7507 = vmatprep.mubr.f32.mxu0 0.0
      %v7508 = vand.u32 %v5950, 4294901760
      %v7509 = vsub.f32 %v5950, %v7508
      %7510 = vmatmul.mubr.f32.gmra.mxu0 %v7509
      %v7511 = vpop.f32.mrf.mxu0
      %v7512 = vadd.f32 %v7025, %v7511
      %v7513 = vpop.f32.mrf.mxu0
      %7514 = vmatprep.mubr.f32.mxu0 0.0
      %v7515 = vand.u32 %v5953, 4294901760
      %v7516 = vsub.f32 %v5953, %v7515
      %7517 = vmatmul.mubr.f32.gmra.mxu0 %v7516
      %v7518 = vpop.f32.mrf.mxu0
      %v7519 = vadd.f32 %v7031, %v7518
      %v7520 = vpop.f32.mrf.mxu0
      %7521 = vmatprep.mubr.f32.mxu0 0.0
      %v7522 = vand.u32 %v5956, 4294901760
      %v7523 = vsub.f32 %v5956, %v7522
      %7524 = vmatmul.mubr.f32.gmra.mxu0 %v7523
      %v7525 = vpop.f32.mrf.mxu0
      %v7526 = vadd.f32 %v7037, %v7525
      %v7527 = vpop.f32.mrf.mxu0
      %7528 = vmatprep.mubr.f32.mxu0 0.0
      %v7529 = vand.u32 %v5959, 4294901760
      %v7530 = vsub.f32 %v5959, %v7529
      %7531 = vmatmul.mubr.f32.gmra.mxu0 %v7530
      %v7532 = vpop.f32.mrf.mxu0
      %v7533 = vadd.f32 %v7043, %v7532
      %v7534 = vpop.f32.mrf.mxu0
      %7535 = vmatprep.mubr.f32.mxu0 0.0
      %v7536 = vand.u32 %v5962, 4294901760
      %v7537 = vsub.f32 %v5962, %v7536
      %7538 = vmatmul.mubr.f32.gmra.mxu0 %v7537
      %v7539 = vpop.f32.mrf.mxu0
      %v7540 = vadd.f32 %v7049, %v7539
      %v7541 = vpop.f32.mrf.mxu0
      %7542 = vmatprep.mubr.f32.mxu0 0.0
      %v7543 = vand.u32 %v5965, 4294901760
      %v7544 = vsub.f32 %v5965, %v7543
      %7545 = vmatmul.mubr.f32.gmra.mxu0 %v7544
      %v7546 = vpop.f32.mrf.mxu0
      %v7547 = vadd.f32 %v7055, %v7546
      %v7548 = vpop.f32.mrf.mxu0
      %7549 = vmatprep.mubr.f32.mxu0 0.0
      %v7550 = vand.u32 %v5968, 4294901760
      %v7551 = vsub.f32 %v5968, %v7550
      %7552 = vmatmul.mubr.f32.gmra.mxu0 %v7551
      %v7553 = vpop.f32.mrf.mxu0
      %v7554 = vadd.f32 %v7061, %v7553
      %v7555 = vpop.f32.mrf.mxu0
      %7556 = vmatprep.mubr.f32.mxu0 0.0
      %v7557 = vand.u32 %v5971, 4294901760
      %v7558 = vsub.f32 %v5971, %v7557
      %7559 = vmatmul.mubr.f32.gmra.mxu0 %v7558
      %v7560 = vpop.f32.mrf.mxu0
      %v7561 = vadd.f32 %v7067, %v7560
      %v7562 = vpop.f32.mrf.mxu0
      %7563 = vmatprep.mubr.f32.mxu0 0.0
      %v7564 = vand.u32 %v5974, 4294901760
      %v7565 = vsub.f32 %v5974, %v7564
      %7566 = vmatmul.mubr.f32.gmra.mxu0 %v7565
      %v7567 = vpop.f32.mrf.mxu0
      %v7568 = vadd.f32 %v7073, %v7567
      %v7569 = vpop.f32.mrf.mxu0
      %7570 = vmatprep.mubr.f32.mxu0 0.0
      %v7571 = vand.u32 %v5977, 4294901760
      %v7572 = vsub.f32 %v5977, %v7571
      %7573 = vmatmul.mubr.f32.gmra.mxu0 %v7572
      %v7574 = vpop.f32.mrf.mxu0
      %v7575 = vadd.f32 %v7079, %v7574
      %v7576 = vpop.f32.mrf.mxu0
      %7577 = vmatprep.mubr.f32.mxu0 0.0
      %v7578 = vand.u32 %v5980, 4294901760
      %v7579 = vsub.f32 %v5980, %v7578
      %7580 = vmatmul.mubr.f32.gmra.mxu0 %v7579
      %v7581 = vpop.f32.mrf.mxu0
      %v7582 = vadd.f32 %v7085, %v7581
      %v7583 = vpop.f32.mrf.mxu0
      %7584 = vmatprep.mubr.f32.mxu0 0.0
      %v7585 = vand.u32 %v5983, 4294901760
      %v7586 = vsub.f32 %v5983, %v7585
      %7587 = vmatmul.mubr.f32.gmra.mxu0 %v7586
      %v7588 = vpop.f32.mrf.mxu0
      %v7589 = vadd.f32 %v7091, %v7588
      %v7590 = vpop.f32.mrf.mxu0
      %7591 = vmatprep.mubr.f32.mxu0 0.0
      %v7592 = vand.u32 %v5986, 4294901760
      %v7593 = vsub.f32 %v5986, %v7592
      %7594 = vmatmul.mubr.f32.gmra.mxu0 %v7593
      %v7595 = vpop.f32.mrf.mxu0
      %v7596 = vadd.f32 %v7097, %v7595
      %v7597 = vpop.f32.mrf.mxu0
      %7598 = vmatprep.mubr.f32.mxu0 0.0
      %v7599 = vand.u32 %v5989, 4294901760
      %v7600 = vsub.f32 %v5989, %v7599
      %7601 = vmatmul.mubr.f32.gmra.mxu0 %v7600
      %v7602 = vpop.f32.mrf.mxu0
      %v7603 = vadd.f32 %v7103, %v7602
      %v7604 = vpop.f32.mrf.mxu0
      %7605 = vmatprep.mubr.f32.mxu0 0.0
      %v7606 = vand.u32 %v5992, 4294901760
      %v7607 = vsub.f32 %v5992, %v7606
      %7608 = vmatmul.mubr.f32.gmra.mxu0 %v7607
      %v7609 = vpop.f32.mrf.mxu0
      %v7610 = vadd.f32 %v7109, %v7609
      %v7611 = vpop.f32.mrf.mxu0
      %7612 = vmatprep.mubr.f32.mxu0 0.0
      %v7613 = vand.u32 %v5995, 4294901760
      %v7614 = vsub.f32 %v5995, %v7613
      %7615 = vmatmul.mubr.f32.gmra.mxu0 %v7614
      %v7616 = vpop.f32.mrf.mxu0
      %v7617 = vadd.f32 %v7115, %v7616
      %v7618 = vpop.f32.mrf.mxu0
      %7619 = vmatprep.mubr.f32.mxu0 0.0
      %v7620 = vand.u32 %v5998, 4294901760
      %v7621 = vsub.f32 %v5998, %v7620
      %7622 = vmatmul.mubr.f32.gmra.mxu0 %v7621
      %v7623 = vpop.f32.mrf.mxu0
      %v7624 = vadd.f32 %v7121, %v7623
      %v7625 = vpop.f32.mrf.mxu0
      %7626 = vmatprep.mubr.f32.mxu0 0.0
      %v7627 = vand.u32 %v6001, 4294901760
      %v7628 = vsub.f32 %v6001, %v7627
      %7629 = vmatmul.mubr.f32.gmra.mxu0 %v7628
      %v7630 = vpop.f32.mrf.mxu0
      %v7631 = vadd.f32 %v7127, %v7630
      %v7632 = vpop.f32.mrf.mxu0
      %7633 = vmatprep.mubr.f32.mxu0 0.0
      %v7634 = vand.u32 %v6004, 4294901760
      %v7635 = vsub.f32 %v6004, %v7634
      %7636 = vmatmul.mubr.f32.gmra.mxu0 %v7635
      %v7637 = vpop.f32.mrf.mxu0
      %v7638 = vadd.f32 %v7133, %v7637
      %v7639 = vpop.f32.mrf.mxu0
      %7640 = vmatprep.mubr.f32.mxu0 0.0
      %v7641 = vand.u32 %v6007, 4294901760
      %v7642 = vsub.f32 %v6007, %v7641
      %7643 = vmatmul.mubr.f32.gmra.mxu0 %v7642
      %v7644 = vpop.f32.mrf.mxu0
      %v7645 = vadd.f32 %v7139, %v7644
      %v7646 = vpop.f32.mrf.mxu0
      %7647 = vmatprep.mubr.f32.mxu0 0.0
      %v7648 = vand.u32 %v6010, 4294901760
      %v7649 = vsub.f32 %v6010, %v7648
      %7650 = vmatmul.mubr.f32.gmra.mxu0 %v7649
      %v7651 = vpop.f32.mrf.mxu0
      %v7652 = vadd.f32 %v7145, %v7651
      %v7653 = vpop.f32.mrf.mxu0
      %7654 = vmatprep.mubr.f32.mxu0 0.0
      %v7655 = vand.u32 %v6013, 4294901760
      %v7656 = vsub.f32 %v6013, %v7655
      %7657 = vmatmul.mubr.f32.gmra.mxu0 %v7656
      %v7658 = vpop.f32.mrf.mxu0
      %v7659 = vadd.f32 %v7151, %v7658
      %v7660 = vpop.f32.mrf.mxu0
      %7661 = vmatprep.mubr.f32.mxu0 0.0
      %v7662 = vand.u32 %v6016, 4294901760
      %v7663 = vsub.f32 %v6016, %v7662
      %7664 = vmatmul.mubr.f32.gmra.mxu0 %v7663
      %v7665 = vpop.f32.mrf.mxu0
      %v7666 = vadd.f32 %v7157, %v7665
      %v7667 = vpop.f32.mrf.mxu0
      %7668 = vmatprep.mubr.f32.mxu0 0.0
      %v7669 = vand.u32 %v6019, 4294901760
      %v7670 = vsub.f32 %v6019, %v7669
      %7671 = vmatmul.mubr.f32.gmra.mxu0 %v7670
      %v7672 = vpop.f32.mrf.mxu0
      %v7673 = vadd.f32 %v7163, %v7672
      %v7674 = vpop.f32.mrf.mxu0
      %7675 = vmatprep.mubr.f32.mxu0 0.0
      %v7676 = vand.u32 %v6022, 4294901760
      %v7677 = vsub.f32 %v6022, %v7676
      %7678 = vmatmul.mubr.f32.gmra.mxu0 %v7677
      %v7679 = vpop.f32.mrf.mxu0
      %v7680 = vadd.f32 %v7169, %v7679
      %v7681 = vpop.f32.mrf.mxu0
      %7682 = vmatprep.mubr.f32.mxu0 0.0
      %v7683 = vand.u32 %v6025, 4294901760
      %v7684 = vsub.f32 %v6025, %v7683
      %7685 = vmatmul.mubr.f32.gmra.mxu0 %v7684
      %v7686 = vpop.f32.mrf.mxu0
      %v7687 = vadd.f32 %v7175, %v7686
      %v7688 = vpop.f32.mrf.mxu0
      %7689 = vmatprep.mubr.f32.mxu0 0.0
      %v7690 = vand.u32 %v6028, 4294901760
      %v7691 = vsub.f32 %v6028, %v7690
      %7692 = vmatmul.mubr.f32.gmra.mxu0 %v7691
      %v7693 = vpop.f32.mrf.mxu0
      %v7694 = vadd.f32 %v7181, %v7693
      %v7695 = vpop.f32.mrf.mxu0
      %7696 = vmatprep.mubr.f32.mxu0 0.0
      %v7697 = vand.u32 %v6031, 4294901760
      %v7698 = vsub.f32 %v6031, %v7697
      %7699 = vmatmul.mubr.f32.gmra.mxu0 %v7698
      %v7700 = vpop.f32.mrf.mxu0
      %v7701 = vadd.f32 %v7187, %v7700
      %v7702 = vpop.f32.mrf.mxu0
      %7703 = vmatprep.mubr.f32.mxu0 0.0
      %v7704 = vand.u32 %v6034, 4294901760
      %v7705 = vsub.f32 %v6034, %v7704
      %7706 = vmatmul.mubr.f32.gmra.mxu0 %v7705
      %v7707 = vpop.f32.mrf.mxu0
      %v7708 = vadd.f32 %v7193, %v7707
      %v7709 = vpop.f32.mrf.mxu0
      %7710 = vmatprep.mubr.f32.mxu0 0.0
      %v7711 = vand.u32 %v6037, 4294901760
      %v7712 = vsub.f32 %v6037, %v7711
      %7713 = vmatmul.mubr.f32.gmra.mxu0 %v7712
      %v7714 = vpop.f32.mrf.mxu0
      %v7715 = vadd.f32 %v7199, %v7714
      %v7716 = vpop.f32.mrf.mxu0
      %7717 = vmatprep.mubr.f32.mxu0 0.0
      %v7718 = vand.u32 %v6040, 4294901760
      %v7719 = vsub.f32 %v6040, %v7718
      %7720 = vmatmul.mubr.f32.gmra.mxu0 %v7719
      %v7721 = vpop.f32.mrf.mxu0
      %v7722 = vadd.f32 %v7205, %v7721
      %v7723 = vpop.f32.mrf.mxu0
      %7724 = vmatprep.mubr.f32.mxu0 0.0
      %v7725 = vand.u32 %v6043, 4294901760
      %v7726 = vsub.f32 %v6043, %v7725
      %7727 = vmatmul.mubr.f32.gmra.mxu0 %v7726
      %v7728 = vpop.f32.mrf.mxu0
      %v7729 = vadd.f32 %v7211, %v7728
      %v7730 = vpop.f32.mrf.mxu0
      %7731 = vmatprep.mubr.f32.mxu0 0.0
      %v7732 = vand.u32 %v6046, 4294901760
      %v7733 = vsub.f32 %v6046, %v7732
      %7734 = vmatmul.mubr.f32.gmra.mxu0 %v7733
      %v7735 = vpop.f32.mrf.mxu0
      %v7736 = vadd.f32 %v7217, %v7735
      %v7737 = vpop.f32.mrf.mxu0
      %7738 = vmatprep.mubr.f32.mxu0 0.0
      %v7739 = vand.u32 %v6049, 4294901760
      %v7740 = vsub.f32 %v6049, %v7739
      %7741 = vmatmul.mubr.f32.gmra.mxu0 %v7740
      %v7742 = vpop.f32.mrf.mxu0
      %v7743 = vadd.f32 %v7223, %v7742
      %v7744 = vpop.f32.mrf.mxu0
      %7745 = vmatprep.mubr.f32.mxu0 0.0
      %v7746 = vand.u32 %v6052, 4294901760
      %v7747 = vsub.f32 %v6052, %v7746
      %7748 = vmatmul.mubr.f32.gmra.mxu0 %v7747
      %v7749 = vpop.f32.mrf.mxu0
      %v7750 = vadd.f32 %v7229, %v7749
      %v7751 = vpop.f32.mrf.mxu0
      %7752 = vmatprep.mubr.f32.mxu0 0.0
      %v7753 = vand.u32 %v6055, 4294901760
      %v7754 = vsub.f32 %v6055, %v7753
      %7755 = vmatmul.mubr.f32.gmra.mxu0 %v7754
      %v7756 = vpop.f32.mrf.mxu0
      %v7757 = vadd.f32 %v7235, %v7756
      %v7758 = vpop.f32.mrf.mxu0
      %7759 = vmatprep.mubr.f32.mxu0 0.0
      %v7760 = vand.u32 %v6058, 4294901760
      %v7761 = vsub.f32 %v6058, %v7760
      %7762 = vmatmul.mubr.f32.gmra.mxu0 %v7761
      %v7763 = vpop.f32.mrf.mxu0
      %v7764 = vadd.f32 %v7241, %v7763
      %v7765 = vpop.f32.mrf.mxu0
      %7766 = vmatprep.mubr.f32.mxu0 0.0
      %v7767 = vand.u32 %v6061, 4294901760
      %v7768 = vsub.f32 %v6061, %v7767
      %7769 = vmatmul.mubr.f32.gmra.mxu0 %v7768
      %v7770 = vpop.f32.mrf.mxu0
      %v7771 = vadd.f32 %v7247, %v7770
      %v7772 = vpop.f32.mrf.mxu0
      %7773 = vmatprep.mubr.f32.mxu0 0.0
      %v7774 = vand.u32 %v6064, 4294901760
      %v7775 = vsub.f32 %v6064, %v7774
      %7776 = vmatmul.mubr.f32.gmra.mxu0 %v7775
      %v7777 = vpop.f32.mrf.mxu0
      %v7778 = vadd.f32 %v7253, %v7777
      %v7779 = vpop.f32.mrf.mxu0
      %7780 = vmatprep.mubr.f32.mxu0 0.0
      %v7781 = vand.u32 %v6067, 4294901760
      %v7782 = vsub.f32 %v6067, %v7781
      %7783 = vmatmul.mubr.f32.gmra.mxu0 %v7782
      %v7784 = vpop.f32.mrf.mxu0
      %v7785 = vadd.f32 %v7259, %v7784
      %v7786 = vpop.f32.mrf.mxu0
      %7787 = vmatprep.mubr.f32.mxu0 0.0
      %v7788 = vand.u32 %v6070, 4294901760
      %v7789 = vsub.f32 %v6070, %v7788
      %7790 = vmatmul.mubr.f32.gmra.mxu0 %v7789
      %v7791 = vpop.f32.mrf.mxu0
      %v7792 = vadd.f32 %v7265, %v7791
      %v7793 = vpop.f32.mrf.mxu0
      %7794 = vmatprep.mubr.f32.mxu0 0.0
      %v7795 = vand.u32 %v6073, 4294901760
      %v7796 = vsub.f32 %v6073, %v7795
      %7797 = vmatmul.mubr.f32.gmra.mxu0 %v7796
      %v7798 = vpop.f32.mrf.mxu0
      %v7799 = vadd.f32 %v7271, %v7798
      %v7800 = vpop.f32.mrf.mxu0
      %7801 = vmatprep.mubr.f32.mxu0 0.0
      %v7802 = vand.u32 %v6076, 4294901760
      %v7803 = vsub.f32 %v6076, %v7802
      %7804 = vmatmul.mubr.f32.gmra.mxu0 %v7803
      %v7805 = vpop.f32.mrf.mxu0
      %v7806 = vadd.f32 %v7277, %v7805
      %v7807 = vpop.f32.mrf.mxu0
      %7808 = vmatprep.mubr.f32.mxu0 0.0
      %v7809 = vand.u32 %v6079, 4294901760
      %v7810 = vsub.f32 %v6079, %v7809
      %7811 = vmatmul.mubr.f32.gmra.mxu0 %v7810
      %v7812 = vpop.f32.mrf.mxu0
      %v7813 = vadd.f32 %v7283, %v7812
      %v7814 = vpop.f32.mrf.mxu0
      %7815 = vmatprep.mubr.f32.mxu0 0.0
      %v7816 = vand.u32 %v6082, 4294901760
      %v7817 = vsub.f32 %v6082, %v7816
      %7818 = vmatmul.mubr.f32.gmra.mxu0 %v7817
      %v7819 = vpop.f32.mrf.mxu0
      %v7820 = vadd.f32 %v7289, %v7819
      %v7821 = vpop.f32.mrf.mxu0
      %7822 = vmatprep.mubr.f32.mxu0 0.0
      %v7823 = vand.u32 %v6085, 4294901760
      %v7824 = vsub.f32 %v6085, %v7823
      %7825 = vmatmul.mubr.f32.gmra.mxu0 %v7824
      %v7826 = vpop.f32.mrf.mxu0
      %v7827 = vadd.f32 %v7295, %v7826
      %v7828 = vpop.f32.mrf.mxu0
      %7829 = vmatprep.mubr.f32.mxu0 0.0
      %v7830 = vand.u32 %v6088, 4294901760
      %v7831 = vsub.f32 %v6088, %v7830
      %7832 = vmatmul.mubr.f32.gmra.mxu0 %v7831
      %v7833 = vpop.f32.mrf.mxu0
      %v7834 = vadd.f32 %v7301, %v7833
      %v7835 = vpop.f32.mrf.mxu0
      %7836 = vmatprep.mubr.f32.mxu0 0.0
      %v7837 = vand.u32 %v6091, 4294901760
      %v7838 = vsub.f32 %v6091, %v7837
      %7839 = vmatmul.mubr.f32.gmra.mxu0 %v7838
      %v7840 = vpop.f32.mrf.mxu0
      %v7841 = vadd.f32 %v7307, %v7840
      %v7842 = vpop.f32.mrf.mxu0
      %7843 = vmatprep.mubr.f32.mxu0 0.0
      %v7844 = vand.u32 %v6094, 4294901760
      %v7845 = vsub.f32 %v6094, %v7844
      %7846 = vmatmul.mubr.f32.gmra.mxu0 %v7845
      %v7847 = vpop.f32.mrf.mxu0
      %v7848 = vadd.f32 %v7313, %v7847
      %v7849 = vpop.f32.mrf.mxu0
      %7850 = vmatprep.mubr.f32.mxu0 0.0
      %v7851 = vand.u32 %v6097, 4294901760
      %v7852 = vsub.f32 %v6097, %v7851
      %7853 = vmatmul.mubr.f32.gmra.mxu0 %v7852
      %v7854 = vpop.f32.mrf.mxu0
      %v7855 = vadd.f32 %v7319, %v7854
      %v7856 = vpop.f32.mrf.mxu0
      %7857 = vmatprep.mubr.f32.mxu0 0.0
      %v7858 = vand.u32 %v6100, 4294901760
      %v7859 = vsub.f32 %v6100, %v7858
      %7860 = vmatmul.mubr.f32.gmra.mxu0 %v7859
      %v7861 = vpop.f32.mrf.mxu0
      %v7862 = vadd.f32 %v7325, %v7861
      %v7863 = vpop.f32.mrf.mxu0
      %7864 = vmatprep.mubr.f32.mxu0 0.0
      %v7865 = vand.u32 %v6103, 4294901760
      %v7866 = vsub.f32 %v6103, %v7865
      %7867 = vmatmul.mubr.f32.gmra.mxu0 %v7866
      %v7868 = vpop.f32.mrf.mxu0
      %v7869 = vadd.f32 %v7331, %v7868
      %v7870 = vpop.f32.mrf.mxu0
      %7871 = vmatprep.mubr.f32.mxu0 0.0
      %v7872 = vand.u32 %v6106, 4294901760
      %v7873 = vsub.f32 %v6106, %v7872
      %7874 = vmatmul.mubr.f32.gmra.mxu0 %v7873
      %v7875 = vpop.f32.mrf.mxu0
      %v7876 = vadd.f32 %v7337, %v7875
      %v7877 = vpop.f32.mrf.mxu0
      %7878 = vdwg.mxu0
      %7879 = vmatprep.subr.mxu0 0.0
      %7880 = vmatpush1.msra.mxu0 0.0
      %7881 = vmatprep.subr.mxu0 0.0
      %7882 = vmatpush1.msra.mxu0 0.0
      %7883 = vmatprep.subr.mxu0 0.0
      %7884 = vmatpush1.msra.mxu0 0.0
      %7885 = vmatprep.subr.mxu0 0.0
      %v7886 = vand.u32 %v5915, 4294901760
      %7887 = vmatpush1.msra.mxu0 %v7886
      %7888 = vmatprep.subr.mxu0 0.0
      %v7889 = vand.u32 %v5914, 4294901760
      %7890 = vmatpush1.msra.mxu0 %v7889
      %7891 = vmatprep.subr.mxu0 0.0
      %v7892 = vand.u32 %v5913, 4294901760
      %7893 = vmatpush1.msra.mxu0 %v7892
      %7894 = vmatprep.subr.mxu0 0.0
      %v7895 = vand.u32 %v5912, 4294901760
      %7896 = vmatpush1.msra.mxu0 %v7895
      %7897 = vmatprep.subr.mxu0 0.0
      %v7898 = vand.u32 %v5911, 4294901760
      %7899 = vmatpush1.msra.mxu0 %v7898
      %7900 = vmatprep.subr.mxu0 0.0
      %v7901 = vand.u32 %v5910, 4294901760
      %7902 = vmatpush1.msra.mxu0 %v7901
      %7903 = vmatprep.subr.mxu0 0.0
      %v7904 = vand.u32 %v5909, 4294901760
      %7905 = vmatpush1.msra.mxu0 %v7904
      %7906 = vmatprep.subr.mxu0 0.0
      %v7907 = vand.u32 %v5908, 4294901760
      %7908 = vmatpush1.msra.mxu0 %v7907
      %7909 = vmatprep.subr.mxu0 0.0
      %v7910 = vand.u32 %v5907, 4294901760
      %7911 = vmatpush1.msra.mxu0 %v7910
      %7912 = vmatprep.subr.mxu0 0.0
      %v7913 = vand.u32 %v5906, 4294901760
      %7914 = vmatpush1.msra.mxu0 %v7913
      %7915 = vmatprep.subr.mxu0 0.0
      %v7916 = vand.u32 %v5905, 4294901760
      %7917 = vmatpush1.msra.mxu0 %v7916
      %7918 = vmatprep.subr.mxu0 0.0
      %v7919 = vand.u32 %v5904, 4294901760
      %7920 = vmatpush1.msra.mxu0 %v7919
      %7921 = vmatprep.subr.mxu0 0.0
      %v7922 = vand.u32 %v5903, 4294901760
      %7923 = vmatpush1.msra.mxu0 %v7922
      %7924 = vmatprep.subr.mxu0 0.0
      %7925 = vmatpush2.msra.mxu0 0.0
      %7926 = vmatprep.subr.mxu0 0.0
      %7927 = vmatpush2.msra.mxu0 0.0
      %7928 = vmatprep.subr.mxu0 0.0
      %7929 = vmatpush2.msra.mxu0 0.0
      %7930 = vmatprep.subr.mxu0 0.0
      %7931 = vmatpush2.msra.mxu0 0.0
      %7932 = vmatprep.subr.mxu0 0.0
      %7933 = vmatpush2.msra.mxu0 0.0
      %7934 = vmatprep.subr.mxu0 0.0
      %7935 = vmatpush2.msra.mxu0 0.0
      %7936 = vmatprep.subr.mxu0 0.0
      %7937 = vmatpush2.msra.mxu0 0.0
      %7938 = vmatprep.subr.mxu0 0.0
      %7939 = vmatpush2.msra.mxu0 0.0
      %7940 = vmatprep.subr.mxu0 0.0
      %7941 = vmatpush2.msra.mxu0 0.0
      %7942 = vmatprep.subr.mxu0 0.0
      %7943 = vmatpush2.msra.mxu0 0.0
      %7944 = vmatprep.subr.mxu0 0.0
      %7945 = vmatpush2.msra.mxu0 0.0
      %7946 = vmatprep.subr.mxu0 0.0
      %7947 = vmatpush2.msra.mxu0 0.0
      %7948 = vmatprep.subr.mxu0 0.0
      %7949 = vmatpush2.msra.mxu0 0.0
      %7950 = vmatprep.subr.mxu0 0.0
      %7951 = vmatpush2.msra.mxu0 0.0
      %7952 = vmatprep.subr.mxu0 0.0
      %7953 = vmatpush2.msra.mxu0 0.0
      %7954 = vmatprep.subr.mxu0 0.0
      %7955 = vmatpush2.msra.mxu0 0.0
      %7956 = vmatprep.mubr.f32.mxu0 0.0
      %v7957 = vand.u32 %v5917, 4294901760
      %v7958 = vsub.f32 %v5917, %v7957
      %v7959 = vand.u32 %v7958, 4294901760
      %7960 = vmatmul.mubr.f32.gmra.mxu0 %v7959
      %v7961 = vpop.f32.mrf.mxu0
      %v7962 = vadd.f32 %v7435, %v7961
      %v7963 = vpop.f32.mrf.mxu0
      %7964 = vmatprep.mubr.f32.mxu0 0.0
      %v7965 = vand.u32 %v5920, 4294901760
      %v7966 = vsub.f32 %v5920, %v7965
      %v7967 = vand.u32 %v7966, 4294901760
      %7968 = vmatmul.mubr.f32.gmra.mxu0 %v7967
      %v7969 = vpop.f32.mrf.mxu0
      %v7970 = vadd.f32 %v7442, %v7969
      %v7971 = vpop.f32.mrf.mxu0
      %7972 = vmatprep.mubr.f32.mxu0 0.0
      %v7973 = vand.u32 %v5923, 4294901760
      %v7974 = vsub.f32 %v5923, %v7973
      %v7975 = vand.u32 %v7974, 4294901760
      %7976 = vmatmul.mubr.f32.gmra.mxu0 %v7975
      %v7977 = vpop.f32.mrf.mxu0
      %v7978 = vadd.f32 %v7449, %v7977
      %v7979 = vpop.f32.mrf.mxu0
      %7980 = vmatprep.mubr.f32.mxu0 0.0
      %v7981 = vand.u32 %v5926, 4294901760
      %v7982 = vsub.f32 %v5926, %v7981
      %v7983 = vand.u32 %v7982, 4294901760
      %7984 = vmatmul.mubr.f32.gmra.mxu0 %v7983
      %v7985 = vpop.f32.mrf.mxu0
      %v7986 = vadd.f32 %v7456, %v7985
      %v7987 = vpop.f32.mrf.mxu0
      %7988 = vmatprep.mubr.f32.mxu0 0.0
      %v7989 = vand.u32 %v5929, 4294901760
      %v7990 = vsub.f32 %v5929, %v7989
      %v7991 = vand.u32 %v7990, 4294901760
      %7992 = vmatmul.mubr.f32.gmra.mxu0 %v7991
      %v7993 = vpop.f32.mrf.mxu0
      %v7994 = vadd.f32 %v7463, %v7993
      %v7995 = vpop.f32.mrf.mxu0
      %7996 = vmatprep.mubr.f32.mxu0 0.0
      %v7997 = vand.u32 %v5932, 4294901760
      %v7998 = vsub.f32 %v5932, %v7997
      %v7999 = vand.u32 %v7998, 4294901760
      %8000 = vmatmul.mubr.f32.gmra.mxu0 %v7999
      %v8001 = vpop.f32.mrf.mxu0
      %v8002 = vadd.f32 %v7470, %v8001
      %v8003 = vpop.f32.mrf.mxu0
      %8004 = vmatprep.mubr.f32.mxu0 0.0
      %v8005 = vand.u32 %v5935, 4294901760
      %v8006 = vsub.f32 %v5935, %v8005
      %v8007 = vand.u32 %v8006, 4294901760
      %8008 = vmatmul.mubr.f32.gmra.mxu0 %v8007
      %v8009 = vpop.f32.mrf.mxu0
      %v8010 = vadd.f32 %v7477, %v8009
      %v8011 = vpop.f32.mrf.mxu0
      %8012 = vmatprep.mubr.f32.mxu0 0.0
      %v8013 = vand.u32 %v5938, 4294901760
      %v8014 = vsub.f32 %v5938, %v8013
      %v8015 = vand.u32 %v8014, 4294901760
      %8016 = vmatmul.mubr.f32.gmra.mxu0 %v8015
      %v8017 = vpop.f32.mrf.mxu0
      %v8018 = vadd.f32 %v7484, %v8017
      %v8019 = vpop.f32.mrf.mxu0
      %8020 = vmatprep.mubr.f32.mxu0 0.0
      %v8021 = vand.u32 %v5941, 4294901760
      %v8022 = vsub.f32 %v5941, %v8021
      %v8023 = vand.u32 %v8022, 4294901760
      %8024 = vmatmul.mubr.f32.gmra.mxu0 %v8023
      %v8025 = vpop.f32.mrf.mxu0
      %v8026 = vadd.f32 %v7491, %v8025
      %v8027 = vpop.f32.mrf.mxu0
      %8028 = vmatprep.mubr.f32.mxu0 0.0
      %v8029 = vand.u32 %v5944, 4294901760
      %v8030 = vsub.f32 %v5944, %v8029
      %v8031 = vand.u32 %v8030, 4294901760
      %8032 = vmatmul.mubr.f32.gmra.mxu0 %v8031
      %v8033 = vpop.f32.mrf.mxu0
      %v8034 = vadd.f32 %v7498, %v8033
      %v8035 = vpop.f32.mrf.mxu0
      %8036 = vmatprep.mubr.f32.mxu0 0.0
      %v8037 = vand.u32 %v5947, 4294901760
      %v8038 = vsub.f32 %v5947, %v8037
      %v8039 = vand.u32 %v8038, 4294901760
      %8040 = vmatmul.mubr.f32.gmra.mxu0 %v8039
      %v8041 = vpop.f32.mrf.mxu0
      %v8042 = vadd.f32 %v7505, %v8041
      %v8043 = vpop.f32.mrf.mxu0
      %8044 = vmatprep.mubr.f32.mxu0 0.0
      %v8045 = vand.u32 %v5950, 4294901760
      %v8046 = vsub.f32 %v5950, %v8045
      %v8047 = vand.u32 %v8046, 4294901760
      %8048 = vmatmul.mubr.f32.gmra.mxu0 %v8047
      %v8049 = vpop.f32.mrf.mxu0
      %v8050 = vadd.f32 %v7512, %v8049
      %v8051 = vpop.f32.mrf.mxu0
      %8052 = vmatprep.mubr.f32.mxu0 0.0
      %v8053 = vand.u32 %v5953, 4294901760
      %v8054 = vsub.f32 %v5953, %v8053
      %v8055 = vand.u32 %v8054, 4294901760
      %8056 = vmatmul.mubr.f32.gmra.mxu0 %v8055
      %v8057 = vpop.f32.mrf.mxu0
      %v8058 = vadd.f32 %v7519, %v8057
      %v8059 = vpop.f32.mrf.mxu0
      %8060 = vmatprep.mubr.f32.mxu0 0.0
      %v8061 = vand.u32 %v5956, 4294901760
      %v8062 = vsub.f32 %v5956, %v8061
      %v8063 = vand.u32 %v8062, 4294901760
      %8064 = vmatmul.mubr.f32.gmra.mxu0 %v8063
      %v8065 = vpop.f32.mrf.mxu0
      %v8066 = vadd.f32 %v7526, %v8065
      %v8067 = vpop.f32.mrf.mxu0
      %8068 = vmatprep.mubr.f32.mxu0 0.0
      %v8069 = vand.u32 %v5959, 4294901760
      %v8070 = vsub.f32 %v5959, %v8069
      %v8071 = vand.u32 %v8070, 4294901760
      %8072 = vmatmul.mubr.f32.gmra.mxu0 %v8071
      %v8073 = vpop.f32.mrf.mxu0
      %v8074 = vadd.f32 %v7533, %v8073
      %v8075 = vpop.f32.mrf.mxu0
      %8076 = vmatprep.mubr.f32.mxu0 0.0
      %v8077 = vand.u32 %v5962, 4294901760
      %v8078 = vsub.f32 %v5962, %v8077
      %v8079 = vand.u32 %v8078, 4294901760
      %8080 = vmatmul.mubr.f32.gmra.mxu0 %v8079
      %v8081 = vpop.f32.mrf.mxu0
      %v8082 = vadd.f32 %v7540, %v8081
      %v8083 = vpop.f32.mrf.mxu0
      %8084 = vmatprep.mubr.f32.mxu0 0.0
      %v8085 = vand.u32 %v5965, 4294901760
      %v8086 = vsub.f32 %v5965, %v8085
      %v8087 = vand.u32 %v8086, 4294901760
      %8088 = vmatmul.mubr.f32.gmra.mxu0 %v8087
      %v8089 = vpop.f32.mrf.mxu0
      %v8090 = vadd.f32 %v7547, %v8089
      %v8091 = vpop.f32.mrf.mxu0
      %8092 = vmatprep.mubr.f32.mxu0 0.0
      %v8093 = vand.u32 %v5968, 4294901760
      %v8094 = vsub.f32 %v5968, %v8093
      %v8095 = vand.u32 %v8094, 4294901760
      %8096 = vmatmul.mubr.f32.gmra.mxu0 %v8095
      %v8097 = vpop.f32.mrf.mxu0
      %v8098 = vadd.f32 %v7554, %v8097
      %v8099 = vpop.f32.mrf.mxu0
      %8100 = vmatprep.mubr.f32.mxu0 0.0
      %v8101 = vand.u32 %v5971, 4294901760
      %v8102 = vsub.f32 %v5971, %v8101
      %v8103 = vand.u32 %v8102, 4294901760
      %8104 = vmatmul.mubr.f32.gmra.mxu0 %v8103
      %v8105 = vpop.f32.mrf.mxu0
      %v8106 = vadd.f32 %v7561, %v8105
      %v8107 = vpop.f32.mrf.mxu0
      %8108 = vmatprep.mubr.f32.mxu0 0.0
      %v8109 = vand.u32 %v5974, 4294901760
      %v8110 = vsub.f32 %v5974, %v8109
      %v8111 = vand.u32 %v8110, 4294901760
      %8112 = vmatmul.mubr.f32.gmra.mxu0 %v8111
      %v8113 = vpop.f32.mrf.mxu0
      %v8114 = vadd.f32 %v7568, %v8113
      %v8115 = vpop.f32.mrf.mxu0
      %8116 = vmatprep.mubr.f32.mxu0 0.0
      %v8117 = vand.u32 %v5977, 4294901760
      %v8118 = vsub.f32 %v5977, %v8117
      %v8119 = vand.u32 %v8118, 4294901760
      %8120 = vmatmul.mubr.f32.gmra.mxu0 %v8119
      %v8121 = vpop.f32.mrf.mxu0
      %v8122 = vadd.f32 %v7575, %v8121
      %v8123 = vpop.f32.mrf.mxu0
      %8124 = vmatprep.mubr.f32.mxu0 0.0
      %v8125 = vand.u32 %v5980, 4294901760
      %v8126 = vsub.f32 %v5980, %v8125
      %v8127 = vand.u32 %v8126, 4294901760
      %8128 = vmatmul.mubr.f32.gmra.mxu0 %v8127
      %v8129 = vpop.f32.mrf.mxu0
      %v8130 = vadd.f32 %v7582, %v8129
      %v8131 = vpop.f32.mrf.mxu0
      %8132 = vmatprep.mubr.f32.mxu0 0.0
      %v8133 = vand.u32 %v5983, 4294901760
      %v8134 = vsub.f32 %v5983, %v8133
      %v8135 = vand.u32 %v8134, 4294901760
      %8136 = vmatmul.mubr.f32.gmra.mxu0 %v8135
      %v8137 = vpop.f32.mrf.mxu0
      %v8138 = vadd.f32 %v7589, %v8137
      %v8139 = vpop.f32.mrf.mxu0
      %8140 = vmatprep.mubr.f32.mxu0 0.0
      %v8141 = vand.u32 %v5986, 4294901760
      %v8142 = vsub.f32 %v5986, %v8141
      %v8143 = vand.u32 %v8142, 4294901760
      %8144 = vmatmul.mubr.f32.gmra.mxu0 %v8143
      %v8145 = vpop.f32.mrf.mxu0
      %v8146 = vadd.f32 %v7596, %v8145
      %v8147 = vpop.f32.mrf.mxu0
      %8148 = vmatprep.mubr.f32.mxu0 0.0
      %v8149 = vand.u32 %v5989, 4294901760
      %v8150 = vsub.f32 %v5989, %v8149
      %v8151 = vand.u32 %v8150, 4294901760
      %8152 = vmatmul.mubr.f32.gmra.mxu0 %v8151
      %v8153 = vpop.f32.mrf.mxu0
      %v8154 = vadd.f32 %v7603, %v8153
      %v8155 = vpop.f32.mrf.mxu0
      %8156 = vmatprep.mubr.f32.mxu0 0.0
      %v8157 = vand.u32 %v5992, 4294901760
      %v8158 = vsub.f32 %v5992, %v8157
      %v8159 = vand.u32 %v8158, 4294901760
      %8160 = vmatmul.mubr.f32.gmra.mxu0 %v8159
      %v8161 = vpop.f32.mrf.mxu0
      %v8162 = vadd.f32 %v7610, %v8161
      %v8163 = vpop.f32.mrf.mxu0
      %8164 = vmatprep.mubr.f32.mxu0 0.0
      %v8165 = vand.u32 %v5995, 4294901760
      %v8166 = vsub.f32 %v5995, %v8165
      %v8167 = vand.u32 %v8166, 4294901760
      %8168 = vmatmul.mubr.f32.gmra.mxu0 %v8167
      %v8169 = vpop.f32.mrf.mxu0
      %v8170 = vadd.f32 %v7617, %v8169
      %v8171 = vpop.f32.mrf.mxu0
      %8172 = vmatprep.mubr.f32.mxu0 0.0
      %v8173 = vand.u32 %v5998, 4294901760
      %v8174 = vsub.f32 %v5998, %v8173
      %v8175 = vand.u32 %v8174, 4294901760
      %8176 = vmatmul.mubr.f32.gmra.mxu0 %v8175
      %v8177 = vpop.f32.mrf.mxu0
      %v8178 = vadd.f32 %v7624, %v8177
      %v8179 = vpop.f32.mrf.mxu0
      %8180 = vmatprep.mubr.f32.mxu0 0.0
      %v8181 = vand.u32 %v6001, 4294901760
      %v8182 = vsub.f32 %v6001, %v8181
      %v8183 = vand.u32 %v8182, 4294901760
      %8184 = vmatmul.mubr.f32.gmra.mxu0 %v8183
      %v8185 = vpop.f32.mrf.mxu0
      %v8186 = vadd.f32 %v7631, %v8185
      %v8187 = vpop.f32.mrf.mxu0
      %8188 = vmatprep.mubr.f32.mxu0 0.0
      %v8189 = vand.u32 %v6004, 4294901760
      %v8190 = vsub.f32 %v6004, %v8189
      %v8191 = vand.u32 %v8190, 4294901760
      %8192 = vmatmul.mubr.f32.gmra.mxu0 %v8191
      %v8193 = vpop.f32.mrf.mxu0
      %v8194 = vadd.f32 %v7638, %v8193
      %v8195 = vpop.f32.mrf.mxu0
      %8196 = vmatprep.mubr.f32.mxu0 0.0
      %v8197 = vand.u32 %v6007, 4294901760
      %v8198 = vsub.f32 %v6007, %v8197
      %v8199 = vand.u32 %v8198, 4294901760
      %8200 = vmatmul.mubr.f32.gmra.mxu0 %v8199
      %v8201 = vpop.f32.mrf.mxu0
      %v8202 = vadd.f32 %v7645, %v8201
      %v8203 = vpop.f32.mrf.mxu0
      %8204 = vmatprep.mubr.f32.mxu0 0.0
      %v8205 = vand.u32 %v6010, 4294901760
      %v8206 = vsub.f32 %v6010, %v8205
      %v8207 = vand.u32 %v8206, 4294901760
      %8208 = vmatmul.mubr.f32.gmra.mxu0 %v8207
      %v8209 = vpop.f32.mrf.mxu0
      %v8210 = vadd.f32 %v7652, %v8209
      %v8211 = vpop.f32.mrf.mxu0
      %8212 = vmatprep.mubr.f32.mxu0 0.0
      %v8213 = vand.u32 %v6013, 4294901760
      %v8214 = vsub.f32 %v6013, %v8213
      %v8215 = vand.u32 %v8214, 4294901760
      %8216 = vmatmul.mubr.f32.gmra.mxu0 %v8215
      %v8217 = vpop.f32.mrf.mxu0
      %v8218 = vadd.f32 %v7659, %v8217
      %v8219 = vpop.f32.mrf.mxu0
      %8220 = vmatprep.mubr.f32.mxu0 0.0
      %v8221 = vand.u32 %v6016, 4294901760
      %v8222 = vsub.f32 %v6016, %v8221
      %v8223 = vand.u32 %v8222, 4294901760
      %8224 = vmatmul.mubr.f32.gmra.mxu0 %v8223
      %v8225 = vpop.f32.mrf.mxu0
      %v8226 = vadd.f32 %v7666, %v8225
      %v8227 = vpop.f32.mrf.mxu0
      %8228 = vmatprep.mubr.f32.mxu0 0.0
      %v8229 = vand.u32 %v6019, 4294901760
      %v8230 = vsub.f32 %v6019, %v8229
      %v8231 = vand.u32 %v8230, 4294901760
      %8232 = vmatmul.mubr.f32.gmra.mxu0 %v8231
      %v8233 = vpop.f32.mrf.mxu0
      %v8234 = vadd.f32 %v7673, %v8233
      %v8235 = vpop.f32.mrf.mxu0
      %8236 = vmatprep.mubr.f32.mxu0 0.0
      %v8237 = vand.u32 %v6022, 4294901760
      %v8238 = vsub.f32 %v6022, %v8237
      %v8239 = vand.u32 %v8238, 4294901760
      %8240 = vmatmul.mubr.f32.gmra.mxu0 %v8239
      %v8241 = vpop.f32.mrf.mxu0
      %v8242 = vadd.f32 %v7680, %v8241
      %v8243 = vpop.f32.mrf.mxu0
      %8244 = vmatprep.mubr.f32.mxu0 0.0
      %v8245 = vand.u32 %v6025, 4294901760
      %v8246 = vsub.f32 %v6025, %v8245
      %v8247 = vand.u32 %v8246, 4294901760
      %8248 = vmatmul.mubr.f32.gmra.mxu0 %v8247
      %v8249 = vpop.f32.mrf.mxu0
      %v8250 = vadd.f32 %v7687, %v8249
      %v8251 = vpop.f32.mrf.mxu0
      %8252 = vmatprep.mubr.f32.mxu0 0.0
      %v8253 = vand.u32 %v6028, 4294901760
      %v8254 = vsub.f32 %v6028, %v8253
      %v8255 = vand.u32 %v8254, 4294901760
      %8256 = vmatmul.mubr.f32.gmra.mxu0 %v8255
      %v8257 = vpop.f32.mrf.mxu0
      %v8258 = vadd.f32 %v7694, %v8257
      %v8259 = vpop.f32.mrf.mxu0
      %8260 = vmatprep.mubr.f32.mxu0 0.0
      %v8261 = vand.u32 %v6031, 4294901760
      %v8262 = vsub.f32 %v6031, %v8261
      %v8263 = vand.u32 %v8262, 4294901760
      %8264 = vmatmul.mubr.f32.gmra.mxu0 %v8263
      %v8265 = vpop.f32.mrf.mxu0
      %v8266 = vadd.f32 %v7701, %v8265
      %v8267 = vpop.f32.mrf.mxu0
      %8268 = vmatprep.mubr.f32.mxu0 0.0
      %v8269 = vand.u32 %v6034, 4294901760
      %v8270 = vsub.f32 %v6034, %v8269
      %v8271 = vand.u32 %v8270, 4294901760
      %8272 = vmatmul.mubr.f32.gmra.mxu0 %v8271
      %v8273 = vpop.f32.mrf.mxu0
      %v8274 = vadd.f32 %v7708, %v8273
      %v8275 = vpop.f32.mrf.mxu0
      %8276 = vmatprep.mubr.f32.mxu0 0.0
      %v8277 = vand.u32 %v6037, 4294901760
      %v8278 = vsub.f32 %v6037, %v8277
      %v8279 = vand.u32 %v8278, 4294901760
      %8280 = vmatmul.mubr.f32.gmra.mxu0 %v8279
      %v8281 = vpop.f32.mrf.mxu0
      %v8282 = vadd.f32 %v7715, %v8281
      %v8283 = vpop.f32.mrf.mxu0
      %8284 = vmatprep.mubr.f32.mxu0 0.0
      %v8285 = vand.u32 %v6040, 4294901760
      %v8286 = vsub.f32 %v6040, %v8285
      %v8287 = vand.u32 %v8286, 4294901760
      %8288 = vmatmul.mubr.f32.gmra.mxu0 %v8287
      %v8289 = vpop.f32.mrf.mxu0
      %v8290 = vadd.f32 %v7722, %v8289
      %v8291 = vpop.f32.mrf.mxu0
      %8292 = vmatprep.mubr.f32.mxu0 0.0
      %v8293 = vand.u32 %v6043, 4294901760
      %v8294 = vsub.f32 %v6043, %v8293
      %v8295 = vand.u32 %v8294, 4294901760
      %8296 = vmatmul.mubr.f32.gmra.mxu0 %v8295
      %v8297 = vpop.f32.mrf.mxu0
      %v8298 = vadd.f32 %v7729, %v8297
      %v8299 = vpop.f32.mrf.mxu0
      %8300 = vmatprep.mubr.f32.mxu0 0.0
      %v8301 = vand.u32 %v6046, 4294901760
      %v8302 = vsub.f32 %v6046, %v8301
      %v8303 = vand.u32 %v8302, 4294901760
      %8304 = vmatmul.mubr.f32.gmra.mxu0 %v8303
      %v8305 = vpop.f32.mrf.mxu0
      %v8306 = vadd.f32 %v7736, %v8305
      %v8307 = vpop.f32.mrf.mxu0
      %8308 = vmatprep.mubr.f32.mxu0 0.0
      %v8309 = vand.u32 %v6049, 4294901760
      %v8310 = vsub.f32 %v6049, %v8309
      %v8311 = vand.u32 %v8310, 4294901760
      %8312 = vmatmul.mubr.f32.gmra.mxu0 %v8311
      %v8313 = vpop.f32.mrf.mxu0
      %v8314 = vadd.f32 %v7743, %v8313
      %v8315 = vpop.f32.mrf.mxu0
      %8316 = vmatprep.mubr.f32.mxu0 0.0
      %v8317 = vand.u32 %v6052, 4294901760
      %v8318 = vsub.f32 %v6052, %v8317
      %v8319 = vand.u32 %v8318, 4294901760
      %8320 = vmatmul.mubr.f32.gmra.mxu0 %v8319
      %v8321 = vpop.f32.mrf.mxu0
      %v8322 = vadd.f32 %v7750, %v8321
      %v8323 = vpop.f32.mrf.mxu0
      %8324 = vmatprep.mubr.f32.mxu0 0.0
      %v8325 = vand.u32 %v6055, 4294901760
      %v8326 = vsub.f32 %v6055, %v8325
      %v8327 = vand.u32 %v8326, 4294901760
      %8328 = vmatmul.mubr.f32.gmra.mxu0 %v8327
      %v8329 = vpop.f32.mrf.mxu0
      %v8330 = vadd.f32 %v7757, %v8329
      %v8331 = vpop.f32.mrf.mxu0
      %8332 = vmatprep.mubr.f32.mxu0 0.0
      %v8333 = vand.u32 %v6058, 4294901760
      %v8334 = vsub.f32 %v6058, %v8333
      %v8335 = vand.u32 %v8334, 4294901760
      %8336 = vmatmul.mubr.f32.gmra.mxu0 %v8335
      %v8337 = vpop.f32.mrf.mxu0
      %v8338 = vadd.f32 %v7764, %v8337
      %v8339 = vpop.f32.mrf.mxu0
      %8340 = vmatprep.mubr.f32.mxu0 0.0
      %v8341 = vand.u32 %v6061, 4294901760
      %v8342 = vsub.f32 %v6061, %v8341
      %v8343 = vand.u32 %v8342, 4294901760
      %8344 = vmatmul.mubr.f32.gmra.mxu0 %v8343
      %v8345 = vpop.f32.mrf.mxu0
      %v8346 = vadd.f32 %v7771, %v8345
      %v8347 = vpop.f32.mrf.mxu0
      %8348 = vmatprep.mubr.f32.mxu0 0.0
      %v8349 = vand.u32 %v6064, 4294901760
      %v8350 = vsub.f32 %v6064, %v8349
      %v8351 = vand.u32 %v8350, 4294901760
      %8352 = vmatmul.mubr.f32.gmra.mxu0 %v8351
      %v8353 = vpop.f32.mrf.mxu0
      %v8354 = vadd.f32 %v7778, %v8353
      %v8355 = vpop.f32.mrf.mxu0
      %8356 = vmatprep.mubr.f32.mxu0 0.0
      %v8357 = vand.u32 %v6067, 4294901760
      %v8358 = vsub.f32 %v6067, %v8357
      %v8359 = vand.u32 %v8358, 4294901760
      %8360 = vmatmul.mubr.f32.gmra.mxu0 %v8359
      %v8361 = vpop.f32.mrf.mxu0
      %v8362 = vadd.f32 %v7785, %v8361
      %v8363 = vpop.f32.mrf.mxu0
      %8364 = vmatprep.mubr.f32.mxu0 0.0
      %v8365 = vand.u32 %v6070, 4294901760
      %v8366 = vsub.f32 %v6070, %v8365
      %v8367 = vand.u32 %v8366, 4294901760
      %8368 = vmatmul.mubr.f32.gmra.mxu0 %v8367
      %v8369 = vpop.f32.mrf.mxu0
      %v8370 = vadd.f32 %v7792, %v8369
      %v8371 = vpop.f32.mrf.mxu0
      %8372 = vmatprep.mubr.f32.mxu0 0.0
      %v8373 = vand.u32 %v6073, 4294901760
      %v8374 = vsub.f32 %v6073, %v8373
      %v8375 = vand.u32 %v8374, 4294901760
      %8376 = vmatmul.mubr.f32.gmra.mxu0 %v8375
      %v8377 = vpop.f32.mrf.mxu0
      %v8378 = vadd.f32 %v7799, %v8377
      %v8379 = vpop.f32.mrf.mxu0
      %8380 = vmatprep.mubr.f32.mxu0 0.0
      %v8381 = vand.u32 %v6076, 4294901760
      %v8382 = vsub.f32 %v6076, %v8381
      %v8383 = vand.u32 %v8382, 4294901760
      %8384 = vmatmul.mubr.f32.gmra.mxu0 %v8383
      %v8385 = vpop.f32.mrf.mxu0
      %v8386 = vadd.f32 %v7806, %v8385
      %v8387 = vpop.f32.mrf.mxu0
      %8388 = vmatprep.mubr.f32.mxu0 0.0
      %v8389 = vand.u32 %v6079, 4294901760
      %v8390 = vsub.f32 %v6079, %v8389
      %v8391 = vand.u32 %v8390, 4294901760
      %8392 = vmatmul.mubr.f32.gmra.mxu0 %v8391
      %v8393 = vpop.f32.mrf.mxu0
      %v8394 = vadd.f32 %v7813, %v8393
      %v8395 = vpop.f32.mrf.mxu0
      %8396 = vmatprep.mubr.f32.mxu0 0.0
      %v8397 = vand.u32 %v6082, 4294901760
      %v8398 = vsub.f32 %v6082, %v8397
      %v8399 = vand.u32 %v8398, 4294901760
      %8400 = vmatmul.mubr.f32.gmra.mxu0 %v8399
      %v8401 = vpop.f32.mrf.mxu0
      %v8402 = vadd.f32 %v7820, %v8401
      %v8403 = vpop.f32.mrf.mxu0
      %8404 = vmatprep.mubr.f32.mxu0 0.0
      %v8405 = vand.u32 %v6085, 4294901760
      %v8406 = vsub.f32 %v6085, %v8405
      %v8407 = vand.u32 %v8406, 4294901760
      %8408 = vmatmul.mubr.f32.gmra.mxu0 %v8407
      %v8409 = vpop.f32.mrf.mxu0
      %v8410 = vadd.f32 %v7827, %v8409
      %v8411 = vpop.f32.mrf.mxu0
      %8412 = vmatprep.mubr.f32.mxu0 0.0
      %v8413 = vand.u32 %v6088, 4294901760
      %v8414 = vsub.f32 %v6088, %v8413
      %v8415 = vand.u32 %v8414, 4294901760
      %8416 = vmatmul.mubr.f32.gmra.mxu0 %v8415
      %v8417 = vpop.f32.mrf.mxu0
      %v8418 = vadd.f32 %v7834, %v8417
      %v8419 = vpop.f32.mrf.mxu0
      %8420 = vmatprep.mubr.f32.mxu0 0.0
      %v8421 = vand.u32 %v6091, 4294901760
      %v8422 = vsub.f32 %v6091, %v8421
      %v8423 = vand.u32 %v8422, 4294901760
      %8424 = vmatmul.mubr.f32.gmra.mxu0 %v8423
      %v8425 = vpop.f32.mrf.mxu0
      %v8426 = vadd.f32 %v7841, %v8425
      %v8427 = vpop.f32.mrf.mxu0
      %8428 = vmatprep.mubr.f32.mxu0 0.0
      %v8429 = vand.u32 %v6094, 4294901760
      %v8430 = vsub.f32 %v6094, %v8429
      %v8431 = vand.u32 %v8430, 4294901760
      %8432 = vmatmul.mubr.f32.gmra.mxu0 %v8431
      %v8433 = vpop.f32.mrf.mxu0
      %v8434 = vadd.f32 %v7848, %v8433
      %v8435 = vpop.f32.mrf.mxu0
      %8436 = vmatprep.mubr.f32.mxu0 0.0
      %v8437 = vand.u32 %v6097, 4294901760
      %v8438 = vsub.f32 %v6097, %v8437
      %v8439 = vand.u32 %v8438, 4294901760
      %8440 = vmatmul.mubr.f32.gmra.mxu0 %v8439
      %v8441 = vpop.f32.mrf.mxu0
      %v8442 = vadd.f32 %v7855, %v8441
      %v8443 = vpop.f32.mrf.mxu0
      %8444 = vmatprep.mubr.f32.mxu0 0.0
      %v8445 = vand.u32 %v6100, 4294901760
      %v8446 = vsub.f32 %v6100, %v8445
      %v8447 = vand.u32 %v8446, 4294901760
      %8448 = vmatmul.mubr.f32.gmra.mxu0 %v8447
      %v8449 = vpop.f32.mrf.mxu0
      %v8450 = vadd.f32 %v7862, %v8449
      %v8451 = vpop.f32.mrf.mxu0
      %8452 = vmatprep.mubr.f32.mxu0 0.0
      %v8453 = vand.u32 %v6103, 4294901760
      %v8454 = vsub.f32 %v6103, %v8453
      %v8455 = vand.u32 %v8454, 4294901760
      %8456 = vmatmul.mubr.f32.gmra.mxu0 %v8455
      %v8457 = vpop.f32.mrf.mxu0
      %v8458 = vadd.f32 %v7869, %v8457
      %v8459 = vpop.f32.mrf.mxu0
      %8460 = vmatprep.mubr.f32.mxu0 0.0
      %v8461 = vand.u32 %v6106, 4294901760
      %v8462 = vsub.f32 %v6106, %v8461
      %v8463 = vand.u32 %v8462, 4294901760
      %8464 = vmatmul.mubr.f32.gmra.mxu0 %v8463
      %v8465 = vpop.f32.mrf.mxu0
      %v8466 = vadd.f32 %v7876, %v8465
      %v8467 = vpop.f32.mrf.mxu0
      %8468 = vdwg.mxu0
      %8469 = vmatprep.subr.mxu0 0.0
      %8470 = vmatpush1.msra.mxu0 0.0
      %8471 = vmatprep.subr.mxu0 0.0
      %8472 = vmatpush1.msra.mxu0 0.0
      %8473 = vmatprep.subr.mxu0 0.0
      %8474 = vmatpush1.msra.mxu0 0.0
      %8475 = vmatprep.subr.mxu0 0.0
      %v8476 = vand.u32 %v5915, 4294901760
      %v8477 = vsub.f32 %v5915, %v8476
      %v8478 = vand.u32 %v8477, 4294901760
      %8479 = vmatpush1.msra.mxu0 %v8478
      %8480 = vmatprep.subr.mxu0 0.0
      %v8481 = vand.u32 %v5914, 4294901760
      %v8482 = vsub.f32 %v5914, %v8481
      %v8483 = vand.u32 %v8482, 4294901760
      %8484 = vmatpush1.msra.mxu0 %v8483
      %8485 = vmatprep.subr.mxu0 0.0
      %v8486 = vand.u32 %v5913, 4294901760
      %v8487 = vsub.f32 %v5913, %v8486
      %v8488 = vand.u32 %v8487, 4294901760
      %8489 = vmatpush1.msra.mxu0 %v8488
      %8490 = vmatprep.subr.mxu0 0.0
      %v8491 = vand.u32 %v5912, 4294901760
      %v8492 = vsub.f32 %v5912, %v8491
      %v8493 = vand.u32 %v8492, 4294901760
      %8494 = vmatpush1.msra.mxu0 %v8493
      %8495 = vmatprep.subr.mxu0 0.0
      %v8496 = vand.u32 %v5911, 4294901760
      %v8497 = vsub.f32 %v5911, %v8496
      %v8498 = vand.u32 %v8497, 4294901760
      %8499 = vmatpush1.msra.mxu0 %v8498
      %8500 = vmatprep.subr.mxu0 0.0
      %v8501 = vand.u32 %v5910, 4294901760
      %v8502 = vsub.f32 %v5910, %v8501
      %v8503 = vand.u32 %v8502, 4294901760
      %8504 = vmatpush1.msra.mxu0 %v8503
      %8505 = vmatprep.subr.mxu0 0.0
      %v8506 = vand.u32 %v5909, 4294901760
      %v8507 = vsub.f32 %v5909, %v8506
      %v8508 = vand.u32 %v8507, 4294901760
      %8509 = vmatpush1.msra.mxu0 %v8508
      %8510 = vmatprep.subr.mxu0 0.0
      %v8511 = vand.u32 %v5908, 4294901760
      %v8512 = vsub.f32 %v5908, %v8511
      %v8513 = vand.u32 %v8512, 4294901760
      %8514 = vmatpush1.msra.mxu0 %v8513
      %8515 = vmatprep.subr.mxu0 0.0
      %v8516 = vand.u32 %v5907, 4294901760
      %v8517 = vsub.f32 %v5907, %v8516
      %v8518 = vand.u32 %v8517, 4294901760
      %8519 = vmatpush1.msra.mxu0 %v8518
      %8520 = vmatprep.subr.mxu0 0.0
      %v8521 = vand.u32 %v5906, 4294901760
      %v8522 = vsub.f32 %v5906, %v8521
      %v8523 = vand.u32 %v8522, 4294901760
      %8524 = vmatpush1.msra.mxu0 %v8523
      %8525 = vmatprep.subr.mxu0 0.0
      %v8526 = vand.u32 %v5905, 4294901760
      %v8527 = vsub.f32 %v5905, %v8526
      %v8528 = vand.u32 %v8527, 4294901760
      %8529 = vmatpush1.msra.mxu0 %v8528
      %8530 = vmatprep.subr.mxu0 0.0
      %v8531 = vand.u32 %v5904, 4294901760
      %v8532 = vsub.f32 %v5904, %v8531
      %v8533 = vand.u32 %v8532, 4294901760
      %8534 = vmatpush1.msra.mxu0 %v8533
      %8535 = vmatprep.subr.mxu0 0.0
      %v8536 = vand.u32 %v5903, 4294901760
      %v8537 = vsub.f32 %v5903, %v8536
      %v8538 = vand.u32 %v8537, 4294901760
      %8539 = vmatpush1.msra.mxu0 %v8538
      %8540 = vmatprep.subr.mxu0 0.0
      %8541 = vmatpush2.msra.mxu0 0.0
      %8542 = vmatprep.subr.mxu0 0.0
      %8543 = vmatpush2.msra.mxu0 0.0
      %8544 = vmatprep.subr.mxu0 0.0
      %8545 = vmatpush2.msra.mxu0 0.0
      %8546 = vmatprep.subr.mxu0 0.0
      %8547 = vmatpush2.msra.mxu0 0.0
      %8548 = vmatprep.subr.mxu0 0.0
      %8549 = vmatpush2.msra.mxu0 0.0
      %8550 = vmatprep.subr.mxu0 0.0
      %8551 = vmatpush2.msra.mxu0 0.0
      %8552 = vmatprep.subr.mxu0 0.0
      %8553 = vmatpush2.msra.mxu0 0.0
      %8554 = vmatprep.subr.mxu0 0.0
      %8555 = vmatpush2.msra.mxu0 0.0
      %8556 = vmatprep.subr.mxu0 0.0
      %8557 = vmatpush2.msra.mxu0 0.0
      %8558 = vmatprep.subr.mxu0 0.0
      %8559 = vmatpush2.msra.mxu0 0.0
      %8560 = vmatprep.subr.mxu0 0.0
      %8561 = vmatpush2.msra.mxu0 0.0
      %8562 = vmatprep.subr.mxu0 0.0
      %8563 = vmatpush2.msra.mxu0 0.0
      %8564 = vmatprep.subr.mxu0 0.0
      %8565 = vmatpush2.msra.mxu0 0.0
      %8566 = vmatprep.subr.mxu0 0.0
      %8567 = vmatpush2.msra.mxu0 0.0
      %8568 = vmatprep.subr.mxu0 0.0
      %8569 = vmatpush2.msra.mxu0 0.0
      %8570 = vmatprep.subr.mxu0 0.0
      %8571 = vmatpush2.msra.mxu0 0.0
      %8572 = vmatprep.mubr.f32.mxu0 0.0
      %v8573 = vand.u32 %v5917, 4294901760
      %8574 = vmatmul.mubr.f32.gmra.mxu0 %v8573
      %v8575 = vpop.f32.mrf.mxu0
      %v8576 = vadd.f32 %v7962, %v8575
      %v8577 = vpop.f32.mrf.mxu0
      %8578 = vmatprep.mubr.f32.mxu0 0.0
      %v8579 = vand.u32 %v5920, 4294901760
      %8580 = vmatmul.mubr.f32.gmra.mxu0 %v8579
      %v8581 = vpop.f32.mrf.mxu0
      %v8582 = vadd.f32 %v7970, %v8581
      %v8583 = vpop.f32.mrf.mxu0
      %8584 = vmatprep.mubr.f32.mxu0 0.0
      %v8585 = vand.u32 %v5923, 4294901760
      %8586 = vmatmul.mubr.f32.gmra.mxu0 %v8585
      %v8587 = vpop.f32.mrf.mxu0
      %v8588 = vadd.f32 %v7978, %v8587
      %v8589 = vpop.f32.mrf.mxu0
      %8590 = vmatprep.mubr.f32.mxu0 0.0
      %v8591 = vand.u32 %v5926, 4294901760
      %8592 = vmatmul.mubr.f32.gmra.mxu0 %v8591
      %v8593 = vpop.f32.mrf.mxu0
      %v8594 = vadd.f32 %v7986, %v8593
      %v8595 = vpop.f32.mrf.mxu0
      %8596 = vmatprep.mubr.f32.mxu0 0.0
      %v8597 = vand.u32 %v5929, 4294901760
      %8598 = vmatmul.mubr.f32.gmra.mxu0 %v8597
      %v8599 = vpop.f32.mrf.mxu0
      %v8600 = vadd.f32 %v7994, %v8599
      %v8601 = vpop.f32.mrf.mxu0
      %8602 = vmatprep.mubr.f32.mxu0 0.0
      %v8603 = vand.u32 %v5932, 4294901760
      %8604 = vmatmul.mubr.f32.gmra.mxu0 %v8603
      %v8605 = vpop.f32.mrf.mxu0
      %v8606 = vadd.f32 %v8002, %v8605
      %v8607 = vpop.f32.mrf.mxu0
      %8608 = vmatprep.mubr.f32.mxu0 0.0
      %v8609 = vand.u32 %v5935, 4294901760
      %8610 = vmatmul.mubr.f32.gmra.mxu0 %v8609
      %v8611 = vpop.f32.mrf.mxu0
      %v8612 = vadd.f32 %v8010, %v8611
      %v8613 = vpop.f32.mrf.mxu0
      %8614 = vmatprep.mubr.f32.mxu0 0.0
      %v8615 = vand.u32 %v5938, 4294901760
      %8616 = vmatmul.mubr.f32.gmra.mxu0 %v8615
      %v8617 = vpop.f32.mrf.mxu0
      %v8618 = vadd.f32 %v8018, %v8617
      %v8619 = vpop.f32.mrf.mxu0
      %8620 = vmatprep.mubr.f32.mxu0 0.0
      %v8621 = vand.u32 %v5941, 4294901760
      %8622 = vmatmul.mubr.f32.gmra.mxu0 %v8621
      %v8623 = vpop.f32.mrf.mxu0
      %v8624 = vadd.f32 %v8026, %v8623
      %v8625 = vpop.f32.mrf.mxu0
      %8626 = vmatprep.mubr.f32.mxu0 0.0
      %v8627 = vand.u32 %v5944, 4294901760
      %8628 = vmatmul.mubr.f32.gmra.mxu0 %v8627
      %v8629 = vpop.f32.mrf.mxu0
      %v8630 = vadd.f32 %v8034, %v8629
      %v8631 = vpop.f32.mrf.mxu0
      %8632 = vmatprep.mubr.f32.mxu0 0.0
      %v8633 = vand.u32 %v5947, 4294901760
      %8634 = vmatmul.mubr.f32.gmra.mxu0 %v8633
      %v8635 = vpop.f32.mrf.mxu0
      %v8636 = vadd.f32 %v8042, %v8635
      %v8637 = vpop.f32.mrf.mxu0
      %8638 = vmatprep.mubr.f32.mxu0 0.0
      %v8639 = vand.u32 %v5950, 4294901760
      %8640 = vmatmul.mubr.f32.gmra.mxu0 %v8639
      %v8641 = vpop.f32.mrf.mxu0
      %v8642 = vadd.f32 %v8050, %v8641
      %v8643 = vpop.f32.mrf.mxu0
      %8644 = vmatprep.mubr.f32.mxu0 0.0
      %v8645 = vand.u32 %v5953, 4294901760
      %8646 = vmatmul.mubr.f32.gmra.mxu0 %v8645
      %v8647 = vpop.f32.mrf.mxu0
      %v8648 = vadd.f32 %v8058, %v8647
      %v8649 = vpop.f32.mrf.mxu0
      %8650 = vmatprep.mubr.f32.mxu0 0.0
      %v8651 = vand.u32 %v5956, 4294901760
      %8652 = vmatmul.mubr.f32.gmra.mxu0 %v8651
      %v8653 = vpop.f32.mrf.mxu0
      %v8654 = vadd.f32 %v8066, %v8653
      %v8655 = vpop.f32.mrf.mxu0
      %8656 = vmatprep.mubr.f32.mxu0 0.0
      %v8657 = vand.u32 %v5959, 4294901760
      %8658 = vmatmul.mubr.f32.gmra.mxu0 %v8657
      %v8659 = vpop.f32.mrf.mxu0
      %v8660 = vadd.f32 %v8074, %v8659
      %v8661 = vpop.f32.mrf.mxu0
      %8662 = vmatprep.mubr.f32.mxu0 0.0
      %v8663 = vand.u32 %v5962, 4294901760
      %8664 = vmatmul.mubr.f32.gmra.mxu0 %v8663
      %v8665 = vpop.f32.mrf.mxu0
      %v8666 = vadd.f32 %v8082, %v8665
      %v8667 = vpop.f32.mrf.mxu0
      %8668 = vmatprep.mubr.f32.mxu0 0.0
      %v8669 = vand.u32 %v5965, 4294901760
      %8670 = vmatmul.mubr.f32.gmra.mxu0 %v8669
      %v8671 = vpop.f32.mrf.mxu0
      %v8672 = vadd.f32 %v8090, %v8671
      %v8673 = vpop.f32.mrf.mxu0
      %8674 = vmatprep.mubr.f32.mxu0 0.0
      %v8675 = vand.u32 %v5968, 4294901760
      %8676 = vmatmul.mubr.f32.gmra.mxu0 %v8675
      %v8677 = vpop.f32.mrf.mxu0
      %v8678 = vadd.f32 %v8098, %v8677
      %v8679 = vpop.f32.mrf.mxu0
      %8680 = vmatprep.mubr.f32.mxu0 0.0
      %v8681 = vand.u32 %v5971, 4294901760
      %8682 = vmatmul.mubr.f32.gmra.mxu0 %v8681
      %v8683 = vpop.f32.mrf.mxu0
      %v8684 = vadd.f32 %v8106, %v8683
      %v8685 = vpop.f32.mrf.mxu0
      %8686 = vmatprep.mubr.f32.mxu0 0.0
      %v8687 = vand.u32 %v5974, 4294901760
      %8688 = vmatmul.mubr.f32.gmra.mxu0 %v8687
      %v8689 = vpop.f32.mrf.mxu0
      %v8690 = vadd.f32 %v8114, %v8689
      %v8691 = vpop.f32.mrf.mxu0
      %8692 = vmatprep.mubr.f32.mxu0 0.0
      %v8693 = vand.u32 %v5977, 4294901760
      %8694 = vmatmul.mubr.f32.gmra.mxu0 %v8693
      %v8695 = vpop.f32.mrf.mxu0
      %v8696 = vadd.f32 %v8122, %v8695
      %v8697 = vpop.f32.mrf.mxu0
      %8698 = vmatprep.mubr.f32.mxu0 0.0
      %v8699 = vand.u32 %v5980, 4294901760
      %8700 = vmatmul.mubr.f32.gmra.mxu0 %v8699
      %v8701 = vpop.f32.mrf.mxu0
      %v8702 = vadd.f32 %v8130, %v8701
      %v8703 = vpop.f32.mrf.mxu0
      %8704 = vmatprep.mubr.f32.mxu0 0.0
      %v8705 = vand.u32 %v5983, 4294901760
      %8706 = vmatmul.mubr.f32.gmra.mxu0 %v8705
      %v8707 = vpop.f32.mrf.mxu0
      %v8708 = vadd.f32 %v8138, %v8707
      %v8709 = vpop.f32.mrf.mxu0
      %8710 = vmatprep.mubr.f32.mxu0 0.0
      %v8711 = vand.u32 %v5986, 4294901760
      %8712 = vmatmul.mubr.f32.gmra.mxu0 %v8711
      %v8713 = vpop.f32.mrf.mxu0
      %v8714 = vadd.f32 %v8146, %v8713
      %v8715 = vpop.f32.mrf.mxu0
      %8716 = vmatprep.mubr.f32.mxu0 0.0
      %v8717 = vand.u32 %v5989, 4294901760
      %8718 = vmatmul.mubr.f32.gmra.mxu0 %v8717
      %v8719 = vpop.f32.mrf.mxu0
      %v8720 = vadd.f32 %v8154, %v8719
      %v8721 = vpop.f32.mrf.mxu0
      %8722 = vmatprep.mubr.f32.mxu0 0.0
      %v8723 = vand.u32 %v5992, 4294901760
      %8724 = vmatmul.mubr.f32.gmra.mxu0 %v8723
      %v8725 = vpop.f32.mrf.mxu0
      %v8726 = vadd.f32 %v8162, %v8725
      %v8727 = vpop.f32.mrf.mxu0
      %8728 = vmatprep.mubr.f32.mxu0 0.0
      %v8729 = vand.u32 %v5995, 4294901760
      %8730 = vmatmul.mubr.f32.gmra.mxu0 %v8729
      %v8731 = vpop.f32.mrf.mxu0
      %v8732 = vadd.f32 %v8170, %v8731
      %v8733 = vpop.f32.mrf.mxu0
      %8734 = vmatprep.mubr.f32.mxu0 0.0
      %v8735 = vand.u32 %v5998, 4294901760
      %8736 = vmatmul.mubr.f32.gmra.mxu0 %v8735
      %v8737 = vpop.f32.mrf.mxu0
      %v8738 = vadd.f32 %v8178, %v8737
      %v8739 = vpop.f32.mrf.mxu0
      %8740 = vmatprep.mubr.f32.mxu0 0.0
      %v8741 = vand.u32 %v6001, 4294901760
      %8742 = vmatmul.mubr.f32.gmra.mxu0 %v8741
      %v8743 = vpop.f32.mrf.mxu0
      %v8744 = vadd.f32 %v8186, %v8743
      %v8745 = vpop.f32.mrf.mxu0
      %8746 = vmatprep.mubr.f32.mxu0 0.0
      %v8747 = vand.u32 %v6004, 4294901760
      %8748 = vmatmul.mubr.f32.gmra.mxu0 %v8747
      %v8749 = vpop.f32.mrf.mxu0
      %v8750 = vadd.f32 %v8194, %v8749
      %v8751 = vpop.f32.mrf.mxu0
      %8752 = vmatprep.mubr.f32.mxu0 0.0
      %v8753 = vand.u32 %v6007, 4294901760
      %8754 = vmatmul.mubr.f32.gmra.mxu0 %v8753
      %v8755 = vpop.f32.mrf.mxu0
      %v8756 = vadd.f32 %v8202, %v8755
      %v8757 = vpop.f32.mrf.mxu0
      %8758 = vmatprep.mubr.f32.mxu0 0.0
      %v8759 = vand.u32 %v6010, 4294901760
      %8760 = vmatmul.mubr.f32.gmra.mxu0 %v8759
      %v8761 = vpop.f32.mrf.mxu0
      %v8762 = vadd.f32 %v8210, %v8761
      %v8763 = vpop.f32.mrf.mxu0
      %8764 = vmatprep.mubr.f32.mxu0 0.0
      %v8765 = vand.u32 %v6013, 4294901760
      %8766 = vmatmul.mubr.f32.gmra.mxu0 %v8765
      %v8767 = vpop.f32.mrf.mxu0
      %v8768 = vadd.f32 %v8218, %v8767
      %v8769 = vpop.f32.mrf.mxu0
      %8770 = vmatprep.mubr.f32.mxu0 0.0
      %v8771 = vand.u32 %v6016, 4294901760
      %8772 = vmatmul.mubr.f32.gmra.mxu0 %v8771
      %v8773 = vpop.f32.mrf.mxu0
      %v8774 = vadd.f32 %v8226, %v8773
      %v8775 = vpop.f32.mrf.mxu0
      %8776 = vmatprep.mubr.f32.mxu0 0.0
      %v8777 = vand.u32 %v6019, 4294901760
      %8778 = vmatmul.mubr.f32.gmra.mxu0 %v8777
      %v8779 = vpop.f32.mrf.mxu0
      %v8780 = vadd.f32 %v8234, %v8779
      %v8781 = vpop.f32.mrf.mxu0
      %8782 = vmatprep.mubr.f32.mxu0 0.0
      %v8783 = vand.u32 %v6022, 4294901760
      %8784 = vmatmul.mubr.f32.gmra.mxu0 %v8783
      %v8785 = vpop.f32.mrf.mxu0
      %v8786 = vadd.f32 %v8242, %v8785
      %v8787 = vpop.f32.mrf.mxu0
      %8788 = vmatprep.mubr.f32.mxu0 0.0
      %v8789 = vand.u32 %v6025, 4294901760
      %8790 = vmatmul.mubr.f32.gmra.mxu0 %v8789
      %v8791 = vpop.f32.mrf.mxu0
      %v8792 = vadd.f32 %v8250, %v8791
      %v8793 = vpop.f32.mrf.mxu0
      %8794 = vmatprep.mubr.f32.mxu0 0.0
      %v8795 = vand.u32 %v6028, 4294901760
      %8796 = vmatmul.mubr.f32.gmra.mxu0 %v8795
      %v8797 = vpop.f32.mrf.mxu0
      %v8798 = vadd.f32 %v8258, %v8797
      %v8799 = vpop.f32.mrf.mxu0
      %8800 = vmatprep.mubr.f32.mxu0 0.0
      %v8801 = vand.u32 %v6031, 4294901760
      %8802 = vmatmul.mubr.f32.gmra.mxu0 %v8801
      %v8803 = vpop.f32.mrf.mxu0
      %v8804 = vadd.f32 %v8266, %v8803
      %v8805 = vpop.f32.mrf.mxu0
      %8806 = vmatprep.mubr.f32.mxu0 0.0
      %v8807 = vand.u32 %v6034, 4294901760
      %8808 = vmatmul.mubr.f32.gmra.mxu0 %v8807
      %v8809 = vpop.f32.mrf.mxu0
      %v8810 = vadd.f32 %v8274, %v8809
      %v8811 = vpop.f32.mrf.mxu0
      %8812 = vmatprep.mubr.f32.mxu0 0.0
      %v8813 = vand.u32 %v6037, 4294901760
      %8814 = vmatmul.mubr.f32.gmra.mxu0 %v8813
      %v8815 = vpop.f32.mrf.mxu0
      %v8816 = vadd.f32 %v8282, %v8815
      %v8817 = vpop.f32.mrf.mxu0
      %8818 = vmatprep.mubr.f32.mxu0 0.0
      %v8819 = vand.u32 %v6040, 4294901760
      %8820 = vmatmul.mubr.f32.gmra.mxu0 %v8819
      %v8821 = vpop.f32.mrf.mxu0
      %v8822 = vadd.f32 %v8290, %v8821
      %v8823 = vpop.f32.mrf.mxu0
      %8824 = vmatprep.mubr.f32.mxu0 0.0
      %v8825 = vand.u32 %v6043, 4294901760
      %8826 = vmatmul.mubr.f32.gmra.mxu0 %v8825
      %v8827 = vpop.f32.mrf.mxu0
      %v8828 = vadd.f32 %v8298, %v8827
      %v8829 = vpop.f32.mrf.mxu0
      %8830 = vmatprep.mubr.f32.mxu0 0.0
      %v8831 = vand.u32 %v6046, 4294901760
      %8832 = vmatmul.mubr.f32.gmra.mxu0 %v8831
      %v8833 = vpop.f32.mrf.mxu0
      %v8834 = vadd.f32 %v8306, %v8833
      %v8835 = vpop.f32.mrf.mxu0
      %8836 = vmatprep.mubr.f32.mxu0 0.0
      %v8837 = vand.u32 %v6049, 4294901760
      %8838 = vmatmul.mubr.f32.gmra.mxu0 %v8837
      %v8839 = vpop.f32.mrf.mxu0
      %v8840 = vadd.f32 %v8314, %v8839
      %v8841 = vpop.f32.mrf.mxu0
      %8842 = vmatprep.mubr.f32.mxu0 0.0
      %v8843 = vand.u32 %v6052, 4294901760
      %8844 = vmatmul.mubr.f32.gmra.mxu0 %v8843
      %v8845 = vpop.f32.mrf.mxu0
      %v8846 = vadd.f32 %v8322, %v8845
      %v8847 = vpop.f32.mrf.mxu0
      %8848 = vmatprep.mubr.f32.mxu0 0.0
      %v8849 = vand.u32 %v6055, 4294901760
      %8850 = vmatmul.mubr.f32.gmra.mxu0 %v8849
      %v8851 = vpop.f32.mrf.mxu0
      %v8852 = vadd.f32 %v8330, %v8851
      %v8853 = vpop.f32.mrf.mxu0
      %8854 = vmatprep.mubr.f32.mxu0 0.0
      %v8855 = vand.u32 %v6058, 4294901760
      %8856 = vmatmul.mubr.f32.gmra.mxu0 %v8855
      %v8857 = vpop.f32.mrf.mxu0
      %v8858 = vadd.f32 %v8338, %v8857
      %v8859 = vpop.f32.mrf.mxu0
      %8860 = vmatprep.mubr.f32.mxu0 0.0
      %v8861 = vand.u32 %v6061, 4294901760
      %8862 = vmatmul.mubr.f32.gmra.mxu0 %v8861
      %v8863 = vpop.f32.mrf.mxu0
      %v8864 = vadd.f32 %v8346, %v8863
      %v8865 = vpop.f32.mrf.mxu0
      %8866 = vmatprep.mubr.f32.mxu0 0.0
      %v8867 = vand.u32 %v6064, 4294901760
      %8868 = vmatmul.mubr.f32.gmra.mxu0 %v8867
      %v8869 = vpop.f32.mrf.mxu0
      %v8870 = vadd.f32 %v8354, %v8869
      %v8871 = vpop.f32.mrf.mxu0
      %8872 = vmatprep.mubr.f32.mxu0 0.0
      %v8873 = vand.u32 %v6067, 4294901760
      %8874 = vmatmul.mubr.f32.gmra.mxu0 %v8873
      %v8875 = vpop.f32.mrf.mxu0
      %v8876 = vadd.f32 %v8362, %v8875
      %v8877 = vpop.f32.mrf.mxu0
      %8878 = vmatprep.mubr.f32.mxu0 0.0
      %v8879 = vand.u32 %v6070, 4294901760
      %8880 = vmatmul.mubr.f32.gmra.mxu0 %v8879
      %v8881 = vpop.f32.mrf.mxu0
      %v8882 = vadd.f32 %v8370, %v8881
      %v8883 = vpop.f32.mrf.mxu0
      %8884 = vmatprep.mubr.f32.mxu0 0.0
      %v8885 = vand.u32 %v6073, 4294901760
      %8886 = vmatmul.mubr.f32.gmra.mxu0 %v8885
      %v8887 = vpop.f32.mrf.mxu0
      %v8888 = vadd.f32 %v8378, %v8887
      %v8889 = vpop.f32.mrf.mxu0
      %8890 = vmatprep.mubr.f32.mxu0 0.0
      %v8891 = vand.u32 %v6076, 4294901760
      %8892 = vmatmul.mubr.f32.gmra.mxu0 %v8891
      %v8893 = vpop.f32.mrf.mxu0
      %v8894 = vadd.f32 %v8386, %v8893
      %v8895 = vpop.f32.mrf.mxu0
      %8896 = vmatprep.mubr.f32.mxu0 0.0
      %v8897 = vand.u32 %v6079, 4294901760
      %8898 = vmatmul.mubr.f32.gmra.mxu0 %v8897
      %v8899 = vpop.f32.mrf.mxu0
      %v8900 = vadd.f32 %v8394, %v8899
      %v8901 = vpop.f32.mrf.mxu0
      %8902 = vmatprep.mubr.f32.mxu0 0.0
      %v8903 = vand.u32 %v6082, 4294901760
      %8904 = vmatmul.mubr.f32.gmra.mxu0 %v8903
      %v8905 = vpop.f32.mrf.mxu0
      %v8906 = vadd.f32 %v8402, %v8905
      %v8907 = vpop.f32.mrf.mxu0
      %8908 = vmatprep.mubr.f32.mxu0 0.0
      %v8909 = vand.u32 %v6085, 4294901760
      %8910 = vmatmul.mubr.f32.gmra.mxu0 %v8909
      %v8911 = vpop.f32.mrf.mxu0
      %v8912 = vadd.f32 %v8410, %v8911
      %v8913 = vpop.f32.mrf.mxu0
      %8914 = vmatprep.mubr.f32.mxu0 0.0
      %v8915 = vand.u32 %v6088, 4294901760
      %8916 = vmatmul.mubr.f32.gmra.mxu0 %v8915
      %v8917 = vpop.f32.mrf.mxu0
      %v8918 = vadd.f32 %v8418, %v8917
      %v8919 = vpop.f32.mrf.mxu0
      %8920 = vmatprep.mubr.f32.mxu0 0.0
      %v8921 = vand.u32 %v6091, 4294901760
      %8922 = vmatmul.mubr.f32.gmra.mxu0 %v8921
      %v8923 = vpop.f32.mrf.mxu0
      %v8924 = vadd.f32 %v8426, %v8923
      %v8925 = vpop.f32.mrf.mxu0
      %8926 = vmatprep.mubr.f32.mxu0 0.0
      %v8927 = vand.u32 %v6094, 4294901760
      %8928 = vmatmul.mubr.f32.gmra.mxu0 %v8927
      %v8929 = vpop.f32.mrf.mxu0
      %v8930 = vadd.f32 %v8434, %v8929
      %v8931 = vpop.f32.mrf.mxu0
      %8932 = vmatprep.mubr.f32.mxu0 0.0
      %v8933 = vand.u32 %v6097, 4294901760
      %8934 = vmatmul.mubr.f32.gmra.mxu0 %v8933
      %v8935 = vpop.f32.mrf.mxu0
      %v8936 = vadd.f32 %v8442, %v8935
      %v8937 = vpop.f32.mrf.mxu0
      %8938 = vmatprep.mubr.f32.mxu0 0.0
      %v8939 = vand.u32 %v6100, 4294901760
      %8940 = vmatmul.mubr.f32.gmra.mxu0 %v8939
      %v8941 = vpop.f32.mrf.mxu0
      %v8942 = vadd.f32 %v8450, %v8941
      %v8943 = vpop.f32.mrf.mxu0
      %8944 = vmatprep.mubr.f32.mxu0 0.0
      %v8945 = vand.u32 %v6103, 4294901760
      %8946 = vmatmul.mubr.f32.gmra.mxu0 %v8945
      %v8947 = vpop.f32.mrf.mxu0
      %v8948 = vadd.f32 %v8458, %v8947
      %v8949 = vpop.f32.mrf.mxu0
      %8950 = vmatprep.mubr.f32.mxu0 0.0
      %v8951 = vand.u32 %v6106, 4294901760
      %8952 = vmatmul.mubr.f32.gmra.mxu0 %v8951
      %v8953 = vpop.f32.mrf.mxu0
      %v8954 = vadd.f32 %v8466, %v8953
      %v8955 = vpop.f32.mrf.mxu0
      %8956 = vdwg.mxu0
      %8957 = vmatprep.subr.mxu0 0.0
      %8958 = vmatpush1.msra.mxu0 0.0
      %8959 = vmatprep.subr.mxu0 0.0
      %8960 = vmatpush1.msra.mxu0 0.0
      %8961 = vmatprep.subr.mxu0 0.0
      %8962 = vmatpush1.msra.mxu0 0.0
      %8963 = vmatprep.subr.mxu0 0.0
      %v8964 = vand.u32 %v5915, 4294901760
      %8965 = vmatpush1.msra.mxu0 %v8964
      %8966 = vmatprep.subr.mxu0 0.0
      %v8967 = vand.u32 %v5914, 4294901760
      %8968 = vmatpush1.msra.mxu0 %v8967
      %8969 = vmatprep.subr.mxu0 0.0
      %v8970 = vand.u32 %v5913, 4294901760
      %8971 = vmatpush1.msra.mxu0 %v8970
      %8972 = vmatprep.subr.mxu0 0.0
      %v8973 = vand.u32 %v5912, 4294901760
      %8974 = vmatpush1.msra.mxu0 %v8973
      %8975 = vmatprep.subr.mxu0 0.0
      %v8976 = vand.u32 %v5911, 4294901760
      %8977 = vmatpush1.msra.mxu0 %v8976
      %8978 = vmatprep.subr.mxu0 0.0
      %v8979 = vand.u32 %v5910, 4294901760
      %8980 = vmatpush1.msra.mxu0 %v8979
      %8981 = vmatprep.subr.mxu0 0.0
      %v8982 = vand.u32 %v5909, 4294901760
      %8983 = vmatpush1.msra.mxu0 %v8982
      %8984 = vmatprep.subr.mxu0 0.0
      %v8985 = vand.u32 %v5908, 4294901760
      %8986 = vmatpush1.msra.mxu0 %v8985
      %8987 = vmatprep.subr.mxu0 0.0
      %v8988 = vand.u32 %v5907, 4294901760
      %8989 = vmatpush1.msra.mxu0 %v8988
      %8990 = vmatprep.subr.mxu0 0.0
      %v8991 = vand.u32 %v5906, 4294901760
      %8992 = vmatpush1.msra.mxu0 %v8991
      %8993 = vmatprep.subr.mxu0 0.0
      %v8994 = vand.u32 %v5905, 4294901760
      %8995 = vmatpush1.msra.mxu0 %v8994
      %8996 = vmatprep.subr.mxu0 0.0
      %v8997 = vand.u32 %v5904, 4294901760
      %8998 = vmatpush1.msra.mxu0 %v8997
      %8999 = vmatprep.subr.mxu0 0.0
      %v9000 = vand.u32 %v5903, 4294901760
      %9001 = vmatpush1.msra.mxu0 %v9000
      %9002 = vmatprep.subr.mxu0 0.0
      %9003 = vmatpush2.msra.mxu0 0.0
      %9004 = vmatprep.subr.mxu0 0.0
      %9005 = vmatpush2.msra.mxu0 0.0
      %9006 = vmatprep.subr.mxu0 0.0
      %9007 = vmatpush2.msra.mxu0 0.0
      %9008 = vmatprep.subr.mxu0 0.0
      %9009 = vmatpush2.msra.mxu0 0.0
      %9010 = vmatprep.subr.mxu0 0.0
      %9011 = vmatpush2.msra.mxu0 0.0
      %9012 = vmatprep.subr.mxu0 0.0
      %9013 = vmatpush2.msra.mxu0 0.0
      %9014 = vmatprep.subr.mxu0 0.0
      %9015 = vmatpush2.msra.mxu0 0.0
      %9016 = vmatprep.subr.mxu0 0.0
      %9017 = vmatpush2.msra.mxu0 0.0
      %9018 = vmatprep.subr.mxu0 0.0
      %9019 = vmatpush2.msra.mxu0 0.0
      %9020 = vmatprep.subr.mxu0 0.0
      %9021 = vmatpush2.msra.mxu0 0.0
      %9022 = vmatprep.subr.mxu0 0.0
      %9023 = vmatpush2.msra.mxu0 0.0
      %9024 = vmatprep.subr.mxu0 0.0
      %9025 = vmatpush2.msra.mxu0 0.0
      %9026 = vmatprep.subr.mxu0 0.0
      %9027 = vmatpush2.msra.mxu0 0.0
      %9028 = vmatprep.subr.mxu0 0.0
      %9029 = vmatpush2.msra.mxu0 0.0
      %9030 = vmatprep.subr.mxu0 0.0
      %9031 = vmatpush2.msra.mxu0 0.0
      %9032 = vmatprep.subr.mxu0 0.0
      %9033 = vmatpush2.msra.mxu0 0.0
      %9034 = vmatprep.mubr.f32.mxu0 0.0
      %v9035 = vand.u32 %v5917, 4294901760
      %9036 = vmatmul.mubr.f32.gmra.mxu0 %v9035
      %v9037 = vpop.f32.mrf.mxu0
      %v9038 = vadd.f32 %v8576, %v9037
      %v9039 = vpop.f32.mrf.mxu0
      %9040 = vmatprep.mubr.f32.mxu0 0.0
      %v9041 = vand.u32 %v5920, 4294901760
      %9042 = vmatmul.mubr.f32.gmra.mxu0 %v9041
      %v9043 = vpop.f32.mrf.mxu0
      %v9044 = vadd.f32 %v8582, %v9043
      %v9045 = vpop.f32.mrf.mxu0
      %9046 = vmatprep.mubr.f32.mxu0 0.0
      %v9047 = vand.u32 %v5923, 4294901760
      %9048 = vmatmul.mubr.f32.gmra.mxu0 %v9047
      %v9049 = vpop.f32.mrf.mxu0
      %v9050 = vadd.f32 %v8588, %v9049
      %v9051 = vpop.f32.mrf.mxu0
      %9052 = vmatprep.mubr.f32.mxu0 0.0
      %v9053 = vand.u32 %v5926, 4294901760
      %9054 = vmatmul.mubr.f32.gmra.mxu0 %v9053
      %v9055 = vpop.f32.mrf.mxu0
      %v9056 = vadd.f32 %v8594, %v9055
      %v9057 = vpop.f32.mrf.mxu0
      %9058 = vmatprep.mubr.f32.mxu0 0.0
      %v9059 = vand.u32 %v5929, 4294901760
      %9060 = vmatmul.mubr.f32.gmra.mxu0 %v9059
      %v9061 = vpop.f32.mrf.mxu0
      %v9062 = vadd.f32 %v8600, %v9061
      %v9063 = vpop.f32.mrf.mxu0
      %9064 = vmatprep.mubr.f32.mxu0 0.0
      %v9065 = vand.u32 %v5932, 4294901760
      %9066 = vmatmul.mubr.f32.gmra.mxu0 %v9065
      %v9067 = vpop.f32.mrf.mxu0
      %v9068 = vadd.f32 %v8606, %v9067
      %v9069 = vpop.f32.mrf.mxu0
      %9070 = vmatprep.mubr.f32.mxu0 0.0
      %v9071 = vand.u32 %v5935, 4294901760
      %9072 = vmatmul.mubr.f32.gmra.mxu0 %v9071
      %v9073 = vpop.f32.mrf.mxu0
      %v9074 = vadd.f32 %v8612, %v9073
      %v9075 = vpop.f32.mrf.mxu0
      %9076 = vmatprep.mubr.f32.mxu0 0.0
      %v9077 = vand.u32 %v5938, 4294901760
      %9078 = vmatmul.mubr.f32.gmra.mxu0 %v9077
      %v9079 = vpop.f32.mrf.mxu0
      %v9080 = vadd.f32 %v8618, %v9079
      %v9081 = vpop.f32.mrf.mxu0
      %9082 = vmatprep.mubr.f32.mxu0 0.0
      %v9083 = vand.u32 %v5941, 4294901760
      %9084 = vmatmul.mubr.f32.gmra.mxu0 %v9083
      %v9085 = vpop.f32.mrf.mxu0
      %v9086 = vadd.f32 %v8624, %v9085
      %v9087 = vpop.f32.mrf.mxu0
      %9088 = vmatprep.mubr.f32.mxu0 0.0
      %v9089 = vand.u32 %v5944, 4294901760
      %9090 = vmatmul.mubr.f32.gmra.mxu0 %v9089
      %v9091 = vpop.f32.mrf.mxu0
      %v9092 = vadd.f32 %v8630, %v9091
      %v9093 = vpop.f32.mrf.mxu0
      %9094 = vmatprep.mubr.f32.mxu0 0.0
      %v9095 = vand.u32 %v5947, 4294901760
      %9096 = vmatmul.mubr.f32.gmra.mxu0 %v9095
      %v9097 = vpop.f32.mrf.mxu0
      %v9098 = vadd.f32 %v8636, %v9097
      %v9099 = vpop.f32.mrf.mxu0
      %9100 = vmatprep.mubr.f32.mxu0 0.0
      %v9101 = vand.u32 %v5950, 4294901760
      %9102 = vmatmul.mubr.f32.gmra.mxu0 %v9101
      %v9103 = vpop.f32.mrf.mxu0
      %v9104 = vadd.f32 %v8642, %v9103
      %v9105 = vpop.f32.mrf.mxu0
      %9106 = vmatprep.mubr.f32.mxu0 0.0
      %v9107 = vand.u32 %v5953, 4294901760
      %9108 = vmatmul.mubr.f32.gmra.mxu0 %v9107
      %v9109 = vpop.f32.mrf.mxu0
      %v9110 = vadd.f32 %v8648, %v9109
      %v9111 = vpop.f32.mrf.mxu0
      %9112 = vmatprep.mubr.f32.mxu0 0.0
      %v9113 = vand.u32 %v5956, 4294901760
      %9114 = vmatmul.mubr.f32.gmra.mxu0 %v9113
      %v9115 = vpop.f32.mrf.mxu0
      %v9116 = vadd.f32 %v8654, %v9115
      %v9117 = vpop.f32.mrf.mxu0
      %9118 = vmatprep.mubr.f32.mxu0 0.0
      %v9119 = vand.u32 %v5959, 4294901760
      %9120 = vmatmul.mubr.f32.gmra.mxu0 %v9119
      %v9121 = vpop.f32.mrf.mxu0
      %v9122 = vadd.f32 %v8660, %v9121
      %v9123 = vpop.f32.mrf.mxu0
      %9124 = vmatprep.mubr.f32.mxu0 0.0
      %v9125 = vand.u32 %v5962, 4294901760
      %9126 = vmatmul.mubr.f32.gmra.mxu0 %v9125
      %v9127 = vpop.f32.mrf.mxu0
      %v9128 = vadd.f32 %v8666, %v9127
      %v9129 = vpop.f32.mrf.mxu0
      %9130 = vmatprep.mubr.f32.mxu0 0.0
      %v9131 = vand.u32 %v5965, 4294901760
      %9132 = vmatmul.mubr.f32.gmra.mxu0 %v9131
      %v9133 = vpop.f32.mrf.mxu0
      %v9134 = vadd.f32 %v8672, %v9133
      %v9135 = vpop.f32.mrf.mxu0
      %9136 = vmatprep.mubr.f32.mxu0 0.0
      %v9137 = vand.u32 %v5968, 4294901760
      %9138 = vmatmul.mubr.f32.gmra.mxu0 %v9137
      %v9139 = vpop.f32.mrf.mxu0
      %v9140 = vadd.f32 %v8678, %v9139
      %v9141 = vpop.f32.mrf.mxu0
      %9142 = vmatprep.mubr.f32.mxu0 0.0
      %v9143 = vand.u32 %v5971, 4294901760
      %9144 = vmatmul.mubr.f32.gmra.mxu0 %v9143
      %v9145 = vpop.f32.mrf.mxu0
      %v9146 = vadd.f32 %v8684, %v9145
      %v9147 = vpop.f32.mrf.mxu0
      %9148 = vmatprep.mubr.f32.mxu0 0.0
      %v9149 = vand.u32 %v5974, 4294901760
      %9150 = vmatmul.mubr.f32.gmra.mxu0 %v9149
      %v9151 = vpop.f32.mrf.mxu0
      %v9152 = vadd.f32 %v8690, %v9151
      %v9153 = vpop.f32.mrf.mxu0
      %9154 = vmatprep.mubr.f32.mxu0 0.0
      %v9155 = vand.u32 %v5977, 4294901760
      %9156 = vmatmul.mubr.f32.gmra.mxu0 %v9155
      %v9157 = vpop.f32.mrf.mxu0
      %v9158 = vadd.f32 %v8696, %v9157
      %v9159 = vpop.f32.mrf.mxu0
      %9160 = vmatprep.mubr.f32.mxu0 0.0
      %v9161 = vand.u32 %v5980, 4294901760
      %9162 = vmatmul.mubr.f32.gmra.mxu0 %v9161
      %v9163 = vpop.f32.mrf.mxu0
      %v9164 = vadd.f32 %v8702, %v9163
      %v9165 = vpop.f32.mrf.mxu0
      %9166 = vmatprep.mubr.f32.mxu0 0.0
      %v9167 = vand.u32 %v5983, 4294901760
      %9168 = vmatmul.mubr.f32.gmra.mxu0 %v9167
      %v9169 = vpop.f32.mrf.mxu0
      %v9170 = vadd.f32 %v8708, %v9169
      %v9171 = vpop.f32.mrf.mxu0
      %9172 = vmatprep.mubr.f32.mxu0 0.0
      %v9173 = vand.u32 %v5986, 4294901760
      %9174 = vmatmul.mubr.f32.gmra.mxu0 %v9173
      %v9175 = vpop.f32.mrf.mxu0
      %v9176 = vadd.f32 %v8714, %v9175
      %v9177 = vpop.f32.mrf.mxu0
      %9178 = vmatprep.mubr.f32.mxu0 0.0
      %v9179 = vand.u32 %v5989, 4294901760
      %9180 = vmatmul.mubr.f32.gmra.mxu0 %v9179
      %v9181 = vpop.f32.mrf.mxu0
      %v9182 = vadd.f32 %v8720, %v9181
      %v9183 = vpop.f32.mrf.mxu0
      %9184 = vmatprep.mubr.f32.mxu0 0.0
      %v9185 = vand.u32 %v5992, 4294901760
      %9186 = vmatmul.mubr.f32.gmra.mxu0 %v9185
      %v9187 = vpop.f32.mrf.mxu0
      %v9188 = vadd.f32 %v8726, %v9187
      %v9189 = vpop.f32.mrf.mxu0
      %9190 = vmatprep.mubr.f32.mxu0 0.0
      %v9191 = vand.u32 %v5995, 4294901760
      %9192 = vmatmul.mubr.f32.gmra.mxu0 %v9191
      %v9193 = vpop.f32.mrf.mxu0
      %v9194 = vadd.f32 %v8732, %v9193
      %v9195 = vpop.f32.mrf.mxu0
      %9196 = vmatprep.mubr.f32.mxu0 0.0
      %v9197 = vand.u32 %v5998, 4294901760
      %9198 = vmatmul.mubr.f32.gmra.mxu0 %v9197
      %v9199 = vpop.f32.mrf.mxu0
      %v9200 = vadd.f32 %v8738, %v9199
      %v9201 = vpop.f32.mrf.mxu0
      %9202 = vmatprep.mubr.f32.mxu0 0.0
      %v9203 = vand.u32 %v6001, 4294901760
      %9204 = vmatmul.mubr.f32.gmra.mxu0 %v9203
      %v9205 = vpop.f32.mrf.mxu0
      %v9206 = vadd.f32 %v8744, %v9205
      %v9207 = vpop.f32.mrf.mxu0
      %9208 = vmatprep.mubr.f32.mxu0 0.0
      %v9209 = vand.u32 %v6004, 4294901760
      %9210 = vmatmul.mubr.f32.gmra.mxu0 %v9209
      %v9211 = vpop.f32.mrf.mxu0
      %v9212 = vadd.f32 %v8750, %v9211
      %v9213 = vpop.f32.mrf.mxu0
      %9214 = vmatprep.mubr.f32.mxu0 0.0
      %v9215 = vand.u32 %v6007, 4294901760
      %9216 = vmatmul.mubr.f32.gmra.mxu0 %v9215
      %v9217 = vpop.f32.mrf.mxu0
      %v9218 = vadd.f32 %v8756, %v9217
      %v9219 = vpop.f32.mrf.mxu0
      %9220 = vmatprep.mubr.f32.mxu0 0.0
      %v9221 = vand.u32 %v6010, 4294901760
      %9222 = vmatmul.mubr.f32.gmra.mxu0 %v9221
      %v9223 = vpop.f32.mrf.mxu0
      %v9224 = vadd.f32 %v8762, %v9223
      %v9225 = vpop.f32.mrf.mxu0
      %9226 = vmatprep.mubr.f32.mxu0 0.0
      %v9227 = vand.u32 %v6013, 4294901760
      %9228 = vmatmul.mubr.f32.gmra.mxu0 %v9227
      %v9229 = vpop.f32.mrf.mxu0
      %v9230 = vadd.f32 %v8768, %v9229
      %v9231 = vpop.f32.mrf.mxu0
      %9232 = vmatprep.mubr.f32.mxu0 0.0
      %v9233 = vand.u32 %v6016, 4294901760
      %9234 = vmatmul.mubr.f32.gmra.mxu0 %v9233
      %v9235 = vpop.f32.mrf.mxu0
      %v9236 = vadd.f32 %v8774, %v9235
      %v9237 = vpop.f32.mrf.mxu0
      %9238 = vmatprep.mubr.f32.mxu0 0.0
      %v9239 = vand.u32 %v6019, 4294901760
      %9240 = vmatmul.mubr.f32.gmra.mxu0 %v9239
      %v9241 = vpop.f32.mrf.mxu0
      %v9242 = vadd.f32 %v8780, %v9241
      %v9243 = vpop.f32.mrf.mxu0
      %9244 = vmatprep.mubr.f32.mxu0 0.0
      %v9245 = vand.u32 %v6022, 4294901760
      %9246 = vmatmul.mubr.f32.gmra.mxu0 %v9245
      %v9247 = vpop.f32.mrf.mxu0
      %v9248 = vadd.f32 %v8786, %v9247
      %v9249 = vpop.f32.mrf.mxu0
      %9250 = vmatprep.mubr.f32.mxu0 0.0
      %v9251 = vand.u32 %v6025, 4294901760
      %9252 = vmatmul.mubr.f32.gmra.mxu0 %v9251
      %v9253 = vpop.f32.mrf.mxu0
      %v9254 = vadd.f32 %v8792, %v9253
      %v9255 = vpop.f32.mrf.mxu0
      %9256 = vmatprep.mubr.f32.mxu0 0.0
      %v9257 = vand.u32 %v6028, 4294901760
      %9258 = vmatmul.mubr.f32.gmra.mxu0 %v9257
      %v9259 = vpop.f32.mrf.mxu0
      %v9260 = vadd.f32 %v8798, %v9259
      %v9261 = vpop.f32.mrf.mxu0
      %9262 = vmatprep.mubr.f32.mxu0 0.0
      %v9263 = vand.u32 %v6031, 4294901760
      %9264 = vmatmul.mubr.f32.gmra.mxu0 %v9263
      %v9265 = vpop.f32.mrf.mxu0
      %v9266 = vadd.f32 %v8804, %v9265
      %v9267 = vpop.f32.mrf.mxu0
      %9268 = vmatprep.mubr.f32.mxu0 0.0
      %v9269 = vand.u32 %v6034, 4294901760
      %9270 = vmatmul.mubr.f32.gmra.mxu0 %v9269
      %v9271 = vpop.f32.mrf.mxu0
      %v9272 = vadd.f32 %v8810, %v9271
      %v9273 = vpop.f32.mrf.mxu0
      %9274 = vmatprep.mubr.f32.mxu0 0.0
      %v9275 = vand.u32 %v6037, 4294901760
      %9276 = vmatmul.mubr.f32.gmra.mxu0 %v9275
      %v9277 = vpop.f32.mrf.mxu0
      %v9278 = vadd.f32 %v8816, %v9277
      %v9279 = vpop.f32.mrf.mxu0
      %9280 = vmatprep.mubr.f32.mxu0 0.0
      %v9281 = vand.u32 %v6040, 4294901760
      %9282 = vmatmul.mubr.f32.gmra.mxu0 %v9281
      %v9283 = vpop.f32.mrf.mxu0
      %v9284 = vadd.f32 %v8822, %v9283
      %v9285 = vpop.f32.mrf.mxu0
      %9286 = vmatprep.mubr.f32.mxu0 0.0
      %v9287 = vand.u32 %v6043, 4294901760
      %9288 = vmatmul.mubr.f32.gmra.mxu0 %v9287
      %v9289 = vpop.f32.mrf.mxu0
      %v9290 = vadd.f32 %v8828, %v9289
      %v9291 = vpop.f32.mrf.mxu0
      %9292 = vmatprep.mubr.f32.mxu0 0.0
      %v9293 = vand.u32 %v6046, 4294901760
      %9294 = vmatmul.mubr.f32.gmra.mxu0 %v9293
      %v9295 = vpop.f32.mrf.mxu0
      %v9296 = vadd.f32 %v8834, %v9295
      %v9297 = vpop.f32.mrf.mxu0
      %9298 = vmatprep.mubr.f32.mxu0 0.0
      %v9299 = vand.u32 %v6049, 4294901760
      %9300 = vmatmul.mubr.f32.gmra.mxu0 %v9299
      %v9301 = vpop.f32.mrf.mxu0
      %v9302 = vadd.f32 %v8840, %v9301
      %v9303 = vpop.f32.mrf.mxu0
      %9304 = vmatprep.mubr.f32.mxu0 0.0
      %v9305 = vand.u32 %v6052, 4294901760
      %9306 = vmatmul.mubr.f32.gmra.mxu0 %v9305
      %v9307 = vpop.f32.mrf.mxu0
      %v9308 = vadd.f32 %v8846, %v9307
      %v9309 = vpop.f32.mrf.mxu0
      %9310 = vmatprep.mubr.f32.mxu0 0.0
      %v9311 = vand.u32 %v6055, 4294901760
      %9312 = vmatmul.mubr.f32.gmra.mxu0 %v9311
      %v9313 = vpop.f32.mrf.mxu0
      %v9314 = vadd.f32 %v8852, %v9313
      %v9315 = vpop.f32.mrf.mxu0
      %9316 = vmatprep.mubr.f32.mxu0 0.0
      %v9317 = vand.u32 %v6058, 4294901760
      %9318 = vmatmul.mubr.f32.gmra.mxu0 %v9317
      %v9319 = vpop.f32.mrf.mxu0
      %v9320 = vadd.f32 %v8858, %v9319
      %v9321 = vpop.f32.mrf.mxu0
      %9322 = vmatprep.mubr.f32.mxu0 0.0
      %v9323 = vand.u32 %v6061, 4294901760
      %9324 = vmatmul.mubr.f32.gmra.mxu0 %v9323
      %v9325 = vpop.f32.mrf.mxu0
      %v9326 = vadd.f32 %v8864, %v9325
      %v9327 = vpop.f32.mrf.mxu0
      %9328 = vmatprep.mubr.f32.mxu0 0.0
      %v9329 = vand.u32 %v6064, 4294901760
      %9330 = vmatmul.mubr.f32.gmra.mxu0 %v9329
      %v9331 = vpop.f32.mrf.mxu0
      %v9332 = vadd.f32 %v8870, %v9331
      %v9333 = vpop.f32.mrf.mxu0
      %9334 = vmatprep.mubr.f32.mxu0 0.0
      %v9335 = vand.u32 %v6067, 4294901760
      %9336 = vmatmul.mubr.f32.gmra.mxu0 %v9335
      %v9337 = vpop.f32.mrf.mxu0
      %v9338 = vadd.f32 %v8876, %v9337
      %v9339 = vpop.f32.mrf.mxu0
      %9340 = vmatprep.mubr.f32.mxu0 0.0
      %v9341 = vand.u32 %v6070, 4294901760
      %9342 = vmatmul.mubr.f32.gmra.mxu0 %v9341
      %v9343 = vpop.f32.mrf.mxu0
      %v9344 = vadd.f32 %v8882, %v9343
      %v9345 = vpop.f32.mrf.mxu0
      %9346 = vmatprep.mubr.f32.mxu0 0.0
      %v9347 = vand.u32 %v6073, 4294901760
      %9348 = vmatmul.mubr.f32.gmra.mxu0 %v9347
      %v9349 = vpop.f32.mrf.mxu0
      %v9350 = vadd.f32 %v8888, %v9349
      %v9351 = vpop.f32.mrf.mxu0
      %9352 = vmatprep.mubr.f32.mxu0 0.0
      %v9353 = vand.u32 %v6076, 4294901760
      %9354 = vmatmul.mubr.f32.gmra.mxu0 %v9353
      %v9355 = vpop.f32.mrf.mxu0
      %v9356 = vadd.f32 %v8894, %v9355
      %v9357 = vpop.f32.mrf.mxu0
      %9358 = vmatprep.mubr.f32.mxu0 0.0
      %v9359 = vand.u32 %v6079, 4294901760
      %9360 = vmatmul.mubr.f32.gmra.mxu0 %v9359
      %v9361 = vpop.f32.mrf.mxu0
      %v9362 = vadd.f32 %v8900, %v9361
      %v9363 = vpop.f32.mrf.mxu0
      %9364 = vmatprep.mubr.f32.mxu0 0.0
      %v9365 = vand.u32 %v6082, 4294901760
      %9366 = vmatmul.mubr.f32.gmra.mxu0 %v9365
      %v9367 = vpop.f32.mrf.mxu0
      %v9368 = vadd.f32 %v8906, %v9367
      %v9369 = vpop.f32.mrf.mxu0
      %9370 = vmatprep.mubr.f32.mxu0 0.0
      %v9371 = vand.u32 %v6085, 4294901760
      %9372 = vmatmul.mubr.f32.gmra.mxu0 %v9371
      %v9373 = vpop.f32.mrf.mxu0
      %v9374 = vadd.f32 %v8912, %v9373
      %v9375 = vpop.f32.mrf.mxu0
      %9376 = vmatprep.mubr.f32.mxu0 0.0
      %v9377 = vand.u32 %v6088, 4294901760
      %9378 = vmatmul.mubr.f32.gmra.mxu0 %v9377
      %v9379 = vpop.f32.mrf.mxu0
      %v9380 = vadd.f32 %v8918, %v9379
      %v9381 = vpop.f32.mrf.mxu0
      %9382 = vmatprep.mubr.f32.mxu0 0.0
      %v9383 = vand.u32 %v6091, 4294901760
      %9384 = vmatmul.mubr.f32.gmra.mxu0 %v9383
      %v9385 = vpop.f32.mrf.mxu0
      %v9386 = vadd.f32 %v8924, %v9385
      %v9387 = vpop.f32.mrf.mxu0
      %9388 = vmatprep.mubr.f32.mxu0 0.0
      %v9389 = vand.u32 %v6094, 4294901760
      %9390 = vmatmul.mubr.f32.gmra.mxu0 %v9389
      %v9391 = vpop.f32.mrf.mxu0
      %v9392 = vadd.f32 %v8930, %v9391
      %v9393 = vpop.f32.mrf.mxu0
      %9394 = vmatprep.mubr.f32.mxu0 0.0
      %v9395 = vand.u32 %v6097, 4294901760
      %9396 = vmatmul.mubr.f32.gmra.mxu0 %v9395
      %v9397 = vpop.f32.mrf.mxu0
      %v9398 = vadd.f32 %v8936, %v9397
      %v9399 = vpop.f32.mrf.mxu0
      %9400 = vmatprep.mubr.f32.mxu0 0.0
      %v9401 = vand.u32 %v6100, 4294901760
      %9402 = vmatmul.mubr.f32.gmra.mxu0 %v9401
      %v9403 = vpop.f32.mrf.mxu0
      %v9404 = vadd.f32 %v8942, %v9403
      %v9405 = vpop.f32.mrf.mxu0
      %9406 = vmatprep.mubr.f32.mxu0 0.0
      %v9407 = vand.u32 %v6103, 4294901760
      %9408 = vmatmul.mubr.f32.gmra.mxu0 %v9407
      %v9409 = vpop.f32.mrf.mxu0
      %v9410 = vadd.f32 %v8948, %v9409
      %v9411 = vpop.f32.mrf.mxu0
      %9412 = vmatprep.mubr.f32.mxu0 0.0
      %v9413 = vand.u32 %v6106, 4294901760
      %9414 = vmatmul.mubr.f32.gmra.mxu0 %v9413
      %v9415 = vpop.f32.mrf.mxu0
      %v9416 = vadd.f32 %v8954, %v9415
      %v9417 = vpop.f32.mrf.mxu0
      %9418 = vdwg.mxu0
      %9419 = vst.msk [vmem:[%s234] sm:$0xff] %vm307, %v9038
      %9420 = vst.msk [vmem:[%s234 + $0x8] sm:$0xff] %vm307, %v9044
      %9421 = vst.msk [vmem:[%s234 + $0x10] sm:$0xff] %vm307, %v9050
      %9422 = vst.msk [vmem:[%s234 + $0x18] sm:$0xff] %vm307, %v9056
      %9423 = vst.msk [vmem:[%s234 + $0x20] sm:$0xff] %vm307, %v9062
      %9424 = vst.msk [vmem:[%s234 + $0x28] sm:$0xff] %vm307, %v9068
      %9425 = vst.msk [vmem:[%s234 + $0x30] sm:$0xff] %vm307, %v9074
      %9426 = vst.msk [vmem:[%s234 + $0x38] sm:$0xff] %vm307, %v9080
      %9427 = vst.msk [vmem:[%s234 + $0x40] sm:$0xff] %vm307, %v9086
      %9428 = vst.msk [vmem:[%s234 + $0x48] sm:$0xff] %vm307, %v9092
      %9429 = vst.msk [vmem:[%s234 + $0x50] sm:$0xff] %vm307, %v9098
      %9430 = vst.msk [vmem:[%s234 + $0x58] sm:$0xff] %vm307, %v9104
      %9431 = vst.msk [vmem:[%s234 + $0x60] sm:$0xff] %vm307, %v9110
      %9432 = vst.msk [vmem:[%s234 + $0x68] sm:$0xff] %vm307, %v9116
      %9433 = vst.msk [vmem:[%s234 + $0x70] sm:$0xff] %vm307, %v9122
      %9434 = vst.msk [vmem:[%s234 + $0x78] sm:$0xff] %vm307, %v9128
      %9435 = vst.msk [vmem:[%s234 + $0x80] sm:$0xff] %vm307, %v9134
      %9436 = vst.msk [vmem:[%s234 + $0x88] sm:$0xff] %vm307, %v9140
      %9437 = vst.msk [vmem:[%s234 + $0x90] sm:$0xff] %vm307, %v9146
      %9438 = vst.msk [vmem:[%s234 + $0x98] sm:$0xff] %vm307, %v9152
      %9439 = vst.msk [vmem:[%s234 + $0xa0] sm:$0xff] %vm307, %v9158
      %9440 = vst.msk [vmem:[%s234 + $0xa8] sm:$0xff] %vm307, %v9164
      %9441 = vst.msk [vmem:[%s234 + $0xb0] sm:$0xff] %vm307, %v9170
      %9442 = vst.msk [vmem:[%s234 + $0xb8] sm:$0xff] %vm307, %v9176
      %9443 = vst.msk [vmem:[%s234 + $0xc0] sm:$0xff] %vm307, %v9182
      %9444 = vst.msk [vmem:[%s234 + $0xc8] sm:$0xff] %vm307, %v9188
      %9445 = vst.msk [vmem:[%s234 + $0xd0] sm:$0xff] %vm307, %v9194
      %9446 = vst.msk [vmem:[%s234 + $0xd8] sm:$0xff] %vm307, %v9200
      %9447 = vst.msk [vmem:[%s234 + $0xe0] sm:$0xff] %vm307, %v9206
      %9448 = vst.msk [vmem:[%s234 + $0xe8] sm:$0xff] %vm307, %v9212
      %9449 = vst.msk [vmem:[%s234 + $0xf0] sm:$0xff] %vm307, %v9218
      %9450 = vst.msk [vmem:[%s234 + $0xf8] sm:$0xff] %vm307, %v9224
      %9451 = vst.msk [vmem:[%s234 + $0x100] sm:$0xff] %vm307, %v9230
      %9452 = vst.msk [vmem:[%s234 + $0x108] sm:$0xff] %vm307, %v9236
      %9453 = vst.msk [vmem:[%s234 + $0x110] sm:$0xff] %vm307, %v9242
      %9454 = vst.msk [vmem:[%s234 + $0x118] sm:$0xff] %vm307, %v9248
      %9455 = vst.msk [vmem:[%s234 + $0x120] sm:$0xff] %vm307, %v9254
      %9456 = vst.msk [vmem:[%s234 + $0x128] sm:$0xff] %vm307, %v9260
      %9457 = vst.msk [vmem:[%s234 + $0x130] sm:$0xff] %vm307, %v9266
      %9458 = vst.msk [vmem:[%s234 + $0x138] sm:$0xff] %vm307, %v9272
      %9459 = vst.msk [vmem:[%s234 + $0x140] sm:$0xff] %vm307, %v9278
      %9460 = vst.msk [vmem:[%s234 + $0x148] sm:$0xff] %vm307, %v9284
      %9461 = vst.msk [vmem:[%s234 + $0x150] sm:$0xff] %vm307, %v9290
      %9462 = vst.msk [vmem:[%s234 + $0x158] sm:$0xff] %vm307, %v9296
      %9463 = vst.msk [vmem:[%s234 + $0x160] sm:$0xff] %vm307, %v9302
      %9464 = vst.msk [vmem:[%s234 + $0x168] sm:$0xff] %vm307, %v9308
      %9465 = vst.msk [vmem:[%s234 + $0x170] sm:$0xff] %vm307, %v9314
      %9466 = vst.msk [vmem:[%s234 + $0x178] sm:$0xff] %vm307, %v9320
      %9467 = vst.msk [vmem:[%s234 + $0x180] sm:$0xff] %vm307, %v9326
      %9468 = vst.msk [vmem:[%s234 + $0x188] sm:$0xff] %vm307, %v9332
      %9469 = vst.msk [vmem:[%s234 + $0x190] sm:$0xff] %vm307, %v9338
      %9470 = vst.msk [vmem:[%s234 + $0x198] sm:$0xff] %vm307, %v9344
      %9471 = vst.msk [vmem:[%s234 + $0x1a0] sm:$0xff] %vm307, %v9350
      %9472 = vst.msk [vmem:[%s234 + $0x1a8] sm:$0xff] %vm307, %v9356
      %9473 = vst.msk [vmem:[%s234 + $0x1b0] sm:$0xff] %vm307, %v9362
      %9474 = vst.msk [vmem:[%s234 + $0x1b8] sm:$0xff] %vm307, %v9368
      %9475 = vst.msk [vmem:[%s234 + $0x1c0] sm:$0xff] %vm307, %v9374
      %9476 = vst.msk [vmem:[%s234 + $0x1c8] sm:$0xff] %vm307, %v9380
      %9477 = vst.msk [vmem:[%s234 + $0x1d0] sm:$0xff] %vm307, %v9386
      %9478 = vst.msk [vmem:[%s234 + $0x1d8] sm:$0xff] %vm307, %v9392
      %9479 = vst.msk [vmem:[%s234 + $0x1e0] sm:$0xff] %vm307, %v9398
      %9480 = vst.msk [vmem:[%s234 + $0x1e8] sm:$0xff] %vm307, %v9404
      %9481 = vst.msk [vmem:[%s234 + $0x1f0] sm:$0xff] %vm307, %v9410
      %9482 = vst.msk [vmem:[%s234 + $0x1f8] sm:$0xff] %vm307, %v9416
      %s9483 = smul.u32 64, %s17
      %p9484 = scmp.lt.s32.totalorder %s9483, 255
      %s9485 = scalar_select %p9484, %s9483, 255
      %s9486 = smul.addr %s9485, 8
      %s9487 = scalar_lea.vmem %s4, %s9486
      %s9488 = smul.u32 64, %s17
      %p9489 = scmp.lt.s32.totalorder %s9488, 255
      %s9490 = scalar_select %p9489, %s9488, 255
      %s9491 = smul.addr %s9490, 8
      %s9492 = scalar_lea.vmem %s5, %s9491
      // Predicated region
      $region37: #{tpu_custom_call.1} parent=35 // pred_check
        %p9493 = pneg %p124
      $region38: #{tpu_custom_call.1} parent=35 // pred_check_branch
        %9495 = sbr.rel (%p9493) target = $region40
      $region39: #{tpu_custom_call.1} parent=35 // pred_region
        %s9496 = smul.u32 64, %s17
      $region40: #{tpu_custom_call.1} parent=35 // pred_fallthru
        _
      // Predicated region
      $region41: #{tpu_custom_call.1} parent=35 // pred_check
        %p9497 = pneg %p150
      $region42: #{tpu_custom_call.1} parent=35 // pred_check_branch
        %9499 = sbr.rel (%p9497) target = $region44
      $region43: #{tpu_custom_call.1} parent=35 // pred_region
        %s9500 = smul.u32 64, %s17
      $region44: #{tpu_custom_call.1} parent=35 // pred_fallthru
        _
    $region36: #{tpu_custom_call.1} parent=5 // pred_fallthru
      _
    %p9501 = scmp.le.s32.totalorder 2, %s12
    // Predicated region
    $region45: #{tpu_custom_call.1} parent=5 // pred_check
      %p9502 = pneg %p9501
    $region46: #{tpu_custom_call.1} parent=5 // pred_check_branch
      %9504 = sbr.rel (%p9502) target = $region48
    $region47: #{tpu_custom_call.1} parent=5 // pred_region
      %s9505 = ssub.s32 %s12, 2
      // Predicated region
      $region49: #{tpu_custom_call.1} parent=47 // pred_check
        %p9506 = pneg %p130
      $region50: #{tpu_custom_call.1} parent=47 // pred_check_branch
        %9508 = sbr.rel (%p9506) target = $region52
      $region51: #{tpu_custom_call.1} parent=47 // pred_region
        %s9509 = smul.u32 64, %s18
        %p9510 = scmp.lt.s32.totalorder %s9509, 255
        %s9511 = scalar_select %p9510, %s9509, 255
        %s9512 = smul.addr %s9511, 8
        %s9513 = scalar_lea.vmem %s4, %s9512
      $region52: #{tpu_custom_call.1} parent=47 // pred_fallthru
        _
      // Predicated region
      $region53: #{tpu_custom_call.1} parent=47 // pred_check
        %p9514 = pneg %p156
      $region54: #{tpu_custom_call.1} parent=47 // pred_check_branch
        %9516 = sbr.rel (%p9514) target = $region56
      $region55: #{tpu_custom_call.1} parent=47 // pred_region
        %s9517 = smul.u32 64, %s18
        %p9518 = scmp.lt.s32.totalorder %s9517, 255
        %s9519 = scalar_select %p9518, %s9517, 255
        %s9520 = smul.addr %s9519, 8
        %s9521 = scalar_lea.vmem %s5, %s9520
      $region56: #{tpu_custom_call.1} parent=47 // pred_fallthru
        _
    $region48: #{tpu_custom_call.1} parent=5 // pred_fallthru
      _
  $region6: #{tpu_custom_call.1} parent=0 // loop_footer
    %s16 = sadd.s32 1, %s12
  $region7: #{tpu_custom_call.1} parent=0 // loop_footer_branch
    %11 = sbr.rel target = $region3
  $region8: #{tpu_custom_call.1} parent=0 // loop_exit
    _

</llo_original>
